<compile_context>
chip_gen: v7x
topology: tpu7x:2x2x1
jax: 0.10.0
libtpu: 0.0.40
codegen_flags: <defaults>
</compile_context>

<pallas_src>
import functools
import math

import jax
import jax.numpy as jnp
from jax import lax
from jax.experimental import pallas as pl
from jax.experimental.pallas import tpu as pltpu


# ----------------------------------------------------------------------------
# Helpers
# ----------------------------------------------------------------------------
def _pick_tile_rows(H, W, target_rows=512):
    """Largest row tile with ~<=512 output rows-of-W that divides H."""
    th = max(1, min(H, target_rows // max(W, 1)))
    while H % th != 0:
        th -= 1
    return th


def pixel_shuffle_nhwc(x, r):
    # PyTorch PixelShuffle: out[n, c, h*r+i, w*r+j] = in[n, c*r*r + i*r + j, h, w]
    N, H, W, Cr2 = x.shape
    C = Cr2 // (r * r)
    x = x.reshape(N, H, W, C, r, r)
    x = jnp.transpose(x, (0, 1, 4, 2, 5, 3))
    return x.reshape(N, H * r, W * r, C)


# ----------------------------------------------------------------------------
# Fused chain kernel: input conv + m ConvReLU blocks + output conv.
# grid = (N, n_layers); the layer axis is "arbitrary" and carries the
# activation in a ping-pong VMEM scratch (with a 1-px zero halo); only the last
# layer writes the (bf16, n_colors-channel) HBM output.
# ----------------------------------------------------------------------------
def _chain_kernel(x_ref, w_ref, b_ref, o_ref, buf_ref, *, H, W, C, TH,
                  n_layers, n_out):
    # x_ref  : (1, H, W, C)       bf16  channel-padded input image (read at l==0)
    # w_ref  : (L, 9*C, C)        bf16  ALL layer weights, resident in VMEM   [9]
    # b_ref  : (L, 1, C)          f32   ALL layer biases,  resident in VMEM   [9]
    # o_ref  : (1, H, W, n_out)   bf16  final output (written at l == L-1)    [2,3]
    # buf_ref: (2, H+2, W+2, C)   bf16  ping-pong activation with 1-px zero halo
    l = pl.program_id(1)
    last = n_layers - 1
    is_last = l == last
    # ConvReLU blocks are layers 1..L-2; the input/output convs have no ReLU.
    apply_relu = jnp.logical_and(l >= 1, l < last)
    src = lax.rem(l, 2)                       # dynamic ping-pong slot        [8]
    dst = 1 - src

    @pl.when(l == 0)
    def _init():
        # Zero only the halo rows of both slots (no full-buffer memset).     [1]
        # Halo *columns* are rewritten (as zeros) by every layer's full-width
        # row store below, so they need no separate maintenance.             [6]
        zr = jnp.zeros((W + 2, C), jnp.bfloat16)
        for s in range(2):
            buf_ref[s, 0, :, :] = zr
            buf_ref[s, H + 1, :, :] = zr
        # Load the image (with zero column halo) into slot 0's interior rows.
        zh = jnp.zeros((H, 1, C), jnp.bfloat16)
        buf_ref[0, 1:H + 1, :, :] = jnp.concatenate([zh, x_ref[0], zh], axis=1)

    w = w_ref[l]                              # (9*C, C) bf16
    b = b_ref[l]                              # (1, C)   f32
    zc = jnp.zeros((TH, 1, C), jnp.bfloat16)  # hoisted zero column for stores

    def row_tile(rt):
        r0 = rt * TH
        if not isinstance(rt, int):
            r0 = pl.multiple_of(r0, TH)
        # Rows r0..r0+TH+1 of the buffer carry the +-1 row halo; columns carry
        # the +-1 column halo already -> no per-tile input concat.           [6]
        xt = buf_ref[src, pl.ds(r0, TH + 2), :, :]           # (TH+2, W+2, C)
        cols = [xt[dy:dy + TH, dx:dx + W, :].reshape(TH * W, C)
                for dy in range(3) for dx in range(3)]
        patch = jnp.concatenate(cols, axis=1)                # (TH*W, 9*C) bf16
        y = jnp.dot(patch, w, preferred_element_type=jnp.float32) + b
        y = jnp.where(apply_relu, jnp.maximum(y, 0.0), y)
        yt = y.reshape(TH, W, C)

        @pl.when(is_last)
        def _():
            # Last layer: write the n_out channels straight to the HBM block.
            o_ref[0, pl.ds(r0, TH), :, :] = (
                yt[:, :, :n_out].astype(o_ref.dtype))

        @pl.when(jnp.logical_not(is_last))
        def _():
            # Other layers: full-width (halo-included) store into the other slot.
            row_val = jnp.concatenate([zc, yt.astype(buf_ref.dtype), zc],
                                      axis=1)                # (TH, W+2, C)
            buf_ref[dst, pl.ds(r0 + 1, TH), :, :] = row_val

    nt = H // TH
    if nt <= 8:                                              # small: unroll   [7]
        for rt in range(nt):
            row_tile(rt)
    else:                                                    # large H: fori   [7]
        def body(rt, carry):
            row_tile(rt)
            return carry
        lax.fori_loop(0, nt, body, 0)


def vdsr_chain(x_nhwc, w_all, b_all, n_out):
    """Fused (input + m ConvReLU + output) chain.

    x_nhwc: (N, H, W, C) bf16 (channel-padded to C=d)
    w_all : (L, 9*C, C)  bf16 ; b_all: (L, 1, C) f32
    returns (N, H, W, n_out) bf16
    """
    N, H, W, C = x_nhwc.shape
    L = w_all.shape[0]
    TH = _pick_tile_rows(H, W)
    kernel = functools.partial(_chain_kernel, H=H, W=W, C=C, TH=TH,
                               n_layers=L, n_out=n_out)

    flops = 2 * N * H * W * 9 * C * C * L
    bytes_accessed = (x_nhwc.size * 2 + N * H * W * n_out * 2
                      + w_all.size * 2 + b_all.size * 4)

    # Derive the VMEM limit from the actual resident footprint.              [14]
    vmem_bytes = (2 * (H + 2) * (W + 2) * C * 2          # ping-pong scratch
                  + 2 * H * W * C * 2                    # input block (x2 bufs)
                  + 2 * L * 9 * C * C * 2                # resident weights
                  + 2 * L * C * 4                        # resident biases
                  + 2 * H * W * n_out * 2                # output block
                  + 4 * (TH * W) * (9 * C + 2) * 4)      # im2col + f32 acc temps
    vmem_limit = int(min(vmem_bytes + (8 << 20), 112 << 20))

    return pl.pallas_call(
        kernel,
        out_shape=jax.ShapeDtypeStruct((N, H, W, n_out), jnp.bfloat16),
        grid=(N, L),
        in_specs=[
            pl.BlockSpec((1, H, W, C), lambda n, l: (n, 0, 0, 0)),
            pl.BlockSpec((L, 9 * C, C), lambda n, l: (0, 0, 0)),   # resident [9]
            pl.BlockSpec((L, 1, C), lambda n, l: (0, 0, 0)),       # resident [9]
        ],
        out_specs=pl.BlockSpec((1, H, W, n_out), lambda n, l: (n, 0, 0, 0)),
        scratch_shapes=[pltpu.VMEM((2, H + 2, W + 2, C), jnp.bfloat16)],
        compiler_params=pltpu.CompilerParams(
            dimension_semantics=("parallel", "arbitrary"),
            vmem_limit_bytes=vmem_limit),
        cost_estimate=pl.CostEstimate(flops=flops, transcendentals=0,
                                      bytes_accessed=bytes_accessed),
    )(x_nhwc, w_all, b_all)


# ----------------------------------------------------------------------------
# Upsampler (tiny small-channel convs + PixelShuffle) -- left to XLA per the
# performance review: a Pallas NHWC conv at Cin=3-4/Cout=12-16 runs at a few
# percent lane/MXU utilization and these layers are <1% of total flops.  [13]
# ----------------------------------------------------------------------------
def _upsample_xla(x_nhwc, params):
    x = x_nhwc
    for (w, b) in params["upsampler"]:
        y = lax.conv_general_dilated(
            x, w, window_strides=(1, 1), padding=((1, 1), (1, 1)),
            dimension_numbers=("NHWC", "HWIO", "NHWC"))
        y = y + b.reshape(1, 1, 1, -1)
        x = pixel_shuffle_nhwc(y, 2)
    return x


# ----------------------------------------------------------------------------
# Parameters (deterministic synthetic init; shapes follow the nn.Module)
# ----------------------------------------------------------------------------
def _make_conv(key, cin, cout, bias=True):
    kw, kb = jax.random.split(key)
    std = math.sqrt(2.0 / (cin * 9))
    w = jax.random.normal(kw, (3, 3, cin, cout), jnp.float32) * std
    if bias:
        b = jax.random.normal(kb, (cout,), jnp.float32) * 0.01
    else:
        b = jnp.zeros((cout,), jnp.float32)
    return w, b


def init_vdsr_params(key, scale, n_colors, d=64, m=8):
    assert scale & (scale - 1) == 0, "only power-of-2 scales implemented here"
    n_up = int(math.log2(scale))
    keys = jax.random.split(key, n_up + 2 + m)
    k = iter(keys)
    params = {
        "upsampler": [_make_conv(next(k), n_colors, 4 * n_colors, bias=True)
                      for _ in range(n_up)],
        "input": _make_conv(next(k), n_colors, d, bias=True),
        "residual": [_make_conv(next(k), d, d, bias=False) for _ in range(m)],
        "output": _make_conv(next(k), d, n_colors, bias=True),
    }
    return params


def _pack_chain_params(params):
    """Pack input/residual/output convs into (L, 9*d, d) bf16 + (L, 1, d) f32.

    First/last convs are zero-padded to d x d (consciously accepted, item 12);
    the K index order of the reshape (dy, dx, cin) matches the im2col patch.
    """
    w_in, b_in = params["input"]                 # (3,3,n_colors,d), (d,)
    d = w_in.shape[-1]
    n_colors = w_in.shape[-2]
    ws, bs = [], []
    wp = jnp.zeros((3, 3, d, d), jnp.float32).at[:, :, :n_colors, :].set(w_in)
    ws.append(wp); bs.append(b_in)
    for (w, b) in params["residual"]:
        ws.append(w); bs.append(b)
    w_out, b_out = params["output"]              # (3,3,d,n_colors), (n_colors,)
    wp = jnp.zeros((3, 3, d, d), jnp.float32).at[:, :, :, :n_colors].set(w_out)
    bp = jnp.zeros((d,), jnp.float32).at[:n_colors].set(b_out)
    ws.append(wp); bs.append(bp)
    w_all = jnp.stack([w.reshape(9 * d, d) for w in ws]).astype(jnp.bfloat16)
    b_all = jnp.stack(bs).reshape(len(bs), 1, d).astype(jnp.float32)
    return w_all, b_all


def _prepare_chain_input(x_nchw, params):
    """Shared prep for the forward and its reference: upsample + channel pad."""
    w_in, _ = params["input"]
    d = w_in.shape[-1]
    n_colors = w_in.shape[-2]
    x = jnp.transpose(x_nchw, (0, 2, 3, 1)).astype(jnp.float32)   # NCHW -> NHWC
    x = _upsample_xla(x, params)
    N, H, W, _ = x.shape
    x_pad = jnp.zeros((N, H, W, d), jnp.bfloat16).at[..., :n_colors].set(
        x.astype(jnp.bfloat16))
    w_all, b_all = _pack_chain_params(params)
    return x_pad, w_all, b_all, n_colors


# ----------------------------------------------------------------------------
# VDSR forward (matches nn.Sequential(upsampler, input, residual*, output)).
# Note: despite the name "residual_layers" the reference module has NO skip
# connection -- it is a plain sequential chain of ConvReLU blocks.
# ----------------------------------------------------------------------------
def vdsr_forward(x_nchw, params):
    x_pad, w_all, b_all, n_colors = _prepare_chain_input(x_nchw, params)
    y = vdsr_chain(x_pad, w_all, b_all, n_colors)        # (N,H,W,n_colors) bf16
    return jnp.transpose(y.astype(jnp.float32), (0, 3, 1, 2))


# ----------------------------------------------------------------------------
# Pure-JAX reference with the SAME im2col decomposition and bf16 rounding
# points as the kernel (so the comparison checks orchestration/indexing, not
# accumulation-order noise).
# ----------------------------------------------------------------------------
def _chain_ref(x_pad, w_all, b_all, n_out):
    N, H, W, C = x_pad.shape
    L = w_all.shape[0]
    a = x_pad                                             # bf16
    for l in range(L):
        ap = jnp.pad(a, ((0, 0), (1, 1), (1, 1), (0, 0)))
        cols = [ap[:, dy:dy + H, dx:dx + W, :].reshape(N * H * W, C)
                for dy in range(3) for dx in range(3)]
        patch = jnp.concatenate(cols, axis=1)             # (N*H*W, 9C) bf16
        y = jnp.dot(patch, w_all[l],
                    preferred_element_type=jnp.float32) + b_all[l]
        if 1 <= l < L - 1:
            y = jnp.maximum(y, 0.0)
        a = y.reshape(N, H, W, C).astype(jnp.bfloat16)
    return a[..., :n_out]


def vdsr_forward_ref(x_nchw, params):
    x_pad, w_all, b_all, n_colors = _prepare_chain_input(x_nchw, params)
    y = _chain_ref(x_pad, w_all, b_all, n_colors)
    return jnp.transpose(y.astype(jnp.float32), (0, 3, 1, 2))


# ----------------------------------------------------------------------------
if __name__ == "__main__":
    scale, n_colors, d, m = 2, 4, 32, 8
    N, H, W = 2, 16, 16

    key = jax.random.PRNGKey(0)
    kx, kp = jax.random.split(key)
    x = jax.random.normal(kx, (N, n_colors, H, W), jnp.float32)   # NCHW
    params = init_vdsr_params(kp, scale, n_colors, d=d, m=m)

    out = jax.block_until_ready(jax.jit(vdsr_forward)(x, params))
    assert out.shape == (N, n_colors, H * scale, W * scale), out.shape

    ref = jax.block_until_ready(jax.jit(vdsr_forward_ref)(x, params))
    max_err = float(jnp.max(jnp.abs(out - ref)))
    assert jnp.allclose(out, ref, rtol=2e-2, atol=2e-2), max_err

    print("KERNEL_OK")
</pallas_src>

<mosaic_0001>
module attributes {stable_mosaic.version = 11 : i64} {
  func.func @_chain_kernel(%arg0: i32, %arg1: i32, %arg2: memref<1x32x32x32xbf16, #tpu.memory_space<vmem>>, %arg3: memref<10x288x32xbf16, #tpu.memory_space<vmem>>, %arg4: memref<10x1x32xf32, #tpu.memory_space<vmem>>, %arg5: memref<1x32x32x4xbf16, #tpu.memory_space<vmem>>, %arg6: memref<2x34x34x32xbf16, #tpu.memory_space<vmem>>) attributes {dimension_semantics = [#tpu.dimension_semantics<parallel>, #tpu.dimension_semantics<arbitrary>], iteration_bounds = array<i64: 2, 10>, scalar_prefetch = 0 : i64, scratch_operands = 1 : i64, tpu.core_type = #tpu.core_type<tc>, window_params = [{transform_indices = @transform_0, window_bounds = array<i64: 1, 32, 32, 32>}, {pipeline_mode = #tpu.pipeline_mode<synchronous>, transform_indices = @transform_1, window_bounds = array<i64: 10, 288, 32>}, {pipeline_mode = #tpu.pipeline_mode<synchronous>, transform_indices = @transform_2, window_bounds = array<i64: 10, 1, 32>}, {transform_indices = @transform_3, window_bounds = array<i64: 1, 32, 32, 4>}]} {
    %c9_i32 = arith.constant 9 : i32
    %0 = arith.cmpi eq, %arg1, %c9_i32 : i32
    %c1_i32 = arith.constant 1 : i32
    %1 = arith.cmpi sge, %arg1, %c1_i32 : i32
    %c9_i32_0 = arith.constant 9 : i32
    %2 = arith.cmpi slt, %arg1, %c9_i32_0 : i32
    %3 = arith.andi %1, %2 : i1
    %c2_i32 = arith.constant 2 : i32
    %4 = arith.remsi %arg1, %c2_i32 : i32
    %c1_i32_1 = arith.constant 1 : i32
    %5 = arith.subi %c1_i32_1, %4 : i32
    %c0_i32 = arith.constant 0 : i32
    %6 = arith.cmpi eq, %arg1, %c0_i32 : i32
    %7 = arith.extui %6 : i1 to i32
    %c0_i32_2 = arith.constant 0 : i32
    %8 = arith.cmpi ne, %7, %c0_i32_2 : i32
    scf.if %8 {
      %cst_20 = arith.constant 0.000000e+00 : bf16
      %84 = vector.broadcast %cst_20 : bf16 to vector<34x32xbf16>
      %c0_21 = arith.constant 0 : index
      %c0_22 = arith.constant 0 : index
      %c0_23 = arith.constant 0 : index
      %c0_24 = arith.constant 0 : index
      %85 = vector.load %arg6[%c0_21, %c0_22, %c0_23, %c0_24] : memref<2x34x34x32xbf16, #tpu.memory_space<vmem>>, vector<1x1x34x32xbf16>
      %86 = vector.shape_cast %85 : vector<1x1x34x32xbf16> to vector<34x32xbf16>
      %87 = vector.shape_cast %84 : vector<34x32xbf16> to vector<1x1x34x32xbf16>
      tpu.vector_store %arg6[%c0_21, %c0_22, %c0_23, %c0_24], %87 {strides = array<i32>} : memref<2x34x34x32xbf16, #tpu.memory_space<vmem>>, vector<1x1x34x32xbf16>,
      %c0_25 = arith.constant 0 : index
      %c33 = arith.constant 33 : index
      %c0_26 = arith.constant 0 : index
      %c0_27 = arith.constant 0 : index
      %88 = vector.load %arg6[%c0_25, %c33, %c0_26, %c0_27] : memref<2x34x34x32xbf16, #tpu.memory_space<vmem>>, vector<1x1x34x32xbf16>
      %89 = vector.shape_cast %88 : vector<1x1x34x32xbf16> to vector<34x32xbf16>
      %90 = vector.shape_cast %84 : vector<34x32xbf16> to vector<1x1x34x32xbf16>
      tpu.vector_store %arg6[%c0_25, %c33, %c0_26, %c0_27], %90 {strides = array<i32>} : memref<2x34x34x32xbf16, #tpu.memory_space<vmem>>, vector<1x1x34x32xbf16>,
      %c1 = arith.constant 1 : index
      %c0_28 = arith.constant 0 : index
      %c0_29 = arith.constant 0 : index
      %c0_30 = arith.constant 0 : index
      %91 = vector.load %arg6[%c1, %c0_28, %c0_29, %c0_30] : memref<2x34x34x32xbf16, #tpu.memory_space<vmem>>, vector<1x1x34x32xbf16>
      %92 = vector.shape_cast %91 : vector<1x1x34x32xbf16> to vector<34x32xbf16>
      %93 = vector.shape_cast %84 : vector<34x32xbf16> to vector<1x1x34x32xbf16>
      tpu.vector_store %arg6[%c1, %c0_28, %c0_29, %c0_30], %93 {strides = array<i32>} : memref<2x34x34x32xbf16, #tpu.memory_space<vmem>>, vector<1x1x34x32xbf16>,
      %c1_31 = arith.constant 1 : index
      %c33_32 = arith.constant 33 : index
      %c0_33 = arith.constant 0 : index
      %c0_34 = arith.constant 0 : index
      %94 = vector.load %arg6[%c1_31, %c33_32, %c0_33, %c0_34] : memref<2x34x34x32xbf16, #tpu.memory_space<vmem>>, vector<1x1x34x32xbf16>
      %95 = vector.shape_cast %94 : vector<1x1x34x32xbf16> to vector<34x32xbf16>
      %96 = vector.shape_cast %84 : vector<34x32xbf16> to vector<1x1x34x32xbf16>
      tpu.vector_store %arg6[%c1_31, %c33_32, %c0_33, %c0_34], %96 {strides = array<i32>} : memref<2x34x34x32xbf16, #tpu.memory_space<vmem>>, vector<1x1x34x32xbf16>,
      %cst_35 = arith.constant 0.000000e+00 : bf16
      %97 = vector.broadcast %cst_35 : bf16 to vector<32x1x32xbf16>
      %c0_36 = arith.constant 0 : index
      %c0_37 = arith.constant 0 : index
      %c0_38 = arith.constant 0 : index
      %c0_39 = arith.constant 0 : index
      %98 = vector.load %arg2[%c0_36, %c0_37, %c0_38, %c0_39] : memref<1x32x32x32xbf16, #tpu.memory_space<vmem>>, vector<1x32x32x32xbf16>
      %99 = vector.shape_cast %98 : vector<1x32x32x32xbf16> to vector<32x32x32xbf16>
      %100 = tpu.concatenate %97, %99, %97 in 1 : vector<32x1x32xbf16>, vector<32x32x32xbf16>, vector<32x1x32xbf16> -> vector<32x34x32xbf16>
      %c0_40 = arith.constant 0 : index
      %c1_41 = arith.constant 1 : index
      %c0_42 = arith.constant 0 : index
      %c0_43 = arith.constant 0 : index
      %101 = vector.load %arg6[%c0_40, %c1_41, %c0_42, %c0_43] : memref<2x34x34x32xbf16, #tpu.memory_space<vmem>>, vector<1x32x34x32xbf16>
      %102 = vector.shape_cast %101 : vector<1x32x34x32xbf16> to vector<32x34x32xbf16>
      %103 = vector.shape_cast %100 : vector<32x34x32xbf16> to vector<1x32x34x32xbf16>
      tpu.vector_store %arg6[%c0_40, %c1_41, %c0_42, %c0_43], %103 {strides = array<i32>} : memref<2x34x34x32xbf16, #tpu.memory_space<vmem>>, vector<1x32x34x32xbf16>,
    } else {
    }
    %9 = arith.index_cast %arg1 : i32 to index
    %c0 = arith.constant 0 : index
    %c0_3 = arith.constant 0 : index
    %10 = vector.load %arg3[%9, %c0, %c0_3] : memref<10x288x32xbf16, #tpu.memory_space<vmem>>, vector<1x288x32xbf16>
    %11 = vector.shape_cast %10 : vector<1x288x32xbf16> to vector<288x32xbf16>
    %12 = arith.index_cast %arg1 : i32 to index
    %c0_4 = arith.constant 0 : index
    %c0_5 = arith.constant 0 : index
    %13 = vector.load %arg4[%12, %c0_4, %c0_5] : memref<10x1x32xf32, #tpu.memory_space<vmem>>, vector<1x1x32xf32>
    %14 = vector.shape_cast %13 : vector<1x1x32xf32> to vector<1x32xf32>
    %cst = arith.constant 0.000000e+00 : bf16
    %15 = vector.broadcast %cst : bf16 to vector<16x1x32xbf16>
    %16 = arith.index_cast %4 : i32 to index
    %c0_6 = arith.constant 0 : index
    %c0_7 = arith.constant 0 : index
    %c0_8 = arith.constant 0 : index
    %17 = vector.load %arg6[%16, %c0_6, %c0_7, %c0_8] : memref<2x34x34x32xbf16, #tpu.memory_space<vmem>>, vector<1x18x34x32xbf16>
    %18 = vector.shape_cast %17 : vector<1x18x34x32xbf16> to vector<18x34x32xbf16>
    %19 = vector.extract_strided_slice %18 {offsets = [0, 0, 0], sizes = [16, 32, 32], strides = [1, 1, 1]} : vector<18x34x32xbf16> to vector<16x32x32xbf16>
    %20 = vector.shape_cast %19 : vector<16x32x32xbf16> to vector<512x32xbf16>
    %21 = vector.extract_strided_slice %18 {offsets = [0, 1, 0], sizes = [16, 32, 32], strides = [1, 1, 1]} : vector<18x34x32xbf16> to vector<16x32x32xbf16>
    %22 = vector.shape_cast %21 : vector<16x32x32xbf16> to vector<512x32xbf16>
    %23 = vector.extract_strided_slice %18 {offsets = [0, 2, 0], sizes = [16, 32, 32], strides = [1, 1, 1]} : vector<18x34x32xbf16> to vector<16x32x32xbf16>
    %24 = vector.shape_cast %23 : vector<16x32x32xbf16> to vector<512x32xbf16>
    %25 = vector.extract_strided_slice %18 {offsets = [1, 0, 0], sizes = [16, 32, 32], strides = [1, 1, 1]} : vector<18x34x32xbf16> to vector<16x32x32xbf16>
    %26 = vector.shape_cast %25 : vector<16x32x32xbf16> to vector<512x32xbf16>
    %27 = vector.extract_strided_slice %18 {offsets = [1, 1, 0], sizes = [16, 32, 32], strides = [1, 1, 1]} : vector<18x34x32xbf16> to vector<16x32x32xbf16>
    %28 = vector.shape_cast %27 : vector<16x32x32xbf16> to vector<512x32xbf16>
    %29 = vector.extract_strided_slice %18 {offsets = [1, 2, 0], sizes = [16, 32, 32], strides = [1, 1, 1]} : vector<18x34x32xbf16> to vector<16x32x32xbf16>
    %30 = vector.shape_cast %29 : vector<16x32x32xbf16> to vector<512x32xbf16>
    %31 = vector.extract_strided_slice %18 {offsets = [2, 0, 0], sizes = [16, 32, 32], strides = [1, 1, 1]} : vector<18x34x32xbf16> to vector<16x32x32xbf16>
    %32 = vector.shape_cast %31 : vector<16x32x32xbf16> to vector<512x32xbf16>
    %33 = vector.extract_strided_slice %18 {offsets = [2, 1, 0], sizes = [16, 32, 32], strides = [1, 1, 1]} : vector<18x34x32xbf16> to vector<16x32x32xbf16>
    %34 = vector.shape_cast %33 : vector<16x32x32xbf16> to vector<512x32xbf16>
    %35 = vector.extract_strided_slice %18 {offsets = [2, 2, 0], sizes = [16, 32, 32], strides = [1, 1, 1]} : vector<18x34x32xbf16> to vector<16x32x32xbf16>
    %36 = vector.shape_cast %35 : vector<16x32x32xbf16> to vector<512x32xbf16>
    %37 = tpu.concatenate %20, %22, %24, %26, %28, %30, %32, %34, %36 in 1 : vector<512x32xbf16>, vector<512x32xbf16>, vector<512x32xbf16>, vector<512x32xbf16>, vector<512x32xbf16>, vector<512x32xbf16>, vector<512x32xbf16>, vector<512x32xbf16>, vector<512x32xbf16> -> vector<512x288xbf16>
    %cst_9 = arith.constant dense<0.000000e+00> : vector<512x32xf32>
    %38 = tpu.matmul %37, %11, %cst_9 {dimension_numbers = #tpu.dot_dimension_numbers<[1], [0], [0], [1], [0, 0, 1, 1], [], []>} : vector<512x288xbf16>, vector<288x32xbf16>, vector<512x32xf32> -> vector<512x32xf32>
    %39 = vector.broadcast %14 : vector<1x32xf32> to vector<512x32xf32>
    %40 = arith.addf %38, %39 : vector<512x32xf32>
    %cst_10 = arith.constant 0.000000e+00 : f32
    %41 = vector.broadcast %cst_10 : f32 to vector<512x32xf32>
    %42 = arith.maximumf %40, %41 : vector<512x32xf32>
    %43 = arith.select %3, %42, %40 : vector<512x32xf32>
    %44 = vector.shape_cast %43 : vector<512x32xf32> to vector<16x32x32xf32>
    %45 = arith.extui %0 : i1 to i32
    %c0_i32_11 = arith.constant 0 : i32
    %46 = arith.cmpi ne, %45, %c0_i32_11 : i32
    scf.if %46 {
      %84 = vector.extract_strided_slice %44 {offsets = [0, 0, 0], sizes = [16, 32, 4], strides = [1, 1, 1]} : vector<16x32x32xf32> to vector<16x32x4xf32>
      %85 = arith.truncf %84 : vector<16x32x4xf32> to vector<16x32x4xbf16>
      %c0_20 = arith.constant 0 : index
      %c0_21 = arith.constant 0 : index
      %c0_22 = arith.constant 0 : index
      %c0_23 = arith.constant 0 : index
      %86 = vector.load %arg5[%c0_20, %c0_21, %c0_22, %c0_23] : memref<1x32x32x4xbf16, #tpu.memory_space<vmem>>, vector<1x16x32x4xbf16>
      %87 = vector.shape_cast %86 : vector<1x16x32x4xbf16> to vector<16x32x4xbf16>
      %88 = vector.shape_cast %85 : vector<16x32x4xbf16> to vector<1x16x32x4xbf16>
      tpu.vector_store %arg5[%c0_20, %c0_21, %c0_22, %c0_23], %88 {strides = array<i32>} : memref<1x32x32x4xbf16, #tpu.memory_space<vmem>>, vector<1x16x32x4xbf16>,
    } else {
    }
    %true = arith.constant true
    %47 = arith.xori %0, %true : i1
    %48 = arith.extui %47 : i1 to i32
    %c0_i32_12 = arith.constant 0 : i32
    %49 = arith.cmpi ne, %48, %c0_i32_12 : i32
    scf.if %49 {
      %84 = arith.truncf %44 : vector<16x32x32xf32> to vector<16x32x32xbf16>
      %85 = tpu.concatenate %15, %84, %15 in 1 : vector<16x1x32xbf16>, vector<16x32x32xbf16>, vector<16x1x32xbf16> -> vector<16x34x32xbf16>
      %86 = arith.index_cast %5 : i32 to index
      %c1 = arith.constant 1 : index
      %c0_20 = arith.constant 0 : index
      %c0_21 = arith.constant 0 : index
      %87 = vector.load %arg6[%86, %c1, %c0_20, %c0_21] : memref<2x34x34x32xbf16, #tpu.memory_space<vmem>>, vector<1x16x34x32xbf16>
      %88 = vector.shape_cast %87 : vector<1x16x34x32xbf16> to vector<16x34x32xbf16>
      %89 = vector.shape_cast %85 : vector<16x34x32xbf16> to vector<1x16x34x32xbf16>
      tpu.vector_store %arg6[%86, %c1, %c0_20, %c0_21], %89 {strides = array<i32>} : memref<2x34x34x32xbf16, #tpu.memory_space<vmem>>, vector<1x16x34x32xbf16>,
    } else {
    }
    %50 = arith.index_cast %4 : i32 to index
    %c16 = arith.constant 16 : index
    %c0_13 = arith.constant 0 : index
    %c0_14 = arith.constant 0 : index
    %51 = vector.load %arg6[%50, %c16, %c0_13, %c0_14] : memref<2x34x34x32xbf16, #tpu.memory_space<vmem>>, vector<1x18x34x32xbf16>
    %52 = vector.shape_cast %51 : vector<1x18x34x32xbf16> to vector<18x34x32xbf16>
    %53 = vector.extract_strided_slice %52 {offsets = [0, 0, 0], sizes = [16, 32, 32], strides = [1, 1, 1]} : vector<18x34x32xbf16> to vector<16x32x32xbf16>
    %54 = vector.shape_cast %53 : vector<16x32x32xbf16> to vector<512x32xbf16>
    %55 = vector.extract_strided_slice %52 {offsets = [0, 1, 0], sizes = [16, 32, 32], strides = [1, 1, 1]} : vector<18x34x32xbf16> to vector<16x32x32xbf16>
    %56 = vector.shape_cast %55 : vector<16x32x32xbf16> to vector<512x32xbf16>
    %57 = vector.extract_strided_slice %52 {offsets = [0, 2, 0], sizes = [16, 32, 32], strides = [1, 1, 1]} : vector<18x34x32xbf16> to vector<16x32x32xbf16>
    %58 = vector.shape_cast %57 : vector<16x32x32xbf16> to vector<512x32xbf16>
    %59 = vector.extract_strided_slice %52 {offsets = [1, 0, 0], sizes = [16, 32, 32], strides = [1, 1, 1]} : vector<18x34x32xbf16> to vector<16x32x32xbf16>
    %60 = vector.shape_cast %59 : vector<16x32x32xbf16> to vector<512x32xbf16>
    %61 = vector.extract_strided_slice %52 {offsets = [1, 1, 0], sizes = [16, 32, 32], strides = [1, 1, 1]} : vector<18x34x32xbf16> to vector<16x32x32xbf16>
    %62 = vector.shape_cast %61 : vector<16x32x32xbf16> to vector<512x32xbf16>
    %63 = vector.extract_strided_slice %52 {offsets = [1, 2, 0], sizes = [16, 32, 32], strides = [1, 1, 1]} : vector<18x34x32xbf16> to vector<16x32x32xbf16>
    %64 = vector.shape_cast %63 : vector<16x32x32xbf16> to vector<512x32xbf16>
    %65 = vector.extract_strided_slice %52 {offsets = [2, 0, 0], sizes = [16, 32, 32], strides = [1, 1, 1]} : vector<18x34x32xbf16> to vector<16x32x32xbf16>
    %66 = vector.shape_cast %65 : vector<16x32x32xbf16> to vector<512x32xbf16>
    %67 = vector.extract_strided_slice %52 {offsets = [2, 1, 0], sizes = [16, 32, 32], strides = [1, 1, 1]} : vector<18x34x32xbf16> to vector<16x32x32xbf16>
    %68 = vector.shape_cast %67 : vector<16x32x32xbf16> to vector<512x32xbf16>
    %69 = vector.extract_strided_slice %52 {offsets = [2, 2, 0], sizes = [16, 32, 32], strides = [1, 1, 1]} : vector<18x34x32xbf16> to vector<16x32x32xbf16>
    %70 = vector.shape_cast %69 : vector<16x32x32xbf16> to vector<512x32xbf16>
    %71 = tpu.concatenate %54, %56, %58, %60, %62, %64, %66, %68, %70 in 1 : vector<512x32xbf16>, vector<512x32xbf16>, vector<512x32xbf16>, vector<512x32xbf16>, vector<512x32xbf16>, vector<512x32xbf16>, vector<512x32xbf16>, vector<512x32xbf16>, vector<512x32xbf16> -> vector<512x288xbf16>
    %cst_15 = arith.constant dense<0.000000e+00> : vector<512x32xf32>
    %72 = tpu.matmul %71, %11, %cst_15 {dimension_numbers = #tpu.dot_dimension_numbers<[1], [0], [0], [1], [0, 0, 1, 1], [], []>} : vector<512x288xbf16>, vector<288x32xbf16>, vector<512x32xf32> -> vector<512x32xf32>
    %73 = vector.broadcast %14 : vector<1x32xf32> to vector<512x32xf32>
    %74 = arith.addf %72, %73 : vector<512x32xf32>
    %cst_16 = arith.constant 0.000000e+00 : f32
    %75 = vector.broadcast %cst_16 : f32 to vector<512x32xf32>
    %76 = arith.maximumf %74, %75 : vector<512x32xf32>
    %77 = arith.select %3, %76, %74 : vector<512x32xf32>
    %78 = vector.shape_cast %77 : vector<512x32xf32> to vector<16x32x32xf32>
    %79 = arith.extui %0 : i1 to i32
    %c0_i32_17 = arith.constant 0 : i32
    %80 = arith.cmpi ne, %79, %c0_i32_17 : i32
    scf.if %80 {
      %84 = vector.extract_strided_slice %78 {offsets = [0, 0, 0], sizes = [16, 32, 4], strides = [1, 1, 1]} : vector<16x32x32xf32> to vector<16x32x4xf32>
      %85 = arith.truncf %84 : vector<16x32x4xf32> to vector<16x32x4xbf16>
      %c0_20 = arith.constant 0 : index
      %c16_21 = arith.constant 16 : index
      %c0_22 = arith.constant 0 : index
      %c0_23 = arith.constant 0 : index
      %86 = vector.load %arg5[%c0_20, %c16_21, %c0_22, %c0_23] : memref<1x32x32x4xbf16, #tpu.memory_space<vmem>>, vector<1x16x32x4xbf16>
      %87 = vector.shape_cast %86 : vector<1x16x32x4xbf16> to vector<16x32x4xbf16>
      %88 = vector.shape_cast %85 : vector<16x32x4xbf16> to vector<1x16x32x4xbf16>
      tpu.vector_store %arg5[%c0_20, %c16_21, %c0_22, %c0_23], %88 {strides = array<i32>} : memref<1x32x32x4xbf16, #tpu.memory_space<vmem>>, vector<1x16x32x4xbf16>,
    } else {
    }
    %true_18 = arith.constant true
    %81 = arith.xori %0, %true_18 : i1
    %82 = arith.extui %81 : i1 to i32
    %c0_i32_19 = arith.constant 0 : i32
    %83 = arith.cmpi ne, %82, %c0_i32_19 : i32
    scf.if %83 {
      %84 = arith.truncf %78 : vector<16x32x32xf32> to vector<16x32x32xbf16>
      %85 = tpu.concatenate %15, %84, %15 in 1 : vector<16x1x32xbf16>, vector<16x32x32xbf16>, vector<16x1x32xbf16> -> vector<16x34x32xbf16>
      %86 = arith.index_cast %5 : i32 to index
      %c17 = arith.constant 17 : index
      %c0_20 = arith.constant 0 : index
      %c0_21 = arith.constant 0 : index
      %87 = vector.load %arg6[%86, %c17, %c0_20, %c0_21] : memref<2x34x34x32xbf16, #tpu.memory_space<vmem>>, vector<1x16x34x32xbf16>
      %88 = vector.shape_cast %87 : vector<1x16x34x32xbf16> to vector<16x34x32xbf16>
      %89 = vector.shape_cast %85 : vector<16x34x32xbf16> to vector<1x16x34x32xbf16>
      tpu.vector_store %arg6[%86, %c17, %c0_20, %c0_21], %89 {strides = array<i32>} : memref<2x34x34x32xbf16, #tpu.memory_space<vmem>>, vector<1x16x34x32xbf16>,
    } else {
    }
    return
  }
  func.func @transform_0(%arg0: i32, %arg1: i32) -> (i32, i32, i32, i32) {
    %c0_i32 = arith.constant 0 : i32
    %c0_i32_0 = arith.constant 0 : i32
    %c0_i32_1 = arith.constant 0 : i32
    %c0_i32_2 = arith.constant 0 : i32
    return %arg0, %c0_i32, %c0_i32_0, %c0_i32_1 : i32, i32, i32, i32
  }
  func.func @transform_1(%arg0: i32, %arg1: i32) -> (i32, i32, i32) {
    %c0_i32 = arith.constant 0 : i32
    %c0_i32_0 = arith.constant 0 : i32
    %c0_i32_1 = arith.constant 0 : i32
    %c0_i32_2 = arith.constant 0 : i32
    return %c0_i32, %c0_i32_0, %c0_i32_1 : i32, i32, i32
  }
  func.func @transform_2(%arg0: i32, %arg1: i32) -> (i32, i32, i32) {
    %c0_i32 = arith.constant 0 : i32
    %c0_i32_0 = arith.constant 0 : i32
    %c0_i32_1 = arith.constant 0 : i32
    %c0_i32_2 = arith.constant 0 : i32
    return %c0_i32, %c0_i32_0, %c0_i32_1 : i32, i32, i32
  }
  func.func @transform_3(%arg0: i32, %arg1: i32) -> (i32, i32, i32, i32) {
    %c0_i32 = arith.constant 0 : i32
    %c0_i32_0 = arith.constant 0 : i32
    %c0_i32_1 = arith.constant 0 : i32
    %c0_i32_2 = arith.constant 0 : i32
    return %arg0, %c0_i32, %c0_i32_0, %c0_i32_1 : i32, i32, i32, i32
  }
}

</mosaic_0001>

<llo_original>
// kernel: vdsr_forward.1
$region0: #{vdsr_forward.1}
  #allocation0 [shape = 'u32[]', space=smem, size = 0x4, offset = 0x4, fixed_abs, tag = 'smem constant byte address 0x4 - core index']
  #allocation1 [shape = 'u32[144,128]{1,0:T(1,128)}', space=vmem, size = 0x12000, scoped, tag = 'internal scratch']
  #allocation2 [shape = 'bf16[2,34,34,32]{3,2,1,0:T(8,128)(2,1)}', space=vmem, size = 0xaa000, scoped, tag = 'scratch operand']
  %s0 = inlined_call_operand.vmem [shape: bf16[2,32,32,32], index: 0, kind: input, shape index: {}]
  %s1 = inlined_call_operand.vmem [shape: bf16[10,288,32], index: 1, kind: input, shape index: {}]
  %s2 = inlined_call_operand.vmem [shape: f32[10,1,32], index: 2, kind: input, shape index: {}]
  %s3 = inlined_call_operand.vmem [shape: bf16[2,32,32,4], index: 3, kind: output, shape index: {}]
  %s4 = sld [smem:[#allocation0]]
  $region65: #{vdsr_forward.1} parent=0
    _
  %s6 = ssub.s32 1, %s4
  %s7 = scalar_select 0, %s6, %s4
  loop: start=0, step=1, limit=22
  $region2: #{vdsr_forward.1} parent=0 // loop_pre_header
    _
  $region3: #{vdsr_forward.1} parent=0 // loop_header
    %s9 = sphi 0, %s13
    %p10 = scmp.ge.s32.totalorder %s9, 22
    %s16 = sphi 0, %s28
    %s17 = sphi 0, %s24
    %s18 = sphi 0, %s16
    %s19 = sphi 0, %s17
    %s20 = sphi 0, %s18
    %s21 = sphi 0, %s19
    %s31 = sphi 0, %s33
    %s34 = sphi 0, %s31
    %s35 = sphi 0, %s34
    %s51 = sphi 0, %s35
    %s55 = sphi 0, %s55
    %s57 = sphi 0, %s55
    %s58 = sphi 0, %s57
    %s72 = sphi 0, %s58
    %s76 = sphi 0, %s76
    %s78 = sphi 0, %s76
    %s79 = sphi 0, %s78
    %s93 = sphi 0, %s79
    %s99 = sphi 0, %s101
    %s102 = sphi 0, %s99
    %s103 = sphi 0, %s102
    %s119 = sphi 0, %s103
  $region4: #{vdsr_forward.1} parent=0 // loop_header_branch
    %12 = sbr.rel (%p10) target = $region8
  $region5: #{vdsr_forward.1} parent=0 // loop_body
    %s14 = ssub.s32 %s9, 1
    %s15 = ssub.s32 %s9, 2
    %s22 = sadd.s32 1, %s17
    %p23 = scmp.ge.s32.totalorder %s22, 10
    %s24 = scalar_select %p23, 0, %s22
    %s25 = sadd.s32 1, %s16
    %s26 = scalar_select %p23, %s25, %s16
    %p27 = scmp.ge.s32.totalorder %s26, 2
    %s28 = scalar_select %p27, 0, %s26
    %s29 = ssub.s32 %s16, %s28
    %p30 = scmp.eq.s32.totalorder %s29, 0
    %s32 = sadd.s32 %s31, 1
    %s33 = scalar_select %p30, %s31, %s32
    %p36 = pneg %p30
    %p37 = scmp.eq.s32.totalorder %s9, 19
    %p38 = por %p36, %p37
    %p39 = scmp.ne.s32.totalorder %s31, %s34
    %p40 = scmp.eq.s32.totalorder %s9, 0
    %p41 = por %p39, %p40
    %p42 = scmp.ne.s32.totalorder %s31, %s34
    %p43 = scmp.eq.s32.totalorder %s14, 19
    %p44 = por %p42, %p43
    %p45 = scmp.ne.s32.totalorder %s34, %s35
    %p46 = scmp.eq.s32.totalorder %s14, 0
    %p47 = por %p45, %p46
    %p48 = scmp.ne.s32.totalorder %s34, %s35
    %p49 = scmp.eq.s32.totalorder %s15, 19
    %p50 = por %p48, %p49
    %p52 = scmp.ne.s32.totalorder %s35, %s51
    %p53 = scmp.eq.s32.totalorder %s15, 0
    %p54 = por %p52, %p53
    %s56 = sadd.s32 %s55, 1
    %p59 = scmp.eq.s32.totalorder %s9, 19
    %p60 = scmp.ne.s32.totalorder %s55, %s57
    %p61 = scmp.eq.s32.totalorder %s9, 0
    %p62 = por %p60, %p61
    %p63 = scmp.ne.s32.totalorder %s55, %s57
    %p64 = scmp.eq.s32.totalorder %s14, 19
    %p65 = por %p63, %p64
    %p66 = scmp.ne.s32.totalorder %s57, %s58
    %p67 = scmp.eq.s32.totalorder %s14, 0
    %p68 = por %p66, %p67
    %p69 = scmp.ne.s32.totalorder %s57, %s58
    %p70 = scmp.eq.s32.totalorder %s15, 19
    %p71 = por %p69, %p70
    %p73 = scmp.ne.s32.totalorder %s58, %s72
    %p74 = scmp.eq.s32.totalorder %s15, 0
    %p75 = por %p73, %p74
    %s77 = sadd.s32 %s76, 1
    %p80 = scmp.eq.s32.totalorder %s9, 19
    %p81 = scmp.ne.s32.totalorder %s76, %s78
    %p82 = scmp.eq.s32.totalorder %s9, 0
    %p83 = por %p81, %p82
    %p84 = scmp.ne.s32.totalorder %s76, %s78
    %p85 = scmp.eq.s32.totalorder %s14, 19
    %p86 = por %p84, %p85
    %p87 = scmp.ne.s32.totalorder %s78, %s79
    %p88 = scmp.eq.s32.totalorder %s14, 0
    %p89 = por %p87, %p88
    %p90 = scmp.ne.s32.totalorder %s78, %s79
    %p91 = scmp.eq.s32.totalorder %s15, 19
    %p92 = por %p90, %p91
    %p94 = scmp.ne.s32.totalorder %s79, %s93
    %p95 = scmp.eq.s32.totalorder %s15, 0
    %p96 = por %p94, %p95
    %s97 = ssub.s32 %s16, %s28
    %p98 = scmp.eq.s32.totalorder %s97, 0
    %s100 = sadd.s32 %s99, 1
    %s101 = scalar_select %p98, %s99, %s100
    %p104 = pneg %p98
    %p105 = scmp.eq.s32.totalorder %s9, 19
    %p106 = por %p104, %p105
    %p107 = scmp.ne.s32.totalorder %s99, %s102
    %p108 = scmp.eq.s32.totalorder %s9, 0
    %p109 = por %p107, %p108
    %p110 = scmp.ne.s32.totalorder %s99, %s102
    %p111 = scmp.eq.s32.totalorder %s14, 19
    %p112 = por %p110, %p111
    %p113 = scmp.ne.s32.totalorder %s102, %s103
    %p114 = scmp.eq.s32.totalorder %s14, 0
    %p115 = por %p113, %p114
    %p116 = scmp.ne.s32.totalorder %s102, %s103
    %p117 = scmp.eq.s32.totalorder %s15, 19
    %p118 = por %p116, %p117
    %p120 = scmp.ne.s32.totalorder %s103, %s119
    %p121 = scmp.eq.s32.totalorder %s15, 0
    %p122 = por %p120, %p121
    %p123 = scmp.le.s32.totalorder 1, %s9
    %p124 = scmp.lt.s32.totalorder %s9, 21
    %p125 = pnand %p123, %p124
    %p126 = pneg %p125
    // Predicated region
    $region9: #{vdsr_forward.1} parent=5 // pred_check
      _
    $region10: #{vdsr_forward.1} parent=5 // pred_check_branch
      %128 = sbr.rel (%p125) target = $region12
    $region11: #{vdsr_forward.1} parent=5 // pred_region
      %s129 = ssub.s32 %s9, 1
      // Predicated region
      $region13: #{vdsr_forward.1} parent=11 // pred_check
        %p130 = pneg %p68
      $region14: #{vdsr_forward.1} parent=11 // pred_check_branch
        %132 = sbr.rel (%p130) target = $region16
      $region15: #{vdsr_forward.1} parent=11 // pred_region
        _
      $region16: #{vdsr_forward.1} parent=11 // pred_fallthru
        _
      // Predicated region
      $region17: #{vdsr_forward.1} parent=11 // pred_check
        %p133 = pneg %p89
      $region18: #{vdsr_forward.1} parent=11 // pred_check_branch
        %135 = sbr.rel (%p133) target = $region20
      $region19: #{vdsr_forward.1} parent=11 // pred_region
        _
      $region20: #{vdsr_forward.1} parent=11 // pred_fallthru
        _
    $region12: #{vdsr_forward.1} parent=5 // pred_fallthru
      _
    %p136 = scmp.lt.s32.totalorder %s9, 20
    // Predicated region
    $region21: #{vdsr_forward.1} parent=5 // pred_check
      %p137 = pneg %p136
    $region22: #{vdsr_forward.1} parent=5 // pred_check_branch
      %139 = sbr.rel (%p137) target = $region24
    $region23: #{vdsr_forward.1} parent=5 // pred_region
      // Predicated region
      $region25: #{vdsr_forward.1} parent=23 // pred_check
        %p140 = pneg %p41
      $region26: #{vdsr_forward.1} parent=23 // pred_check_branch
        %142 = sbr.rel (%p140) target = $region28
      $region27: #{vdsr_forward.1} parent=23 // pred_region
        %p143 = scmp.lt.s32.totalorder %s16, 1
        %s144 = scalar_select %p143, %s16, 1
        %s145 = smul.addr %s144, 128
        %s146 = smul.addr %s145, 4
        %s147 = scalar_lea.vmem %s0, %s146
      $region28: #{vdsr_forward.1} parent=23 // pred_fallthru
        _
    $region24: #{vdsr_forward.1} parent=5 // pred_fallthru
      _
    %p148 = scmp.le.s32.totalorder 1, %s9
    %p149 = scmp.lt.s32.totalorder %s9, 21
    %p150 = pnand %p148, %p149
    %p151 = pneg %p150
    // Predicated region
    $region29: #{vdsr_forward.1} parent=5 // pred_check
      _
    $region30: #{vdsr_forward.1} parent=5 // pred_check_branch
      %153 = sbr.rel (%p150) target = $region32
    $region31: #{vdsr_forward.1} parent=5 // pred_region
      %s154 = ssub.s32 %s9, 1
      %p155 = scmp.lt.s32.totalorder %s18, 1
      %s156 = scalar_select %p155, %s18, 1
      %s157 = smul.addr %s156, 128
      %s158 = smul.addr %s157, 4
      %s159 = scalar_lea.vmem %s0, %s158
      %p160 = pneg %p47
      %p161 = pneg %p44
      %p162 = pneg %p68
      %p163 = pneg %p65
      %p164 = pneg %p89
      %p165 = pneg %p86
      %p166 = pneg %p115
      %p167 = pneg %p112
      %p168 = scmp.lt.s32.totalorder %s18, 1
      %s169 = scalar_select %p168, %s18, 1
      %s170 = smul.addr %s169, 128
      %s171 = smul.addr %s170, 4
      %s172 = scalar_lea.vmem %s3, %s171
      %p173 = scmp.lt.s32.totalorder %s18, 1
      %s174 = scalar_select %p173, %s18, 1
      %s175 = smul.addr %s174, 128
      %s176 = smul.addr %s175, 4
      %s177 = scalar_lea.vmem %s0, %s176
      %p178 = scmp.lt.s32.totalorder %s18, 1
      %s179 = scalar_select %p178, %s18, 1
      %s180 = smul.addr %s179, 128
      %s181 = smul.addr %s180, 4
      %s182 = scalar_lea.vmem %s3, %s181
      %p184 = scmp.eq.s32.totalorder %s19, 9
      %p185 = scmp.ge.s32.totalorder %s19, 1
      %p186 = scmp.lt.s32.totalorder %s19, 9
      %p187 = pnand %p185, %p186
      %p188 = pneg %p187
      %p189 = scmp.lt.s32.totalorder %s19, 0
      %s190 = ssub.s32 0, %s19
      %s191 = scalar_select %p189, %s190, %s19
      %s192 = sand.u32 %s191, 1
      %s193 = ssub.s32 0, %s192
      %s194 = scalar_select %p189, %s193, %s192
      %s195 = ssub.s32 1, %s194
      %p196 = scmp.eq.s32.totalorder %s19, 0
      // Predicated region
      $region33: #{vdsr_forward.1} parent=31 // pred_check
        %p197 = pneg %p196
      $region34: #{vdsr_forward.1} parent=31 // pred_check_branch
        %199 = sbr.rel (%p197) target = $region36
      $region35: #{vdsr_forward.1} parent=31 // pred_region
        %vm200 = vcmask 257024
        %201 = vst.msk [vmem:[#allocation2] sm:$0xf] %vm200, 0
        %202 = vst.msk [vmem:[#allocation2 + $0x4] sm:$0xf] %vm200, 0
        %203 = vst.msk [vmem:[#allocation2 + $0x8] sm:$0xf] %vm200, 0
        %204 = vst.msk [vmem:[#allocation2 + $0xc] sm:$0xf] %vm200, 0
        %vm205 = vcmask 253952
        %206 = vst.msk [vmem:[#allocation2 + $0x10] sm:$0x1] %vm205, 0
        %s207 = scalar_lea.vmem [#allocation2], 660
        %208 = vst.msk [vmem:[%s207] sm:$0xf] %vm200, 0
        %209 = vst.msk [vmem:[%s207 + $0x4] sm:$0xf] %vm200, 0
        %210 = vst.msk [vmem:[%s207 + $0x8] sm:$0xf] %vm200, 0
        %211 = vst.msk [vmem:[%s207 + $0xc] sm:$0xf] %vm200, 0
        %212 = vst.msk [vmem:[%s207 + $0x10] sm:$0x1] %vm205, 0
        %s213 = scalar_lea.vmem [#allocation2], 680
        %214 = vst.msk [vmem:[%s213] sm:$0xf] %vm200, 0
        %215 = vst.msk [vmem:[%s213 + $0x4] sm:$0xf] %vm200, 0
        %216 = vst.msk [vmem:[%s213 + $0x8] sm:$0xf] %vm200, 0
        %217 = vst.msk [vmem:[%s213 + $0xc] sm:$0xf] %vm200, 0
        %218 = vst.msk [vmem:[%s213 + $0x10] sm:$0x1] %vm205, 0
        %s219 = scalar_lea.vmem [#allocation2], 1340
        %220 = vst.msk [vmem:[%s219] sm:$0xf] %vm200, 0
        %221 = vst.msk [vmem:[%s219 + $0x4] sm:$0xf] %vm200, 0
        %222 = vst.msk [vmem:[%s219 + $0x8] sm:$0xf] %vm200, 0
        %223 = vst.msk [vmem:[%s219 + $0xc] sm:$0xf] %vm200, 0
        %224 = vst.msk [vmem:[%s219 + $0x10] sm:$0x1] %vm205, 0
        %v225 = vld [vmem:[%s177] sm:$0xf]
        %v226 = vld [vmem:[%s177 + $0x4] sm:$0xf]
        %v227 = vld [vmem:[%s177 + $0x8] sm:$0xf]
        %v228 = vld [vmem:[%s177 + $0xc] sm:$0xf]
        %v229 = vld [vmem:[%s177 + $0x10] sm:$0xf]
        %v230 = vld [vmem:[%s177 + $0x14] sm:$0xf]
        %v231 = vld [vmem:[%s177 + $0x18] sm:$0xf]
        %v232 = vld [vmem:[%s177 + $0x1c] sm:$0xf]
        %v233 = vld [vmem:[%s177 + $0x20] sm:$0xf]
        %v234 = vld [vmem:[%s177 + $0x24] sm:$0xf]
        %v235 = vld [vmem:[%s177 + $0x28] sm:$0xf]
        %v236 = vld [vmem:[%s177 + $0x2c] sm:$0xf]
        %v237 = vld [vmem:[%s177 + $0x30] sm:$0xf]
        %v238 = vld [vmem:[%s177 + $0x34] sm:$0xf]
        %v239 = vld [vmem:[%s177 + $0x38] sm:$0xf]
        %v240 = vld [vmem:[%s177 + $0x3c] sm:$0xf]
        %v241 = vld [vmem:[%s177 + $0x40] sm:$0xf]
        %v242 = vld [vmem:[%s177 + $0x44] sm:$0xf]
        %v243 = vld [vmem:[%s177 + $0x48] sm:$0xf]
        %v244 = vld [vmem:[%s177 + $0x4c] sm:$0xf]
        %v245 = vld [vmem:[%s177 + $0x50] sm:$0xf]
        %v246 = vld [vmem:[%s177 + $0x54] sm:$0xf]
        %v247 = vld [vmem:[%s177 + $0x58] sm:$0xf]
        %v248 = vld [vmem:[%s177 + $0x5c] sm:$0xf]
        %v249 = vld [vmem:[%s177 + $0x60] sm:$0xf]
        %v250 = vld [vmem:[%s177 + $0x64] sm:$0xf]
        %v251 = vld [vmem:[%s177 + $0x68] sm:$0xf]
        %v252 = vld [vmem:[%s177 + $0x6c] sm:$0xf]
        %v253 = vld [vmem:[%s177 + $0x70] sm:$0xf]
        %v254 = vld [vmem:[%s177 + $0x74] sm:$0xf]
        %v255 = vld [vmem:[%s177 + $0x78] sm:$0xf]
        %v256 = vld [vmem:[%s177 + $0x7c] sm:$0xf]
        %v257 = vld [vmem:[%s177 + $0x80] sm:$0xf]
        %v258 = vld [vmem:[%s177 + $0x84] sm:$0xf]
        %v259 = vld [vmem:[%s177 + $0x88] sm:$0xf]
        %v260 = vld [vmem:[%s177 + $0x8c] sm:$0xf]
        %v261 = vld [vmem:[%s177 + $0x90] sm:$0xf]
        %v262 = vld [vmem:[%s177 + $0x94] sm:$0xf]
        %v263 = vld [vmem:[%s177 + $0x98] sm:$0xf]
        %v264 = vld [vmem:[%s177 + $0x9c] sm:$0xf]
        %v265 = vld [vmem:[%s177 + $0xa0] sm:$0xf]
        %v266 = vld [vmem:[%s177 + $0xa4] sm:$0xf]
        %v267 = vld [vmem:[%s177 + $0xa8] sm:$0xf]
        %v268 = vld [vmem:[%s177 + $0xac] sm:$0xf]
        %v269 = vld [vmem:[%s177 + $0xb0] sm:$0xf]
        %v270 = vld [vmem:[%s177 + $0xb4] sm:$0xf]
        %v271 = vld [vmem:[%s177 + $0xb8] sm:$0xf]
        %v272 = vld [vmem:[%s177 + $0xbc] sm:$0xf]
        %v273 = vld [vmem:[%s177 + $0xc0] sm:$0xf]
        %v274 = vld [vmem:[%s177 + $0xc4] sm:$0xf]
        %v275 = vld [vmem:[%s177 + $0xc8] sm:$0xf]
        %v276 = vld [vmem:[%s177 + $0xcc] sm:$0xf]
        %v277 = vld [vmem:[%s177 + $0xd0] sm:$0xf]
        %v278 = vld [vmem:[%s177 + $0xd4] sm:$0xf]
        %v279 = vld [vmem:[%s177 + $0xd8] sm:$0xf]
        %v280 = vld [vmem:[%s177 + $0xdc] sm:$0xf]
        %v281 = vld [vmem:[%s177 + $0xe0] sm:$0xf]
        %v282 = vld [vmem:[%s177 + $0xe4] sm:$0xf]
        %v283 = vld [vmem:[%s177 + $0xe8] sm:$0xf]
        %v284 = vld [vmem:[%s177 + $0xec] sm:$0xf]
        %v285 = vld [vmem:[%s177 + $0xf0] sm:$0xf]
        %v286 = vld [vmem:[%s177 + $0xf4] sm:$0xf]
        %v287 = vld [vmem:[%s177 + $0xf8] sm:$0xf]
        %v288 = vld [vmem:[%s177 + $0xfc] sm:$0xf]
        %v289 = vld [vmem:[%s177 + $0x100] sm:$0xf]
        %v290 = vld [vmem:[%s177 + $0x104] sm:$0xf]
        %v291 = vld [vmem:[%s177 + $0x108] sm:$0xf]
        %v292 = vld [vmem:[%s177 + $0x10c] sm:$0xf]
        %v293 = vld [vmem:[%s177 + $0x110] sm:$0xf]
        %v294 = vld [vmem:[%s177 + $0x114] sm:$0xf]
        %v295 = vld [vmem:[%s177 + $0x118] sm:$0xf]
        %v296 = vld [vmem:[%s177 + $0x11c] sm:$0xf]
        %v297 = vld [vmem:[%s177 + $0x120] sm:$0xf]
        %v298 = vld [vmem:[%s177 + $0x124] sm:$0xf]
        %v299 = vld [vmem:[%s177 + $0x128] sm:$0xf]
        %v300 = vld [vmem:[%s177 + $0x12c] sm:$0xf]
        %v301 = vld [vmem:[%s177 + $0x130] sm:$0xf]
        %v302 = vld [vmem:[%s177 + $0x134] sm:$0xf]
        %v303 = vld [vmem:[%s177 + $0x138] sm:$0xf]
        %v304 = vld [vmem:[%s177 + $0x13c] sm:$0xf]
        %v305 = vld [vmem:[%s177 + $0x140] sm:$0xf]
        %v306 = vld [vmem:[%s177 + $0x144] sm:$0xf]
        %v307 = vld [vmem:[%s177 + $0x148] sm:$0xf]
        %v308 = vld [vmem:[%s177 + $0x14c] sm:$0xf]
        %v309 = vld [vmem:[%s177 + $0x150] sm:$0xf]
        %v310 = vld [vmem:[%s177 + $0x154] sm:$0xf]
        %v311 = vld [vmem:[%s177 + $0x158] sm:$0xf]
        %v312 = vld [vmem:[%s177 + $0x15c] sm:$0xf]
        %v313 = vld [vmem:[%s177 + $0x160] sm:$0xf]
        %v314 = vld [vmem:[%s177 + $0x164] sm:$0xf]
        %v315 = vld [vmem:[%s177 + $0x168] sm:$0xf]
        %v316 = vld [vmem:[%s177 + $0x16c] sm:$0xf]
        %v317 = vld [vmem:[%s177 + $0x170] sm:$0xf]
        %v318 = vld [vmem:[%s177 + $0x174] sm:$0xf]
        %v319 = vld [vmem:[%s177 + $0x178] sm:$0xf]
        %v320 = vld [vmem:[%s177 + $0x17c] sm:$0xf]
        %v321 = vld [vmem:[%s177 + $0x180] sm:$0xf]
        %v322 = vld [vmem:[%s177 + $0x184] sm:$0xf]
        %v323 = vld [vmem:[%s177 + $0x188] sm:$0xf]
        %v324 = vld [vmem:[%s177 + $0x18c] sm:$0xf]
        %v325 = vld [vmem:[%s177 + $0x190] sm:$0xf]
        %v326 = vld [vmem:[%s177 + $0x194] sm:$0xf]
        %v327 = vld [vmem:[%s177 + $0x198] sm:$0xf]
        %v328 = vld [vmem:[%s177 + $0x19c] sm:$0xf]
        %v329 = vld [vmem:[%s177 + $0x1a0] sm:$0xf]
        %v330 = vld [vmem:[%s177 + $0x1a4] sm:$0xf]
        %v331 = vld [vmem:[%s177 + $0x1a8] sm:$0xf]
        %v332 = vld [vmem:[%s177 + $0x1ac] sm:$0xf]
        %v333 = vld [vmem:[%s177 + $0x1b0] sm:$0xf]
        %v334 = vld [vmem:[%s177 + $0x1b4] sm:$0xf]
        %v335 = vld [vmem:[%s177 + $0x1b8] sm:$0xf]
        %v336 = vld [vmem:[%s177 + $0x1bc] sm:$0xf]
        %v337 = vld [vmem:[%s177 + $0x1c0] sm:$0xf]
        %v338 = vld [vmem:[%s177 + $0x1c4] sm:$0xf]
        %v339 = vld [vmem:[%s177 + $0x1c8] sm:$0xf]
        %v340 = vld [vmem:[%s177 + $0x1cc] sm:$0xf]
        %v341 = vld [vmem:[%s177 + $0x1d0] sm:$0xf]
        %v342 = vld [vmem:[%s177 + $0x1d4] sm:$0xf]
        %v343 = vld [vmem:[%s177 + $0x1d8] sm:$0xf]
        %v344 = vld [vmem:[%s177 + $0x1dc] sm:$0xf]
        %v345 = vld [vmem:[%s177 + $0x1e0] sm:$0xf]
        %v346 = vld [vmem:[%s177 + $0x1e4] sm:$0xf]
        %v347 = vld [vmem:[%s177 + $0x1e8] sm:$0xf]
        %v348 = vld [vmem:[%s177 + $0x1ec] sm:$0xf]
        %v349 = vld [vmem:[%s177 + $0x1f0] sm:$0xf]
        %v350 = vld [vmem:[%s177 + $0x1f4] sm:$0xf]
        %v351 = vld [vmem:[%s177 + $0x1f8] sm:$0xf]
        %v352 = vld [vmem:[%s177 + $0x1fc] sm:$0xf]
        %v481 = vunpack.c.l.b16 %v225
        %v482 = vunpack.c.l.b16 %v226
        %v483 = vunpack.c.l.b16 %v227
        %v484 = vunpack.c.l.b16 %v228
        %v485 = vunpack.c.l.b16 %v229
        %v486 = vunpack.c.l.b16 %v230
        %v487 = vunpack.c.l.b16 %v231
        %v488 = vunpack.c.l.b16 %v232
        %v489 = vunpack.c.l.b16 %v233
        %v490 = vunpack.c.l.b16 %v234
        %v491 = vunpack.c.l.b16 %v235
        %v492 = vunpack.c.l.b16 %v236
        %v493 = vunpack.c.l.b16 %v237
        %v494 = vunpack.c.l.b16 %v238
        %v495 = vunpack.c.l.b16 %v239
        %v496 = vunpack.c.l.b16 %v240
        %v497 = vunpack.c.l.b16 %v241
        %v498 = vunpack.c.l.b16 %v242
        %v499 = vunpack.c.l.b16 %v243
        %v500 = vunpack.c.l.b16 %v244
        %v501 = vunpack.c.l.b16 %v245
        %v502 = vunpack.c.l.b16 %v246
        %v503 = vunpack.c.l.b16 %v247
        %v504 = vunpack.c.l.b16 %v248
        %v505 = vunpack.c.l.b16 %v249
        %v506 = vunpack.c.l.b16 %v250
        %v507 = vunpack.c.l.b16 %v251
        %v508 = vunpack.c.l.b16 %v252
        %v509 = vunpack.c.l.b16 %v253
        %v510 = vunpack.c.l.b16 %v254
        %v511 = vunpack.c.l.b16 %v255
        %v512 = vunpack.c.l.b16 %v256
        %v513 = vunpack.c.l.b16 %v257
        %v514 = vunpack.c.l.b16 %v258
        %v515 = vunpack.c.l.b16 %v259
        %v516 = vunpack.c.l.b16 %v260
        %v517 = vunpack.c.l.b16 %v261
        %v518 = vunpack.c.l.b16 %v262
        %v519 = vunpack.c.l.b16 %v263
        %v520 = vunpack.c.l.b16 %v264
        %v521 = vunpack.c.l.b16 %v265
        %v522 = vunpack.c.l.b16 %v266
        %v523 = vunpack.c.l.b16 %v267
        %v524 = vunpack.c.l.b16 %v268
        %v525 = vunpack.c.l.b16 %v269
        %v526 = vunpack.c.l.b16 %v270
        %v527 = vunpack.c.l.b16 %v271
        %v528 = vunpack.c.l.b16 %v272
        %v529 = vunpack.c.l.b16 %v273
        %v530 = vunpack.c.l.b16 %v274
        %v531 = vunpack.c.l.b16 %v275
        %v532 = vunpack.c.l.b16 %v276
        %v533 = vunpack.c.l.b16 %v277
        %v534 = vunpack.c.l.b16 %v278
        %v535 = vunpack.c.l.b16 %v279
        %v536 = vunpack.c.l.b16 %v280
        %v537 = vunpack.c.l.b16 %v281
        %v538 = vunpack.c.l.b16 %v282
        %v539 = vunpack.c.l.b16 %v283
        %v540 = vunpack.c.l.b16 %v284
        %v541 = vunpack.c.l.b16 %v285
        %v542 = vunpack.c.l.b16 %v286
        %v543 = vunpack.c.l.b16 %v287
        %v544 = vunpack.c.l.b16 %v288
        %v545 = vunpack.c.l.b16 %v289
        %v546 = vunpack.c.l.b16 %v290
        %v547 = vunpack.c.l.b16 %v291
        %v548 = vunpack.c.l.b16 %v292
        %v549 = vunpack.c.l.b16 %v293
        %v550 = vunpack.c.l.b16 %v294
        %v551 = vunpack.c.l.b16 %v295
        %v552 = vunpack.c.l.b16 %v296
        %v553 = vunpack.c.l.b16 %v297
        %v554 = vunpack.c.l.b16 %v298
        %v555 = vunpack.c.l.b16 %v299
        %v556 = vunpack.c.l.b16 %v300
        %v557 = vunpack.c.l.b16 %v301
        %v558 = vunpack.c.l.b16 %v302
        %v559 = vunpack.c.l.b16 %v303
        %v560 = vunpack.c.l.b16 %v304
        %v561 = vunpack.c.l.b16 %v305
        %v562 = vunpack.c.l.b16 %v306
        %v563 = vunpack.c.l.b16 %v307
        %v564 = vunpack.c.l.b16 %v308
        %v565 = vunpack.c.l.b16 %v309
        %v566 = vunpack.c.l.b16 %v310
        %v567 = vunpack.c.l.b16 %v311
        %v568 = vunpack.c.l.b16 %v312
        %v569 = vunpack.c.l.b16 %v313
        %v570 = vunpack.c.l.b16 %v314
        %v571 = vunpack.c.l.b16 %v315
        %v572 = vunpack.c.l.b16 %v316
        %v573 = vunpack.c.l.b16 %v317
        %v574 = vunpack.c.l.b16 %v318
        %v575 = vunpack.c.l.b16 %v319
        %v576 = vunpack.c.l.b16 %v320
        %v577 = vunpack.c.l.b16 %v321
        %v578 = vunpack.c.l.b16 %v322
        %v579 = vunpack.c.l.b16 %v323
        %v580 = vunpack.c.l.b16 %v324
        %v581 = vunpack.c.l.b16 %v325
        %v582 = vunpack.c.l.b16 %v326
        %v583 = vunpack.c.l.b16 %v327
        %v584 = vunpack.c.l.b16 %v328
        %v585 = vunpack.c.l.b16 %v329
        %v586 = vunpack.c.l.b16 %v330
        %v587 = vunpack.c.l.b16 %v331
        %v588 = vunpack.c.l.b16 %v332
        %v589 = vunpack.c.l.b16 %v333
        %v590 = vunpack.c.l.b16 %v334
        %v591 = vunpack.c.l.b16 %v335
        %v592 = vunpack.c.l.b16 %v336
        %v593 = vunpack.c.l.b16 %v337
        %v594 = vunpack.c.l.b16 %v338
        %v595 = vunpack.c.l.b16 %v339
        %v596 = vunpack.c.l.b16 %v340
        %v597 = vunpack.c.l.b16 %v341
        %v598 = vunpack.c.l.b16 %v342
        %v599 = vunpack.c.l.b16 %v343
        %v600 = vunpack.c.l.b16 %v344
        %v601 = vunpack.c.l.b16 %v345
        %v602 = vunpack.c.l.b16 %v346
        %v603 = vunpack.c.l.b16 %v347
        %v604 = vunpack.c.l.b16 %v348
        %v605 = vunpack.c.l.b16 %v349
        %v606 = vunpack.c.l.b16 %v350
        %v607 = vunpack.c.l.b16 %v351
        %v608 = vunpack.c.l.b16 %v352
        %v609 = vpack.c.b16 %v482, %v481
        %v610 = vpack.c.b16 %v484, %v483
        %v611 = vpack.c.b16 %v486, %v485
        %v612 = vpack.c.b16 %v488, %v487
        %v613 = vpack.c.b16 %v490, %v489
        %v614 = vpack.c.b16 %v492, %v491
        %v615 = vpack.c.b16 %v494, %v493
        %v616 = vpack.c.b16 %v496, %v495
        %v617 = vpack.c.b16 %v498, %v497
        %v618 = vpack.c.b16 %v500, %v499
        %v619 = vpack.c.b16 %v502, %v501
        %v620 = vpack.c.b16 %v504, %v503
        %v621 = vpack.c.b16 %v506, %v505
        %v622 = vpack.c.b16 %v508, %v507
        %v623 = vpack.c.b16 %v510, %v509
        %v624 = vpack.c.b16 %v512, %v511
        %v625 = vpack.c.b16 %v514, %v513
        %v626 = vpack.c.b16 %v516, %v515
        %v627 = vpack.c.b16 %v518, %v517
        %v628 = vpack.c.b16 %v520, %v519
        %v629 = vpack.c.b16 %v522, %v521
        %v630 = vpack.c.b16 %v524, %v523
        %v631 = vpack.c.b16 %v526, %v525
        %v632 = vpack.c.b16 %v528, %v527
        %v633 = vpack.c.b16 %v530, %v529
        %v634 = vpack.c.b16 %v532, %v531
        %v635 = vpack.c.b16 %v534, %v533
        %v636 = vpack.c.b16 %v536, %v535
        %v637 = vpack.c.b16 %v538, %v537
        %v638 = vpack.c.b16 %v540, %v539
        %v639 = vpack.c.b16 %v542, %v541
        %v640 = vpack.c.b16 %v544, %v543
        %v641 = vpack.c.b16 %v546, %v545
        %v642 = vpack.c.b16 %v548, %v547
        %v643 = vpack.c.b16 %v550, %v549
        %v644 = vpack.c.b16 %v552, %v551
        %v645 = vpack.c.b16 %v554, %v553
        %v646 = vpack.c.b16 %v556, %v555
        %v647 = vpack.c.b16 %v558, %v557
        %v648 = vpack.c.b16 %v560, %v559
        %v649 = vpack.c.b16 %v562, %v561
        %v650 = vpack.c.b16 %v564, %v563
        %v651 = vpack.c.b16 %v566, %v565
        %v652 = vpack.c.b16 %v568, %v567
        %v653 = vpack.c.b16 %v570, %v569
        %v654 = vpack.c.b16 %v572, %v571
        %v655 = vpack.c.b16 %v574, %v573
        %v656 = vpack.c.b16 %v576, %v575
        %v657 = vpack.c.b16 %v578, %v577
        %v658 = vpack.c.b16 %v580, %v579
        %v659 = vpack.c.b16 %v582, %v581
        %v660 = vpack.c.b16 %v584, %v583
        %v661 = vpack.c.b16 %v586, %v585
        %v662 = vpack.c.b16 %v588, %v587
        %v663 = vpack.c.b16 %v590, %v589
        %v664 = vpack.c.b16 %v592, %v591
        %v665 = vpack.c.b16 %v594, %v593
        %v666 = vpack.c.b16 %v596, %v595
        %v667 = vpack.c.b16 %v598, %v597
        %v668 = vpack.c.b16 %v600, %v599
        %v669 = vpack.c.b16 %v602, %v601
        %v670 = vpack.c.b16 %v604, %v603
        %v671 = vpack.c.b16 %v606, %v605
        %v672 = vpack.c.b16 %v608, %v607
        %vm673 = vsmask.f32 256
        %v675 = vshrl.u32 %v609, 16
        %v677 = vrot.slane %v675, 7
        %v678 = vshll.u32 %v609, 16
        %v680 = vor.u32 %v677, %v678
        %v682 = vshrl.u32 %v610, 16
        %v684 = vrot.slane %v682, 7
        %v685 = vshll.u32 %v610, 16
        %v687 = vor.u32 %v684, %v685
        %v688 = vsel %vm673, %v677, %v687
        %v690 = vshrl.u32 %v611, 16
        %v692 = vrot.slane %v690, 7
        %v693 = vshll.u32 %v611, 16
        %v695 = vor.u32 %v692, %v693
        %v697 = vshrl.u32 %v612, 16
        %v699 = vrot.slane %v697, 7
        %v700 = vshll.u32 %v612, 16
        %v702 = vor.u32 %v699, %v700
        %v703 = vsel %vm673, %v692, %v702
        %v705 = vshrl.u32 %v613, 16
        %v707 = vrot.slane %v705, 7
        %v708 = vshll.u32 %v613, 16
        %v710 = vor.u32 %v707, %v708
        %v712 = vshrl.u32 %v614, 16
        %v714 = vrot.slane %v712, 7
        %v715 = vshll.u32 %v614, 16
        %v717 = vor.u32 %v714, %v715
        %v718 = vsel %vm673, %v707, %v717
        %v720 = vshrl.u32 %v615, 16
        %v722 = vrot.slane %v720, 7
        %v723 = vshll.u32 %v615, 16
        %v725 = vor.u32 %v722, %v723
        %v727 = vshrl.u32 %v616, 16
        %v729 = vrot.slane %v727, 7
        %v730 = vshll.u32 %v616, 16
        %v732 = vor.u32 %v729, %v730
        %v733 = vsel %vm673, %v722, %v732
        %v735 = vshrl.u32 %v617, 16
        %v737 = vrot.slane %v735, 7
        %v738 = vshll.u32 %v617, 16
        %v740 = vor.u32 %v737, %v738
        %v742 = vshrl.u32 %v618, 16
        %v744 = vrot.slane %v742, 7
        %v745 = vshll.u32 %v618, 16
        %v747 = vor.u32 %v744, %v745
        %v748 = vsel %vm673, %v737, %v747
        %v750 = vshrl.u32 %v619, 16
        %v752 = vrot.slane %v750, 7
        %v753 = vshll.u32 %v619, 16
        %v755 = vor.u32 %v752, %v753
        %v757 = vshrl.u32 %v620, 16
        %v759 = vrot.slane %v757, 7
        %v760 = vshll.u32 %v620, 16
        %v762 = vor.u32 %v759, %v760
        %v763 = vsel %vm673, %v752, %v762
        %v765 = vshrl.u32 %v621, 16
        %v767 = vrot.slane %v765, 7
        %v768 = vshll.u32 %v621, 16
        %v770 = vor.u32 %v767, %v768
        %v772 = vshrl.u32 %v622, 16
        %v774 = vrot.slane %v772, 7
        %v775 = vshll.u32 %v622, 16
        %v777 = vor.u32 %v774, %v775
        %v778 = vsel %vm673, %v767, %v777
        %v780 = vshrl.u32 %v623, 16
        %v782 = vrot.slane %v780, 7
        %v783 = vshll.u32 %v623, 16
        %v785 = vor.u32 %v782, %v783
        %v787 = vshrl.u32 %v624, 16
        %v789 = vrot.slane %v787, 7
        %v790 = vshll.u32 %v624, 16
        %v792 = vor.u32 %v789, %v790
        %v793 = vsel %vm673, %v782, %v792
        %v795 = vshrl.u32 %v625, 16
        %v797 = vrot.slane %v795, 7
        %v798 = vshll.u32 %v625, 16
        %v800 = vor.u32 %v797, %v798
        %v802 = vshrl.u32 %v626, 16
        %v804 = vrot.slane %v802, 7
        %v805 = vshll.u32 %v626, 16
        %v807 = vor.u32 %v804, %v805
        %v808 = vsel %vm673, %v797, %v807
        %v810 = vshrl.u32 %v627, 16
        %v812 = vrot.slane %v810, 7
        %v813 = vshll.u32 %v627, 16
        %v815 = vor.u32 %v812, %v813
        %v817 = vshrl.u32 %v628, 16
        %v819 = vrot.slane %v817, 7
        %v820 = vshll.u32 %v628, 16
        %v822 = vor.u32 %v819, %v820
        %v823 = vsel %vm673, %v812, %v822
        %v825 = vshrl.u32 %v629, 16
        %v827 = vrot.slane %v825, 7
        %v828 = vshll.u32 %v629, 16
        %v830 = vor.u32 %v827, %v828
        %v832 = vshrl.u32 %v630, 16
        %v834 = vrot.slane %v832, 7
        %v835 = vshll.u32 %v630, 16
        %v837 = vor.u32 %v834, %v835
        %v838 = vsel %vm673, %v827, %v837
        %v840 = vshrl.u32 %v631, 16
        %v842 = vrot.slane %v840, 7
        %v843 = vshll.u32 %v631, 16
        %v845 = vor.u32 %v842, %v843
        %v847 = vshrl.u32 %v632, 16
        %v849 = vrot.slane %v847, 7
        %v850 = vshll.u32 %v632, 16
        %v852 = vor.u32 %v849, %v850
        %v853 = vsel %vm673, %v842, %v852
        %v855 = vshrl.u32 %v633, 16
        %v857 = vrot.slane %v855, 7
        %v858 = vshll.u32 %v633, 16
        %v860 = vor.u32 %v857, %v858
        %v862 = vshrl.u32 %v634, 16
        %v864 = vrot.slane %v862, 7
        %v865 = vshll.u32 %v634, 16
        %v867 = vor.u32 %v864, %v865
        %v868 = vsel %vm673, %v857, %v867
        %v870 = vshrl.u32 %v635, 16
        %v872 = vrot.slane %v870, 7
        %v873 = vshll.u32 %v635, 16
        %v875 = vor.u32 %v872, %v873
        %v877 = vshrl.u32 %v636, 16
        %v879 = vrot.slane %v877, 7
        %v880 = vshll.u32 %v636, 16
        %v882 = vor.u32 %v879, %v880
        %v883 = vsel %vm673, %v872, %v882
        %v885 = vshrl.u32 %v637, 16
        %v887 = vrot.slane %v885, 7
        %v888 = vshll.u32 %v637, 16
        %v890 = vor.u32 %v887, %v888
        %v892 = vshrl.u32 %v638, 16
        %v894 = vrot.slane %v892, 7
        %v895 = vshll.u32 %v638, 16
        %v897 = vor.u32 %v894, %v895
        %v898 = vsel %vm673, %v887, %v897
        %v900 = vshrl.u32 %v639, 16
        %v902 = vrot.slane %v900, 7
        %v903 = vshll.u32 %v639, 16
        %v905 = vor.u32 %v902, %v903
        %v907 = vshrl.u32 %v640, 16
        %v909 = vrot.slane %v907, 7
        %v910 = vshll.u32 %v640, 16
        %v912 = vor.u32 %v909, %v910
        %v913 = vsel %vm673, %v902, %v912
        %v915 = vshrl.u32 %v641, 16
        %v917 = vrot.slane %v915, 7
        %v918 = vshll.u32 %v641, 16
        %v920 = vor.u32 %v917, %v918
        %v922 = vshrl.u32 %v642, 16
        %v924 = vrot.slane %v922, 7
        %v925 = vshll.u32 %v642, 16
        %v927 = vor.u32 %v924, %v925
        %v928 = vsel %vm673, %v917, %v927
        %v930 = vshrl.u32 %v643, 16
        %v932 = vrot.slane %v930, 7
        %v933 = vshll.u32 %v643, 16
        %v935 = vor.u32 %v932, %v933
        %v937 = vshrl.u32 %v644, 16
        %v939 = vrot.slane %v937, 7
        %v940 = vshll.u32 %v644, 16
        %v942 = vor.u32 %v939, %v940
        %v943 = vsel %vm673, %v932, %v942
        %v945 = vshrl.u32 %v645, 16
        %v947 = vrot.slane %v945, 7
        %v948 = vshll.u32 %v645, 16
        %v950 = vor.u32 %v947, %v948
        %v952 = vshrl.u32 %v646, 16
        %v954 = vrot.slane %v952, 7
        %v955 = vshll.u32 %v646, 16
        %v957 = vor.u32 %v954, %v955
        %v958 = vsel %vm673, %v947, %v957
        %v960 = vshrl.u32 %v647, 16
        %v962 = vrot.slane %v960, 7
        %v963 = vshll.u32 %v647, 16
        %v965 = vor.u32 %v962, %v963
        %v967 = vshrl.u32 %v648, 16
        %v969 = vrot.slane %v967, 7
        %v970 = vshll.u32 %v648, 16
        %v972 = vor.u32 %v969, %v970
        %v973 = vsel %vm673, %v962, %v972
        %v975 = vshrl.u32 %v649, 16
        %v977 = vrot.slane %v975, 7
        %v978 = vshll.u32 %v649, 16
        %v980 = vor.u32 %v977, %v978
        %v982 = vshrl.u32 %v650, 16
        %v984 = vrot.slane %v982, 7
        %v985 = vshll.u32 %v650, 16
        %v987 = vor.u32 %v984, %v985
        %v988 = vsel %vm673, %v977, %v987
        %v990 = vshrl.u32 %v651, 16
        %v992 = vrot.slane %v990, 7
        %v993 = vshll.u32 %v651, 16
        %v995 = vor.u32 %v992, %v993
        %v997 = vshrl.u32 %v652, 16
        %v999 = vrot.slane %v997, 7
        %v1000 = vshll.u32 %v652, 16
        %v1002 = vor.u32 %v999, %v1000
        %v1003 = vsel %vm673, %v992, %v1002
        %v1005 = vshrl.u32 %v653, 16
        %v1007 = vrot.slane %v1005, 7
        %v1008 = vshll.u32 %v653, 16
        %v1010 = vor.u32 %v1007, %v1008
        %v1012 = vshrl.u32 %v654, 16
        %v1014 = vrot.slane %v1012, 7
        %v1015 = vshll.u32 %v654, 16
        %v1017 = vor.u32 %v1014, %v1015
        %v1018 = vsel %vm673, %v1007, %v1017
        %v1020 = vshrl.u32 %v655, 16
        %v1022 = vrot.slane %v1020, 7
        %v1023 = vshll.u32 %v655, 16
        %v1025 = vor.u32 %v1022, %v1023
        %v1027 = vshrl.u32 %v656, 16
        %v1029 = vrot.slane %v1027, 7
        %v1030 = vshll.u32 %v656, 16
        %v1032 = vor.u32 %v1029, %v1030
        %v1033 = vsel %vm673, %v1022, %v1032
        %v1035 = vshrl.u32 %v657, 16
        %v1037 = vrot.slane %v1035, 7
        %v1038 = vshll.u32 %v657, 16
        %v1040 = vor.u32 %v1037, %v1038
        %v1042 = vshrl.u32 %v658, 16
        %v1044 = vrot.slane %v1042, 7
        %v1045 = vshll.u32 %v658, 16
        %v1047 = vor.u32 %v1044, %v1045
        %v1048 = vsel %vm673, %v1037, %v1047
        %v1050 = vshrl.u32 %v659, 16
        %v1052 = vrot.slane %v1050, 7
        %v1053 = vshll.u32 %v659, 16
        %v1055 = vor.u32 %v1052, %v1053
        %v1057 = vshrl.u32 %v660, 16
        %v1059 = vrot.slane %v1057, 7
        %v1060 = vshll.u32 %v660, 16
        %v1062 = vor.u32 %v1059, %v1060
        %v1063 = vsel %vm673, %v1052, %v1062
        %v1065 = vshrl.u32 %v661, 16
        %v1067 = vrot.slane %v1065, 7
        %v1068 = vshll.u32 %v661, 16
        %v1070 = vor.u32 %v1067, %v1068
        %v1072 = vshrl.u32 %v662, 16
        %v1074 = vrot.slane %v1072, 7
        %v1075 = vshll.u32 %v662, 16
        %v1077 = vor.u32 %v1074, %v1075
        %v1078 = vsel %vm673, %v1067, %v1077
        %v1080 = vshrl.u32 %v663, 16
        %v1082 = vrot.slane %v1080, 7
        %v1083 = vshll.u32 %v663, 16
        %v1085 = vor.u32 %v1082, %v1083
        %v1087 = vshrl.u32 %v664, 16
        %v1089 = vrot.slane %v1087, 7
        %v1090 = vshll.u32 %v664, 16
        %v1092 = vor.u32 %v1089, %v1090
        %v1093 = vsel %vm673, %v1082, %v1092
        %v1095 = vshrl.u32 %v665, 16
        %v1097 = vrot.slane %v1095, 7
        %v1098 = vshll.u32 %v665, 16
        %v1100 = vor.u32 %v1097, %v1098
        %v1102 = vshrl.u32 %v666, 16
        %v1104 = vrot.slane %v1102, 7
        %v1105 = vshll.u32 %v666, 16
        %v1107 = vor.u32 %v1104, %v1105
        %v1108 = vsel %vm673, %v1097, %v1107
        %v1110 = vshrl.u32 %v667, 16
        %v1112 = vrot.slane %v1110, 7
        %v1113 = vshll.u32 %v667, 16
        %v1115 = vor.u32 %v1112, %v1113
        %v1117 = vshrl.u32 %v668, 16
        %v1119 = vrot.slane %v1117, 7
        %v1120 = vshll.u32 %v668, 16
        %v1122 = vor.u32 %v1119, %v1120
        %v1123 = vsel %vm673, %v1112, %v1122
        %v1125 = vshrl.u32 %v669, 16
        %v1127 = vrot.slane %v1125, 7
        %v1128 = vshll.u32 %v669, 16
        %v1130 = vor.u32 %v1127, %v1128
        %v1132 = vshrl.u32 %v670, 16
        %v1134 = vrot.slane %v1132, 7
        %v1135 = vshll.u32 %v670, 16
        %v1137 = vor.u32 %v1134, %v1135
        %v1138 = vsel %vm673, %v1127, %v1137
        %v1140 = vshrl.u32 %v671, 16
        %v1142 = vrot.slane %v1140, 7
        %v1143 = vshll.u32 %v671, 16
        %v1145 = vor.u32 %v1142, %v1143
        %v1147 = vshrl.u32 %v672, 16
        %v1149 = vrot.slane %v1147, 7
        %v1150 = vshll.u32 %v672, 16
        %v1152 = vor.u32 %v1149, %v1150
        %v1153 = vsel %vm673, %v1142, %v1152
        %vm1218 = vcmask 1040384
        %vm1219 = vmand %vm1218, %vm673
        %v1220 = vsel %vm1219, 0, %v680
        %v1221 = vsel %vm1219, 0, %v695
        %v1222 = vsel %vm1219, 0, %v710
        %v1223 = vsel %vm1219, 0, %v725
        %v1224 = vsel %vm1219, 0, %v740
        %v1225 = vsel %vm1219, 0, %v755
        %v1226 = vsel %vm1219, 0, %v770
        %v1227 = vsel %vm1219, 0, %v785
        %v1228 = vsel %vm1219, 0, %v800
        %v1229 = vsel %vm1219, 0, %v815
        %v1230 = vsel %vm1219, 0, %v830
        %v1231 = vsel %vm1219, 0, %v845
        %v1232 = vsel %vm1219, 0, %v860
        %v1233 = vsel %vm1219, 0, %v875
        %v1234 = vsel %vm1219, 0, %v890
        %v1235 = vsel %vm1219, 0, %v905
        %v1236 = vsel %vm1219, 0, %v920
        %v1237 = vsel %vm1219, 0, %v935
        %v1238 = vsel %vm1219, 0, %v950
        %v1239 = vsel %vm1219, 0, %v965
        %v1240 = vsel %vm1219, 0, %v980
        %v1241 = vsel %vm1219, 0, %v995
        %v1242 = vsel %vm1219, 0, %v1010
        %v1243 = vsel %vm1219, 0, %v1025
        %v1244 = vsel %vm1219, 0, %v1040
        %v1245 = vsel %vm1219, 0, %v1055
        %v1246 = vsel %vm1219, 0, %v1070
        %v1247 = vsel %vm1219, 0, %v1085
        %v1248 = vsel %vm1219, 0, %v1100
        %v1249 = vsel %vm1219, 0, %v1115
        %v1250 = vsel %vm1219, 0, %v1130
        %v1251 = vsel %vm1219, 0, %v1145
        %v1252 = vsel %vm1219, %v684, 0
        %v1253 = vsel %vm1219, %v699, 0
        %v1254 = vsel %vm1219, %v714, 0
        %v1255 = vsel %vm1219, %v729, 0
        %v1256 = vsel %vm1219, %v744, 0
        %v1257 = vsel %vm1219, %v759, 0
        %v1258 = vsel %vm1219, %v774, 0
        %v1259 = vsel %vm1219, %v789, 0
        %v1260 = vsel %vm1219, %v804, 0
        %v1261 = vsel %vm1219, %v819, 0
        %v1262 = vsel %vm1219, %v834, 0
        %v1263 = vsel %vm1219, %v849, 0
        %v1264 = vsel %vm1219, %v864, 0
        %v1265 = vsel %vm1219, %v879, 0
        %v1266 = vsel %vm1219, %v894, 0
        %v1267 = vsel %vm1219, %v909, 0
        %v1268 = vsel %vm1219, %v924, 0
        %v1269 = vsel %vm1219, %v939, 0
        %v1270 = vsel %vm1219, %v954, 0
        %v1271 = vsel %vm1219, %v969, 0
        %v1272 = vsel %vm1219, %v984, 0
        %v1273 = vsel %vm1219, %v999, 0
        %v1274 = vsel %vm1219, %v1014, 0
        %v1275 = vsel %vm1219, %v1029, 0
        %v1276 = vsel %vm1219, %v1044, 0
        %v1277 = vsel %vm1219, %v1059, 0
        %v1278 = vsel %vm1219, %v1074, 0
        %v1279 = vsel %vm1219, %v1089, 0
        %v1280 = vsel %vm1219, %v1104, 0
        %v1281 = vsel %vm1219, %v1119, 0
        %v1282 = vsel %vm1219, %v1134, 0
        %v1283 = vsel %vm1219, %v1149, 0
        %v1348 = vunpack.c.l.b16 %v1220
        %v1349 = vunpack.c.h.b16 %v1220
        %v1350 = vunpack.c.l.b16 %v688
        %v1351 = vunpack.c.h.b16 %v688
        %v1352 = vunpack.c.l.b16 %v1252
        %v1353 = vunpack.c.l.b16 %v1221
        %v1354 = vunpack.c.h.b16 %v1221
        %v1355 = vunpack.c.l.b16 %v703
        %v1356 = vunpack.c.h.b16 %v703
        %v1357 = vunpack.c.l.b16 %v1253
        %v1358 = vunpack.c.l.b16 %v1222
        %v1359 = vunpack.c.h.b16 %v1222
        %v1360 = vunpack.c.l.b16 %v718
        %v1361 = vunpack.c.h.b16 %v718
        %v1362 = vunpack.c.l.b16 %v1254
        %v1363 = vunpack.c.l.b16 %v1223
        %v1364 = vunpack.c.h.b16 %v1223
        %v1365 = vunpack.c.l.b16 %v733
        %v1366 = vunpack.c.h.b16 %v733
        %v1367 = vunpack.c.l.b16 %v1255
        %v1368 = vunpack.c.l.b16 %v1224
        %v1369 = vunpack.c.h.b16 %v1224
        %v1370 = vunpack.c.l.b16 %v748
        %v1371 = vunpack.c.h.b16 %v748
        %v1372 = vunpack.c.l.b16 %v1256
        %v1373 = vunpack.c.l.b16 %v1225
        %v1374 = vunpack.c.h.b16 %v1225
        %v1375 = vunpack.c.l.b16 %v763
        %v1376 = vunpack.c.h.b16 %v763
        %v1377 = vunpack.c.l.b16 %v1257
        %v1378 = vunpack.c.l.b16 %v1226
        %v1379 = vunpack.c.h.b16 %v1226
        %v1380 = vunpack.c.l.b16 %v778
        %v1381 = vunpack.c.h.b16 %v778
        %v1382 = vunpack.c.l.b16 %v1258
        %v1383 = vunpack.c.l.b16 %v1227
        %v1384 = vunpack.c.h.b16 %v1227
        %v1385 = vunpack.c.l.b16 %v793
        %v1386 = vunpack.c.h.b16 %v793
        %v1387 = vunpack.c.l.b16 %v1259
        %v1388 = vunpack.c.l.b16 %v1228
        %v1389 = vunpack.c.h.b16 %v1228
        %v1390 = vunpack.c.l.b16 %v808
        %v1391 = vunpack.c.h.b16 %v808
        %v1392 = vunpack.c.l.b16 %v1260
        %v1393 = vunpack.c.l.b16 %v1229
        %v1394 = vunpack.c.h.b16 %v1229
        %v1395 = vunpack.c.l.b16 %v823
        %v1396 = vunpack.c.h.b16 %v823
        %v1397 = vunpack.c.l.b16 %v1261
        %v1398 = vunpack.c.l.b16 %v1230
        %v1399 = vunpack.c.h.b16 %v1230
        %v1400 = vunpack.c.l.b16 %v838
        %v1401 = vunpack.c.h.b16 %v838
        %v1402 = vunpack.c.l.b16 %v1262
        %v1403 = vunpack.c.l.b16 %v1231
        %v1404 = vunpack.c.h.b16 %v1231
        %v1405 = vunpack.c.l.b16 %v853
        %v1406 = vunpack.c.h.b16 %v853
        %v1407 = vunpack.c.l.b16 %v1263
        %v1408 = vunpack.c.l.b16 %v1232
        %v1409 = vunpack.c.h.b16 %v1232
        %v1410 = vunpack.c.l.b16 %v868
        %v1411 = vunpack.c.h.b16 %v868
        %v1412 = vunpack.c.l.b16 %v1264
        %v1413 = vunpack.c.l.b16 %v1233
        %v1414 = vunpack.c.h.b16 %v1233
        %v1415 = vunpack.c.l.b16 %v883
        %v1416 = vunpack.c.h.b16 %v883
        %v1417 = vunpack.c.l.b16 %v1265
        %v1418 = vunpack.c.l.b16 %v1234
        %v1419 = vunpack.c.h.b16 %v1234
        %v1420 = vunpack.c.l.b16 %v898
        %v1421 = vunpack.c.h.b16 %v898
        %v1422 = vunpack.c.l.b16 %v1266
        %v1423 = vunpack.c.l.b16 %v1235
        %v1424 = vunpack.c.h.b16 %v1235
        %v1425 = vunpack.c.l.b16 %v913
        %v1426 = vunpack.c.h.b16 %v913
        %v1427 = vunpack.c.l.b16 %v1267
        %v1428 = vunpack.c.l.b16 %v1236
        %v1429 = vunpack.c.h.b16 %v1236
        %v1430 = vunpack.c.l.b16 %v928
        %v1431 = vunpack.c.h.b16 %v928
        %v1432 = vunpack.c.l.b16 %v1268
        %v1433 = vunpack.c.l.b16 %v1237
        %v1434 = vunpack.c.h.b16 %v1237
        %v1435 = vunpack.c.l.b16 %v943
        %v1436 = vunpack.c.h.b16 %v943
        %v1437 = vunpack.c.l.b16 %v1269
        %v1438 = vunpack.c.l.b16 %v1238
        %v1439 = vunpack.c.h.b16 %v1238
        %v1440 = vunpack.c.l.b16 %v958
        %v1441 = vunpack.c.h.b16 %v958
        %v1442 = vunpack.c.l.b16 %v1270
        %v1443 = vunpack.c.l.b16 %v1239
        %v1444 = vunpack.c.h.b16 %v1239
        %v1445 = vunpack.c.l.b16 %v973
        %v1446 = vunpack.c.h.b16 %v973
        %v1447 = vunpack.c.l.b16 %v1271
        %v1448 = vunpack.c.l.b16 %v1240
        %v1449 = vunpack.c.h.b16 %v1240
        %v1450 = vunpack.c.l.b16 %v988
        %v1451 = vunpack.c.h.b16 %v988
        %v1452 = vunpack.c.l.b16 %v1272
        %v1453 = vunpack.c.l.b16 %v1241
        %v1454 = vunpack.c.h.b16 %v1241
        %v1455 = vunpack.c.l.b16 %v1003
        %v1456 = vunpack.c.h.b16 %v1003
        %v1457 = vunpack.c.l.b16 %v1273
        %v1458 = vunpack.c.l.b16 %v1242
        %v1459 = vunpack.c.h.b16 %v1242
        %v1460 = vunpack.c.l.b16 %v1018
        %v1461 = vunpack.c.h.b16 %v1018
        %v1462 = vunpack.c.l.b16 %v1274
        %v1463 = vunpack.c.l.b16 %v1243
        %v1464 = vunpack.c.h.b16 %v1243
        %v1465 = vunpack.c.l.b16 %v1033
        %v1466 = vunpack.c.h.b16 %v1033
        %v1467 = vunpack.c.l.b16 %v1275
        %v1468 = vunpack.c.l.b16 %v1244
        %v1469 = vunpack.c.h.b16 %v1244
        %v1470 = vunpack.c.l.b16 %v1048
        %v1471 = vunpack.c.h.b16 %v1048
        %v1472 = vunpack.c.l.b16 %v1276
        %v1473 = vunpack.c.l.b16 %v1245
        %v1474 = vunpack.c.h.b16 %v1245
        %v1475 = vunpack.c.l.b16 %v1063
        %v1476 = vunpack.c.h.b16 %v1063
        %v1477 = vunpack.c.l.b16 %v1277
        %v1478 = vunpack.c.l.b16 %v1246
        %v1479 = vunpack.c.h.b16 %v1246
        %v1480 = vunpack.c.l.b16 %v1078
        %v1481 = vunpack.c.h.b16 %v1078
        %v1482 = vunpack.c.l.b16 %v1278
        %v1483 = vunpack.c.l.b16 %v1247
        %v1484 = vunpack.c.h.b16 %v1247
        %v1485 = vunpack.c.l.b16 %v1093
        %v1486 = vunpack.c.h.b16 %v1093
        %v1487 = vunpack.c.l.b16 %v1279
        %v1488 = vunpack.c.l.b16 %v1248
        %v1489 = vunpack.c.h.b16 %v1248
        %v1490 = vunpack.c.l.b16 %v1108
        %v1491 = vunpack.c.h.b16 %v1108
        %v1492 = vunpack.c.l.b16 %v1280
        %v1493 = vunpack.c.l.b16 %v1249
        %v1494 = vunpack.c.h.b16 %v1249
        %v1495 = vunpack.c.l.b16 %v1123
        %v1496 = vunpack.c.h.b16 %v1123
        %v1497 = vunpack.c.l.b16 %v1281
        %v1498 = vunpack.c.l.b16 %v1250
        %v1499 = vunpack.c.h.b16 %v1250
        %v1500 = vunpack.c.l.b16 %v1138
        %v1501 = vunpack.c.h.b16 %v1138
        %v1502 = vunpack.c.l.b16 %v1282
        %v1503 = vunpack.c.l.b16 %v1251
        %v1504 = vunpack.c.h.b16 %v1251
        %v1505 = vunpack.c.l.b16 %v1153
        %v1506 = vunpack.c.h.b16 %v1153
        %v1507 = vunpack.c.l.b16 %v1283
        %v1508 = vpack.c.b16 %v1348, %v1348
        %v1509 = vpack.c.b16 %v1349, %v1349
        %v1510 = vpack.c.b16 %v1350, %v1350
        %v1511 = vpack.c.b16 %v1351, %v1351
        %v1512 = vpack.c.b16 %v1352, %v1352
        %v1513 = vpack.c.b16 %v1353, %v1353
        %v1514 = vpack.c.b16 %v1354, %v1354
        %v1515 = vpack.c.b16 %v1355, %v1355
        %v1516 = vpack.c.b16 %v1356, %v1356
        %v1517 = vpack.c.b16 %v1357, %v1357
        %v1518 = vpack.c.b16 %v1358, %v1358
        %v1519 = vpack.c.b16 %v1359, %v1359
        %v1520 = vpack.c.b16 %v1360, %v1360
        %v1521 = vpack.c.b16 %v1361, %v1361
        %v1522 = vpack.c.b16 %v1362, %v1362
        %v1523 = vpack.c.b16 %v1363, %v1363
        %v1524 = vpack.c.b16 %v1364, %v1364
        %v1525 = vpack.c.b16 %v1365, %v1365
        %v1526 = vpack.c.b16 %v1366, %v1366
        %v1527 = vpack.c.b16 %v1367, %v1367
        %v1528 = vpack.c.b16 %v1368, %v1368
        %v1529 = vpack.c.b16 %v1369, %v1369
        %v1530 = vpack.c.b16 %v1370, %v1370
        %v1531 = vpack.c.b16 %v1371, %v1371
        %v1532 = vpack.c.b16 %v1372, %v1372
        %v1533 = vpack.c.b16 %v1373, %v1373
        %v1534 = vpack.c.b16 %v1374, %v1374
        %v1535 = vpack.c.b16 %v1375, %v1375
        %v1536 = vpack.c.b16 %v1376, %v1376
        %v1537 = vpack.c.b16 %v1377, %v1377
        %v1538 = vpack.c.b16 %v1378, %v1378
        %v1539 = vpack.c.b16 %v1379, %v1379
        %v1540 = vpack.c.b16 %v1380, %v1380
        %v1541 = vpack.c.b16 %v1381, %v1381
        %v1542 = vpack.c.b16 %v1382, %v1382
        %v1543 = vpack.c.b16 %v1383, %v1383
        %v1544 = vpack.c.b16 %v1384, %v1384
        %v1545 = vpack.c.b16 %v1385, %v1385
        %v1546 = vpack.c.b16 %v1386, %v1386
        %v1547 = vpack.c.b16 %v1387, %v1387
        %v1548 = vpack.c.b16 %v1388, %v1388
        %v1549 = vpack.c.b16 %v1389, %v1389
        %v1550 = vpack.c.b16 %v1390, %v1390
        %v1551 = vpack.c.b16 %v1391, %v1391
        %v1552 = vpack.c.b16 %v1392, %v1392
        %v1553 = vpack.c.b16 %v1393, %v1393
        %v1554 = vpack.c.b16 %v1394, %v1394
        %v1555 = vpack.c.b16 %v1395, %v1395
        %v1556 = vpack.c.b16 %v1396, %v1396
        %v1557 = vpack.c.b16 %v1397, %v1397
        %v1558 = vpack.c.b16 %v1398, %v1398
        %v1559 = vpack.c.b16 %v1399, %v1399
        %v1560 = vpack.c.b16 %v1400, %v1400
        %v1561 = vpack.c.b16 %v1401, %v1401
        %v1562 = vpack.c.b16 %v1402, %v1402
        %v1563 = vpack.c.b16 %v1403, %v1403
        %v1564 = vpack.c.b16 %v1404, %v1404
        %v1565 = vpack.c.b16 %v1405, %v1405
        %v1566 = vpack.c.b16 %v1406, %v1406
        %v1567 = vpack.c.b16 %v1407, %v1407
        %v1568 = vpack.c.b16 %v1408, %v1408
        %v1569 = vpack.c.b16 %v1409, %v1409
        %v1570 = vpack.c.b16 %v1410, %v1410
        %v1571 = vpack.c.b16 %v1411, %v1411
        %v1572 = vpack.c.b16 %v1412, %v1412
        %v1573 = vpack.c.b16 %v1413, %v1413
        %v1574 = vpack.c.b16 %v1414, %v1414
        %v1575 = vpack.c.b16 %v1415, %v1415
        %v1576 = vpack.c.b16 %v1416, %v1416
        %v1577 = vpack.c.b16 %v1417, %v1417
        %v1578 = vpack.c.b16 %v1418, %v1418
        %v1579 = vpack.c.b16 %v1419, %v1419
        %v1580 = vpack.c.b16 %v1420, %v1420
        %v1581 = vpack.c.b16 %v1421, %v1421
        %v1582 = vpack.c.b16 %v1422, %v1422
        %v1583 = vpack.c.b16 %v1423, %v1423
        %v1584 = vpack.c.b16 %v1424, %v1424
        %v1585 = vpack.c.b16 %v1425, %v1425
        %v1586 = vpack.c.b16 %v1426, %v1426
        %v1587 = vpack.c.b16 %v1427, %v1427
        %v1588 = vpack.c.b16 %v1428, %v1428
        %v1589 = vpack.c.b16 %v1429, %v1429
        %v1590 = vpack.c.b16 %v1430, %v1430
        %v1591 = vpack.c.b16 %v1431, %v1431
        %v1592 = vpack.c.b16 %v1432, %v1432
        %v1593 = vpack.c.b16 %v1433, %v1433
        %v1594 = vpack.c.b16 %v1434, %v1434
        %v1595 = vpack.c.b16 %v1435, %v1435
        %v1596 = vpack.c.b16 %v1436, %v1436
        %v1597 = vpack.c.b16 %v1437, %v1437
        %v1598 = vpack.c.b16 %v1438, %v1438
        %v1599 = vpack.c.b16 %v1439, %v1439
        %v1600 = vpack.c.b16 %v1440, %v1440
        %v1601 = vpack.c.b16 %v1441, %v1441
        %v1602 = vpack.c.b16 %v1442, %v1442
        %v1603 = vpack.c.b16 %v1443, %v1443
        %v1604 = vpack.c.b16 %v1444, %v1444
        %v1605 = vpack.c.b16 %v1445, %v1445
        %v1606 = vpack.c.b16 %v1446, %v1446
        %v1607 = vpack.c.b16 %v1447, %v1447
        %v1608 = vpack.c.b16 %v1448, %v1448
        %v1609 = vpack.c.b16 %v1449, %v1449
        %v1610 = vpack.c.b16 %v1450, %v1450
        %v1611 = vpack.c.b16 %v1451, %v1451
        %v1612 = vpack.c.b16 %v1452, %v1452
        %v1613 = vpack.c.b16 %v1453, %v1453
        %v1614 = vpack.c.b16 %v1454, %v1454
        %v1615 = vpack.c.b16 %v1455, %v1455
        %v1616 = vpack.c.b16 %v1456, %v1456
        %v1617 = vpack.c.b16 %v1457, %v1457
        %v1618 = vpack.c.b16 %v1458, %v1458
        %v1619 = vpack.c.b16 %v1459, %v1459
        %v1620 = vpack.c.b16 %v1460, %v1460
        %v1621 = vpack.c.b16 %v1461, %v1461
        %v1622 = vpack.c.b16 %v1462, %v1462
        %v1623 = vpack.c.b16 %v1463, %v1463
        %v1624 = vpack.c.b16 %v1464, %v1464
        %v1625 = vpack.c.b16 %v1465, %v1465
        %v1626 = vpack.c.b16 %v1466, %v1466
        %v1627 = vpack.c.b16 %v1467, %v1467
        %v1628 = vpack.c.b16 %v1468, %v1468
        %v1629 = vpack.c.b16 %v1469, %v1469
        %v1630 = vpack.c.b16 %v1470, %v1470
        %v1631 = vpack.c.b16 %v1471, %v1471
        %v1632 = vpack.c.b16 %v1472, %v1472
        %v1633 = vpack.c.b16 %v1473, %v1473
        %v1634 = vpack.c.b16 %v1474, %v1474
        %v1635 = vpack.c.b16 %v1475, %v1475
        %v1636 = vpack.c.b16 %v1476, %v1476
        %v1637 = vpack.c.b16 %v1477, %v1477
        %v1638 = vpack.c.b16 %v1478, %v1478
        %v1639 = vpack.c.b16 %v1479, %v1479
        %v1640 = vpack.c.b16 %v1480, %v1480
        %v1641 = vpack.c.b16 %v1481, %v1481
        %v1642 = vpack.c.b16 %v1482, %v1482
        %v1643 = vpack.c.b16 %v1483, %v1483
        %v1644 = vpack.c.b16 %v1484, %v1484
        %v1645 = vpack.c.b16 %v1485, %v1485
        %v1646 = vpack.c.b16 %v1486, %v1486
        %v1647 = vpack.c.b16 %v1487, %v1487
        %v1648 = vpack.c.b16 %v1488, %v1488
        %v1649 = vpack.c.b16 %v1489, %v1489
        %v1650 = vpack.c.b16 %v1490, %v1490
        %v1651 = vpack.c.b16 %v1491, %v1491
        %v1652 = vpack.c.b16 %v1492, %v1492
        %v1653 = vpack.c.b16 %v1493, %v1493
        %v1654 = vpack.c.b16 %v1494, %v1494
        %v1655 = vpack.c.b16 %v1495, %v1495
        %v1656 = vpack.c.b16 %v1496, %v1496
        %v1657 = vpack.c.b16 %v1497, %v1497
        %v1658 = vpack.c.b16 %v1498, %v1498
        %v1659 = vpack.c.b16 %v1499, %v1499
        %v1660 = vpack.c.b16 %v1500, %v1500
        %v1661 = vpack.c.b16 %v1501, %v1501
        %v1662 = vpack.c.b16 %v1502, %v1502
        %v1663 = vpack.c.b16 %v1503, %v1503
        %v1664 = vpack.c.b16 %v1504, %v1504
        %v1665 = vpack.c.b16 %v1505, %v1505
        %v1666 = vpack.c.b16 %v1506, %v1506
        %v1667 = vpack.c.b16 %v1507, %v1507
        %s1828 = scalar_lea.vmem [#allocation2], 20
        %1829 = vst.msk [vmem:[%s1828] sm:$0xf] %vm200, %v1508
        %1830 = vst.msk [vmem:[%s1828 + $0x4] sm:$0xf] %vm200, %v1509
        %1831 = vst.msk [vmem:[%s1828 + $0x8] sm:$0xf] %vm200, %v1510
        %1832 = vst.msk [vmem:[%s1828 + $0xc] sm:$0xf] %vm200, %v1511
        %1833 = vst.msk [vmem:[%s1828 + $0x10] sm:$0x1] %vm205, %v1512
        %1834 = vst.msk [vmem:[%s1828 + $0x14] sm:$0xf] %vm200, %v1513
        %1835 = vst.msk [vmem:[%s1828 + $0x18] sm:$0xf] %vm200, %v1514
        %1836 = vst.msk [vmem:[%s1828 + $0x1c] sm:$0xf] %vm200, %v1515
        %1837 = vst.msk [vmem:[%s1828 + $0x20] sm:$0xf] %vm200, %v1516
        %1838 = vst.msk [vmem:[%s1828 + $0x24] sm:$0x1] %vm205, %v1517
        %1839 = vst.msk [vmem:[%s1828 + $0x28] sm:$0xf] %vm200, %v1518
        %1840 = vst.msk [vmem:[%s1828 + $0x2c] sm:$0xf] %vm200, %v1519
        %1841 = vst.msk [vmem:[%s1828 + $0x30] sm:$0xf] %vm200, %v1520
        %1842 = vst.msk [vmem:[%s1828 + $0x34] sm:$0xf] %vm200, %v1521
        %1843 = vst.msk [vmem:[%s1828 + $0x38] sm:$0x1] %vm205, %v1522
        %1844 = vst.msk [vmem:[%s1828 + $0x3c] sm:$0xf] %vm200, %v1523
        %1845 = vst.msk [vmem:[%s1828 + $0x40] sm:$0xf] %vm200, %v1524
        %1846 = vst.msk [vmem:[%s1828 + $0x44] sm:$0xf] %vm200, %v1525
        %1847 = vst.msk [vmem:[%s1828 + $0x48] sm:$0xf] %vm200, %v1526
        %1848 = vst.msk [vmem:[%s1828 + $0x4c] sm:$0x1] %vm205, %v1527
        %1849 = vst.msk [vmem:[%s1828 + $0x50] sm:$0xf] %vm200, %v1528
        %1850 = vst.msk [vmem:[%s1828 + $0x54] sm:$0xf] %vm200, %v1529
        %1851 = vst.msk [vmem:[%s1828 + $0x58] sm:$0xf] %vm200, %v1530
        %1852 = vst.msk [vmem:[%s1828 + $0x5c] sm:$0xf] %vm200, %v1531
        %1853 = vst.msk [vmem:[%s1828 + $0x60] sm:$0x1] %vm205, %v1532
        %1854 = vst.msk [vmem:[%s1828 + $0x64] sm:$0xf] %vm200, %v1533
        %1855 = vst.msk [vmem:[%s1828 + $0x68] sm:$0xf] %vm200, %v1534
        %1856 = vst.msk [vmem:[%s1828 + $0x6c] sm:$0xf] %vm200, %v1535
        %1857 = vst.msk [vmem:[%s1828 + $0x70] sm:$0xf] %vm200, %v1536
        %1858 = vst.msk [vmem:[%s1828 + $0x74] sm:$0x1] %vm205, %v1537
        %1859 = vst.msk [vmem:[%s1828 + $0x78] sm:$0xf] %vm200, %v1538
        %1860 = vst.msk [vmem:[%s1828 + $0x7c] sm:$0xf] %vm200, %v1539
        %1861 = vst.msk [vmem:[%s1828 + $0x80] sm:$0xf] %vm200, %v1540
        %1862 = vst.msk [vmem:[%s1828 + $0x84] sm:$0xf] %vm200, %v1541
        %1863 = vst.msk [vmem:[%s1828 + $0x88] sm:$0x1] %vm205, %v1542
        %1864 = vst.msk [vmem:[%s1828 + $0x8c] sm:$0xf] %vm200, %v1543
        %1865 = vst.msk [vmem:[%s1828 + $0x90] sm:$0xf] %vm200, %v1544
        %1866 = vst.msk [vmem:[%s1828 + $0x94] sm:$0xf] %vm200, %v1545
        %1867 = vst.msk [vmem:[%s1828 + $0x98] sm:$0xf] %vm200, %v1546
        %1868 = vst.msk [vmem:[%s1828 + $0x9c] sm:$0x1] %vm205, %v1547
        %1869 = vst.msk [vmem:[%s1828 + $0xa0] sm:$0xf] %vm200, %v1548
        %1870 = vst.msk [vmem:[%s1828 + $0xa4] sm:$0xf] %vm200, %v1549
        %1871 = vst.msk [vmem:[%s1828 + $0xa8] sm:$0xf] %vm200, %v1550
        %1872 = vst.msk [vmem:[%s1828 + $0xac] sm:$0xf] %vm200, %v1551
        %1873 = vst.msk [vmem:[%s1828 + $0xb0] sm:$0x1] %vm205, %v1552
        %1874 = vst.msk [vmem:[%s1828 + $0xb4] sm:$0xf] %vm200, %v1553
        %1875 = vst.msk [vmem:[%s1828 + $0xb8] sm:$0xf] %vm200, %v1554
        %1876 = vst.msk [vmem:[%s1828 + $0xbc] sm:$0xf] %vm200, %v1555
        %1877 = vst.msk [vmem:[%s1828 + $0xc0] sm:$0xf] %vm200, %v1556
        %1878 = vst.msk [vmem:[%s1828 + $0xc4] sm:$0x1] %vm205, %v1557
        %1879 = vst.msk [vmem:[%s1828 + $0xc8] sm:$0xf] %vm200, %v1558
        %1880 = vst.msk [vmem:[%s1828 + $0xcc] sm:$0xf] %vm200, %v1559
        %1881 = vst.msk [vmem:[%s1828 + $0xd0] sm:$0xf] %vm200, %v1560
        %1882 = vst.msk [vmem:[%s1828 + $0xd4] sm:$0xf] %vm200, %v1561
        %1883 = vst.msk [vmem:[%s1828 + $0xd8] sm:$0x1] %vm205, %v1562
        %1884 = vst.msk [vmem:[%s1828 + $0xdc] sm:$0xf] %vm200, %v1563
        %1885 = vst.msk [vmem:[%s1828 + $0xe0] sm:$0xf] %vm200, %v1564
        %1886 = vst.msk [vmem:[%s1828 + $0xe4] sm:$0xf] %vm200, %v1565
        %1887 = vst.msk [vmem:[%s1828 + $0xe8] sm:$0xf] %vm200, %v1566
        %1888 = vst.msk [vmem:[%s1828 + $0xec] sm:$0x1] %vm205, %v1567
        %1889 = vst.msk [vmem:[%s1828 + $0xf0] sm:$0xf] %vm200, %v1568
        %1890 = vst.msk [vmem:[%s1828 + $0xf4] sm:$0xf] %vm200, %v1569
        %1891 = vst.msk [vmem:[%s1828 + $0xf8] sm:$0xf] %vm200, %v1570
        %1892 = vst.msk [vmem:[%s1828 + $0xfc] sm:$0xf] %vm200, %v1571
        %1893 = vst.msk [vmem:[%s1828 + $0x100] sm:$0x1] %vm205, %v1572
        %1894 = vst.msk [vmem:[%s1828 + $0x104] sm:$0xf] %vm200, %v1573
        %1895 = vst.msk [vmem:[%s1828 + $0x108] sm:$0xf] %vm200, %v1574
        %1896 = vst.msk [vmem:[%s1828 + $0x10c] sm:$0xf] %vm200, %v1575
        %1897 = vst.msk [vmem:[%s1828 + $0x110] sm:$0xf] %vm200, %v1576
        %1898 = vst.msk [vmem:[%s1828 + $0x114] sm:$0x1] %vm205, %v1577
        %1899 = vst.msk [vmem:[%s1828 + $0x118] sm:$0xf] %vm200, %v1578
        %1900 = vst.msk [vmem:[%s1828 + $0x11c] sm:$0xf] %vm200, %v1579
        %1901 = vst.msk [vmem:[%s1828 + $0x120] sm:$0xf] %vm200, %v1580
        %1902 = vst.msk [vmem:[%s1828 + $0x124] sm:$0xf] %vm200, %v1581
        %1903 = vst.msk [vmem:[%s1828 + $0x128] sm:$0x1] %vm205, %v1582
        %1904 = vst.msk [vmem:[%s1828 + $0x12c] sm:$0xf] %vm200, %v1583
        %1905 = vst.msk [vmem:[%s1828 + $0x130] sm:$0xf] %vm200, %v1584
        %1906 = vst.msk [vmem:[%s1828 + $0x134] sm:$0xf] %vm200, %v1585
        %1907 = vst.msk [vmem:[%s1828 + $0x138] sm:$0xf] %vm200, %v1586
        %1908 = vst.msk [vmem:[%s1828 + $0x13c] sm:$0x1] %vm205, %v1587
        %1909 = vst.msk [vmem:[%s1828 + $0x140] sm:$0xf] %vm200, %v1588
        %1910 = vst.msk [vmem:[%s1828 + $0x144] sm:$0xf] %vm200, %v1589
        %1911 = vst.msk [vmem:[%s1828 + $0x148] sm:$0xf] %vm200, %v1590
        %1912 = vst.msk [vmem:[%s1828 + $0x14c] sm:$0xf] %vm200, %v1591
        %1913 = vst.msk [vmem:[%s1828 + $0x150] sm:$0x1] %vm205, %v1592
        %1914 = vst.msk [vmem:[%s1828 + $0x154] sm:$0xf] %vm200, %v1593
        %1915 = vst.msk [vmem:[%s1828 + $0x158] sm:$0xf] %vm200, %v1594
        %1916 = vst.msk [vmem:[%s1828 + $0x15c] sm:$0xf] %vm200, %v1595
        %1917 = vst.msk [vmem:[%s1828 + $0x160] sm:$0xf] %vm200, %v1596
        %1918 = vst.msk [vmem:[%s1828 + $0x164] sm:$0x1] %vm205, %v1597
        %1919 = vst.msk [vmem:[%s1828 + $0x168] sm:$0xf] %vm200, %v1598
        %1920 = vst.msk [vmem:[%s1828 + $0x16c] sm:$0xf] %vm200, %v1599
        %1921 = vst.msk [vmem:[%s1828 + $0x170] sm:$0xf] %vm200, %v1600
        %1922 = vst.msk [vmem:[%s1828 + $0x174] sm:$0xf] %vm200, %v1601
        %1923 = vst.msk [vmem:[%s1828 + $0x178] sm:$0x1] %vm205, %v1602
        %1924 = vst.msk [vmem:[%s1828 + $0x17c] sm:$0xf] %vm200, %v1603
        %1925 = vst.msk [vmem:[%s1828 + $0x180] sm:$0xf] %vm200, %v1604
        %1926 = vst.msk [vmem:[%s1828 + $0x184] sm:$0xf] %vm200, %v1605
        %1927 = vst.msk [vmem:[%s1828 + $0x188] sm:$0xf] %vm200, %v1606
        %1928 = vst.msk [vmem:[%s1828 + $0x18c] sm:$0x1] %vm205, %v1607
        %1929 = vst.msk [vmem:[%s1828 + $0x190] sm:$0xf] %vm200, %v1608
        %1930 = vst.msk [vmem:[%s1828 + $0x194] sm:$0xf] %vm200, %v1609
        %1931 = vst.msk [vmem:[%s1828 + $0x198] sm:$0xf] %vm200, %v1610
        %1932 = vst.msk [vmem:[%s1828 + $0x19c] sm:$0xf] %vm200, %v1611
        %1933 = vst.msk [vmem:[%s1828 + $0x1a0] sm:$0x1] %vm205, %v1612
        %1934 = vst.msk [vmem:[%s1828 + $0x1a4] sm:$0xf] %vm200, %v1613
        %1935 = vst.msk [vmem:[%s1828 + $0x1a8] sm:$0xf] %vm200, %v1614
        %1936 = vst.msk [vmem:[%s1828 + $0x1ac] sm:$0xf] %vm200, %v1615
        %1937 = vst.msk [vmem:[%s1828 + $0x1b0] sm:$0xf] %vm200, %v1616
        %1938 = vst.msk [vmem:[%s1828 + $0x1b4] sm:$0x1] %vm205, %v1617
        %1939 = vst.msk [vmem:[%s1828 + $0x1b8] sm:$0xf] %vm200, %v1618
        %1940 = vst.msk [vmem:[%s1828 + $0x1bc] sm:$0xf] %vm200, %v1619
        %1941 = vst.msk [vmem:[%s1828 + $0x1c0] sm:$0xf] %vm200, %v1620
        %1942 = vst.msk [vmem:[%s1828 + $0x1c4] sm:$0xf] %vm200, %v1621
        %1943 = vst.msk [vmem:[%s1828 + $0x1c8] sm:$0x1] %vm205, %v1622
        %1944 = vst.msk [vmem:[%s1828 + $0x1cc] sm:$0xf] %vm200, %v1623
        %1945 = vst.msk [vmem:[%s1828 + $0x1d0] sm:$0xf] %vm200, %v1624
        %1946 = vst.msk [vmem:[%s1828 + $0x1d4] sm:$0xf] %vm200, %v1625
        %1947 = vst.msk [vmem:[%s1828 + $0x1d8] sm:$0xf] %vm200, %v1626
        %1948 = vst.msk [vmem:[%s1828 + $0x1dc] sm:$0x1] %vm205, %v1627
        %1949 = vst.msk [vmem:[%s1828 + $0x1e0] sm:$0xf] %vm200, %v1628
        %1950 = vst.msk [vmem:[%s1828 + $0x1e4] sm:$0xf] %vm200, %v1629
        %1951 = vst.msk [vmem:[%s1828 + $0x1e8] sm:$0xf] %vm200, %v1630
        %1952 = vst.msk [vmem:[%s1828 + $0x1ec] sm:$0xf] %vm200, %v1631
        %1953 = vst.msk [vmem:[%s1828 + $0x1f0] sm:$0x1] %vm205, %v1632
        %1954 = vst.msk [vmem:[%s1828 + $0x1f4] sm:$0xf] %vm200, %v1633
        %1955 = vst.msk [vmem:[%s1828 + $0x1f8] sm:$0xf] %vm200, %v1634
        %1956 = vst.msk [vmem:[%s1828 + $0x1fc] sm:$0xf] %vm200, %v1635
        %1957 = vst.msk [vmem:[%s1828 + $0x200] sm:$0xf] %vm200, %v1636
        %1958 = vst.msk [vmem:[%s1828 + $0x204] sm:$0x1] %vm205, %v1637
        %1959 = vst.msk [vmem:[%s1828 + $0x208] sm:$0xf] %vm200, %v1638
        %1960 = vst.msk [vmem:[%s1828 + $0x20c] sm:$0xf] %vm200, %v1639
        %1961 = vst.msk [vmem:[%s1828 + $0x210] sm:$0xf] %vm200, %v1640
        %1962 = vst.msk [vmem:[%s1828 + $0x214] sm:$0xf] %vm200, %v1641
        %1963 = vst.msk [vmem:[%s1828 + $0x218] sm:$0x1] %vm205, %v1642
        %1964 = vst.msk [vmem:[%s1828 + $0x21c] sm:$0xf] %vm200, %v1643
        %1965 = vst.msk [vmem:[%s1828 + $0x220] sm:$0xf] %vm200, %v1644
        %1966 = vst.msk [vmem:[%s1828 + $0x224] sm:$0xf] %vm200, %v1645
        %1967 = vst.msk [vmem:[%s1828 + $0x228] sm:$0xf] %vm200, %v1646
        %1968 = vst.msk [vmem:[%s1828 + $0x22c] sm:$0x1] %vm205, %v1647
        %1969 = vst.msk [vmem:[%s1828 + $0x230] sm:$0xf] %vm200, %v1648
        %1970 = vst.msk [vmem:[%s1828 + $0x234] sm:$0xf] %vm200, %v1649
        %1971 = vst.msk [vmem:[%s1828 + $0x238] sm:$0xf] %vm200, %v1650
        %1972 = vst.msk [vmem:[%s1828 + $0x23c] sm:$0xf] %vm200, %v1651
        %1973 = vst.msk [vmem:[%s1828 + $0x240] sm:$0x1] %vm205, %v1652
        %1974 = vst.msk [vmem:[%s1828 + $0x244] sm:$0xf] %vm200, %v1653
        %1975 = vst.msk [vmem:[%s1828 + $0x248] sm:$0xf] %vm200, %v1654
        %1976 = vst.msk [vmem:[%s1828 + $0x24c] sm:$0xf] %vm200, %v1655
        %1977 = vst.msk [vmem:[%s1828 + $0x250] sm:$0xf] %vm200, %v1656
        %1978 = vst.msk [vmem:[%s1828 + $0x254] sm:$0x1] %vm205, %v1657
        %1979 = vst.msk [vmem:[%s1828 + $0x258] sm:$0xf] %vm200, %v1658
        %1980 = vst.msk [vmem:[%s1828 + $0x25c] sm:$0xf] %vm200, %v1659
        %1981 = vst.msk [vmem:[%s1828 + $0x260] sm:$0xf] %vm200, %v1660
        %1982 = vst.msk [vmem:[%s1828 + $0x264] sm:$0xf] %vm200, %v1661
        %1983 = vst.msk [vmem:[%s1828 + $0x268] sm:$0x1] %vm205, %v1662
        %1984 = vst.msk [vmem:[%s1828 + $0x26c] sm:$0xf] %vm200, %v1663
        %1985 = vst.msk [vmem:[%s1828 + $0x270] sm:$0xf] %vm200, %v1664
        %1986 = vst.msk [vmem:[%s1828 + $0x274] sm:$0xf] %vm200, %v1665
        %1987 = vst.msk [vmem:[%s1828 + $0x278] sm:$0xf] %vm200, %v1666
        %1988 = vst.msk [vmem:[%s1828 + $0x27c] sm:$0x1] %vm205, %v1667
      $region36: #{vdsr_forward.1} parent=31 // pred_fallthru
        _
      %s1989 = smul.u32 %s19, 36
      %s1990 = smul.addr %s1989, 4
      %s1991 = scalar_lea.vmem %s1, %s1990
      %v1992 = vld [vmem:[%s1991] sm:$0xf]
      %v1993 = vld [vmem:[%s1991 + $0x4] sm:$0xf]
      %v1994 = vld [vmem:[%s1991 + $0x8] sm:$0xf]
      %v1995 = vld [vmem:[%s1991 + $0xc] sm:$0xf]
      %v1996 = vld [vmem:[%s1991 + $0x10] sm:$0xf]
      %v1997 = vld [vmem:[%s1991 + $0x14] sm:$0xf]
      %v1998 = vld [vmem:[%s1991 + $0x18] sm:$0xf]
      %v1999 = vld [vmem:[%s1991 + $0x1c] sm:$0xf]
      %v2000 = vld [vmem:[%s1991 + $0x20] sm:$0xf]
      %v2001 = vld [vmem:[%s1991 + $0x24] sm:$0xf]
      %v2002 = vld [vmem:[%s1991 + $0x28] sm:$0xf]
      %v2003 = vld [vmem:[%s1991 + $0x2c] sm:$0xf]
      %v2004 = vld [vmem:[%s1991 + $0x30] sm:$0xf]
      %v2005 = vld [vmem:[%s1991 + $0x34] sm:$0xf]
      %v2006 = vld [vmem:[%s1991 + $0x38] sm:$0xf]
      %v2007 = vld [vmem:[%s1991 + $0x3c] sm:$0xf]
      %v2008 = vld [vmem:[%s1991 + $0x40] sm:$0xf]
      %v2009 = vld [vmem:[%s1991 + $0x44] sm:$0xf]
      %v2010 = vld [vmem:[%s1991 + $0x48] sm:$0xf]
      %v2011 = vld [vmem:[%s1991 + $0x4c] sm:$0xf]
      %v2012 = vld [vmem:[%s1991 + $0x50] sm:$0xf]
      %v2013 = vld [vmem:[%s1991 + $0x54] sm:$0xf]
      %v2014 = vld [vmem:[%s1991 + $0x58] sm:$0xf]
      %v2015 = vld [vmem:[%s1991 + $0x5c] sm:$0xf]
      %v2016 = vld [vmem:[%s1991 + $0x60] sm:$0xf]
      %v2017 = vld [vmem:[%s1991 + $0x64] sm:$0xf]
      %v2018 = vld [vmem:[%s1991 + $0x68] sm:$0xf]
      %v2019 = vld [vmem:[%s1991 + $0x6c] sm:$0xf]
      %v2020 = vld [vmem:[%s1991 + $0x70] sm:$0xf]
      %v2021 = vld [vmem:[%s1991 + $0x74] sm:$0xf]
      %v2022 = vld [vmem:[%s1991 + $0x78] sm:$0xf]
      %v2023 = vld [vmem:[%s1991 + $0x7c] sm:$0xf]
      %v2024 = vld [vmem:[%s1991 + $0x80] sm:$0xf]
      %v2025 = vld [vmem:[%s1991 + $0x84] sm:$0xf]
      %v2026 = vld [vmem:[%s1991 + $0x88] sm:$0xf]
      %v2027 = vld [vmem:[%s1991 + $0x8c] sm:$0xf]
      %s2028 = scalar_lea.vmem %s2, %s19
      %v2029 = vld [vmem:[%s2028] sm:$0x1]
      %s2030 = smul.u32 %s194, 170
      %s2031 = smul.addr %s2030, 4
      %s2032 = scalar_lea.vmem [#allocation2], %s2031
      %v2033 = vld [vmem:[%s2032] sm:$0xf]
      %v2034 = vld [vmem:[%s2032 + $0x4] sm:$0xf]
      %v2035 = vld [vmem:[%s2032 + $0x8] sm:$0xf]
      %v2036 = vld [vmem:[%s2032 + $0xc] sm:$0xf]
      %v2037 = vld [vmem:[%s2032 + $0x10] sm:$0x1]
      %v2038 = vld [vmem:[%s2032 + $0x14] sm:$0xf]
      %v2039 = vld [vmem:[%s2032 + $0x18] sm:$0xf]
      %v2040 = vld [vmem:[%s2032 + $0x1c] sm:$0xf]
      %v2041 = vld [vmem:[%s2032 + $0x20] sm:$0xf]
      %v2042 = vld [vmem:[%s2032 + $0x24] sm:$0x1]
      %v2043 = vld [vmem:[%s2032 + $0x28] sm:$0xf]
      %v2044 = vld [vmem:[%s2032 + $0x2c] sm:$0xf]
      %v2045 = vld [vmem:[%s2032 + $0x30] sm:$0xf]
      %v2046 = vld [vmem:[%s2032 + $0x34] sm:$0xf]
      %v2047 = vld [vmem:[%s2032 + $0x38] sm:$0x1]
      %v2048 = vld [vmem:[%s2032 + $0x3c] sm:$0xf]
      %v2049 = vld [vmem:[%s2032 + $0x40] sm:$0xf]
      %v2050 = vld [vmem:[%s2032 + $0x44] sm:$0xf]
      %v2051 = vld [vmem:[%s2032 + $0x48] sm:$0xf]
      %v2052 = vld [vmem:[%s2032 + $0x4c] sm:$0x1]
      %v2053 = vld [vmem:[%s2032 + $0x50] sm:$0xf]
      %v2054 = vld [vmem:[%s2032 + $0x54] sm:$0xf]
      %v2055 = vld [vmem:[%s2032 + $0x58] sm:$0xf]
      %v2056 = vld [vmem:[%s2032 + $0x5c] sm:$0xf]
      %v2057 = vld [vmem:[%s2032 + $0x60] sm:$0x1]
      %v2058 = vld [vmem:[%s2032 + $0x64] sm:$0xf]
      %v2059 = vld [vmem:[%s2032 + $0x68] sm:$0xf]
      %v2060 = vld [vmem:[%s2032 + $0x6c] sm:$0xf]
      %v2061 = vld [vmem:[%s2032 + $0x70] sm:$0xf]
      %v2062 = vld [vmem:[%s2032 + $0x74] sm:$0x1]
      %v2063 = vld [vmem:[%s2032 + $0x78] sm:$0xf]
      %v2064 = vld [vmem:[%s2032 + $0x7c] sm:$0xf]
      %v2065 = vld [vmem:[%s2032 + $0x80] sm:$0xf]
      %v2066 = vld [vmem:[%s2032 + $0x84] sm:$0xf]
      %v2067 = vld [vmem:[%s2032 + $0x88] sm:$0x1]
      %v2068 = vld [vmem:[%s2032 + $0x8c] sm:$0xf]
      %v2069 = vld [vmem:[%s2032 + $0x90] sm:$0xf]
      %v2070 = vld [vmem:[%s2032 + $0x94] sm:$0xf]
      %v2071 = vld [vmem:[%s2032 + $0x98] sm:$0xf]
      %v2072 = vld [vmem:[%s2032 + $0x9c] sm:$0x1]
      %v2073 = vld [vmem:[%s2032 + $0xa0] sm:$0xf]
      %v2074 = vld [vmem:[%s2032 + $0xa4] sm:$0xf]
      %v2075 = vld [vmem:[%s2032 + $0xa8] sm:$0xf]
      %v2076 = vld [vmem:[%s2032 + $0xac] sm:$0xf]
      %v2077 = vld [vmem:[%s2032 + $0xb0] sm:$0x1]
      %v2078 = vld [vmem:[%s2032 + $0xb4] sm:$0xf]
      %v2079 = vld [vmem:[%s2032 + $0xb8] sm:$0xf]
      %v2080 = vld [vmem:[%s2032 + $0xbc] sm:$0xf]
      %v2081 = vld [vmem:[%s2032 + $0xc0] sm:$0xf]
      %v2082 = vld [vmem:[%s2032 + $0xc4] sm:$0x1]
      %v2083 = vld [vmem:[%s2032 + $0xc8] sm:$0xf]
      %v2084 = vld [vmem:[%s2032 + $0xcc] sm:$0xf]
      %v2085 = vld [vmem:[%s2032 + $0xd0] sm:$0xf]
      %v2086 = vld [vmem:[%s2032 + $0xd4] sm:$0xf]
      %v2087 = vld [vmem:[%s2032 + $0xd8] sm:$0x1]
      %v2088 = vld [vmem:[%s2032 + $0xdc] sm:$0xf]
      %v2089 = vld [vmem:[%s2032 + $0xe0] sm:$0xf]
      %v2090 = vld [vmem:[%s2032 + $0xe4] sm:$0xf]
      %v2091 = vld [vmem:[%s2032 + $0xe8] sm:$0xf]
      %v2092 = vld [vmem:[%s2032 + $0xec] sm:$0x1]
      %v2093 = vld [vmem:[%s2032 + $0xf0] sm:$0xf]
      %v2094 = vld [vmem:[%s2032 + $0xf4] sm:$0xf]
      %v2095 = vld [vmem:[%s2032 + $0xf8] sm:$0xf]
      %v2096 = vld [vmem:[%s2032 + $0xfc] sm:$0xf]
      %v2097 = vld [vmem:[%s2032 + $0x100] sm:$0x1]
      %v2098 = vld [vmem:[%s2032 + $0x104] sm:$0xf]
      %v2099 = vld [vmem:[%s2032 + $0x108] sm:$0xf]
      %v2100 = vld [vmem:[%s2032 + $0x10c] sm:$0xf]
      %v2101 = vld [vmem:[%s2032 + $0x110] sm:$0xf]
      %v2102 = vld [vmem:[%s2032 + $0x114] sm:$0x1]
      %v2103 = vld [vmem:[%s2032 + $0x118] sm:$0xf]
      %v2104 = vld [vmem:[%s2032 + $0x11c] sm:$0xf]
      %v2105 = vld [vmem:[%s2032 + $0x120] sm:$0xf]
      %v2106 = vld [vmem:[%s2032 + $0x124] sm:$0xf]
      %v2107 = vld [vmem:[%s2032 + $0x128] sm:$0x1]
      %v2108 = vld [vmem:[%s2032 + $0x12c] sm:$0xf]
      %v2109 = vld [vmem:[%s2032 + $0x130] sm:$0xf]
      %v2110 = vld [vmem:[%s2032 + $0x134] sm:$0xf]
      %v2111 = vld [vmem:[%s2032 + $0x138] sm:$0xf]
      %v2112 = vld [vmem:[%s2032 + $0x13c] sm:$0x1]
      %v2113 = vld [vmem:[%s2032 + $0x140] sm:$0xf]
      %v2114 = vld [vmem:[%s2032 + $0x144] sm:$0xf]
      %v2115 = vld [vmem:[%s2032 + $0x148] sm:$0xf]
      %v2116 = vld [vmem:[%s2032 + $0x14c] sm:$0xf]
      %v2117 = vld [vmem:[%s2032 + $0x150] sm:$0x1]
      %v2118 = vld [vmem:[%s2032 + $0x154] sm:$0xf]
      %v2119 = vld [vmem:[%s2032 + $0x158] sm:$0xf]
      %v2120 = vld [vmem:[%s2032 + $0x15c] sm:$0xf]
      %v2121 = vld [vmem:[%s2032 + $0x160] sm:$0xf]
      %v2122 = vld [vmem:[%s2032 + $0x164] sm:$0x1]
      %vm2123 = vsmask.f32 3328
      %vm2124 = vsmask.f32 7440
      %vm2125 = vmor %vm2123, %vm2124
      %v2127 = vshrl.u32 %v2033, 16
      %v2129 = vrot.slane %v2127, 4
      %v2130 = vshll.u32 %v2033, 16
      %v2132 = vrot.slane %v2130, 5
      %v2133 = vor.u32 %v2129, %v2132
      %v2134 = vrot.slane %v2133, 4
      %v2136 = vshll.u32 %v2034, 16
      %v2138 = vrot.slane %v2136, 5
      %v2139 = vsel %vm2125, %v2134, %v2138
      %v2140 = vshrl.u32 %v2034, 16
      %v2142 = vrot.slane %v2140, 4
      %v2143 = vor.u32 %v2142, %v2138
      %v2144 = vrot.slane %v2143, 4
      %v2146 = vshll.u32 %v2035, 16
      %v2148 = vrot.slane %v2146, 5
      %v2149 = vsel %vm2125, %v2144, %v2148
      %v2150 = vshrl.u32 %v2035, 16
      %v2152 = vrot.slane %v2150, 4
      %v2153 = vor.u32 %v2152, %v2148
      %v2154 = vrot.slane %v2153, 4
      %v2156 = vshll.u32 %v2036, 16
      %v2158 = vrot.slane %v2156, 5
      %v2159 = vsel %vm2125, %v2154, %v2158
      %v2160 = vshrl.u32 %v2036, 16
      %v2162 = vrot.slane %v2160, 4
      %v2163 = vor.u32 %v2162, %v2158
      %v2164 = vrot.slane %v2163, 4
      %v2166 = vshll.u32 %v2037, 16
      %v2168 = vrot.slane %v2166, 5
      %v2169 = vsel %vm2125, %v2164, %v2168
      %v2171 = vshrl.u32 %v2038, 16
      %v2173 = vrot.slane %v2171, 4
      %v2174 = vshll.u32 %v2038, 16
      %v2176 = vrot.slane %v2174, 5
      %v2177 = vor.u32 %v2173, %v2176
      %v2178 = vrot.slane %v2177, 4
      %v2180 = vshll.u32 %v2039, 16
      %v2182 = vrot.slane %v2180, 5
      %v2183 = vsel %vm2125, %v2178, %v2182
      %v2184 = vshrl.u32 %v2039, 16
      %v2186 = vrot.slane %v2184, 4
      %v2187 = vor.u32 %v2186, %v2182
      %v2188 = vrot.slane %v2187, 4
      %v2190 = vshll.u32 %v2040, 16
      %v2192 = vrot.slane %v2190, 5
      %v2193 = vsel %vm2125, %v2188, %v2192
      %v2194 = vshrl.u32 %v2040, 16
      %v2196 = vrot.slane %v2194, 4
      %v2197 = vor.u32 %v2196, %v2192
      %v2198 = vrot.slane %v2197, 4
      %v2200 = vshll.u32 %v2041, 16
      %v2202 = vrot.slane %v2200, 5
      %v2203 = vsel %vm2125, %v2198, %v2202
      %v2204 = vshrl.u32 %v2041, 16
      %v2206 = vrot.slane %v2204, 4
      %v2207 = vor.u32 %v2206, %v2202
      %v2208 = vrot.slane %v2207, 4
      %v2210 = vshll.u32 %v2042, 16
      %v2212 = vrot.slane %v2210, 5
      %v2213 = vsel %vm2125, %v2208, %v2212
      %v2215 = vshrl.u32 %v2043, 16
      %v2217 = vrot.slane %v2215, 4
      %v2218 = vshll.u32 %v2043, 16
      %v2220 = vrot.slane %v2218, 5
      %v2221 = vor.u32 %v2217, %v2220
      %v2222 = vrot.slane %v2221, 4
      %v2224 = vshll.u32 %v2044, 16
      %v2226 = vrot.slane %v2224, 5
      %v2227 = vsel %vm2125, %v2222, %v2226
      %v2228 = vshrl.u32 %v2044, 16
      %v2230 = vrot.slane %v2228, 4
      %v2231 = vor.u32 %v2230, %v2226
      %v2232 = vrot.slane %v2231, 4
      %v2234 = vshll.u32 %v2045, 16
      %v2236 = vrot.slane %v2234, 5
      %v2237 = vsel %vm2125, %v2232, %v2236
      %v2238 = vshrl.u32 %v2045, 16
      %v2240 = vrot.slane %v2238, 4
      %v2241 = vor.u32 %v2240, %v2236
      %v2242 = vrot.slane %v2241, 4
      %v2244 = vshll.u32 %v2046, 16
      %v2246 = vrot.slane %v2244, 5
      %v2247 = vsel %vm2125, %v2242, %v2246
      %v2248 = vshrl.u32 %v2046, 16
      %v2250 = vrot.slane %v2248, 4
      %v2251 = vor.u32 %v2250, %v2246
      %v2252 = vrot.slane %v2251, 4
      %v2254 = vshll.u32 %v2047, 16
      %v2256 = vrot.slane %v2254, 5
      %v2257 = vsel %vm2125, %v2252, %v2256
      %v2259 = vshrl.u32 %v2048, 16
      %v2261 = vrot.slane %v2259, 4
      %v2262 = vshll.u32 %v2048, 16
      %v2264 = vrot.slane %v2262, 5
      %v2265 = vor.u32 %v2261, %v2264
      %v2266 = vrot.slane %v2265, 4
      %v2268 = vshll.u32 %v2049, 16
      %v2270 = vrot.slane %v2268, 5
      %v2271 = vsel %vm2125, %v2266, %v2270
      %v2272 = vshrl.u32 %v2049, 16
      %v2274 = vrot.slane %v2272, 4
      %v2275 = vor.u32 %v2274, %v2270
      %v2276 = vrot.slane %v2275, 4
      %v2278 = vshll.u32 %v2050, 16
      %v2280 = vrot.slane %v2278, 5
      %v2281 = vsel %vm2125, %v2276, %v2280
      %v2282 = vshrl.u32 %v2050, 16
      %v2284 = vrot.slane %v2282, 4
      %v2285 = vor.u32 %v2284, %v2280
      %v2286 = vrot.slane %v2285, 4
      %v2288 = vshll.u32 %v2051, 16
      %v2290 = vrot.slane %v2288, 5
      %v2291 = vsel %vm2125, %v2286, %v2290
      %v2292 = vshrl.u32 %v2051, 16
      %v2294 = vrot.slane %v2292, 4
      %v2295 = vor.u32 %v2294, %v2290
      %v2296 = vrot.slane %v2295, 4
      %v2298 = vshll.u32 %v2052, 16
      %v2300 = vrot.slane %v2298, 5
      %v2301 = vsel %vm2125, %v2296, %v2300
      %v2303 = vshrl.u32 %v2053, 16
      %v2305 = vrot.slane %v2303, 4
      %v2306 = vshll.u32 %v2053, 16
      %v2308 = vrot.slane %v2306, 5
      %v2309 = vor.u32 %v2305, %v2308
      %v2310 = vrot.slane %v2309, 4
      %v2312 = vshll.u32 %v2054, 16
      %v2314 = vrot.slane %v2312, 5
      %v2315 = vsel %vm2125, %v2310, %v2314
      %v2316 = vshrl.u32 %v2054, 16
      %v2318 = vrot.slane %v2316, 4
      %v2319 = vor.u32 %v2318, %v2314
      %v2320 = vrot.slane %v2319, 4
      %v2322 = vshll.u32 %v2055, 16
      %v2324 = vrot.slane %v2322, 5
      %v2325 = vsel %vm2125, %v2320, %v2324
      %v2326 = vshrl.u32 %v2055, 16
      %v2328 = vrot.slane %v2326, 4
      %v2329 = vor.u32 %v2328, %v2324
      %v2330 = vrot.slane %v2329, 4
      %v2332 = vshll.u32 %v2056, 16
      %v2334 = vrot.slane %v2332, 5
      %v2335 = vsel %vm2125, %v2330, %v2334
      %v2336 = vshrl.u32 %v2056, 16
      %v2338 = vrot.slane %v2336, 4
      %v2339 = vor.u32 %v2338, %v2334
      %v2340 = vrot.slane %v2339, 4
      %v2342 = vshll.u32 %v2057, 16
      %v2344 = vrot.slane %v2342, 5
      %v2345 = vsel %vm2125, %v2340, %v2344
      %v2347 = vshrl.u32 %v2058, 16
      %v2349 = vrot.slane %v2347, 4
      %v2350 = vshll.u32 %v2058, 16
      %v2352 = vrot.slane %v2350, 5
      %v2353 = vor.u32 %v2349, %v2352
      %v2354 = vrot.slane %v2353, 4
      %v2356 = vshll.u32 %v2059, 16
      %v2358 = vrot.slane %v2356, 5
      %v2359 = vsel %vm2125, %v2354, %v2358
      %v2360 = vshrl.u32 %v2059, 16
      %v2362 = vrot.slane %v2360, 4
      %v2363 = vor.u32 %v2362, %v2358
      %v2364 = vrot.slane %v2363, 4
      %v2366 = vshll.u32 %v2060, 16
      %v2368 = vrot.slane %v2366, 5
      %v2369 = vsel %vm2125, %v2364, %v2368
      %v2370 = vshrl.u32 %v2060, 16
      %v2372 = vrot.slane %v2370, 4
      %v2373 = vor.u32 %v2372, %v2368
      %v2374 = vrot.slane %v2373, 4
      %v2376 = vshll.u32 %v2061, 16
      %v2378 = vrot.slane %v2376, 5
      %v2379 = vsel %vm2125, %v2374, %v2378
      %v2380 = vshrl.u32 %v2061, 16
      %v2382 = vrot.slane %v2380, 4
      %v2383 = vor.u32 %v2382, %v2378
      %v2384 = vrot.slane %v2383, 4
      %v2386 = vshll.u32 %v2062, 16
      %v2388 = vrot.slane %v2386, 5
      %v2389 = vsel %vm2125, %v2384, %v2388
      %v2391 = vshrl.u32 %v2063, 16
      %v2393 = vrot.slane %v2391, 4
      %v2394 = vshll.u32 %v2063, 16
      %v2396 = vrot.slane %v2394, 5
      %v2397 = vor.u32 %v2393, %v2396
      %v2398 = vrot.slane %v2397, 4
      %v2400 = vshll.u32 %v2064, 16
      %v2402 = vrot.slane %v2400, 5
      %v2403 = vsel %vm2125, %v2398, %v2402
      %v2404 = vshrl.u32 %v2064, 16
      %v2406 = vrot.slane %v2404, 4
      %v2407 = vor.u32 %v2406, %v2402
      %v2408 = vrot.slane %v2407, 4
      %v2410 = vshll.u32 %v2065, 16
      %v2412 = vrot.slane %v2410, 5
      %v2413 = vsel %vm2125, %v2408, %v2412
      %v2414 = vshrl.u32 %v2065, 16
      %v2416 = vrot.slane %v2414, 4
      %v2417 = vor.u32 %v2416, %v2412
      %v2418 = vrot.slane %v2417, 4
      %v2420 = vshll.u32 %v2066, 16
      %v2422 = vrot.slane %v2420, 5
      %v2423 = vsel %vm2125, %v2418, %v2422
      %v2424 = vshrl.u32 %v2066, 16
      %v2426 = vrot.slane %v2424, 4
      %v2427 = vor.u32 %v2426, %v2422
      %v2428 = vrot.slane %v2427, 4
      %v2430 = vshll.u32 %v2067, 16
      %v2432 = vrot.slane %v2430, 5
      %v2433 = vsel %vm2125, %v2428, %v2432
      %v2435 = vshrl.u32 %v2068, 16
      %v2437 = vrot.slane %v2435, 4
      %v2438 = vshll.u32 %v2068, 16
      %v2440 = vrot.slane %v2438, 5
      %v2441 = vor.u32 %v2437, %v2440
      %v2442 = vrot.slane %v2441, 4
      %v2444 = vshll.u32 %v2069, 16
      %v2446 = vrot.slane %v2444, 5
      %v2447 = vsel %vm2125, %v2442, %v2446
      %v2448 = vshrl.u32 %v2069, 16
      %v2450 = vrot.slane %v2448, 4
      %v2451 = vor.u32 %v2450, %v2446
      %v2452 = vrot.slane %v2451, 4
      %v2454 = vshll.u32 %v2070, 16
      %v2456 = vrot.slane %v2454, 5
      %v2457 = vsel %vm2125, %v2452, %v2456
      %v2458 = vshrl.u32 %v2070, 16
      %v2460 = vrot.slane %v2458, 4
      %v2461 = vor.u32 %v2460, %v2456
      %v2462 = vrot.slane %v2461, 4
      %v2464 = vshll.u32 %v2071, 16
      %v2466 = vrot.slane %v2464, 5
      %v2467 = vsel %vm2125, %v2462, %v2466
      %v2468 = vshrl.u32 %v2071, 16
      %v2470 = vrot.slane %v2468, 4
      %v2471 = vor.u32 %v2470, %v2466
      %v2472 = vrot.slane %v2471, 4
      %v2474 = vshll.u32 %v2072, 16
      %v2476 = vrot.slane %v2474, 5
      %v2477 = vsel %vm2125, %v2472, %v2476
      %v2479 = vshrl.u32 %v2073, 16
      %v2481 = vrot.slane %v2479, 4
      %v2482 = vshll.u32 %v2073, 16
      %v2484 = vrot.slane %v2482, 5
      %v2485 = vor.u32 %v2481, %v2484
      %v2486 = vrot.slane %v2485, 4
      %v2488 = vshll.u32 %v2074, 16
      %v2490 = vrot.slane %v2488, 5
      %v2491 = vsel %vm2125, %v2486, %v2490
      %v2492 = vshrl.u32 %v2074, 16
      %v2494 = vrot.slane %v2492, 4
      %v2495 = vor.u32 %v2494, %v2490
      %v2496 = vrot.slane %v2495, 4
      %v2498 = vshll.u32 %v2075, 16
      %v2500 = vrot.slane %v2498, 5
      %v2501 = vsel %vm2125, %v2496, %v2500
      %v2502 = vshrl.u32 %v2075, 16
      %v2504 = vrot.slane %v2502, 4
      %v2505 = vor.u32 %v2504, %v2500
      %v2506 = vrot.slane %v2505, 4
      %v2508 = vshll.u32 %v2076, 16
      %v2510 = vrot.slane %v2508, 5
      %v2511 = vsel %vm2125, %v2506, %v2510
      %v2512 = vshrl.u32 %v2076, 16
      %v2514 = vrot.slane %v2512, 4
      %v2515 = vor.u32 %v2514, %v2510
      %v2516 = vrot.slane %v2515, 4
      %v2518 = vshll.u32 %v2077, 16
      %v2520 = vrot.slane %v2518, 5
      %v2521 = vsel %vm2125, %v2516, %v2520
      %v2523 = vshrl.u32 %v2078, 16
      %v2525 = vrot.slane %v2523, 4
      %v2526 = vshll.u32 %v2078, 16
      %v2528 = vrot.slane %v2526, 5
      %v2529 = vor.u32 %v2525, %v2528
      %v2530 = vrot.slane %v2529, 4
      %v2532 = vshll.u32 %v2079, 16
      %v2534 = vrot.slane %v2532, 5
      %v2535 = vsel %vm2125, %v2530, %v2534
      %v2536 = vshrl.u32 %v2079, 16
      %v2538 = vrot.slane %v2536, 4
      %v2539 = vor.u32 %v2538, %v2534
      %v2540 = vrot.slane %v2539, 4
      %v2542 = vshll.u32 %v2080, 16
      %v2544 = vrot.slane %v2542, 5
      %v2545 = vsel %vm2125, %v2540, %v2544
      %v2546 = vshrl.u32 %v2080, 16
      %v2548 = vrot.slane %v2546, 4
      %v2549 = vor.u32 %v2548, %v2544
      %v2550 = vrot.slane %v2549, 4
      %v2552 = vshll.u32 %v2081, 16
      %v2554 = vrot.slane %v2552, 5
      %v2555 = vsel %vm2125, %v2550, %v2554
      %v2556 = vshrl.u32 %v2081, 16
      %v2558 = vrot.slane %v2556, 4
      %v2559 = vor.u32 %v2558, %v2554
      %v2560 = vrot.slane %v2559, 4
      %v2562 = vshll.u32 %v2082, 16
      %v2564 = vrot.slane %v2562, 5
      %v2565 = vsel %vm2125, %v2560, %v2564
      %v2567 = vshrl.u32 %v2083, 16
      %v2569 = vrot.slane %v2567, 4
      %v2570 = vshll.u32 %v2083, 16
      %v2572 = vrot.slane %v2570, 5
      %v2573 = vor.u32 %v2569, %v2572
      %v2574 = vrot.slane %v2573, 4
      %v2576 = vshll.u32 %v2084, 16
      %v2578 = vrot.slane %v2576, 5
      %v2579 = vsel %vm2125, %v2574, %v2578
      %v2580 = vshrl.u32 %v2084, 16
      %v2582 = vrot.slane %v2580, 4
      %v2583 = vor.u32 %v2582, %v2578
      %v2584 = vrot.slane %v2583, 4
      %v2586 = vshll.u32 %v2085, 16
      %v2588 = vrot.slane %v2586, 5
      %v2589 = vsel %vm2125, %v2584, %v2588
      %v2590 = vshrl.u32 %v2085, 16
      %v2592 = vrot.slane %v2590, 4
      %v2593 = vor.u32 %v2592, %v2588
      %v2594 = vrot.slane %v2593, 4
      %v2596 = vshll.u32 %v2086, 16
      %v2598 = vrot.slane %v2596, 5
      %v2599 = vsel %vm2125, %v2594, %v2598
      %v2600 = vshrl.u32 %v2086, 16
      %v2602 = vrot.slane %v2600, 4
      %v2603 = vor.u32 %v2602, %v2598
      %v2604 = vrot.slane %v2603, 4
      %v2606 = vshll.u32 %v2087, 16
      %v2608 = vrot.slane %v2606, 5
      %v2609 = vsel %vm2125, %v2604, %v2608
      %v2611 = vshrl.u32 %v2088, 16
      %v2613 = vrot.slane %v2611, 4
      %v2614 = vshll.u32 %v2088, 16
      %v2616 = vrot.slane %v2614, 5
      %v2617 = vor.u32 %v2613, %v2616
      %v2618 = vrot.slane %v2617, 4
      %v2620 = vshll.u32 %v2089, 16
      %v2622 = vrot.slane %v2620, 5
      %v2623 = vsel %vm2125, %v2618, %v2622
      %v2624 = vshrl.u32 %v2089, 16
      %v2626 = vrot.slane %v2624, 4
      %v2627 = vor.u32 %v2626, %v2622
      %v2628 = vrot.slane %v2627, 4
      %v2630 = vshll.u32 %v2090, 16
      %v2632 = vrot.slane %v2630, 5
      %v2633 = vsel %vm2125, %v2628, %v2632
      %v2634 = vshrl.u32 %v2090, 16
      %v2636 = vrot.slane %v2634, 4
      %v2637 = vor.u32 %v2636, %v2632
      %v2638 = vrot.slane %v2637, 4
      %v2640 = vshll.u32 %v2091, 16
      %v2642 = vrot.slane %v2640, 5
      %v2643 = vsel %vm2125, %v2638, %v2642
      %v2644 = vshrl.u32 %v2091, 16
      %v2646 = vrot.slane %v2644, 4
      %v2647 = vor.u32 %v2646, %v2642
      %v2648 = vrot.slane %v2647, 4
      %v2650 = vshll.u32 %v2092, 16
      %v2652 = vrot.slane %v2650, 5
      %v2653 = vsel %vm2125, %v2648, %v2652
      %v2655 = vshrl.u32 %v2093, 16
      %v2657 = vrot.slane %v2655, 4
      %v2658 = vshll.u32 %v2093, 16
      %v2660 = vrot.slane %v2658, 5
      %v2661 = vor.u32 %v2657, %v2660
      %v2662 = vrot.slane %v2661, 4
      %v2664 = vshll.u32 %v2094, 16
      %v2666 = vrot.slane %v2664, 5
      %v2667 = vsel %vm2125, %v2662, %v2666
      %v2668 = vshrl.u32 %v2094, 16
      %v2670 = vrot.slane %v2668, 4
      %v2671 = vor.u32 %v2670, %v2666
      %v2672 = vrot.slane %v2671, 4
      %v2674 = vshll.u32 %v2095, 16
      %v2676 = vrot.slane %v2674, 5
      %v2677 = vsel %vm2125, %v2672, %v2676
      %v2678 = vshrl.u32 %v2095, 16
      %v2680 = vrot.slane %v2678, 4
      %v2681 = vor.u32 %v2680, %v2676
      %v2682 = vrot.slane %v2681, 4
      %v2684 = vshll.u32 %v2096, 16
      %v2686 = vrot.slane %v2684, 5
      %v2687 = vsel %vm2125, %v2682, %v2686
      %v2688 = vshrl.u32 %v2096, 16
      %v2690 = vrot.slane %v2688, 4
      %v2691 = vor.u32 %v2690, %v2686
      %v2692 = vrot.slane %v2691, 4
      %v2694 = vshll.u32 %v2097, 16
      %v2696 = vrot.slane %v2694, 5
      %v2697 = vsel %vm2125, %v2692, %v2696
      %v2699 = vshrl.u32 %v2098, 16
      %v2701 = vrot.slane %v2699, 4
      %v2702 = vshll.u32 %v2098, 16
      %v2704 = vrot.slane %v2702, 5
      %v2705 = vor.u32 %v2701, %v2704
      %v2706 = vrot.slane %v2705, 4
      %v2708 = vshll.u32 %v2099, 16
      %v2710 = vrot.slane %v2708, 5
      %v2711 = vsel %vm2125, %v2706, %v2710
      %v2712 = vshrl.u32 %v2099, 16
      %v2714 = vrot.slane %v2712, 4
      %v2715 = vor.u32 %v2714, %v2710
      %v2716 = vrot.slane %v2715, 4
      %v2718 = vshll.u32 %v2100, 16
      %v2720 = vrot.slane %v2718, 5
      %v2721 = vsel %vm2125, %v2716, %v2720
      %v2722 = vshrl.u32 %v2100, 16
      %v2724 = vrot.slane %v2722, 4
      %v2725 = vor.u32 %v2724, %v2720
      %v2726 = vrot.slane %v2725, 4
      %v2728 = vshll.u32 %v2101, 16
      %v2730 = vrot.slane %v2728, 5
      %v2731 = vsel %vm2125, %v2726, %v2730
      %v2732 = vshrl.u32 %v2101, 16
      %v2734 = vrot.slane %v2732, 4
      %v2735 = vor.u32 %v2734, %v2730
      %v2736 = vrot.slane %v2735, 4
      %v2738 = vshll.u32 %v2102, 16
      %v2740 = vrot.slane %v2738, 5
      %v2741 = vsel %vm2125, %v2736, %v2740
      %v2743 = vshrl.u32 %v2103, 16
      %v2745 = vrot.slane %v2743, 4
      %v2746 = vshll.u32 %v2103, 16
      %v2748 = vrot.slane %v2746, 5
      %v2749 = vor.u32 %v2745, %v2748
      %v2750 = vrot.slane %v2749, 4
      %v2752 = vshll.u32 %v2104, 16
      %v2754 = vrot.slane %v2752, 5
      %v2755 = vsel %vm2125, %v2750, %v2754
      %v2756 = vshrl.u32 %v2104, 16
      %v2758 = vrot.slane %v2756, 4
      %v2759 = vor.u32 %v2758, %v2754
      %v2760 = vrot.slane %v2759, 4
      %v2762 = vshll.u32 %v2105, 16
      %v2764 = vrot.slane %v2762, 5
      %v2765 = vsel %vm2125, %v2760, %v2764
      %v2766 = vshrl.u32 %v2105, 16
      %v2768 = vrot.slane %v2766, 4
      %v2769 = vor.u32 %v2768, %v2764
      %v2770 = vrot.slane %v2769, 4
      %v2772 = vshll.u32 %v2106, 16
      %v2774 = vrot.slane %v2772, 5
      %v2775 = vsel %vm2125, %v2770, %v2774
      %v2776 = vshrl.u32 %v2106, 16
      %v2778 = vrot.slane %v2776, 4
      %v2779 = vor.u32 %v2778, %v2774
      %v2780 = vrot.slane %v2779, 4
      %v2782 = vshll.u32 %v2107, 16
      %v2784 = vrot.slane %v2782, 5
      %v2785 = vsel %vm2125, %v2780, %v2784
      %v2787 = vshrl.u32 %v2108, 16
      %v2789 = vrot.slane %v2787, 4
      %v2790 = vshll.u32 %v2108, 16
      %v2792 = vrot.slane %v2790, 5
      %v2793 = vor.u32 %v2789, %v2792
      %v2794 = vrot.slane %v2793, 4
      %v2796 = vshll.u32 %v2109, 16
      %v2798 = vrot.slane %v2796, 5
      %v2799 = vsel %vm2125, %v2794, %v2798
      %v2800 = vshrl.u32 %v2109, 16
      %v2802 = vrot.slane %v2800, 4
      %v2803 = vor.u32 %v2802, %v2798
      %v2804 = vrot.slane %v2803, 4
      %v2806 = vshll.u32 %v2110, 16
      %v2808 = vrot.slane %v2806, 5
      %v2809 = vsel %vm2125, %v2804, %v2808
      %v2810 = vshrl.u32 %v2110, 16
      %v2812 = vrot.slane %v2810, 4
      %v2813 = vor.u32 %v2812, %v2808
      %v2814 = vrot.slane %v2813, 4
      %v2816 = vshll.u32 %v2111, 16
      %v2818 = vrot.slane %v2816, 5
      %v2819 = vsel %vm2125, %v2814, %v2818
      %v2820 = vshrl.u32 %v2111, 16
      %v2822 = vrot.slane %v2820, 4
      %v2823 = vor.u32 %v2822, %v2818
      %v2824 = vrot.slane %v2823, 4
      %v2826 = vshll.u32 %v2112, 16
      %v2828 = vrot.slane %v2826, 5
      %v2829 = vsel %vm2125, %v2824, %v2828
      %vm2910 = vcmask 1042432
      %vm2911 = vcmask 1046532
      %vm2912 = vmor %vm2910, %vm2911
      %v2913 = vrot.slane %v2033, 5
      %v2914 = vrot.slane %v2913, 4
      %v2915 = vrot.slane %v2034, 5
      %v2916 = vsel %vm2912, %v2914, %v2915
      %v2917 = vrot.slane %v2915, 4
      %v2918 = vrot.slane %v2035, 5
      %v2919 = vsel %vm2912, %v2917, %v2918
      %v2920 = vrot.slane %v2918, 4
      %v2921 = vrot.slane %v2036, 5
      %v2922 = vsel %vm2912, %v2920, %v2921
      %v2923 = vrot.slane %v2921, 4
      %v2924 = vrot.slane %v2037, 5
      %v2925 = vsel %vm2912, %v2923, %v2924
      %v2926 = vrot.slane %v2038, 5
      %v2927 = vrot.slane %v2926, 4
      %v2928 = vrot.slane %v2039, 5
      %v2929 = vsel %vm2912, %v2927, %v2928
      %v2930 = vrot.slane %v2928, 4
      %v2931 = vrot.slane %v2040, 5
      %v2932 = vsel %vm2912, %v2930, %v2931
      %v2933 = vrot.slane %v2931, 4
      %v2934 = vrot.slane %v2041, 5
      %v2935 = vsel %vm2912, %v2933, %v2934
      %v2936 = vrot.slane %v2934, 4
      %v2937 = vrot.slane %v2042, 5
      %v2938 = vsel %vm2912, %v2936, %v2937
      %v2939 = vrot.slane %v2043, 5
      %v2940 = vrot.slane %v2939, 4
      %v2941 = vrot.slane %v2044, 5
      %v2942 = vsel %vm2912, %v2940, %v2941
      %v2943 = vrot.slane %v2941, 4
      %v2944 = vrot.slane %v2045, 5
      %v2945 = vsel %vm2912, %v2943, %v2944
      %v2946 = vrot.slane %v2944, 4
      %v2947 = vrot.slane %v2046, 5
      %v2948 = vsel %vm2912, %v2946, %v2947
      %v2949 = vrot.slane %v2947, 4
      %v2950 = vrot.slane %v2047, 5
      %v2951 = vsel %vm2912, %v2949, %v2950
      %v2952 = vrot.slane %v2048, 5
      %v2953 = vrot.slane %v2952, 4
      %v2954 = vrot.slane %v2049, 5
      %v2955 = vsel %vm2912, %v2953, %v2954
      %v2956 = vrot.slane %v2954, 4
      %v2957 = vrot.slane %v2050, 5
      %v2958 = vsel %vm2912, %v2956, %v2957
      %v2959 = vrot.slane %v2957, 4
      %v2960 = vrot.slane %v2051, 5
      %v2961 = vsel %vm2912, %v2959, %v2960
      %v2962 = vrot.slane %v2960, 4
      %v2963 = vrot.slane %v2052, 5
      %v2964 = vsel %vm2912, %v2962, %v2963
      %v2965 = vrot.slane %v2053, 5
      %v2966 = vrot.slane %v2965, 4
      %v2967 = vrot.slane %v2054, 5
      %v2968 = vsel %vm2912, %v2966, %v2967
      %v2969 = vrot.slane %v2967, 4
      %v2970 = vrot.slane %v2055, 5
      %v2971 = vsel %vm2912, %v2969, %v2970
      %v2972 = vrot.slane %v2970, 4
      %v2973 = vrot.slane %v2056, 5
      %v2974 = vsel %vm2912, %v2972, %v2973
      %v2975 = vrot.slane %v2973, 4
      %v2976 = vrot.slane %v2057, 5
      %v2977 = vsel %vm2912, %v2975, %v2976
      %v2978 = vrot.slane %v2058, 5
      %v2979 = vrot.slane %v2978, 4
      %v2980 = vrot.slane %v2059, 5
      %v2981 = vsel %vm2912, %v2979, %v2980
      %v2982 = vrot.slane %v2980, 4
      %v2983 = vrot.slane %v2060, 5
      %v2984 = vsel %vm2912, %v2982, %v2983
      %v2985 = vrot.slane %v2983, 4
      %v2986 = vrot.slane %v2061, 5
      %v2987 = vsel %vm2912, %v2985, %v2986
      %v2988 = vrot.slane %v2986, 4
      %v2989 = vrot.slane %v2062, 5
      %v2990 = vsel %vm2912, %v2988, %v2989
      %v2991 = vrot.slane %v2063, 5
      %v2992 = vrot.slane %v2991, 4
      %v2993 = vrot.slane %v2064, 5
      %v2994 = vsel %vm2912, %v2992, %v2993
      %v2995 = vrot.slane %v2993, 4
      %v2996 = vrot.slane %v2065, 5
      %v2997 = vsel %vm2912, %v2995, %v2996
      %v2998 = vrot.slane %v2996, 4
      %v2999 = vrot.slane %v2066, 5
      %v3000 = vsel %vm2912, %v2998, %v2999
      %v3001 = vrot.slane %v2999, 4
      %v3002 = vrot.slane %v2067, 5
      %v3003 = vsel %vm2912, %v3001, %v3002
      %v3004 = vrot.slane %v2068, 5
      %v3005 = vrot.slane %v3004, 4
      %v3006 = vrot.slane %v2069, 5
      %v3007 = vsel %vm2912, %v3005, %v3006
      %v3008 = vrot.slane %v3006, 4
      %v3009 = vrot.slane %v2070, 5
      %v3010 = vsel %vm2912, %v3008, %v3009
      %v3011 = vrot.slane %v3009, 4
      %v3012 = vrot.slane %v2071, 5
      %v3013 = vsel %vm2912, %v3011, %v3012
      %v3014 = vrot.slane %v3012, 4
      %v3015 = vrot.slane %v2072, 5
      %v3016 = vsel %vm2912, %v3014, %v3015
      %v3017 = vrot.slane %v2073, 5
      %v3018 = vrot.slane %v3017, 4
      %v3019 = vrot.slane %v2074, 5
      %v3020 = vsel %vm2912, %v3018, %v3019
      %v3021 = vrot.slane %v3019, 4
      %v3022 = vrot.slane %v2075, 5
      %v3023 = vsel %vm2912, %v3021, %v3022
      %v3024 = vrot.slane %v3022, 4
      %v3025 = vrot.slane %v2076, 5
      %v3026 = vsel %vm2912, %v3024, %v3025
      %v3027 = vrot.slane %v3025, 4
      %v3028 = vrot.slane %v2077, 5
      %v3029 = vsel %vm2912, %v3027, %v3028
      %v3030 = vrot.slane %v2078, 5
      %v3031 = vrot.slane %v3030, 4
      %v3032 = vrot.slane %v2079, 5
      %v3033 = vsel %vm2912, %v3031, %v3032
      %v3034 = vrot.slane %v3032, 4
      %v3035 = vrot.slane %v2080, 5
      %v3036 = vsel %vm2912, %v3034, %v3035
      %v3037 = vrot.slane %v3035, 4
      %v3038 = vrot.slane %v2081, 5
      %v3039 = vsel %vm2912, %v3037, %v3038
      %v3040 = vrot.slane %v3038, 4
      %v3041 = vrot.slane %v2082, 5
      %v3042 = vsel %vm2912, %v3040, %v3041
      %v3043 = vrot.slane %v2083, 5
      %v3044 = vrot.slane %v3043, 4
      %v3045 = vrot.slane %v2084, 5
      %v3046 = vsel %vm2912, %v3044, %v3045
      %v3047 = vrot.slane %v3045, 4
      %v3048 = vrot.slane %v2085, 5
      %v3049 = vsel %vm2912, %v3047, %v3048
      %v3050 = vrot.slane %v3048, 4
      %v3051 = vrot.slane %v2086, 5
      %v3052 = vsel %vm2912, %v3050, %v3051
      %v3053 = vrot.slane %v3051, 4
      %v3054 = vrot.slane %v2087, 5
      %v3055 = vsel %vm2912, %v3053, %v3054
      %v3056 = vrot.slane %v2088, 5
      %v3057 = vrot.slane %v3056, 4
      %v3058 = vrot.slane %v2089, 5
      %v3059 = vsel %vm2912, %v3057, %v3058
      %v3060 = vrot.slane %v3058, 4
      %v3061 = vrot.slane %v2090, 5
      %v3062 = vsel %vm2912, %v3060, %v3061
      %v3063 = vrot.slane %v3061, 4
      %v3064 = vrot.slane %v2091, 5
      %v3065 = vsel %vm2912, %v3063, %v3064
      %v3066 = vrot.slane %v3064, 4
      %v3067 = vrot.slane %v2092, 5
      %v3068 = vsel %vm2912, %v3066, %v3067
      %v3069 = vrot.slane %v2093, 5
      %v3070 = vrot.slane %v3069, 4
      %v3071 = vrot.slane %v2094, 5
      %v3072 = vsel %vm2912, %v3070, %v3071
      %v3073 = vrot.slane %v3071, 4
      %v3074 = vrot.slane %v2095, 5
      %v3075 = vsel %vm2912, %v3073, %v3074
      %v3076 = vrot.slane %v3074, 4
      %v3077 = vrot.slane %v2096, 5
      %v3078 = vsel %vm2912, %v3076, %v3077
      %v3079 = vrot.slane %v3077, 4
      %v3080 = vrot.slane %v2097, 5
      %v3081 = vsel %vm2912, %v3079, %v3080
      %v3082 = vrot.slane %v2098, 5
      %v3083 = vrot.slane %v3082, 4
      %v3084 = vrot.slane %v2099, 5
      %v3085 = vsel %vm2912, %v3083, %v3084
      %v3086 = vrot.slane %v3084, 4
      %v3087 = vrot.slane %v2100, 5
      %v3088 = vsel %vm2912, %v3086, %v3087
      %v3089 = vrot.slane %v3087, 4
      %v3090 = vrot.slane %v2101, 5
      %v3091 = vsel %vm2912, %v3089, %v3090
      %v3092 = vrot.slane %v3090, 4
      %v3093 = vrot.slane %v2102, 5
      %v3094 = vsel %vm2912, %v3092, %v3093
      %v3095 = vrot.slane %v2103, 5
      %v3096 = vrot.slane %v3095, 4
      %v3097 = vrot.slane %v2104, 5
      %v3098 = vsel %vm2912, %v3096, %v3097
      %v3099 = vrot.slane %v3097, 4
      %v3100 = vrot.slane %v2105, 5
      %v3101 = vsel %vm2912, %v3099, %v3100
      %v3102 = vrot.slane %v3100, 4
      %v3103 = vrot.slane %v2106, 5
      %v3104 = vsel %vm2912, %v3102, %v3103
      %v3105 = vrot.slane %v3103, 4
      %v3106 = vrot.slane %v2107, 5
      %v3107 = vsel %vm2912, %v3105, %v3106
      %v3108 = vrot.slane %v2108, 5
      %v3109 = vrot.slane %v3108, 4
      %v3110 = vrot.slane %v2109, 5
      %v3111 = vsel %vm2912, %v3109, %v3110
      %v3112 = vrot.slane %v3110, 4
      %v3113 = vrot.slane %v2110, 5
      %v3114 = vsel %vm2912, %v3112, %v3113
      %v3115 = vrot.slane %v3113, 4
      %v3116 = vrot.slane %v2111, 5
      %v3117 = vsel %vm2912, %v3115, %v3116
      %v3118 = vrot.slane %v3116, 4
      %v3119 = vrot.slane %v2112, 5
      %v3120 = vsel %vm2912, %v3118, %v3119
      %v3122 = vshrl.u32 %v2113, 16
      %v3124 = vrot.slane %v3122, 4
      %v3125 = vshll.u32 %v2113, 16
      %v3127 = vrot.slane %v3125, 5
      %v3128 = vor.u32 %v3124, %v3127
      %v3129 = vrot.slane %v3128, 4
      %v3131 = vshll.u32 %v2114, 16
      %v3133 = vrot.slane %v3131, 5
      %v3134 = vsel %vm2125, %v3129, %v3133
      %v3135 = vshrl.u32 %v2114, 16
      %v3137 = vrot.slane %v3135, 4
      %v3138 = vor.u32 %v3137, %v3133
      %v3139 = vrot.slane %v3138, 4
      %v3141 = vshll.u32 %v2115, 16
      %v3143 = vrot.slane %v3141, 5
      %v3144 = vsel %vm2125, %v3139, %v3143
      %v3145 = vshrl.u32 %v2115, 16
      %v3147 = vrot.slane %v3145, 4
      %v3148 = vor.u32 %v3147, %v3143
      %v3149 = vrot.slane %v3148, 4
      %v3151 = vshll.u32 %v2116, 16
      %v3153 = vrot.slane %v3151, 5
      %v3154 = vsel %vm2125, %v3149, %v3153
      %v3155 = vshrl.u32 %v2116, 16
      %v3157 = vrot.slane %v3155, 4
      %v3158 = vor.u32 %v3157, %v3153
      %v3159 = vrot.slane %v3158, 4
      %v3161 = vshll.u32 %v2117, 16
      %v3163 = vrot.slane %v3161, 5
      %v3164 = vsel %vm2125, %v3159, %v3163
      %v3170 = vrot.slane %v2113, 5
      %v3171 = vrot.slane %v3170, 4
      %v3172 = vrot.slane %v2114, 5
      %v3173 = vsel %vm2912, %v3171, %v3172
      %v3174 = vrot.slane %v3172, 4
      %v3175 = vrot.slane %v2115, 5
      %v3176 = vsel %vm2912, %v3174, %v3175
      %v3177 = vrot.slane %v3175, 4
      %v3178 = vrot.slane %v2116, 5
      %v3179 = vsel %vm2912, %v3177, %v3178
      %v3180 = vrot.slane %v3178, 4
      %v3181 = vrot.slane %v2117, 5
      %v3182 = vsel %vm2912, %v3180, %v3181
      %v3184 = vshrl.u32 %v2118, 16
      %v3186 = vrot.slane %v3184, 4
      %v3187 = vshll.u32 %v2118, 16
      %v3189 = vrot.slane %v3187, 5
      %v3190 = vor.u32 %v3186, %v3189
      %v3191 = vrot.slane %v3190, 4
      %v3193 = vshll.u32 %v2119, 16
      %v3195 = vrot.slane %v3193, 5
      %v3196 = vsel %vm2125, %v3191, %v3195
      %v3197 = vshrl.u32 %v2119, 16
      %v3199 = vrot.slane %v3197, 4
      %v3200 = vor.u32 %v3199, %v3195
      %v3201 = vrot.slane %v3200, 4
      %v3203 = vshll.u32 %v2120, 16
      %v3205 = vrot.slane %v3203, 5
      %v3206 = vsel %vm2125, %v3201, %v3205
      %v3207 = vshrl.u32 %v2120, 16
      %v3209 = vrot.slane %v3207, 4
      %v3210 = vor.u32 %v3209, %v3205
      %v3211 = vrot.slane %v3210, 4
      %v3213 = vshll.u32 %v2121, 16
      %v3215 = vrot.slane %v3213, 5
      %v3216 = vsel %vm2125, %v3211, %v3215
      %v3217 = vshrl.u32 %v2121, 16
      %v3219 = vrot.slane %v3217, 4
      %v3220 = vor.u32 %v3219, %v3215
      %v3221 = vrot.slane %v3220, 4
      %v3223 = vshll.u32 %v2122, 16
      %v3225 = vrot.slane %v3223, 5
      %v3226 = vsel %vm2125, %v3221, %v3225
      %v3232 = vrot.slane %v2118, 5
      %v3233 = vrot.slane %v3232, 4
      %v3234 = vrot.slane %v2119, 5
      %v3235 = vsel %vm2912, %v3233, %v3234
      %v3236 = vrot.slane %v3234, 4
      %v3237 = vrot.slane %v2120, 5
      %v3238 = vsel %vm2912, %v3236, %v3237
      %v3239 = vrot.slane %v3237, 4
      %v3240 = vrot.slane %v2121, 5
      %v3241 = vsel %vm2912, %v3239, %v3240
      %v3242 = vrot.slane %v3240, 4
      %v3243 = vrot.slane %v2122, 5
      %v3244 = vsel %vm2912, %v3242, %v3243
      %v3245 = vunpack.c.l.b16 %v2033
      %v3246 = vunpack.c.l.b16 %v2034
      %v3247 = vunpack.c.l.b16 %v2035
      %v3248 = vunpack.c.l.b16 %v2036
      %v3249 = vunpack.c.l.b16 %v2038
      %v3250 = vunpack.c.l.b16 %v2039
      %v3251 = vunpack.c.l.b16 %v2040
      %v3252 = vunpack.c.l.b16 %v2041
      %v3253 = vunpack.c.l.b16 %v2043
      %v3254 = vunpack.c.l.b16 %v2044
      %v3255 = vunpack.c.l.b16 %v2045
      %v3256 = vunpack.c.l.b16 %v2046
      %v3257 = vunpack.c.l.b16 %v2048
      %v3258 = vunpack.c.l.b16 %v2049
      %v3259 = vunpack.c.l.b16 %v2050
      %v3260 = vunpack.c.l.b16 %v2051
      %v3261 = vunpack.c.l.b16 %v2053
      %v3262 = vunpack.c.l.b16 %v2054
      %v3263 = vunpack.c.l.b16 %v2055
      %v3264 = vunpack.c.l.b16 %v2056
      %v3265 = vunpack.c.l.b16 %v2058
      %v3266 = vunpack.c.l.b16 %v2059
      %v3267 = vunpack.c.l.b16 %v2060
      %v3268 = vunpack.c.l.b16 %v2061
      %v3269 = vunpack.c.l.b16 %v2063
      %v3270 = vunpack.c.l.b16 %v2064
      %v3271 = vunpack.c.l.b16 %v2065
      %v3272 = vunpack.c.l.b16 %v2066
      %v3273 = vunpack.c.l.b16 %v2068
      %v3274 = vunpack.c.l.b16 %v2069
      %v3275 = vunpack.c.l.b16 %v2070
      %v3276 = vunpack.c.l.b16 %v2071
      %v3277 = vunpack.c.l.b16 %v2073
      %v3278 = vunpack.c.l.b16 %v2074
      %v3279 = vunpack.c.l.b16 %v2075
      %v3280 = vunpack.c.l.b16 %v2076
      %v3281 = vunpack.c.l.b16 %v2078
      %v3282 = vunpack.c.l.b16 %v2079
      %v3283 = vunpack.c.l.b16 %v2080
      %v3284 = vunpack.c.l.b16 %v2081
      %v3285 = vunpack.c.l.b16 %v2083
      %v3286 = vunpack.c.l.b16 %v2084
      %v3287 = vunpack.c.l.b16 %v2085
      %v3288 = vunpack.c.l.b16 %v2086
      %v3289 = vunpack.c.l.b16 %v2088
      %v3290 = vunpack.c.l.b16 %v2089
      %v3291 = vunpack.c.l.b16 %v2090
      %v3292 = vunpack.c.l.b16 %v2091
      %v3293 = vunpack.c.l.b16 %v2093
      %v3294 = vunpack.c.l.b16 %v2094
      %v3295 = vunpack.c.l.b16 %v2095
      %v3296 = vunpack.c.l.b16 %v2096
      %v3297 = vunpack.c.l.b16 %v2098
      %v3298 = vunpack.c.l.b16 %v2099
      %v3299 = vunpack.c.l.b16 %v2100
      %v3300 = vunpack.c.l.b16 %v2101
      %v3301 = vunpack.c.l.b16 %v2103
      %v3302 = vunpack.c.l.b16 %v2104
      %v3303 = vunpack.c.l.b16 %v2105
      %v3304 = vunpack.c.l.b16 %v2106
      %v3305 = vunpack.c.l.b16 %v2108
      %v3306 = vunpack.c.l.b16 %v2109
      %v3307 = vunpack.c.l.b16 %v2110
      %v3308 = vunpack.c.l.b16 %v2111
      %v3309 = vpack.c.b16 %v3246, %v3245
      %v3310 = vpack.c.b16 %v3248, %v3247
      %v3311 = vpack.c.b16 %v3250, %v3249
      %v3312 = vpack.c.b16 %v3252, %v3251
      %v3313 = vpack.c.b16 %v3254, %v3253
      %v3314 = vpack.c.b16 %v3256, %v3255
      %v3315 = vpack.c.b16 %v3258, %v3257
      %v3316 = vpack.c.b16 %v3260, %v3259
      %v3317 = vpack.c.b16 %v3262, %v3261
      %v3318 = vpack.c.b16 %v3264, %v3263
      %v3319 = vpack.c.b16 %v3266, %v3265
      %v3320 = vpack.c.b16 %v3268, %v3267
      %v3321 = vpack.c.b16 %v3270, %v3269
      %v3322 = vpack.c.b16 %v3272, %v3271
      %v3323 = vpack.c.b16 %v3274, %v3273
      %v3324 = vpack.c.b16 %v3276, %v3275
      %v3325 = vpack.c.b16 %v3278, %v3277
      %v3326 = vpack.c.b16 %v3280, %v3279
      %v3327 = vpack.c.b16 %v3282, %v3281
      %v3328 = vpack.c.b16 %v3284, %v3283
      %v3329 = vpack.c.b16 %v3286, %v3285
      %v3330 = vpack.c.b16 %v3288, %v3287
      %v3331 = vpack.c.b16 %v3290, %v3289
      %v3332 = vpack.c.b16 %v3292, %v3291
      %v3333 = vpack.c.b16 %v3294, %v3293
      %v3334 = vpack.c.b16 %v3296, %v3295
      %v3335 = vpack.c.b16 %v3298, %v3297
      %v3336 = vpack.c.b16 %v3300, %v3299
      %v3337 = vpack.c.b16 %v3302, %v3301
      %v3338 = vpack.c.b16 %v3304, %v3303
      %v3339 = vpack.c.b16 %v3306, %v3305
      %v3340 = vpack.c.b16 %v3308, %v3307
      %v3341 = vunpack.c.l.b16 %v2139
      %v3342 = vunpack.c.l.b16 %v2149
      %v3343 = vunpack.c.l.b16 %v2159
      %v3344 = vunpack.c.l.b16 %v2169
      %v3345 = vunpack.c.l.b16 %v2183
      %v3346 = vunpack.c.l.b16 %v2193
      %v3347 = vunpack.c.l.b16 %v2203
      %v3348 = vunpack.c.l.b16 %v2213
      %v3349 = vunpack.c.l.b16 %v2227
      %v3350 = vunpack.c.l.b16 %v2237
      %v3351 = vunpack.c.l.b16 %v2247
      %v3352 = vunpack.c.l.b16 %v2257
      %v3353 = vunpack.c.l.b16 %v2271
      %v3354 = vunpack.c.l.b16 %v2281
      %v3355 = vunpack.c.l.b16 %v2291
      %v3356 = vunpack.c.l.b16 %v2301
      %v3357 = vunpack.c.l.b16 %v2315
      %v3358 = vunpack.c.l.b16 %v2325
      %v3359 = vunpack.c.l.b16 %v2335
      %v3360 = vunpack.c.l.b16 %v2345
      %v3361 = vunpack.c.l.b16 %v2359
      %v3362 = vunpack.c.l.b16 %v2369
      %v3363 = vunpack.c.l.b16 %v2379
      %v3364 = vunpack.c.l.b16 %v2389
      %v3365 = vunpack.c.l.b16 %v2403
      %v3366 = vunpack.c.l.b16 %v2413
      %v3367 = vunpack.c.l.b16 %v2423
      %v3368 = vunpack.c.l.b16 %v2433
      %v3369 = vunpack.c.l.b16 %v2447
      %v3370 = vunpack.c.l.b16 %v2457
      %v3371 = vunpack.c.l.b16 %v2467
      %v3372 = vunpack.c.l.b16 %v2477
      %v3373 = vunpack.c.l.b16 %v2491
      %v3374 = vunpack.c.l.b16 %v2501
      %v3375 = vunpack.c.l.b16 %v2511
      %v3376 = vunpack.c.l.b16 %v2521
      %v3377 = vunpack.c.l.b16 %v2535
      %v3378 = vunpack.c.l.b16 %v2545
      %v3379 = vunpack.c.l.b16 %v2555
      %v3380 = vunpack.c.l.b16 %v2565
      %v3381 = vunpack.c.l.b16 %v2579
      %v3382 = vunpack.c.l.b16 %v2589
      %v3383 = vunpack.c.l.b16 %v2599
      %v3384 = vunpack.c.l.b16 %v2609
      %v3385 = vunpack.c.l.b16 %v2623
      %v3386 = vunpack.c.l.b16 %v2633
      %v3387 = vunpack.c.l.b16 %v2643
      %v3388 = vunpack.c.l.b16 %v2653
      %v3389 = vunpack.c.l.b16 %v2667
      %v3390 = vunpack.c.l.b16 %v2677
      %v3391 = vunpack.c.l.b16 %v2687
      %v3392 = vunpack.c.l.b16 %v2697
      %v3393 = vunpack.c.l.b16 %v2711
      %v3394 = vunpack.c.l.b16 %v2721
      %v3395 = vunpack.c.l.b16 %v2731
      %v3396 = vunpack.c.l.b16 %v2741
      %v3397 = vunpack.c.l.b16 %v2755
      %v3398 = vunpack.c.l.b16 %v2765
      %v3399 = vunpack.c.l.b16 %v2775
      %v3400 = vunpack.c.l.b16 %v2785
      %v3401 = vunpack.c.l.b16 %v2799
      %v3402 = vunpack.c.l.b16 %v2809
      %v3403 = vunpack.c.l.b16 %v2819
      %v3404 = vunpack.c.l.b16 %v2829
      %v3405 = vpack.c.b16 %v3342, %v3341
      %v3406 = vpack.c.b16 %v3344, %v3343
      %v3407 = vpack.c.b16 %v3346, %v3345
      %v3408 = vpack.c.b16 %v3348, %v3347
      %v3409 = vpack.c.b16 %v3350, %v3349
      %v3410 = vpack.c.b16 %v3352, %v3351
      %v3411 = vpack.c.b16 %v3354, %v3353
      %v3412 = vpack.c.b16 %v3356, %v3355
      %v3413 = vpack.c.b16 %v3358, %v3357
      %v3414 = vpack.c.b16 %v3360, %v3359
      %v3415 = vpack.c.b16 %v3362, %v3361
      %v3416 = vpack.c.b16 %v3364, %v3363
      %v3417 = vpack.c.b16 %v3366, %v3365
      %v3418 = vpack.c.b16 %v3368, %v3367
      %v3419 = vpack.c.b16 %v3370, %v3369
      %v3420 = vpack.c.b16 %v3372, %v3371
      %v3421 = vpack.c.b16 %v3374, %v3373
      %v3422 = vpack.c.b16 %v3376, %v3375
      %v3423 = vpack.c.b16 %v3378, %v3377
      %v3424 = vpack.c.b16 %v3380, %v3379
      %v3425 = vpack.c.b16 %v3382, %v3381
      %v3426 = vpack.c.b16 %v3384, %v3383
      %v3427 = vpack.c.b16 %v3386, %v3385
      %v3428 = vpack.c.b16 %v3388, %v3387
      %v3429 = vpack.c.b16 %v3390, %v3389
      %v3430 = vpack.c.b16 %v3392, %v3391
      %v3431 = vpack.c.b16 %v3394, %v3393
      %v3432 = vpack.c.b16 %v3396, %v3395
      %v3433 = vpack.c.b16 %v3398, %v3397
      %v3434 = vpack.c.b16 %v3400, %v3399
      %v3435 = vpack.c.b16 %v3402, %v3401
      %v3436 = vpack.c.b16 %v3404, %v3403
      %3437 = vrot.lane.b32.xlu0 %v3405, 32
      %v3438 = vpop.permute.xlu0 %3437
      %3439 = vrot.lane.b32.xlu0 %v3406, 32
      %v3440 = vpop.permute.xlu0 %3439
      %3441 = vrot.lane.b32.xlu0 %v3407, 32
      %v3442 = vpop.permute.xlu0 %3441
      %3443 = vrot.lane.b32.xlu0 %v3408, 32
      %v3444 = vpop.permute.xlu0 %3443
      %3445 = vrot.lane.b32.xlu0 %v3409, 32
      %v3446 = vpop.permute.xlu0 %3445
      %3447 = vrot.lane.b32.xlu0 %v3410, 32
      %v3448 = vpop.permute.xlu0 %3447
      %3449 = vrot.lane.b32.xlu0 %v3411, 32
      %v3450 = vpop.permute.xlu0 %3449
      %3451 = vrot.lane.b32.xlu0 %v3412, 32
      %v3452 = vpop.permute.xlu0 %3451
      %3453 = vrot.lane.b32.xlu0 %v3413, 32
      %v3454 = vpop.permute.xlu0 %3453
      %3455 = vrot.lane.b32.xlu0 %v3414, 32
      %v3456 = vpop.permute.xlu0 %3455
      %3457 = vrot.lane.b32.xlu0 %v3415, 32
      %v3458 = vpop.permute.xlu0 %3457
      %3459 = vrot.lane.b32.xlu0 %v3416, 32
      %v3460 = vpop.permute.xlu0 %3459
      %3461 = vrot.lane.b32.xlu0 %v3417, 32
      %v3462 = vpop.permute.xlu0 %3461
      %3463 = vrot.lane.b32.xlu0 %v3418, 32
      %v3464 = vpop.permute.xlu0 %3463
      %3465 = vrot.lane.b32.xlu0 %v3419, 32
      %v3466 = vpop.permute.xlu0 %3465
      %3467 = vrot.lane.b32.xlu0 %v3420, 32
      %v3468 = vpop.permute.xlu0 %3467
      %3469 = vrot.lane.b32.xlu0 %v3421, 32
      %v3470 = vpop.permute.xlu0 %3469
      %3471 = vrot.lane.b32.xlu0 %v3422, 32
      %v3472 = vpop.permute.xlu0 %3471
      %3473 = vrot.lane.b32.xlu0 %v3423, 32
      %v3474 = vpop.permute.xlu0 %3473
      %3475 = vrot.lane.b32.xlu0 %v3424, 32
      %v3476 = vpop.permute.xlu0 %3475
      %3477 = vrot.lane.b32.xlu0 %v3425, 32
      %v3478 = vpop.permute.xlu0 %3477
      %3479 = vrot.lane.b32.xlu0 %v3426, 32
      %v3480 = vpop.permute.xlu0 %3479
      %3481 = vrot.lane.b32.xlu0 %v3427, 32
      %v3482 = vpop.permute.xlu0 %3481
      %3483 = vrot.lane.b32.xlu0 %v3428, 32
      %v3484 = vpop.permute.xlu0 %3483
      %3485 = vrot.lane.b32.xlu0 %v3429, 32
      %v3486 = vpop.permute.xlu0 %3485
      %3487 = vrot.lane.b32.xlu0 %v3430, 32
      %v3488 = vpop.permute.xlu0 %3487
      %3489 = vrot.lane.b32.xlu0 %v3431, 32
      %v3490 = vpop.permute.xlu0 %3489
      %3491 = vrot.lane.b32.xlu0 %v3432, 32
      %v3492 = vpop.permute.xlu0 %3491
      %3493 = vrot.lane.b32.xlu0 %v3433, 32
      %v3494 = vpop.permute.xlu0 %3493
      %3495 = vrot.lane.b32.xlu0 %v3434, 32
      %v3496 = vpop.permute.xlu0 %3495
      %3497 = vrot.lane.b32.xlu0 %v3435, 32
      %v3498 = vpop.permute.xlu0 %3497
      %3499 = vrot.lane.b32.xlu0 %v3436, 32
      %v3500 = vpop.permute.xlu0 %3499
      %v3501 = vunpack.c.l.b16 %v2916
      %v3502 = vunpack.c.l.b16 %v2919
      %v3503 = vunpack.c.l.b16 %v2922
      %v3504 = vunpack.c.l.b16 %v2925
      %v3505 = vunpack.c.l.b16 %v2929
      %v3506 = vunpack.c.l.b16 %v2932
      %v3507 = vunpack.c.l.b16 %v2935
      %v3508 = vunpack.c.l.b16 %v2938
      %v3509 = vunpack.c.l.b16 %v2942
      %v3510 = vunpack.c.l.b16 %v2945
      %v3511 = vunpack.c.l.b16 %v2948
      %v3512 = vunpack.c.l.b16 %v2951
      %v3513 = vunpack.c.l.b16 %v2955
      %v3514 = vunpack.c.l.b16 %v2958
      %v3515 = vunpack.c.l.b16 %v2961
      %v3516 = vunpack.c.l.b16 %v2964
      %v3517 = vunpack.c.l.b16 %v2968
      %v3518 = vunpack.c.l.b16 %v2971
      %v3519 = vunpack.c.l.b16 %v2974
      %v3520 = vunpack.c.l.b16 %v2977
      %v3521 = vunpack.c.l.b16 %v2981
      %v3522 = vunpack.c.l.b16 %v2984
      %v3523 = vunpack.c.l.b16 %v2987
      %v3524 = vunpack.c.l.b16 %v2990
      %v3525 = vunpack.c.l.b16 %v2994
      %v3526 = vunpack.c.l.b16 %v2997
      %v3527 = vunpack.c.l.b16 %v3000
      %v3528 = vunpack.c.l.b16 %v3003
      %v3529 = vunpack.c.l.b16 %v3007
      %v3530 = vunpack.c.l.b16 %v3010
      %v3531 = vunpack.c.l.b16 %v3013
      %v3532 = vunpack.c.l.b16 %v3016
      %v3533 = vunpack.c.l.b16 %v3020
      %v3534 = vunpack.c.l.b16 %v3023
      %v3535 = vunpack.c.l.b16 %v3026
      %v3536 = vunpack.c.l.b16 %v3029
      %v3537 = vunpack.c.l.b16 %v3033
      %v3538 = vunpack.c.l.b16 %v3036
      %v3539 = vunpack.c.l.b16 %v3039
      %v3540 = vunpack.c.l.b16 %v3042
      %v3541 = vunpack.c.l.b16 %v3046
      %v3542 = vunpack.c.l.b16 %v3049
      %v3543 = vunpack.c.l.b16 %v3052
      %v3544 = vunpack.c.l.b16 %v3055
      %v3545 = vunpack.c.l.b16 %v3059
      %v3546 = vunpack.c.l.b16 %v3062
      %v3547 = vunpack.c.l.b16 %v3065
      %v3548 = vunpack.c.l.b16 %v3068
      %v3549 = vunpack.c.l.b16 %v3072
      %v3550 = vunpack.c.l.b16 %v3075
      %v3551 = vunpack.c.l.b16 %v3078
      %v3552 = vunpack.c.l.b16 %v3081
      %v3553 = vunpack.c.l.b16 %v3085
      %v3554 = vunpack.c.l.b16 %v3088
      %v3555 = vunpack.c.l.b16 %v3091
      %v3556 = vunpack.c.l.b16 %v3094
      %v3557 = vunpack.c.l.b16 %v3098
      %v3558 = vunpack.c.l.b16 %v3101
      %v3559 = vunpack.c.l.b16 %v3104
      %v3560 = vunpack.c.l.b16 %v3107
      %v3561 = vunpack.c.l.b16 %v3111
      %v3562 = vunpack.c.l.b16 %v3114
      %v3563 = vunpack.c.l.b16 %v3117
      %v3564 = vunpack.c.l.b16 %v3120
      %v3565 = vpack.c.b16 %v3502, %v3501
      %v3566 = vpack.c.b16 %v3504, %v3503
      %v3567 = vpack.c.b16 %v3506, %v3505
      %v3568 = vpack.c.b16 %v3508, %v3507
      %v3569 = vpack.c.b16 %v3510, %v3509
      %v3570 = vpack.c.b16 %v3512, %v3511
      %v3571 = vpack.c.b16 %v3514, %v3513
      %v3572 = vpack.c.b16 %v3516, %v3515
      %v3573 = vpack.c.b16 %v3518, %v3517
      %v3574 = vpack.c.b16 %v3520, %v3519
      %v3575 = vpack.c.b16 %v3522, %v3521
      %v3576 = vpack.c.b16 %v3524, %v3523
      %v3577 = vpack.c.b16 %v3526, %v3525
      %v3578 = vpack.c.b16 %v3528, %v3527
      %v3579 = vpack.c.b16 %v3530, %v3529
      %v3580 = vpack.c.b16 %v3532, %v3531
      %v3581 = vpack.c.b16 %v3534, %v3533
      %v3582 = vpack.c.b16 %v3536, %v3535
      %v3583 = vpack.c.b16 %v3538, %v3537
      %v3584 = vpack.c.b16 %v3540, %v3539
      %v3585 = vpack.c.b16 %v3542, %v3541
      %v3586 = vpack.c.b16 %v3544, %v3543
      %v3587 = vpack.c.b16 %v3546, %v3545
      %v3588 = vpack.c.b16 %v3548, %v3547
      %v3589 = vpack.c.b16 %v3550, %v3549
      %v3590 = vpack.c.b16 %v3552, %v3551
      %v3591 = vpack.c.b16 %v3554, %v3553
      %v3592 = vpack.c.b16 %v3556, %v3555
      %v3593 = vpack.c.b16 %v3558, %v3557
      %v3594 = vpack.c.b16 %v3560, %v3559
      %v3595 = vpack.c.b16 %v3562, %v3561
      %v3596 = vpack.c.b16 %v3564, %v3563
      %3597 = vrot.lane.b32.xlu0 %v3565, 64
      %v3598 = vpop.permute.xlu0 %3597
      %3599 = vrot.lane.b32.xlu0 %v3566, 64
      %v3600 = vpop.permute.xlu0 %3599
      %3601 = vrot.lane.b32.xlu0 %v3567, 64
      %v3602 = vpop.permute.xlu0 %3601
      %3603 = vrot.lane.b32.xlu0 %v3568, 64
      %v3604 = vpop.permute.xlu0 %3603
      %3605 = vrot.lane.b32.xlu0 %v3569, 64
      %v3606 = vpop.permute.xlu0 %3605
      %3607 = vrot.lane.b32.xlu0 %v3570, 64
      %v3608 = vpop.permute.xlu0 %3607
      %3609 = vrot.lane.b32.xlu0 %v3571, 64
      %v3610 = vpop.permute.xlu0 %3609
      %3611 = vrot.lane.b32.xlu0 %v3572, 64
      %v3612 = vpop.permute.xlu0 %3611
      %3613 = vrot.lane.b32.xlu0 %v3573, 64
      %v3614 = vpop.permute.xlu0 %3613
      %3615 = vrot.lane.b32.xlu0 %v3574, 64
      %v3616 = vpop.permute.xlu0 %3615
      %3617 = vrot.lane.b32.xlu0 %v3575, 64
      %v3618 = vpop.permute.xlu0 %3617
      %3619 = vrot.lane.b32.xlu0 %v3576, 64
      %v3620 = vpop.permute.xlu0 %3619
      %3621 = vrot.lane.b32.xlu0 %v3577, 64
      %v3622 = vpop.permute.xlu0 %3621
      %3623 = vrot.lane.b32.xlu0 %v3578, 64
      %v3624 = vpop.permute.xlu0 %3623
      %3625 = vrot.lane.b32.xlu0 %v3579, 64
      %v3626 = vpop.permute.xlu0 %3625
      %3627 = vrot.lane.b32.xlu0 %v3580, 64
      %v3628 = vpop.permute.xlu0 %3627
      %3629 = vrot.lane.b32.xlu0 %v3581, 64
      %v3630 = vpop.permute.xlu0 %3629
      %3631 = vrot.lane.b32.xlu0 %v3582, 64
      %v3632 = vpop.permute.xlu0 %3631
      %3633 = vrot.lane.b32.xlu0 %v3583, 64
      %v3634 = vpop.permute.xlu0 %3633
      %3635 = vrot.lane.b32.xlu0 %v3584, 64
      %v3636 = vpop.permute.xlu0 %3635
      %3637 = vrot.lane.b32.xlu0 %v3585, 64
      %v3638 = vpop.permute.xlu0 %3637
      %3639 = vrot.lane.b32.xlu0 %v3586, 64
      %v3640 = vpop.permute.xlu0 %3639
      %3641 = vrot.lane.b32.xlu0 %v3587, 64
      %v3642 = vpop.permute.xlu0 %3641
      %3643 = vrot.lane.b32.xlu0 %v3588, 64
      %v3644 = vpop.permute.xlu0 %3643
      %3645 = vrot.lane.b32.xlu0 %v3589, 64
      %v3646 = vpop.permute.xlu0 %3645
      %3647 = vrot.lane.b32.xlu0 %v3590, 64
      %v3648 = vpop.permute.xlu0 %3647
      %3649 = vrot.lane.b32.xlu0 %v3591, 64
      %v3650 = vpop.permute.xlu0 %3649
      %3651 = vrot.lane.b32.xlu0 %v3592, 64
      %v3652 = vpop.permute.xlu0 %3651
      %3653 = vrot.lane.b32.xlu0 %v3593, 64
      %v3654 = vpop.permute.xlu0 %3653
      %3655 = vrot.lane.b32.xlu0 %v3594, 64
      %v3656 = vpop.permute.xlu0 %3655
      %3657 = vrot.lane.b32.xlu0 %v3595, 64
      %v3658 = vpop.permute.xlu0 %3657
      %3659 = vrot.lane.b32.xlu0 %v3596, 64
      %v3660 = vpop.permute.xlu0 %3659
      %v3661 = vunpack.c.l.b16 %v2113
      %v3662 = vunpack.c.l.b16 %v2114
      %v3663 = vunpack.c.l.b16 %v2115
      %v3664 = vunpack.c.l.b16 %v2116
      %v3665 = vpack.c.b16 %v3662, %v3661
      %v3666 = vpack.c.b16 %v3664, %v3663
      %3667 = vrot.lane.b32.xlu0 %v3311, 96
      %v3668 = vpop.permute.xlu0 %3667
      %3669 = vrot.lane.b32.xlu0 %v3312, 96
      %v3670 = vpop.permute.xlu0 %3669
      %3671 = vrot.lane.b32.xlu0 %v3313, 96
      %v3672 = vpop.permute.xlu0 %3671
      %3673 = vrot.lane.b32.xlu0 %v3314, 96
      %v3674 = vpop.permute.xlu0 %3673
      %3675 = vrot.lane.b32.xlu0 %v3315, 96
      %v3676 = vpop.permute.xlu0 %3675
      %3677 = vrot.lane.b32.xlu0 %v3316, 96
      %v3678 = vpop.permute.xlu0 %3677
      %3679 = vrot.lane.b32.xlu0 %v3317, 96
      %v3680 = vpop.permute.xlu0 %3679
      %3681 = vrot.lane.b32.xlu0 %v3318, 96
      %v3682 = vpop.permute.xlu0 %3681
      %3683 = vrot.lane.b32.xlu0 %v3319, 96
      %v3684 = vpop.permute.xlu0 %3683
      %3685 = vrot.lane.b32.xlu0 %v3320, 96
      %v3686 = vpop.permute.xlu0 %3685
      %3687 = vrot.lane.b32.xlu0 %v3321, 96
      %v3688 = vpop.permute.xlu0 %3687
      %3689 = vrot.lane.b32.xlu0 %v3322, 96
      %v3690 = vpop.permute.xlu0 %3689
      %3691 = vrot.lane.b32.xlu0 %v3323, 96
      %v3692 = vpop.permute.xlu0 %3691
      %3693 = vrot.lane.b32.xlu0 %v3324, 96
      %v3694 = vpop.permute.xlu0 %3693
      %3695 = vrot.lane.b32.xlu0 %v3325, 96
      %v3696 = vpop.permute.xlu0 %3695
      %3697 = vrot.lane.b32.xlu0 %v3326, 96
      %v3698 = vpop.permute.xlu0 %3697
      %3699 = vrot.lane.b32.xlu0 %v3327, 96
      %v3700 = vpop.permute.xlu0 %3699
      %3701 = vrot.lane.b32.xlu0 %v3328, 96
      %v3702 = vpop.permute.xlu0 %3701
      %3703 = vrot.lane.b32.xlu0 %v3329, 96
      %v3704 = vpop.permute.xlu0 %3703
      %3705 = vrot.lane.b32.xlu0 %v3330, 96
      %v3706 = vpop.permute.xlu0 %3705
      %3707 = vrot.lane.b32.xlu0 %v3331, 96
      %v3708 = vpop.permute.xlu0 %3707
      %3709 = vrot.lane.b32.xlu0 %v3332, 96
      %v3710 = vpop.permute.xlu0 %3709
      %3711 = vrot.lane.b32.xlu0 %v3333, 96
      %v3712 = vpop.permute.xlu0 %3711
      %3713 = vrot.lane.b32.xlu0 %v3334, 96
      %v3714 = vpop.permute.xlu0 %3713
      %3715 = vrot.lane.b32.xlu0 %v3335, 96
      %v3716 = vpop.permute.xlu0 %3715
      %3717 = vrot.lane.b32.xlu0 %v3336, 96
      %v3718 = vpop.permute.xlu0 %3717
      %3719 = vrot.lane.b32.xlu0 %v3337, 96
      %v3720 = vpop.permute.xlu0 %3719
      %3721 = vrot.lane.b32.xlu0 %v3338, 96
      %v3722 = vpop.permute.xlu0 %3721
      %3723 = vrot.lane.b32.xlu0 %v3339, 96
      %v3724 = vpop.permute.xlu0 %3723
      %3725 = vrot.lane.b32.xlu0 %v3340, 96
      %v3726 = vpop.permute.xlu0 %3725
      %3727 = vrot.lane.b32.xlu0 %v3665, 96
      %v3728 = vpop.permute.xlu0 %3727
      %3729 = vrot.lane.b32.xlu0 %v3666, 96
      %v3730 = vpop.permute.xlu0 %3729
      %v3731 = vunpack.c.l.b16 %v3134
      %v3732 = vunpack.c.l.b16 %v3144
      %v3733 = vunpack.c.l.b16 %v3154
      %v3734 = vunpack.c.l.b16 %v3164
      %v3735 = vpack.c.b16 %v3732, %v3731
      %v3736 = vpack.c.b16 %v3734, %v3733
      %v3737 = vunpack.c.l.b16 %v3173
      %v3738 = vunpack.c.l.b16 %v3176
      %v3739 = vunpack.c.l.b16 %v3179
      %v3740 = vunpack.c.l.b16 %v3182
      %v3741 = vpack.c.b16 %v3738, %v3737
      %v3742 = vpack.c.b16 %v3740, %v3739
      %3743 = vrot.lane.b32.xlu0 %v3567, 32
      %v3744 = vpop.permute.xlu0 %3743
      %3745 = vrot.lane.b32.xlu0 %v3568, 32
      %v3746 = vpop.permute.xlu0 %3745
      %3747 = vrot.lane.b32.xlu0 %v3569, 32
      %v3748 = vpop.permute.xlu0 %3747
      %3749 = vrot.lane.b32.xlu0 %v3570, 32
      %v3750 = vpop.permute.xlu0 %3749
      %3751 = vrot.lane.b32.xlu0 %v3571, 32
      %v3752 = vpop.permute.xlu0 %3751
      %3753 = vrot.lane.b32.xlu0 %v3572, 32
      %v3754 = vpop.permute.xlu0 %3753
      %3755 = vrot.lane.b32.xlu0 %v3573, 32
      %v3756 = vpop.permute.xlu0 %3755
      %3757 = vrot.lane.b32.xlu0 %v3574, 32
      %v3758 = vpop.permute.xlu0 %3757
      %3759 = vrot.lane.b32.xlu0 %v3575, 32
      %v3760 = vpop.permute.xlu0 %3759
      %3761 = vrot.lane.b32.xlu0 %v3576, 32
      %v3762 = vpop.permute.xlu0 %3761
      %3763 = vrot.lane.b32.xlu0 %v3577, 32
      %v3764 = vpop.permute.xlu0 %3763
      %3765 = vrot.lane.b32.xlu0 %v3578, 32
      %v3766 = vpop.permute.xlu0 %3765
      %3767 = vrot.lane.b32.xlu0 %v3579, 32
      %v3768 = vpop.permute.xlu0 %3767
      %3769 = vrot.lane.b32.xlu0 %v3580, 32
      %v3770 = vpop.permute.xlu0 %3769
      %3771 = vrot.lane.b32.xlu0 %v3581, 32
      %v3772 = vpop.permute.xlu0 %3771
      %3773 = vrot.lane.b32.xlu0 %v3582, 32
      %v3774 = vpop.permute.xlu0 %3773
      %3775 = vrot.lane.b32.xlu0 %v3583, 32
      %v3776 = vpop.permute.xlu0 %3775
      %3777 = vrot.lane.b32.xlu0 %v3584, 32
      %v3778 = vpop.permute.xlu0 %3777
      %3779 = vrot.lane.b32.xlu0 %v3585, 32
      %v3780 = vpop.permute.xlu0 %3779
      %3781 = vrot.lane.b32.xlu0 %v3586, 32
      %v3782 = vpop.permute.xlu0 %3781
      %3783 = vrot.lane.b32.xlu0 %v3587, 32
      %v3784 = vpop.permute.xlu0 %3783
      %3785 = vrot.lane.b32.xlu0 %v3588, 32
      %v3786 = vpop.permute.xlu0 %3785
      %3787 = vrot.lane.b32.xlu0 %v3589, 32
      %v3788 = vpop.permute.xlu0 %3787
      %3789 = vrot.lane.b32.xlu0 %v3590, 32
      %v3790 = vpop.permute.xlu0 %3789
      %3791 = vrot.lane.b32.xlu0 %v3591, 32
      %v3792 = vpop.permute.xlu0 %3791
      %3793 = vrot.lane.b32.xlu0 %v3592, 32
      %v3794 = vpop.permute.xlu0 %3793
      %3795 = vrot.lane.b32.xlu0 %v3593, 32
      %v3796 = vpop.permute.xlu0 %3795
      %3797 = vrot.lane.b32.xlu0 %v3594, 32
      %v3798 = vpop.permute.xlu0 %3797
      %3799 = vrot.lane.b32.xlu0 %v3595, 32
      %v3800 = vpop.permute.xlu0 %3799
      %3801 = vrot.lane.b32.xlu0 %v3596, 32
      %v3802 = vpop.permute.xlu0 %3801
      %3803 = vrot.lane.b32.xlu0 %v3741, 32
      %v3804 = vpop.permute.xlu0 %3803
      %3805 = vrot.lane.b32.xlu0 %v3742, 32
      %v3806 = vpop.permute.xlu0 %3805
      %v3807 = vunpack.c.l.b16 %v2118
      %v3808 = vunpack.c.l.b16 %v2119
      %v3809 = vunpack.c.l.b16 %v2120
      %v3810 = vunpack.c.l.b16 %v2121
      %v3811 = vpack.c.b16 %v3808, %v3807
      %v3812 = vpack.c.b16 %v3810, %v3809
      %3813 = vrot.lane.b32.xlu0 %v3313, 64
      %v3814 = vpop.permute.xlu0 %3813
      %3815 = vrot.lane.b32.xlu0 %v3314, 64
      %v3816 = vpop.permute.xlu0 %3815
      %3817 = vrot.lane.b32.xlu0 %v3315, 64
      %v3818 = vpop.permute.xlu0 %3817
      %3819 = vrot.lane.b32.xlu0 %v3316, 64
      %v3820 = vpop.permute.xlu0 %3819
      %3821 = vrot.lane.b32.xlu0 %v3317, 64
      %v3822 = vpop.permute.xlu0 %3821
      %3823 = vrot.lane.b32.xlu0 %v3318, 64
      %v3824 = vpop.permute.xlu0 %3823
      %3825 = vrot.lane.b32.xlu0 %v3319, 64
      %v3826 = vpop.permute.xlu0 %3825
      %3827 = vrot.lane.b32.xlu0 %v3320, 64
      %v3828 = vpop.permute.xlu0 %3827
      %3829 = vrot.lane.b32.xlu0 %v3321, 64
      %v3830 = vpop.permute.xlu0 %3829
      %3831 = vrot.lane.b32.xlu0 %v3322, 64
      %v3832 = vpop.permute.xlu0 %3831
      %3833 = vrot.lane.b32.xlu0 %v3323, 64
      %v3834 = vpop.permute.xlu0 %3833
      %3835 = vrot.lane.b32.xlu0 %v3324, 64
      %v3836 = vpop.permute.xlu0 %3835
      %3837 = vrot.lane.b32.xlu0 %v3325, 64
      %v3838 = vpop.permute.xlu0 %3837
      %3839 = vrot.lane.b32.xlu0 %v3326, 64
      %v3840 = vpop.permute.xlu0 %3839
      %3841 = vrot.lane.b32.xlu0 %v3327, 64
      %v3842 = vpop.permute.xlu0 %3841
      %3843 = vrot.lane.b32.xlu0 %v3328, 64
      %v3844 = vpop.permute.xlu0 %3843
      %3845 = vrot.lane.b32.xlu0 %v3329, 64
      %v3846 = vpop.permute.xlu0 %3845
      %3847 = vrot.lane.b32.xlu0 %v3330, 64
      %v3848 = vpop.permute.xlu0 %3847
      %3849 = vrot.lane.b32.xlu0 %v3331, 64
      %v3850 = vpop.permute.xlu0 %3849
      %3851 = vrot.lane.b32.xlu0 %v3332, 64
      %v3852 = vpop.permute.xlu0 %3851
      %3853 = vrot.lane.b32.xlu0 %v3333, 64
      %v3854 = vpop.permute.xlu0 %3853
      %3855 = vrot.lane.b32.xlu0 %v3334, 64
      %v3856 = vpop.permute.xlu0 %3855
      %3857 = vrot.lane.b32.xlu0 %v3335, 64
      %v3858 = vpop.permute.xlu0 %3857
      %3859 = vrot.lane.b32.xlu0 %v3336, 64
      %v3860 = vpop.permute.xlu0 %3859
      %3861 = vrot.lane.b32.xlu0 %v3337, 64
      %v3862 = vpop.permute.xlu0 %3861
      %3863 = vrot.lane.b32.xlu0 %v3338, 64
      %v3864 = vpop.permute.xlu0 %3863
      %3865 = vrot.lane.b32.xlu0 %v3339, 64
      %v3866 = vpop.permute.xlu0 %3865
      %3867 = vrot.lane.b32.xlu0 %v3340, 64
      %v3868 = vpop.permute.xlu0 %3867
      %3869 = vrot.lane.b32.xlu0 %v3665, 64
      %v3870 = vpop.permute.xlu0 %3869
      %3871 = vrot.lane.b32.xlu0 %v3666, 64
      %v3872 = vpop.permute.xlu0 %3871
      %3873 = vrot.lane.b32.xlu0 %v3811, 64
      %v3874 = vpop.permute.xlu0 %3873
      %3875 = vrot.lane.b32.xlu0 %v3812, 64
      %v3876 = vpop.permute.xlu0 %3875
      %v3877 = vunpack.c.l.b16 %v3196
      %v3878 = vunpack.c.l.b16 %v3206
      %v3879 = vunpack.c.l.b16 %v3216
      %v3880 = vunpack.c.l.b16 %v3226
      %v3881 = vpack.c.b16 %v3878, %v3877
      %v3882 = vpack.c.b16 %v3880, %v3879
      %3883 = vrot.lane.b32.xlu0 %v3409, 96
      %v3884 = vpop.permute.xlu0 %3883
      %3885 = vrot.lane.b32.xlu0 %v3410, 96
      %v3886 = vpop.permute.xlu0 %3885
      %3887 = vrot.lane.b32.xlu0 %v3411, 96
      %v3888 = vpop.permute.xlu0 %3887
      %3889 = vrot.lane.b32.xlu0 %v3412, 96
      %v3890 = vpop.permute.xlu0 %3889
      %3891 = vrot.lane.b32.xlu0 %v3413, 96
      %v3892 = vpop.permute.xlu0 %3891
      %3893 = vrot.lane.b32.xlu0 %v3414, 96
      %v3894 = vpop.permute.xlu0 %3893
      %3895 = vrot.lane.b32.xlu0 %v3415, 96
      %v3896 = vpop.permute.xlu0 %3895
      %3897 = vrot.lane.b32.xlu0 %v3416, 96
      %v3898 = vpop.permute.xlu0 %3897
      %3899 = vrot.lane.b32.xlu0 %v3417, 96
      %v3900 = vpop.permute.xlu0 %3899
      %3901 = vrot.lane.b32.xlu0 %v3418, 96
      %v3902 = vpop.permute.xlu0 %3901
      %3903 = vrot.lane.b32.xlu0 %v3419, 96
      %v3904 = vpop.permute.xlu0 %3903
      %3905 = vrot.lane.b32.xlu0 %v3420, 96
      %v3906 = vpop.permute.xlu0 %3905
      %3907 = vrot.lane.b32.xlu0 %v3421, 96
      %v3908 = vpop.permute.xlu0 %3907
      %3909 = vrot.lane.b32.xlu0 %v3422, 96
      %v3910 = vpop.permute.xlu0 %3909
      %3911 = vrot.lane.b32.xlu0 %v3423, 96
      %v3912 = vpop.permute.xlu0 %3911
      %3913 = vrot.lane.b32.xlu0 %v3424, 96
      %v3914 = vpop.permute.xlu0 %3913
      %3915 = vrot.lane.b32.xlu0 %v3425, 96
      %v3916 = vpop.permute.xlu0 %3915
      %3917 = vrot.lane.b32.xlu0 %v3426, 96
      %v3918 = vpop.permute.xlu0 %3917
      %3919 = vrot.lane.b32.xlu0 %v3427, 96
      %v3920 = vpop.permute.xlu0 %3919
      %3921 = vrot.lane.b32.xlu0 %v3428, 96
      %v3922 = vpop.permute.xlu0 %3921
      %3923 = vrot.lane.b32.xlu0 %v3429, 96
      %v3924 = vpop.permute.xlu0 %3923
      %3925 = vrot.lane.b32.xlu0 %v3430, 96
      %v3926 = vpop.permute.xlu0 %3925
      %3927 = vrot.lane.b32.xlu0 %v3431, 96
      %v3928 = vpop.permute.xlu0 %3927
      %3929 = vrot.lane.b32.xlu0 %v3432, 96
      %v3930 = vpop.permute.xlu0 %3929
      %3931 = vrot.lane.b32.xlu0 %v3433, 96
      %v3932 = vpop.permute.xlu0 %3931
      %3933 = vrot.lane.b32.xlu0 %v3434, 96
      %v3934 = vpop.permute.xlu0 %3933
      %3935 = vrot.lane.b32.xlu0 %v3435, 96
      %v3936 = vpop.permute.xlu0 %3935
      %3937 = vrot.lane.b32.xlu0 %v3436, 96
      %v3938 = vpop.permute.xlu0 %3937
      %3939 = vrot.lane.b32.xlu0 %v3735, 96
      %v3940 = vpop.permute.xlu0 %3939
      %3941 = vrot.lane.b32.xlu0 %v3736, 96
      %v3942 = vpop.permute.xlu0 %3941
      %3943 = vrot.lane.b32.xlu0 %v3881, 96
      %v3944 = vpop.permute.xlu0 %3943
      %3945 = vrot.lane.b32.xlu0 %v3882, 96
      %v3946 = vpop.permute.xlu0 %3945
      %v3947 = vunpack.c.l.b16 %v3235
      %v3948 = vunpack.c.l.b16 %v3238
      %v3949 = vunpack.c.l.b16 %v3241
      %v3950 = vunpack.c.l.b16 %v3244
      %v3951 = vpack.c.b16 %v3948, %v3947
      %v3952 = vpack.c.b16 %v3950, %v3949
      %vm3953 = vcmask 261120
      %v3956 = vsel %vm3953, %v3309, %v3438
      %v3959 = vsel %vm3953, %v3310, %v3440
      %v3962 = vsel %vm3953, %v3311, %v3442
      %v3965 = vsel %vm3953, %v3312, %v3444
      %v3968 = vsel %vm3953, %v3313, %v3446
      %v3971 = vsel %vm3953, %v3314, %v3448
      %v3974 = vsel %vm3953, %v3315, %v3450
      %v3977 = vsel %vm3953, %v3316, %v3452
      %v3980 = vsel %vm3953, %v3317, %v3454
      %v3983 = vsel %vm3953, %v3318, %v3456
      %v3986 = vsel %vm3953, %v3319, %v3458
      %v3989 = vsel %vm3953, %v3320, %v3460
      %v3992 = vsel %vm3953, %v3321, %v3462
      %v3995 = vsel %vm3953, %v3322, %v3464
      %v3998 = vsel %vm3953, %v3323, %v3466
      %v4001 = vsel %vm3953, %v3324, %v3468
      %v4004 = vsel %vm3953, %v3325, %v3470
      %v4007 = vsel %vm3953, %v3326, %v3472
      %v4010 = vsel %vm3953, %v3327, %v3474
      %v4013 = vsel %vm3953, %v3328, %v3476
      %v4016 = vsel %vm3953, %v3329, %v3478
      %v4019 = vsel %vm3953, %v3330, %v3480
      %v4022 = vsel %vm3953, %v3331, %v3482
      %v4025 = vsel %vm3953, %v3332, %v3484
      %v4028 = vsel %vm3953, %v3333, %v3486
      %v4031 = vsel %vm3953, %v3334, %v3488
      %v4034 = vsel %vm3953, %v3335, %v3490
      %v4037 = vsel %vm3953, %v3336, %v3492
      %v4040 = vsel %vm3953, %v3337, %v3494
      %v4043 = vsel %vm3953, %v3338, %v3496
      %v4046 = vsel %vm3953, %v3339, %v3498
      %v4049 = vsel %vm3953, %v3340, %v3500
      %vm4050 = vcmask 523264
      %v4052 = vsel %vm4050, %v3956, %v3598
      %v4054 = vsel %vm4050, %v3959, %v3600
      %v4056 = vsel %vm4050, %v3962, %v3602
      %v4058 = vsel %vm4050, %v3965, %v3604
      %v4060 = vsel %vm4050, %v3968, %v3606
      %v4062 = vsel %vm4050, %v3971, %v3608
      %v4064 = vsel %vm4050, %v3974, %v3610
      %v4066 = vsel %vm4050, %v3977, %v3612
      %v4068 = vsel %vm4050, %v3980, %v3614
      %v4070 = vsel %vm4050, %v3983, %v3616
      %v4072 = vsel %vm4050, %v3986, %v3618
      %v4074 = vsel %vm4050, %v3989, %v3620
      %v4076 = vsel %vm4050, %v3992, %v3622
      %v4078 = vsel %vm4050, %v3995, %v3624
      %v4080 = vsel %vm4050, %v3998, %v3626
      %v4082 = vsel %vm4050, %v4001, %v3628
      %v4084 = vsel %vm4050, %v4004, %v3630
      %v4086 = vsel %vm4050, %v4007, %v3632
      %v4088 = vsel %vm4050, %v4010, %v3634
      %v4090 = vsel %vm4050, %v4013, %v3636
      %v4092 = vsel %vm4050, %v4016, %v3638
      %v4094 = vsel %vm4050, %v4019, %v3640
      %v4096 = vsel %vm4050, %v4022, %v3642
      %v4098 = vsel %vm4050, %v4025, %v3644
      %v4100 = vsel %vm4050, %v4028, %v3646
      %v4102 = vsel %vm4050, %v4031, %v3648
      %v4104 = vsel %vm4050, %v4034, %v3650
      %v4106 = vsel %vm4050, %v4037, %v3652
      %v4108 = vsel %vm4050, %v4040, %v3654
      %v4110 = vsel %vm4050, %v4043, %v3656
      %v4112 = vsel %vm4050, %v4046, %v3658
      %v4114 = vsel %vm4050, %v4049, %v3660
      %vm4115 = vcmask 785408
      %v4117 = vsel %vm4115, %v4052, %v3668
      %v4120 = vsel %vm4115, %v4054, %v3670
      %v4123 = vsel %vm4115, %v4056, %v3672
      %v4126 = vsel %vm4115, %v4058, %v3674
      %v4129 = vsel %vm4115, %v4060, %v3676
      %v4132 = vsel %vm4115, %v4062, %v3678
      %v4135 = vsel %vm4115, %v4064, %v3680
      %v4138 = vsel %vm4115, %v4066, %v3682
      %v4141 = vsel %vm4115, %v4068, %v3684
      %v4144 = vsel %vm4115, %v4070, %v3686
      %v4147 = vsel %vm4115, %v4072, %v3688
      %v4150 = vsel %vm4115, %v4074, %v3690
      %v4153 = vsel %vm4115, %v4076, %v3692
      %v4156 = vsel %vm4115, %v4078, %v3694
      %v4159 = vsel %vm4115, %v4080, %v3696
      %v4162 = vsel %vm4115, %v4082, %v3698
      %v4165 = vsel %vm4115, %v4084, %v3700
      %v4168 = vsel %vm4115, %v4086, %v3702
      %v4171 = vsel %vm4115, %v4088, %v3704
      %v4174 = vsel %vm4115, %v4090, %v3706
      %v4177 = vsel %vm4115, %v4092, %v3708
      %v4180 = vsel %vm4115, %v4094, %v3710
      %v4183 = vsel %vm4115, %v4096, %v3712
      %v4186 = vsel %vm4115, %v4098, %v3714
      %v4189 = vsel %vm4115, %v4100, %v3716
      %v4192 = vsel %vm4115, %v4102, %v3718
      %v4195 = vsel %vm4115, %v4104, %v3720
      %v4198 = vsel %vm4115, %v4106, %v3722
      %v4201 = vsel %vm4115, %v4108, %v3724
      %v4204 = vsel %vm4115, %v4110, %v3726
      %v4207 = vsel %vm4115, %v4112, %v3728
      %v4210 = vsel %vm4115, %v4114, %v3730
      %v4214 = vsel %vm3953, %v3407, %v3744
      %v4217 = vsel %vm3953, %v3408, %v3746
      %v4220 = vsel %vm3953, %v3409, %v3748
      %v4223 = vsel %vm3953, %v3410, %v3750
      %v4226 = vsel %vm3953, %v3411, %v3752
      %v4229 = vsel %vm3953, %v3412, %v3754
      %v4232 = vsel %vm3953, %v3413, %v3756
      %v4235 = vsel %vm3953, %v3414, %v3758
      %v4238 = vsel %vm3953, %v3415, %v3760
      %v4241 = vsel %vm3953, %v3416, %v3762
      %v4244 = vsel %vm3953, %v3417, %v3764
      %v4247 = vsel %vm3953, %v3418, %v3766
      %v4250 = vsel %vm3953, %v3419, %v3768
      %v4253 = vsel %vm3953, %v3420, %v3770
      %v4256 = vsel %vm3953, %v3421, %v3772
      %v4259 = vsel %vm3953, %v3422, %v3774
      %v4262 = vsel %vm3953, %v3423, %v3776
      %v4265 = vsel %vm3953, %v3424, %v3778
      %v4268 = vsel %vm3953, %v3425, %v3780
      %v4271 = vsel %vm3953, %v3426, %v3782
      %v4274 = vsel %vm3953, %v3427, %v3784
      %v4277 = vsel %vm3953, %v3428, %v3786
      %v4280 = vsel %vm3953, %v3429, %v3788
      %v4283 = vsel %vm3953, %v3430, %v3790
      %v4286 = vsel %vm3953, %v3431, %v3792
      %v4289 = vsel %vm3953, %v3432, %v3794
      %v4292 = vsel %vm3953, %v3433, %v3796
      %v4295 = vsel %vm3953, %v3434, %v3798
      %v4298 = vsel %vm3953, %v3435, %v3800
      %v4301 = vsel %vm3953, %v3436, %v3802
      %v4304 = vsel %vm3953, %v3735, %v3804
      %v4307 = vsel %vm3953, %v3736, %v3806
      %v4309 = vsel %vm4050, %v4214, %v3814
      %v4311 = vsel %vm4050, %v4217, %v3816
      %v4313 = vsel %vm4050, %v4220, %v3818
      %v4315 = vsel %vm4050, %v4223, %v3820
      %v4317 = vsel %vm4050, %v4226, %v3822
      %v4319 = vsel %vm4050, %v4229, %v3824
      %v4321 = vsel %vm4050, %v4232, %v3826
      %v4323 = vsel %vm4050, %v4235, %v3828
      %v4325 = vsel %vm4050, %v4238, %v3830
      %v4327 = vsel %vm4050, %v4241, %v3832
      %v4329 = vsel %vm4050, %v4244, %v3834
      %v4331 = vsel %vm4050, %v4247, %v3836
      %v4333 = vsel %vm4050, %v4250, %v3838
      %v4335 = vsel %vm4050, %v4253, %v3840
      %v4337 = vsel %vm4050, %v4256, %v3842
      %v4339 = vsel %vm4050, %v4259, %v3844
      %v4341 = vsel %vm4050, %v4262, %v3846
      %v4343 = vsel %vm4050, %v4265, %v3848
      %v4345 = vsel %vm4050, %v4268, %v3850
      %v4347 = vsel %vm4050, %v4271, %v3852
      %v4349 = vsel %vm4050, %v4274, %v3854
      %v4351 = vsel %vm4050, %v4277, %v3856
      %v4353 = vsel %vm4050, %v4280, %v3858
      %v4355 = vsel %vm4050, %v4283, %v3860
      %v4357 = vsel %vm4050, %v4286, %v3862
      %v4359 = vsel %vm4050, %v4289, %v3864
      %v4361 = vsel %vm4050, %v4292, %v3866
      %v4363 = vsel %vm4050, %v4295, %v3868
      %v4365 = vsel %vm4050, %v4298, %v3870
      %v4367 = vsel %vm4050, %v4301, %v3872
      %v4369 = vsel %vm4050, %v4304, %v3874
      %v4371 = vsel %vm4050, %v4307, %v3876
      %v4373 = vsel %vm4115, %v4309, %v3884
      %v4376 = vsel %vm4115, %v4311, %v3886
      %v4379 = vsel %vm4115, %v4313, %v3888
      %v4382 = vsel %vm4115, %v4315, %v3890
      %v4385 = vsel %vm4115, %v4317, %v3892
      %v4388 = vsel %vm4115, %v4319, %v3894
      %v4391 = vsel %vm4115, %v4321, %v3896
      %v4394 = vsel %vm4115, %v4323, %v3898
      %v4397 = vsel %vm4115, %v4325, %v3900
      %v4400 = vsel %vm4115, %v4327, %v3902
      %v4403 = vsel %vm4115, %v4329, %v3904
      %v4406 = vsel %vm4115, %v4331, %v3906
      %v4409 = vsel %vm4115, %v4333, %v3908
      %v4412 = vsel %vm4115, %v4335, %v3910
      %v4415 = vsel %vm4115, %v4337, %v3912
      %v4418 = vsel %vm4115, %v4339, %v3914
      %v4421 = vsel %vm4115, %v4341, %v3916
      %v4424 = vsel %vm4115, %v4343, %v3918
      %v4427 = vsel %vm4115, %v4345, %v3920
      %v4430 = vsel %vm4115, %v4347, %v3922
      %v4433 = vsel %vm4115, %v4349, %v3924
      %v4436 = vsel %vm4115, %v4351, %v3926
      %v4439 = vsel %vm4115, %v4353, %v3928
      %v4442 = vsel %vm4115, %v4355, %v3930
      %v4445 = vsel %vm4115, %v4357, %v3932
      %v4448 = vsel %vm4115, %v4359, %v3934
      %v4451 = vsel %vm4115, %v4361, %v3936
      %v4454 = vsel %vm4115, %v4363, %v3938
      %v4457 = vsel %vm4115, %v4365, %v3940
      %v4460 = vsel %vm4115, %v4367, %v3942
      %v4463 = vsel %vm4115, %v4369, %v3944
      %v4466 = vsel %vm4115, %v4371, %v3946
      %v4469 = vlaneseq
      %v4470 = vshrl.u32 %v4469, 7
      %v4471 = vsub.s32 0, %v4470
      %v4472 = vrot.slane %v2029, %v4471
      %v4510 = vunpack.c.l.b16 %v1992
      %v4511 = vunpack.c.l.b16 %v1993
      %v4512 = vunpack.c.l.b16 %v1994
      %v4513 = vunpack.c.l.b16 %v1995
      %v4514 = vunpack.c.l.b16 %v1996
      %v4515 = vunpack.c.l.b16 %v1997
      %v4516 = vunpack.c.l.b16 %v1998
      %v4517 = vunpack.c.l.b16 %v1999
      %v4518 = vunpack.c.l.b16 %v2000
      %v4519 = vunpack.c.l.b16 %v2001
      %v4520 = vunpack.c.l.b16 %v2002
      %v4521 = vunpack.c.l.b16 %v2003
      %v4522 = vunpack.c.l.b16 %v2004
      %v4523 = vunpack.c.l.b16 %v2005
      %v4524 = vunpack.c.l.b16 %v2006
      %v4525 = vunpack.c.l.b16 %v2007
      %v4526 = vunpack.c.l.b16 %v2008
      %v4527 = vunpack.c.l.b16 %v2009
      %v4528 = vunpack.c.l.b16 %v2010
      %v4529 = vunpack.c.l.b16 %v2011
      %v4530 = vunpack.c.l.b16 %v2012
      %v4531 = vunpack.c.l.b16 %v2013
      %v4532 = vunpack.c.l.b16 %v2014
      %v4533 = vunpack.c.l.b16 %v2015
      %v4534 = vunpack.c.l.b16 %v2016
      %v4535 = vunpack.c.l.b16 %v2017
      %v4536 = vunpack.c.l.b16 %v2018
      %v4537 = vunpack.c.l.b16 %v2019
      %v4538 = vunpack.c.l.b16 %v2020
      %v4539 = vunpack.c.l.b16 %v2021
      %v4540 = vunpack.c.l.b16 %v2022
      %v4541 = vunpack.c.l.b16 %v2023
      %v4542 = vunpack.c.l.b16 %v2024
      %v4543 = vunpack.c.l.b16 %v2025
      %v4544 = vunpack.c.l.b16 %v2026
      %v4545 = vunpack.c.l.b16 %v2027
      %v4546 = vpack.c.b16 %v4511, %v4510
      %v4547 = vpack.c.b16 %v4513, %v4512
      %v4548 = vpack.c.b16 %v4515, %v4514
      %v4549 = vpack.c.b16 %v4517, %v4516
      %v4550 = vpack.c.b16 %v4519, %v4518
      %v4551 = vpack.c.b16 %v4521, %v4520
      %v4552 = vpack.c.b16 %v4523, %v4522
      %v4553 = vpack.c.b16 %v4525, %v4524
      %v4554 = vpack.c.b16 %v4527, %v4526
      %v4555 = vpack.c.b16 %v4529, %v4528
      %v4556 = vpack.c.b16 %v4531, %v4530
      %v4557 = vpack.c.b16 %v4533, %v4532
      %v4558 = vpack.c.b16 %v4535, %v4534
      %v4559 = vpack.c.b16 %v4537, %v4536
      %v4560 = vpack.c.b16 %v4539, %v4538
      %v4561 = vpack.c.b16 %v4541, %v4540
      %v4562 = vpack.c.b16 %v4543, %v4542
      %v4563 = vpack.c.b16 %v4545, %v4544
      %v4583 = vsel %vm3953, %v3569, 0
      %v4586 = vsel %vm3953, %v3570, 0
      %v4589 = vsel %vm3953, %v3571, 0
      %v4592 = vsel %vm3953, %v3572, 0
      %v4595 = vsel %vm3953, %v3573, 0
      %v4598 = vsel %vm3953, %v3574, 0
      %v4601 = vsel %vm3953, %v3575, 0
      %v4604 = vsel %vm3953, %v3576, 0
      %v4607 = vsel %vm3953, %v3577, 0
      %v4610 = vsel %vm3953, %v3578, 0
      %v4613 = vsel %vm3953, %v3579, 0
      %v4616 = vsel %vm3953, %v3580, 0
      %v4619 = vsel %vm3953, %v3581, 0
      %v4622 = vsel %vm3953, %v3582, 0
      %v4625 = vsel %vm3953, %v3583, 0
      %v4628 = vsel %vm3953, %v3584, 0
      %v4631 = vsel %vm3953, %v3585, 0
      %v4634 = vsel %vm3953, %v3586, 0
      %v4637 = vsel %vm3953, %v3587, 0
      %v4640 = vsel %vm3953, %v3588, 0
      %v4643 = vsel %vm3953, %v3589, 0
      %v4646 = vsel %vm3953, %v3590, 0
      %v4649 = vsel %vm3953, %v3591, 0
      %v4652 = vsel %vm3953, %v3592, 0
      %v4655 = vsel %vm3953, %v3593, 0
      %v4658 = vsel %vm3953, %v3594, 0
      %v4661 = vsel %vm3953, %v3595, 0
      %v4664 = vsel %vm3953, %v3596, 0
      %v4667 = vsel %vm3953, %v3741, 0
      %v4670 = vsel %vm3953, %v3742, 0
      %v4673 = vsel %vm3953, %v3951, 0
      %v4676 = vsel %vm3953, %v3952, 0
      %4678 = vmatprep.subr.bf16.mxu0 0
      %4679 = vmatpush1.bf16.msra.mxu0 %v4546
      %4680 = vmatprep.subr.bf16.mxu0 0
      %4681 = vmatpush1.bf16.msra.mxu0 %v4547
      %4682 = vmatprep.subr.bf16.mxu0 0
      %4683 = vmatpush1.bf16.msra.mxu0 %v4548
      %4684 = vmatprep.subr.bf16.mxu0 0
      %4685 = vmatpush1.bf16.msra.mxu0 %v4549
      %4686 = vmatprep.subr.bf16.mxu0 0
      %4687 = vmatpush1.bf16.msra.mxu0 %v4550
      %4688 = vmatprep.subr.bf16.mxu0 0
      %4689 = vmatpush1.bf16.msra.mxu0 %v4551
      %4690 = vmatprep.subr.bf16.mxu0 0
      %4691 = vmatpush1.bf16.msra.mxu0 %v4552
      %4692 = vmatprep.subr.bf16.mxu0 0
      %4693 = vmatpush1.bf16.msra.mxu0 %v4553
      %4694 = vmatprep.subr.bf16.mxu0 0
      %4695 = vmatpush1.bf16.msra.mxu0 %v4554
      %4696 = vmatprep.subr.bf16.mxu0 0
      %4697 = vmatpush1.bf16.msra.mxu0 %v4555
      %4698 = vmatprep.subr.bf16.mxu0 0
      %4699 = vmatpush1.bf16.msra.mxu0 %v4556
      %4700 = vmatprep.subr.bf16.mxu0 0
      %4701 = vmatpush1.bf16.msra.mxu0 %v4557
      %4702 = vmatprep.subr.bf16.mxu0 0
      %4703 = vmatpush1.bf16.msra.mxu0 %v4558
      %4704 = vmatprep.subr.bf16.mxu0 0
      %4705 = vmatpush1.bf16.msra.mxu0 %v4559
      %4706 = vmatprep.subr.bf16.mxu0 0
      %4707 = vmatpush1.bf16.msra.mxu0 %v4560
      %4708 = vmatprep.subr.bf16.mxu0 0
      %4709 = vmatpush1.bf16.msra.mxu0 %v4561
      %4710 = vmatprep.mubr.bf16.mxu0 %v4373
      %4711 = vmatmul.mubr.bf16.gmra.mrb[0].mxu0 %v4117
      %v4712 = vpop.f32.mrb[0].mxu0
      %v4713 = vadd.f32 %v4472, %v4712
      %v4714 = vpop.f32.mrb[0].mxu0
      %v4715 = vpop.f32.mrb[0].mxu0
      %v4716 = vadd.f32 %v4472, %v4715
      %v4717 = vpop.f32.mrb[0].mxu0
      %4718 = vmatprep.mubr.bf16.mxu0 %v4376
      %4719 = vmatmul.mubr.bf16.gmra.mrb[0].mxu0 %v4120
      %v4720 = vpop.f32.mrb[0].mxu0
      %v4721 = vadd.f32 %v4472, %v4720
      %v4722 = vpop.f32.mrb[0].mxu0
      %v4723 = vpop.f32.mrb[0].mxu0
      %v4724 = vadd.f32 %v4472, %v4723
      %v4725 = vpop.f32.mrb[0].mxu0
      %4726 = vmatprep.mubr.bf16.mxu0 %v4379
      %4727 = vmatmul.mubr.bf16.gmra.mrb[0].mxu0 %v4123
      %v4728 = vpop.f32.mrb[0].mxu0
      %v4729 = vadd.f32 %v4472, %v4728
      %v4730 = vpop.f32.mrb[0].mxu0
      %v4731 = vpop.f32.mrb[0].mxu0
      %v4732 = vadd.f32 %v4472, %v4731
      %v4733 = vpop.f32.mrb[0].mxu0
      %4734 = vmatprep.mubr.bf16.mxu0 %v4382
      %4735 = vmatmul.mubr.bf16.gmra.mrb[0].mxu0 %v4126
      %v4736 = vpop.f32.mrb[0].mxu0
      %v4737 = vadd.f32 %v4472, %v4736
      %v4738 = vpop.f32.mrb[0].mxu0
      %v4739 = vpop.f32.mrb[0].mxu0
      %v4740 = vadd.f32 %v4472, %v4739
      %v4741 = vpop.f32.mrb[0].mxu0
      %4742 = vmatprep.mubr.bf16.mxu0 %v4385
      %4743 = vmatmul.mubr.bf16.gmra.mrb[0].mxu0 %v4129
      %v4744 = vpop.f32.mrb[0].mxu0
      %v4745 = vadd.f32 %v4472, %v4744
      %v4746 = vpop.f32.mrb[0].mxu0
      %v4747 = vpop.f32.mrb[0].mxu0
      %v4748 = vadd.f32 %v4472, %v4747
      %v4749 = vpop.f32.mrb[0].mxu0
      %4750 = vmatprep.mubr.bf16.mxu0 %v4388
      %4751 = vmatmul.mubr.bf16.gmra.mrb[0].mxu0 %v4132
      %v4752 = vpop.f32.mrb[0].mxu0
      %v4753 = vadd.f32 %v4472, %v4752
      %v4754 = vpop.f32.mrb[0].mxu0
      %v4755 = vpop.f32.mrb[0].mxu0
      %v4756 = vadd.f32 %v4472, %v4755
      %v4757 = vpop.f32.mrb[0].mxu0
      %4758 = vmatprep.mubr.bf16.mxu0 %v4391
      %4759 = vmatmul.mubr.bf16.gmra.mrb[0].mxu0 %v4135
      %v4760 = vpop.f32.mrb[0].mxu0
      %v4761 = vadd.f32 %v4472, %v4760
      %v4762 = vpop.f32.mrb[0].mxu0
      %v4763 = vpop.f32.mrb[0].mxu0
      %v4764 = vadd.f32 %v4472, %v4763
      %v4765 = vpop.f32.mrb[0].mxu0
      %4766 = vmatprep.mubr.bf16.mxu0 %v4394
      %4767 = vmatmul.mubr.bf16.gmra.mrb[0].mxu0 %v4138
      %v4768 = vpop.f32.mrb[0].mxu0
      %v4769 = vadd.f32 %v4472, %v4768
      %v4770 = vpop.f32.mrb[0].mxu0
      %v4771 = vpop.f32.mrb[0].mxu0
      %v4772 = vadd.f32 %v4472, %v4771
      %v4773 = vpop.f32.mrb[0].mxu0
      %4774 = vmatprep.mubr.bf16.mxu0 %v4397
      %4775 = vmatmul.mubr.bf16.gmra.mrb[0].mxu0 %v4141
      %v4776 = vpop.f32.mrb[0].mxu0
      %v4777 = vadd.f32 %v4472, %v4776
      %v4778 = vpop.f32.mrb[0].mxu0
      %v4779 = vpop.f32.mrb[0].mxu0
      %v4780 = vadd.f32 %v4472, %v4779
      %v4781 = vpop.f32.mrb[0].mxu0
      %4782 = vmatprep.mubr.bf16.mxu0 %v4400
      %4783 = vmatmul.mubr.bf16.gmra.mrb[0].mxu0 %v4144
      %v4784 = vpop.f32.mrb[0].mxu0
      %v4785 = vadd.f32 %v4472, %v4784
      %v4786 = vpop.f32.mrb[0].mxu0
      %v4787 = vpop.f32.mrb[0].mxu0
      %v4788 = vadd.f32 %v4472, %v4787
      %v4789 = vpop.f32.mrb[0].mxu0
      %4790 = vmatprep.mubr.bf16.mxu0 %v4403
      %4791 = vmatmul.mubr.bf16.gmra.mrb[0].mxu0 %v4147
      %v4792 = vpop.f32.mrb[0].mxu0
      %v4793 = vadd.f32 %v4472, %v4792
      %v4794 = vpop.f32.mrb[0].mxu0
      %v4795 = vpop.f32.mrb[0].mxu0
      %v4796 = vadd.f32 %v4472, %v4795
      %v4797 = vpop.f32.mrb[0].mxu0
      %4798 = vmatprep.mubr.bf16.mxu0 %v4406
      %4799 = vmatmul.mubr.bf16.gmra.mrb[0].mxu0 %v4150
      %v4800 = vpop.f32.mrb[0].mxu0
      %v4801 = vadd.f32 %v4472, %v4800
      %v4802 = vpop.f32.mrb[0].mxu0
      %v4803 = vpop.f32.mrb[0].mxu0
      %v4804 = vadd.f32 %v4472, %v4803
      %v4805 = vpop.f32.mrb[0].mxu0
      %4806 = vmatprep.mubr.bf16.mxu0 %v4409
      %4807 = vmatmul.mubr.bf16.gmra.mrb[0].mxu0 %v4153
      %v4808 = vpop.f32.mrb[0].mxu0
      %v4809 = vadd.f32 %v4472, %v4808
      %v4810 = vpop.f32.mrb[0].mxu0
      %v4811 = vpop.f32.mrb[0].mxu0
      %v4812 = vadd.f32 %v4472, %v4811
      %v4813 = vpop.f32.mrb[0].mxu0
      %4814 = vmatprep.mubr.bf16.mxu0 %v4412
      %4815 = vmatmul.mubr.bf16.gmra.mrb[0].mxu0 %v4156
      %v4816 = vpop.f32.mrb[0].mxu0
      %v4817 = vadd.f32 %v4472, %v4816
      %v4818 = vpop.f32.mrb[0].mxu0
      %v4819 = vpop.f32.mrb[0].mxu0
      %v4820 = vadd.f32 %v4472, %v4819
      %v4821 = vpop.f32.mrb[0].mxu0
      %4822 = vmatprep.mubr.bf16.mxu0 %v4415
      %4823 = vmatmul.mubr.bf16.gmra.mrb[0].mxu0 %v4159
      %v4824 = vpop.f32.mrb[0].mxu0
      %v4825 = vadd.f32 %v4472, %v4824
      %v4826 = vpop.f32.mrb[0].mxu0
      %v4827 = vpop.f32.mrb[0].mxu0
      %v4828 = vadd.f32 %v4472, %v4827
      %v4829 = vpop.f32.mrb[0].mxu0
      %4830 = vmatprep.mubr.bf16.mxu0 %v4418
      %4831 = vmatmul.mubr.bf16.gmra.mrb[0].mxu0 %v4162
      %v4832 = vpop.f32.mrb[0].mxu0
      %v4833 = vadd.f32 %v4472, %v4832
      %v4834 = vpop.f32.mrb[0].mxu0
      %v4835 = vpop.f32.mrb[0].mxu0
      %v4836 = vadd.f32 %v4472, %v4835
      %v4837 = vpop.f32.mrb[0].mxu0
      %4838 = vmatprep.mubr.bf16.mxu0 %v4421
      %4839 = vmatmul.mubr.bf16.gmra.mrb[0].mxu0 %v4165
      %v4840 = vpop.f32.mrb[0].mxu0
      %v4841 = vadd.f32 %v4472, %v4840
      %v4842 = vpop.f32.mrb[0].mxu0
      %v4843 = vpop.f32.mrb[0].mxu0
      %v4844 = vadd.f32 %v4472, %v4843
      %v4845 = vpop.f32.mrb[0].mxu0
      %4846 = vmatprep.mubr.bf16.mxu0 %v4424
      %4847 = vmatmul.mubr.bf16.gmra.mrb[0].mxu0 %v4168
      %v4848 = vpop.f32.mrb[0].mxu0
      %v4849 = vadd.f32 %v4472, %v4848
      %v4850 = vpop.f32.mrb[0].mxu0
      %v4851 = vpop.f32.mrb[0].mxu0
      %v4852 = vadd.f32 %v4472, %v4851
      %v4853 = vpop.f32.mrb[0].mxu0
      %4854 = vmatprep.mubr.bf16.mxu0 %v4427
      %4855 = vmatmul.mubr.bf16.gmra.mrb[0].mxu0 %v4171
      %v4856 = vpop.f32.mrb[0].mxu0
      %v4857 = vadd.f32 %v4472, %v4856
      %v4858 = vpop.f32.mrb[0].mxu0
      %v4859 = vpop.f32.mrb[0].mxu0
      %v4860 = vadd.f32 %v4472, %v4859
      %v4861 = vpop.f32.mrb[0].mxu0
      %4862 = vmatprep.mubr.bf16.mxu0 %v4430
      %4863 = vmatmul.mubr.bf16.gmra.mrb[0].mxu0 %v4174
      %v4864 = vpop.f32.mrb[0].mxu0
      %v4865 = vadd.f32 %v4472, %v4864
      %v4866 = vpop.f32.mrb[0].mxu0
      %v4867 = vpop.f32.mrb[0].mxu0
      %v4868 = vadd.f32 %v4472, %v4867
      %v4869 = vpop.f32.mrb[0].mxu0
      %4870 = vmatprep.mubr.bf16.mxu0 %v4433
      %4871 = vmatmul.mubr.bf16.gmra.mrb[0].mxu0 %v4177
      %v4872 = vpop.f32.mrb[0].mxu0
      %v4873 = vadd.f32 %v4472, %v4872
      %v4874 = vpop.f32.mrb[0].mxu0
      %v4875 = vpop.f32.mrb[0].mxu0
      %v4876 = vadd.f32 %v4472, %v4875
      %v4877 = vpop.f32.mrb[0].mxu0
      %4878 = vmatprep.mubr.bf16.mxu0 %v4436
      %4879 = vmatmul.mubr.bf16.gmra.mrb[0].mxu0 %v4180
      %v4880 = vpop.f32.mrb[0].mxu0
      %v4881 = vadd.f32 %v4472, %v4880
      %v4882 = vpop.f32.mrb[0].mxu0
      %v4883 = vpop.f32.mrb[0].mxu0
      %v4884 = vadd.f32 %v4472, %v4883
      %v4885 = vpop.f32.mrb[0].mxu0
      %4886 = vmatprep.mubr.bf16.mxu0 %v4439
      %4887 = vmatmul.mubr.bf16.gmra.mrb[0].mxu0 %v4183
      %v4888 = vpop.f32.mrb[0].mxu0
      %v4889 = vadd.f32 %v4472, %v4888
      %v4890 = vpop.f32.mrb[0].mxu0
      %v4891 = vpop.f32.mrb[0].mxu0
      %v4892 = vadd.f32 %v4472, %v4891
      %v4893 = vpop.f32.mrb[0].mxu0
      %4894 = vmatprep.mubr.bf16.mxu0 %v4442
      %4895 = vmatmul.mubr.bf16.gmra.mrb[0].mxu0 %v4186
      %v4896 = vpop.f32.mrb[0].mxu0
      %v4897 = vadd.f32 %v4472, %v4896
      %v4898 = vpop.f32.mrb[0].mxu0
      %v4899 = vpop.f32.mrb[0].mxu0
      %v4900 = vadd.f32 %v4472, %v4899
      %v4901 = vpop.f32.mrb[0].mxu0
      %4902 = vmatprep.mubr.bf16.mxu0 %v4445
      %4903 = vmatmul.mubr.bf16.gmra.mrb[0].mxu0 %v4189
      %v4904 = vpop.f32.mrb[0].mxu0
      %v4905 = vadd.f32 %v4472, %v4904
      %v4906 = vpop.f32.mrb[0].mxu0
      %v4907 = vpop.f32.mrb[0].mxu0
      %v4908 = vadd.f32 %v4472, %v4907
      %v4909 = vpop.f32.mrb[0].mxu0
      %4910 = vmatprep.mubr.bf16.mxu0 %v4448
      %4911 = vmatmul.mubr.bf16.gmra.mrb[0].mxu0 %v4192
      %v4912 = vpop.f32.mrb[0].mxu0
      %v4913 = vadd.f32 %v4472, %v4912
      %v4914 = vpop.f32.mrb[0].mxu0
      %v4915 = vpop.f32.mrb[0].mxu0
      %v4916 = vadd.f32 %v4472, %v4915
      %v4917 = vpop.f32.mrb[0].mxu0
      %4918 = vmatprep.mubr.bf16.mxu0 %v4451
      %4919 = vmatmul.mubr.bf16.gmra.mrb[0].mxu0 %v4195
      %v4920 = vpop.f32.mrb[0].mxu0
      %v4921 = vadd.f32 %v4472, %v4920
      %v4922 = vpop.f32.mrb[0].mxu0
      %v4923 = vpop.f32.mrb[0].mxu0
      %v4924 = vadd.f32 %v4472, %v4923
      %v4925 = vpop.f32.mrb[0].mxu0
      %4926 = vmatprep.mubr.bf16.mxu0 %v4454
      %4927 = vmatmul.mubr.bf16.gmra.mrb[0].mxu0 %v4198
      %v4928 = vpop.f32.mrb[0].mxu0
      %v4929 = vadd.f32 %v4472, %v4928
      %v4930 = vpop.f32.mrb[0].mxu0
      %v4931 = vpop.f32.mrb[0].mxu0
      %v4932 = vadd.f32 %v4472, %v4931
      %v4933 = vpop.f32.mrb[0].mxu0
      %4934 = vmatprep.mubr.bf16.mxu0 %v4457
      %4935 = vmatmul.mubr.bf16.gmra.mrb[0].mxu0 %v4201
      %v4936 = vpop.f32.mrb[0].mxu0
      %v4937 = vadd.f32 %v4472, %v4936
      %v4938 = vpop.f32.mrb[0].mxu0
      %v4939 = vpop.f32.mrb[0].mxu0
      %v4940 = vadd.f32 %v4472, %v4939
      %v4941 = vpop.f32.mrb[0].mxu0
      %4942 = vmatprep.mubr.bf16.mxu0 %v4460
      %4943 = vmatmul.mubr.bf16.gmra.mrb[0].mxu0 %v4204
      %v4944 = vpop.f32.mrb[0].mxu0
      %v4945 = vadd.f32 %v4472, %v4944
      %v4946 = vpop.f32.mrb[0].mxu0
      %v4947 = vpop.f32.mrb[0].mxu0
      %v4948 = vadd.f32 %v4472, %v4947
      %v4949 = vpop.f32.mrb[0].mxu0
      %4950 = vmatprep.mubr.bf16.mxu0 %v4463
      %4951 = vmatmul.mubr.bf16.gmra.mrb[0].mxu0 %v4207
      %v4952 = vpop.f32.mrb[0].mxu0
      %v4953 = vadd.f32 %v4472, %v4952
      %v4954 = vpop.f32.mrb[0].mxu0
      %v4955 = vpop.f32.mrb[0].mxu0
      %v4956 = vadd.f32 %v4472, %v4955
      %v4957 = vpop.f32.mrb[0].mxu0
      %4958 = vmatprep.mubr.bf16.mxu0 %v4466
      %4959 = vmatmul.mubr.bf16.gmra.mrb[0].mxu0 %v4210
      %v4960 = vpop.f32.mrb[0].mxu0
      %v4961 = vadd.f32 %v4472, %v4960
      %v4962 = vpop.f32.mrb[0].mxu0
      %v4963 = vpop.f32.mrb[0].mxu0
      %v4964 = vadd.f32 %v4472, %v4963
      %v4965 = vpop.f32.mrb[0].mxu0
      %4966 = vdwg.mxu0
      %4967 = vmatprep.subr.bf16.mxu0 0
      %4968 = vmatpush1.bf16.msra.mxu0 %v4562
      %4969 = vmatprep.subr.bf16.mxu0 0
      %4970 = vmatpush1.bf16.msra.mxu0 %v4563
      %4971 = vmatprep.subr.bf16.mxu0 0
      %4972 = vmatpush1.bf16.msra.mxu0 0
      %4973 = vmatprep.subr.bf16.mxu0 0
      %4974 = vmatpush1.bf16.msra.mxu0 0
      %4975 = vmatprep.subr.bf16.mxu0 0
      %4976 = vmatpush1.bf16.msra.mxu0 0
      %4977 = vmatprep.subr.bf16.mxu0 0
      %4978 = vmatpush1.bf16.msra.mxu0 0
      %4979 = vmatprep.subr.bf16.mxu0 0
      %4980 = vmatpush1.bf16.msra.mxu0 0
      %4981 = vmatprep.subr.bf16.mxu0 0
      %4982 = vmatpush1.bf16.msra.mxu0 0
      %4983 = vmatprep.subr.bf16.mxu0 0
      %4984 = vmatpush1.bf16.msra.mxu0 0
      %4985 = vmatprep.subr.bf16.mxu0 0
      %4986 = vmatpush1.bf16.msra.mxu0 0
      %4987 = vmatprep.subr.bf16.mxu0 0
      %4988 = vmatpush1.bf16.msra.mxu0 0
      %4989 = vmatprep.subr.bf16.mxu0 0
      %4990 = vmatpush1.bf16.msra.mxu0 0
      %4991 = vmatprep.subr.bf16.mxu0 0
      %4992 = vmatpush1.bf16.msra.mxu0 0
      %4993 = vmatprep.subr.bf16.mxu0 0
      %4994 = vmatpush1.bf16.msra.mxu0 0
      %4995 = vmatprep.subr.bf16.mxu0 0
      %4996 = vmatpush1.bf16.msra.mxu0 0
      %4997 = vmatprep.subr.bf16.mxu0 0
      %4998 = vmatpush1.bf16.msra.mxu0 0
      %4999 = vmatprep.mubr.bf16.mxu0 0
      %5000 = vmatmul.mubr.bf16.gmra.mrb[0].mxu0 %v4583
      %v5001 = vpop.f32.mrb[0].mxu0
      %v5002 = vadd.f32 %v4713, %v5001
      %v5003 = vpop.f32.mrb[0].mxu0
      %v5004 = vpop.f32.mrb[0].mxu0
      %v5005 = vadd.f32 %v4716, %v5004
      %v5006 = vpop.f32.mrb[0].mxu0
      %5007 = vmatprep.mubr.bf16.mxu0 0
      %5008 = vmatmul.mubr.bf16.gmra.mrb[0].mxu0 %v4586
      %v5009 = vpop.f32.mrb[0].mxu0
      %v5010 = vadd.f32 %v4721, %v5009
      %v5011 = vpop.f32.mrb[0].mxu0
      %v5012 = vpop.f32.mrb[0].mxu0
      %v5013 = vadd.f32 %v4724, %v5012
      %v5014 = vpop.f32.mrb[0].mxu0
      %5015 = vmatprep.mubr.bf16.mxu0 0
      %5016 = vmatmul.mubr.bf16.gmra.mrb[0].mxu0 %v4589
      %v5017 = vpop.f32.mrb[0].mxu0
      %v5018 = vadd.f32 %v4729, %v5017
      %v5019 = vpop.f32.mrb[0].mxu0
      %v5020 = vpop.f32.mrb[0].mxu0
      %v5021 = vadd.f32 %v4732, %v5020
      %v5022 = vpop.f32.mrb[0].mxu0
      %5023 = vmatprep.mubr.bf16.mxu0 0
      %5024 = vmatmul.mubr.bf16.gmra.mrb[0].mxu0 %v4592
      %v5025 = vpop.f32.mrb[0].mxu0
      %v5026 = vadd.f32 %v4737, %v5025
      %v5027 = vpop.f32.mrb[0].mxu0
      %v5028 = vpop.f32.mrb[0].mxu0
      %v5029 = vadd.f32 %v4740, %v5028
      %v5030 = vpop.f32.mrb[0].mxu0
      %5031 = vmatprep.mubr.bf16.mxu0 0
      %5032 = vmatmul.mubr.bf16.gmra.mrb[0].mxu0 %v4595
      %v5033 = vpop.f32.mrb[0].mxu0
      %v5034 = vadd.f32 %v4745, %v5033
      %v5035 = vpop.f32.mrb[0].mxu0
      %v5036 = vpop.f32.mrb[0].mxu0
      %v5037 = vadd.f32 %v4748, %v5036
      %v5038 = vpop.f32.mrb[0].mxu0
      %5039 = vmatprep.mubr.bf16.mxu0 0
      %5040 = vmatmul.mubr.bf16.gmra.mrb[0].mxu0 %v4598
      %v5041 = vpop.f32.mrb[0].mxu0
      %v5042 = vadd.f32 %v4753, %v5041
      %v5043 = vpop.f32.mrb[0].mxu0
      %v5044 = vpop.f32.mrb[0].mxu0
      %v5045 = vadd.f32 %v4756, %v5044
      %v5046 = vpop.f32.mrb[0].mxu0
      %5047 = vmatprep.mubr.bf16.mxu0 0
      %5048 = vmatmul.mubr.bf16.gmra.mrb[0].mxu0 %v4601
      %v5049 = vpop.f32.mrb[0].mxu0
      %v5050 = vadd.f32 %v4761, %v5049
      %v5051 = vpop.f32.mrb[0].mxu0
      %v5052 = vpop.f32.mrb[0].mxu0
      %v5053 = vadd.f32 %v4764, %v5052
      %v5054 = vpop.f32.mrb[0].mxu0
      %5055 = vmatprep.mubr.bf16.mxu0 0
      %5056 = vmatmul.mubr.bf16.gmra.mrb[0].mxu0 %v4604
      %v5057 = vpop.f32.mrb[0].mxu0
      %v5058 = vadd.f32 %v4769, %v5057
      %v5059 = vpop.f32.mrb[0].mxu0
      %v5060 = vpop.f32.mrb[0].mxu0
      %v5061 = vadd.f32 %v4772, %v5060
      %v5062 = vpop.f32.mrb[0].mxu0
      %5063 = vmatprep.mubr.bf16.mxu0 0
      %5064 = vmatmul.mubr.bf16.gmra.mrb[0].mxu0 %v4607
      %v5065 = vpop.f32.mrb[0].mxu0
      %v5066 = vadd.f32 %v4777, %v5065
      %v5067 = vpop.f32.mrb[0].mxu0
      %v5068 = vpop.f32.mrb[0].mxu0
      %v5069 = vadd.f32 %v4780, %v5068
      %v5070 = vpop.f32.mrb[0].mxu0
      %5071 = vmatprep.mubr.bf16.mxu0 0
      %5072 = vmatmul.mubr.bf16.gmra.mrb[0].mxu0 %v4610
      %v5073 = vpop.f32.mrb[0].mxu0
      %v5074 = vadd.f32 %v4785, %v5073
      %v5075 = vpop.f32.mrb[0].mxu0
      %v5076 = vpop.f32.mrb[0].mxu0
      %v5077 = vadd.f32 %v4788, %v5076
      %v5078 = vpop.f32.mrb[0].mxu0
      %5079 = vmatprep.mubr.bf16.mxu0 0
      %5080 = vmatmul.mubr.bf16.gmra.mrb[0].mxu0 %v4613
      %v5081 = vpop.f32.mrb[0].mxu0
      %v5082 = vadd.f32 %v4793, %v5081
      %v5083 = vpop.f32.mrb[0].mxu0
      %v5084 = vpop.f32.mrb[0].mxu0
      %v5085 = vadd.f32 %v4796, %v5084
      %v5086 = vpop.f32.mrb[0].mxu0
      %5087 = vmatprep.mubr.bf16.mxu0 0
      %5088 = vmatmul.mubr.bf16.gmra.mrb[0].mxu0 %v4616
      %v5089 = vpop.f32.mrb[0].mxu0
      %v5090 = vadd.f32 %v4801, %v5089
      %v5091 = vpop.f32.mrb[0].mxu0
      %v5092 = vpop.f32.mrb[0].mxu0
      %v5093 = vadd.f32 %v4804, %v5092
      %v5094 = vpop.f32.mrb[0].mxu0
      %5095 = vmatprep.mubr.bf16.mxu0 0
      %5096 = vmatmul.mubr.bf16.gmra.mrb[0].mxu0 %v4619
      %v5097 = vpop.f32.mrb[0].mxu0
      %v5098 = vadd.f32 %v4809, %v5097
      %v5099 = vpop.f32.mrb[0].mxu0
      %v5100 = vpop.f32.mrb[0].mxu0
      %v5101 = vadd.f32 %v4812, %v5100
      %v5102 = vpop.f32.mrb[0].mxu0
      %5103 = vmatprep.mubr.bf16.mxu0 0
      %5104 = vmatmul.mubr.bf16.gmra.mrb[0].mxu0 %v4622
      %v5105 = vpop.f32.mrb[0].mxu0
      %v5106 = vadd.f32 %v4817, %v5105
      %v5107 = vpop.f32.mrb[0].mxu0
      %v5108 = vpop.f32.mrb[0].mxu0
      %v5109 = vadd.f32 %v4820, %v5108
      %v5110 = vpop.f32.mrb[0].mxu0
      %5111 = vmatprep.mubr.bf16.mxu0 0
      %5112 = vmatmul.mubr.bf16.gmra.mrb[0].mxu0 %v4625
      %v5113 = vpop.f32.mrb[0].mxu0
      %v5114 = vadd.f32 %v4825, %v5113
      %v5115 = vpop.f32.mrb[0].mxu0
      %v5116 = vpop.f32.mrb[0].mxu0
      %v5117 = vadd.f32 %v4828, %v5116
      %v5118 = vpop.f32.mrb[0].mxu0
      %5119 = vmatprep.mubr.bf16.mxu0 0
      %5120 = vmatmul.mubr.bf16.gmra.mrb[0].mxu0 %v4628
      %v5121 = vpop.f32.mrb[0].mxu0
      %v5122 = vadd.f32 %v4833, %v5121
      %v5123 = vpop.f32.mrb[0].mxu0
      %v5124 = vpop.f32.mrb[0].mxu0
      %v5125 = vadd.f32 %v4836, %v5124
      %v5126 = vpop.f32.mrb[0].mxu0
      %5127 = vmatprep.mubr.bf16.mxu0 0
      %5128 = vmatmul.mubr.bf16.gmra.mrb[0].mxu0 %v4631
      %v5129 = vpop.f32.mrb[0].mxu0
      %v5130 = vadd.f32 %v4841, %v5129
      %v5131 = vpop.f32.mrb[0].mxu0
      %v5132 = vpop.f32.mrb[0].mxu0
      %v5133 = vadd.f32 %v4844, %v5132
      %v5134 = vpop.f32.mrb[0].mxu0
      %5135 = vmatprep.mubr.bf16.mxu0 0
      %5136 = vmatmul.mubr.bf16.gmra.mrb[0].mxu0 %v4634
      %v5137 = vpop.f32.mrb[0].mxu0
      %v5138 = vadd.f32 %v4849, %v5137
      %v5139 = vpop.f32.mrb[0].mxu0
      %v5140 = vpop.f32.mrb[0].mxu0
      %v5141 = vadd.f32 %v4852, %v5140
      %v5142 = vpop.f32.mrb[0].mxu0
      %5143 = vmatprep.mubr.bf16.mxu0 0
      %5144 = vmatmul.mubr.bf16.gmra.mrb[0].mxu0 %v4637
      %v5145 = vpop.f32.mrb[0].mxu0
      %v5146 = vadd.f32 %v4857, %v5145
      %v5147 = vpop.f32.mrb[0].mxu0
      %v5148 = vpop.f32.mrb[0].mxu0
      %v5149 = vadd.f32 %v4860, %v5148
      %v5150 = vpop.f32.mrb[0].mxu0
      %5151 = vmatprep.mubr.bf16.mxu0 0
      %5152 = vmatmul.mubr.bf16.gmra.mrb[0].mxu0 %v4640
      %v5153 = vpop.f32.mrb[0].mxu0
      %v5154 = vadd.f32 %v4865, %v5153
      %v5155 = vpop.f32.mrb[0].mxu0
      %v5156 = vpop.f32.mrb[0].mxu0
      %v5157 = vadd.f32 %v4868, %v5156
      %v5158 = vpop.f32.mrb[0].mxu0
      %5159 = vmatprep.mubr.bf16.mxu0 0
      %5160 = vmatmul.mubr.bf16.gmra.mrb[0].mxu0 %v4643
      %v5161 = vpop.f32.mrb[0].mxu0
      %v5162 = vadd.f32 %v4873, %v5161
      %v5163 = vpop.f32.mrb[0].mxu0
      %v5164 = vpop.f32.mrb[0].mxu0
      %v5165 = vadd.f32 %v4876, %v5164
      %v5166 = vpop.f32.mrb[0].mxu0
      %5167 = vmatprep.mubr.bf16.mxu0 0
      %5168 = vmatmul.mubr.bf16.gmra.mrb[0].mxu0 %v4646
      %v5169 = vpop.f32.mrb[0].mxu0
      %v5170 = vadd.f32 %v4881, %v5169
      %v5171 = vpop.f32.mrb[0].mxu0
      %v5172 = vpop.f32.mrb[0].mxu0
      %v5173 = vadd.f32 %v4884, %v5172
      %v5174 = vpop.f32.mrb[0].mxu0
      %5175 = vmatprep.mubr.bf16.mxu0 0
      %5176 = vmatmul.mubr.bf16.gmra.mrb[0].mxu0 %v4649
      %v5177 = vpop.f32.mrb[0].mxu0
      %v5178 = vadd.f32 %v4889, %v5177
      %v5179 = vpop.f32.mrb[0].mxu0
      %v5180 = vpop.f32.mrb[0].mxu0
      %v5181 = vadd.f32 %v4892, %v5180
      %v5182 = vpop.f32.mrb[0].mxu0
      %5183 = vmatprep.mubr.bf16.mxu0 0
      %5184 = vmatmul.mubr.bf16.gmra.mrb[0].mxu0 %v4652
      %v5185 = vpop.f32.mrb[0].mxu0
      %v5186 = vadd.f32 %v4897, %v5185
      %v5187 = vpop.f32.mrb[0].mxu0
      %v5188 = vpop.f32.mrb[0].mxu0
      %v5189 = vadd.f32 %v4900, %v5188
      %v5190 = vpop.f32.mrb[0].mxu0
      %5191 = vmatprep.mubr.bf16.mxu0 0
      %5192 = vmatmul.mubr.bf16.gmra.mrb[0].mxu0 %v4655
      %v5193 = vpop.f32.mrb[0].mxu0
      %v5194 = vadd.f32 %v4905, %v5193
      %v5195 = vpop.f32.mrb[0].mxu0
      %v5196 = vpop.f32.mrb[0].mxu0
      %v5197 = vadd.f32 %v4908, %v5196
      %v5198 = vpop.f32.mrb[0].mxu0
      %5199 = vmatprep.mubr.bf16.mxu0 0
      %5200 = vmatmul.mubr.bf16.gmra.mrb[0].mxu0 %v4658
      %v5201 = vpop.f32.mrb[0].mxu0
      %v5202 = vadd.f32 %v4913, %v5201
      %v5203 = vpop.f32.mrb[0].mxu0
      %v5204 = vpop.f32.mrb[0].mxu0
      %v5205 = vadd.f32 %v4916, %v5204
      %v5206 = vpop.f32.mrb[0].mxu0
      %5207 = vmatprep.mubr.bf16.mxu0 0
      %5208 = vmatmul.mubr.bf16.gmra.mrb[0].mxu0 %v4661
      %v5209 = vpop.f32.mrb[0].mxu0
      %v5210 = vadd.f32 %v4921, %v5209
      %v5211 = vpop.f32.mrb[0].mxu0
      %v5212 = vpop.f32.mrb[0].mxu0
      %v5213 = vadd.f32 %v4924, %v5212
      %v5214 = vpop.f32.mrb[0].mxu0
      %5215 = vmatprep.mubr.bf16.mxu0 0
      %5216 = vmatmul.mubr.bf16.gmra.mrb[0].mxu0 %v4664
      %v5217 = vpop.f32.mrb[0].mxu0
      %v5218 = vadd.f32 %v4929, %v5217
      %v5219 = vpop.f32.mrb[0].mxu0
      %v5220 = vpop.f32.mrb[0].mxu0
      %v5221 = vadd.f32 %v4932, %v5220
      %v5222 = vpop.f32.mrb[0].mxu0
      %5223 = vmatprep.mubr.bf16.mxu0 0
      %5224 = vmatmul.mubr.bf16.gmra.mrb[0].mxu0 %v4667
      %v5225 = vpop.f32.mrb[0].mxu0
      %v5226 = vadd.f32 %v4937, %v5225
      %v5227 = vpop.f32.mrb[0].mxu0
      %v5228 = vpop.f32.mrb[0].mxu0
      %v5229 = vadd.f32 %v4940, %v5228
      %v5230 = vpop.f32.mrb[0].mxu0
      %5231 = vmatprep.mubr.bf16.mxu0 0
      %5232 = vmatmul.mubr.bf16.gmra.mrb[0].mxu0 %v4670
      %v5233 = vpop.f32.mrb[0].mxu0
      %v5234 = vadd.f32 %v4945, %v5233
      %v5235 = vpop.f32.mrb[0].mxu0
      %v5236 = vpop.f32.mrb[0].mxu0
      %v5237 = vadd.f32 %v4948, %v5236
      %v5238 = vpop.f32.mrb[0].mxu0
      %5239 = vmatprep.mubr.bf16.mxu0 0
      %5240 = vmatmul.mubr.bf16.gmra.mrb[0].mxu0 %v4673
      %v5241 = vpop.f32.mrb[0].mxu0
      %v5242 = vadd.f32 %v4953, %v5241
      %v5243 = vpop.f32.mrb[0].mxu0
      %v5244 = vpop.f32.mrb[0].mxu0
      %v5245 = vadd.f32 %v4956, %v5244
      %v5246 = vpop.f32.mrb[0].mxu0
      %5247 = vmatprep.mubr.bf16.mxu0 0
      %5248 = vmatmul.mubr.bf16.gmra.mrb[0].mxu0 %v4676
      %v5249 = vpop.f32.mrb[0].mxu0
      %v5250 = vadd.f32 %v4961, %v5249
      %v5251 = vpop.f32.mrb[0].mxu0
      %v5252 = vpop.f32.mrb[0].mxu0
      %v5253 = vadd.f32 %v4964, %v5252
      %v5254 = vpop.f32.mrb[0].mxu0
      %5255 = vdwg.mxu0
      %v5256 = vmax.f32 %v5002, 0.0
      %v5257 = vmax.f32 %v5005, 0.0
      %v5258 = vmax.f32 %v5010, 0.0
      %v5259 = vmax.f32 %v5013, 0.0
      %v5260 = vmax.f32 %v5018, 0.0
      %v5261 = vmax.f32 %v5021, 0.0
      %v5262 = vmax.f32 %v5026, 0.0
      %v5263 = vmax.f32 %v5029, 0.0
      %v5264 = vmax.f32 %v5034, 0.0
      %v5265 = vmax.f32 %v5037, 0.0
      %v5266 = vmax.f32 %v5042, 0.0
      %v5267 = vmax.f32 %v5045, 0.0
      %v5268 = vmax.f32 %v5050, 0.0
      %v5269 = vmax.f32 %v5053, 0.0
      %v5270 = vmax.f32 %v5058, 0.0
      %v5271 = vmax.f32 %v5061, 0.0
      %v5272 = vmax.f32 %v5066, 0.0
      %v5273 = vmax.f32 %v5069, 0.0
      %v5274 = vmax.f32 %v5074, 0.0
      %v5275 = vmax.f32 %v5077, 0.0
      %v5276 = vmax.f32 %v5082, 0.0
      %v5277 = vmax.f32 %v5085, 0.0
      %v5278 = vmax.f32 %v5090, 0.0
      %v5279 = vmax.f32 %v5093, 0.0
      %v5280 = vmax.f32 %v5098, 0.0
      %v5281 = vmax.f32 %v5101, 0.0
      %v5282 = vmax.f32 %v5106, 0.0
      %v5283 = vmax.f32 %v5109, 0.0
      %v5284 = vmax.f32 %v5114, 0.0
      %v5285 = vmax.f32 %v5117, 0.0
      %v5286 = vmax.f32 %v5122, 0.0
      %v5287 = vmax.f32 %v5125, 0.0
      %v5288 = vmax.f32 %v5130, 0.0
      %v5289 = vmax.f32 %v5133, 0.0
      %v5290 = vmax.f32 %v5138, 0.0
      %v5291 = vmax.f32 %v5141, 0.0
      %v5292 = vmax.f32 %v5146, 0.0
      %v5293 = vmax.f32 %v5149, 0.0
      %v5294 = vmax.f32 %v5154, 0.0
      %v5295 = vmax.f32 %v5157, 0.0
      %v5296 = vmax.f32 %v5162, 0.0
      %v5297 = vmax.f32 %v5165, 0.0
      %v5298 = vmax.f32 %v5170, 0.0
      %v5299 = vmax.f32 %v5173, 0.0
      %v5300 = vmax.f32 %v5178, 0.0
      %v5301 = vmax.f32 %v5181, 0.0
      %v5302 = vmax.f32 %v5186, 0.0
      %v5303 = vmax.f32 %v5189, 0.0
      %v5304 = vmax.f32 %v5194, 0.0
      %v5305 = vmax.f32 %v5197, 0.0
      %v5306 = vmax.f32 %v5202, 0.0
      %v5307 = vmax.f32 %v5205, 0.0
      %v5308 = vmax.f32 %v5210, 0.0
      %v5309 = vmax.f32 %v5213, 0.0
      %v5310 = vmax.f32 %v5218, 0.0
      %v5311 = vmax.f32 %v5221, 0.0
      %v5312 = vmax.f32 %v5226, 0.0
      %v5313 = vmax.f32 %v5229, 0.0
      %v5314 = vmax.f32 %v5234, 0.0
      %v5315 = vmax.f32 %v5237, 0.0
      %v5316 = vmax.f32 %v5242, 0.0
      %v5317 = vmax.f32 %v5245, 0.0
      %v5318 = vmax.f32 %v5250, 0.0
      %v5319 = vmax.f32 %v5253, 0.0
      %s5320 = scalar_select %p188, 1, 0
      %v5321 = vstv %s5320
      %vm5322 = vcmp.eq.s32.totalorder %v5321, 1
      %v5323 = vsel %vm5322, %v5256, %v5002
      %v5324 = vsel %vm5322, %v5257, %v5005
      %v5325 = vsel %vm5322, %v5258, %v5010
      %v5326 = vsel %vm5322, %v5259, %v5013
      %v5327 = vsel %vm5322, %v5260, %v5018
      %v5328 = vsel %vm5322, %v5261, %v5021
      %v5329 = vsel %vm5322, %v5262, %v5026
      %v5330 = vsel %vm5322, %v5263, %v5029
      %v5331 = vsel %vm5322, %v5264, %v5034
      %v5332 = vsel %vm5322, %v5265, %v5037
      %v5333 = vsel %vm5322, %v5266, %v5042
      %v5334 = vsel %vm5322, %v5267, %v5045
      %v5335 = vsel %vm5322, %v5268, %v5050
      %v5336 = vsel %vm5322, %v5269, %v5053
      %v5337 = vsel %vm5322, %v5270, %v5058
      %v5338 = vsel %vm5322, %v5271, %v5061
      %v5339 = vsel %vm5322, %v5272, %v5066
      %v5340 = vsel %vm5322, %v5273, %v5069
      %v5341 = vsel %vm5322, %v5274, %v5074
      %v5342 = vsel %vm5322, %v5275, %v5077
      %v5343 = vsel %vm5322, %v5276, %v5082
      %v5344 = vsel %vm5322, %v5277, %v5085
      %v5345 = vsel %vm5322, %v5278, %v5090
      %v5346 = vsel %vm5322, %v5279, %v5093
      %v5347 = vsel %vm5322, %v5280, %v5098
      %v5348 = vsel %vm5322, %v5281, %v5101
      %v5349 = vsel %vm5322, %v5282, %v5106
      %v5350 = vsel %vm5322, %v5283, %v5109
      %v5351 = vsel %vm5322, %v5284, %v5114
      %v5352 = vsel %vm5322, %v5285, %v5117
      %v5353 = vsel %vm5322, %v5286, %v5122
      %v5354 = vsel %vm5322, %v5287, %v5125
      %v5355 = vsel %vm5322, %v5288, %v5130
      %v5356 = vsel %vm5322, %v5289, %v5133
      %v5357 = vsel %vm5322, %v5290, %v5138
      %v5358 = vsel %vm5322, %v5291, %v5141
      %v5359 = vsel %vm5322, %v5292, %v5146
      %v5360 = vsel %vm5322, %v5293, %v5149
      %v5361 = vsel %vm5322, %v5294, %v5154
      %v5362 = vsel %vm5322, %v5295, %v5157
      %v5363 = vsel %vm5322, %v5296, %v5162
      %v5364 = vsel %vm5322, %v5297, %v5165
      %v5365 = vsel %vm5322, %v5298, %v5170
      %v5366 = vsel %vm5322, %v5299, %v5173
      %v5367 = vsel %vm5322, %v5300, %v5178
      %v5368 = vsel %vm5322, %v5301, %v5181
      %v5369 = vsel %vm5322, %v5302, %v5186
      %v5370 = vsel %vm5322, %v5303, %v5189
      %v5371 = vsel %vm5322, %v5304, %v5194
      %v5372 = vsel %vm5322, %v5305, %v5197
      %v5373 = vsel %vm5322, %v5306, %v5202
      %v5374 = vsel %vm5322, %v5307, %v5205
      %v5375 = vsel %vm5322, %v5308, %v5210
      %v5376 = vsel %vm5322, %v5309, %v5213
      %v5377 = vsel %vm5322, %v5310, %v5218
      %v5378 = vsel %vm5322, %v5311, %v5221
      %v5379 = vsel %vm5322, %v5312, %v5226
      %v5380 = vsel %vm5322, %v5313, %v5229
      %v5381 = vsel %vm5322, %v5314, %v5234
      %v5382 = vsel %vm5322, %v5315, %v5237
      %v5383 = vsel %vm5322, %v5316, %v5242
      %v5384 = vsel %vm5322, %v5317, %v5245
      %v5385 = vsel %vm5322, %v5318, %v5250
      %v5386 = vsel %vm5322, %v5319, %v5253
      // Predicated region
      $region37: #{vdsr_forward.1} parent=31 // pred_check
        %p5387 = pneg %p184
      $region38: #{vdsr_forward.1} parent=31 // pred_check_branch
        %5389 = sbr.rel (%p5387) target = $region40
      $region39: #{vdsr_forward.1} parent=31 // pred_region
        %v5390 = vpack.c.bf16 %v5324, %v5323
        %v5391 = vpack.c.bf16 %v5326, %v5325
        %v5392 = vpack.c.bf16 %v5328, %v5327
        %v5393 = vpack.c.bf16 %v5330, %v5329
        %v5394 = vpack.c.bf16 %v5332, %v5331
        %v5395 = vpack.c.bf16 %v5334, %v5333
        %v5396 = vpack.c.bf16 %v5336, %v5335
        %v5397 = vpack.c.bf16 %v5338, %v5337
        %v5398 = vpack.c.bf16 %v5340, %v5339
        %v5399 = vpack.c.bf16 %v5342, %v5341
        %v5400 = vpack.c.bf16 %v5344, %v5343
        %v5401 = vpack.c.bf16 %v5346, %v5345
        %v5402 = vpack.c.bf16 %v5348, %v5347
        %v5403 = vpack.c.bf16 %v5350, %v5349
        %v5404 = vpack.c.bf16 %v5352, %v5351
        %v5405 = vpack.c.bf16 %v5354, %v5353
        %v5406 = vpack.c.bf16 %v5356, %v5355
        %v5407 = vpack.c.bf16 %v5358, %v5357
        %v5408 = vpack.c.bf16 %v5360, %v5359
        %v5409 = vpack.c.bf16 %v5362, %v5361
        %v5410 = vpack.c.bf16 %v5364, %v5363
        %v5411 = vpack.c.bf16 %v5366, %v5365
        %v5412 = vpack.c.bf16 %v5368, %v5367
        %v5413 = vpack.c.bf16 %v5370, %v5369
        %v5414 = vpack.c.bf16 %v5372, %v5371
        %v5415 = vpack.c.bf16 %v5374, %v5373
        %v5416 = vpack.c.bf16 %v5376, %v5375
        %v5417 = vpack.c.bf16 %v5378, %v5377
        %v5418 = vpack.c.bf16 %v5380, %v5379
        %v5419 = vpack.c.bf16 %v5382, %v5381
        %v5420 = vpack.c.bf16 %v5384, %v5383
        %v5421 = vpack.c.bf16 %v5386, %v5385
        %v5454 = vunpack.c.l.b16 %v5390
        %v5455 = vunpack.c.h.b16 %v5390
        %v5456 = vunpack.c.l.b16 %v5391
        %v5457 = vunpack.c.h.b16 %v5391
        %v5458 = vunpack.c.l.b16 %v5392
        %v5459 = vunpack.c.h.b16 %v5392
        %v5460 = vunpack.c.l.b16 %v5393
        %v5461 = vunpack.c.h.b16 %v5393
        %v5462 = vunpack.c.l.b16 %v5394
        %v5463 = vunpack.c.h.b16 %v5394
        %v5464 = vunpack.c.l.b16 %v5395
        %v5465 = vunpack.c.h.b16 %v5395
        %v5466 = vunpack.c.l.b16 %v5396
        %v5467 = vunpack.c.h.b16 %v5396
        %v5468 = vunpack.c.l.b16 %v5397
        %v5469 = vunpack.c.h.b16 %v5397
        %v5470 = vunpack.c.l.b16 %v5398
        %v5471 = vunpack.c.h.b16 %v5398
        %v5472 = vunpack.c.l.b16 %v5399
        %v5473 = vunpack.c.h.b16 %v5399
        %v5474 = vunpack.c.l.b16 %v5400
        %v5475 = vunpack.c.h.b16 %v5400
        %v5476 = vunpack.c.l.b16 %v5401
        %v5477 = vunpack.c.h.b16 %v5401
        %v5478 = vunpack.c.l.b16 %v5402
        %v5479 = vunpack.c.h.b16 %v5402
        %v5480 = vunpack.c.l.b16 %v5403
        %v5481 = vunpack.c.h.b16 %v5403
        %v5482 = vunpack.c.l.b16 %v5404
        %v5483 = vunpack.c.h.b16 %v5404
        %v5484 = vunpack.c.l.b16 %v5405
        %v5485 = vunpack.c.h.b16 %v5405
        %v5486 = vunpack.c.l.b16 %v5406
        %v5487 = vunpack.c.h.b16 %v5406
        %v5488 = vunpack.c.l.b16 %v5407
        %v5489 = vunpack.c.h.b16 %v5407
        %v5490 = vunpack.c.l.b16 %v5408
        %v5491 = vunpack.c.h.b16 %v5408
        %v5492 = vunpack.c.l.b16 %v5409
        %v5493 = vunpack.c.h.b16 %v5409
        %v5494 = vunpack.c.l.b16 %v5410
        %v5495 = vunpack.c.h.b16 %v5410
        %v5496 = vunpack.c.l.b16 %v5411
        %v5497 = vunpack.c.h.b16 %v5411
        %v5498 = vunpack.c.l.b16 %v5412
        %v5499 = vunpack.c.h.b16 %v5412
        %v5500 = vunpack.c.l.b16 %v5413
        %v5501 = vunpack.c.h.b16 %v5413
        %v5502 = vunpack.c.l.b16 %v5414
        %v5503 = vunpack.c.h.b16 %v5414
        %v5504 = vunpack.c.l.b16 %v5415
        %v5505 = vunpack.c.h.b16 %v5415
        %v5506 = vunpack.c.l.b16 %v5416
        %v5507 = vunpack.c.h.b16 %v5416
        %v5508 = vunpack.c.l.b16 %v5417
        %v5509 = vunpack.c.h.b16 %v5417
        %v5510 = vunpack.c.l.b16 %v5418
        %v5511 = vunpack.c.h.b16 %v5418
        %v5512 = vunpack.c.l.b16 %v5419
        %v5513 = vunpack.c.h.b16 %v5419
        %v5514 = vunpack.c.l.b16 %v5420
        %v5515 = vunpack.c.h.b16 %v5420
        %v5516 = vunpack.c.l.b16 %v5421
        %v5517 = vunpack.c.h.b16 %v5421
        %v5518 = vpack.c.b16 %v5454, %v5454
        %v5519 = vpack.c.b16 %v5455, %v5455
        %v5520 = vpack.c.b16 %v5456, %v5456
        %v5521 = vpack.c.b16 %v5457, %v5457
        %v5522 = vpack.c.b16 %v5458, %v5458
        %v5523 = vpack.c.b16 %v5459, %v5459
        %v5524 = vpack.c.b16 %v5460, %v5460
        %v5525 = vpack.c.b16 %v5461, %v5461
        %v5526 = vpack.c.b16 %v5462, %v5462
        %v5527 = vpack.c.b16 %v5463, %v5463
        %v5528 = vpack.c.b16 %v5464, %v5464
        %v5529 = vpack.c.b16 %v5465, %v5465
        %v5530 = vpack.c.b16 %v5466, %v5466
        %v5531 = vpack.c.b16 %v5467, %v5467
        %v5532 = vpack.c.b16 %v5468, %v5468
        %v5533 = vpack.c.b16 %v5469, %v5469
        %v5534 = vpack.c.b16 %v5470, %v5470
        %v5535 = vpack.c.b16 %v5471, %v5471
        %v5536 = vpack.c.b16 %v5472, %v5472
        %v5537 = vpack.c.b16 %v5473, %v5473
        %v5538 = vpack.c.b16 %v5474, %v5474
        %v5539 = vpack.c.b16 %v5475, %v5475
        %v5540 = vpack.c.b16 %v5476, %v5476
        %v5541 = vpack.c.b16 %v5477, %v5477
        %v5542 = vpack.c.b16 %v5478, %v5478
        %v5543 = vpack.c.b16 %v5479, %v5479
        %v5544 = vpack.c.b16 %v5480, %v5480
        %v5545 = vpack.c.b16 %v5481, %v5481
        %v5546 = vpack.c.b16 %v5482, %v5482
        %v5547 = vpack.c.b16 %v5483, %v5483
        %v5548 = vpack.c.b16 %v5484, %v5484
        %v5549 = vpack.c.b16 %v5485, %v5485
        %v5550 = vpack.c.b16 %v5486, %v5486
        %v5551 = vpack.c.b16 %v5487, %v5487
        %v5552 = vpack.c.b16 %v5488, %v5488
        %v5553 = vpack.c.b16 %v5489, %v5489
        %v5554 = vpack.c.b16 %v5490, %v5490
        %v5555 = vpack.c.b16 %v5491, %v5491
        %v5556 = vpack.c.b16 %v5492, %v5492
        %v5557 = vpack.c.b16 %v5493, %v5493
        %v5558 = vpack.c.b16 %v5494, %v5494
        %v5559 = vpack.c.b16 %v5495, %v5495
        %v5560 = vpack.c.b16 %v5496, %v5496
        %v5561 = vpack.c.b16 %v5497, %v5497
        %v5562 = vpack.c.b16 %v5498, %v5498
        %v5563 = vpack.c.b16 %v5499, %v5499
        %v5564 = vpack.c.b16 %v5500, %v5500
        %v5565 = vpack.c.b16 %v5501, %v5501
        %v5566 = vpack.c.b16 %v5502, %v5502
        %v5567 = vpack.c.b16 %v5503, %v5503
        %v5568 = vpack.c.b16 %v5504, %v5504
        %v5569 = vpack.c.b16 %v5505, %v5505
        %v5570 = vpack.c.b16 %v5506, %v5506
        %v5571 = vpack.c.b16 %v5507, %v5507
        %v5572 = vpack.c.b16 %v5508, %v5508
        %v5573 = vpack.c.b16 %v5509, %v5509
        %v5574 = vpack.c.b16 %v5510, %v5510
        %v5575 = vpack.c.b16 %v5511, %v5511
        %v5576 = vpack.c.b16 %v5512, %v5512
        %v5577 = vpack.c.b16 %v5513, %v5513
        %v5578 = vpack.c.b16 %v5514, %v5514
        %v5579 = vpack.c.b16 %v5515, %v5515
        %v5580 = vpack.c.b16 %v5516, %v5516
        %v5581 = vpack.c.b16 %v5517, %v5517
        %vm5646 = vcmask 27648
        %5647 = vst.msk [vmem:[%s182] sm:$0xf] %vm5646, %v5518
        %5648 = vst.msk [vmem:[%s182 + $0x4] sm:$0xf] %vm5646, %v5519
        %5649 = vst.msk [vmem:[%s182 + $0x8] sm:$0xf] %vm5646, %v5520
        %5650 = vst.msk [vmem:[%s182 + $0xc] sm:$0xf] %vm5646, %v5521
        %5651 = vst.msk [vmem:[%s182 + $0x10] sm:$0xf] %vm5646, %v5522
        %5652 = vst.msk [vmem:[%s182 + $0x14] sm:$0xf] %vm5646, %v5523
        %5653 = vst.msk [vmem:[%s182 + $0x18] sm:$0xf] %vm5646, %v5524
        %5654 = vst.msk [vmem:[%s182 + $0x1c] sm:$0xf] %vm5646, %v5525
        %5655 = vst.msk [vmem:[%s182 + $0x20] sm:$0xf] %vm5646, %v5526
        %5656 = vst.msk [vmem:[%s182 + $0x24] sm:$0xf] %vm5646, %v5527
        %5657 = vst.msk [vmem:[%s182 + $0x28] sm:$0xf] %vm5646, %v5528
        %5658 = vst.msk [vmem:[%s182 + $0x2c] sm:$0xf] %vm5646, %v5529
        %5659 = vst.msk [vmem:[%s182 + $0x30] sm:$0xf] %vm5646, %v5530
        %5660 = vst.msk [vmem:[%s182 + $0x34] sm:$0xf] %vm5646, %v5531
        %5661 = vst.msk [vmem:[%s182 + $0x38] sm:$0xf] %vm5646, %v5532
        %5662 = vst.msk [vmem:[%s182 + $0x3c] sm:$0xf] %vm5646, %v5533
        %5663 = vst.msk [vmem:[%s182 + $0x40] sm:$0xf] %vm5646, %v5534
        %5664 = vst.msk [vmem:[%s182 + $0x44] sm:$0xf] %vm5646, %v5535
        %5665 = vst.msk [vmem:[%s182 + $0x48] sm:$0xf] %vm5646, %v5536
        %5666 = vst.msk [vmem:[%s182 + $0x4c] sm:$0xf] %vm5646, %v5537
        %5667 = vst.msk [vmem:[%s182 + $0x50] sm:$0xf] %vm5646, %v5538
        %5668 = vst.msk [vmem:[%s182 + $0x54] sm:$0xf] %vm5646, %v5539
        %5669 = vst.msk [vmem:[%s182 + $0x58] sm:$0xf] %vm5646, %v5540
        %5670 = vst.msk [vmem:[%s182 + $0x5c] sm:$0xf] %vm5646, %v5541
        %5671 = vst.msk [vmem:[%s182 + $0x60] sm:$0xf] %vm5646, %v5542
        %5672 = vst.msk [vmem:[%s182 + $0x64] sm:$0xf] %vm5646, %v5543
        %5673 = vst.msk [vmem:[%s182 + $0x68] sm:$0xf] %vm5646, %v5544
        %5674 = vst.msk [vmem:[%s182 + $0x6c] sm:$0xf] %vm5646, %v5545
        %5675 = vst.msk [vmem:[%s182 + $0x70] sm:$0xf] %vm5646, %v5546
        %5676 = vst.msk [vmem:[%s182 + $0x74] sm:$0xf] %vm5646, %v5547
        %5677 = vst.msk [vmem:[%s182 + $0x78] sm:$0xf] %vm5646, %v5548
        %5678 = vst.msk [vmem:[%s182 + $0x7c] sm:$0xf] %vm5646, %v5549
        %5679 = vst.msk [vmem:[%s182 + $0x80] sm:$0xf] %vm5646, %v5550
        %5680 = vst.msk [vmem:[%s182 + $0x84] sm:$0xf] %vm5646, %v5551
        %5681 = vst.msk [vmem:[%s182 + $0x88] sm:$0xf] %vm5646, %v5552
        %5682 = vst.msk [vmem:[%s182 + $0x8c] sm:$0xf] %vm5646, %v5553
        %5683 = vst.msk [vmem:[%s182 + $0x90] sm:$0xf] %vm5646, %v5554
        %5684 = vst.msk [vmem:[%s182 + $0x94] sm:$0xf] %vm5646, %v5555
        %5685 = vst.msk [vmem:[%s182 + $0x98] sm:$0xf] %vm5646, %v5556
        %5686 = vst.msk [vmem:[%s182 + $0x9c] sm:$0xf] %vm5646, %v5557
        %5687 = vst.msk [vmem:[%s182 + $0xa0] sm:$0xf] %vm5646, %v5558
        %5688 = vst.msk [vmem:[%s182 + $0xa4] sm:$0xf] %vm5646, %v5559
        %5689 = vst.msk [vmem:[%s182 + $0xa8] sm:$0xf] %vm5646, %v5560
        %5690 = vst.msk [vmem:[%s182 + $0xac] sm:$0xf] %vm5646, %v5561
        %5691 = vst.msk [vmem:[%s182 + $0xb0] sm:$0xf] %vm5646, %v5562
        %5692 = vst.msk [vmem:[%s182 + $0xb4] sm:$0xf] %vm5646, %v5563
        %5693 = vst.msk [vmem:[%s182 + $0xb8] sm:$0xf] %vm5646, %v5564
        %5694 = vst.msk [vmem:[%s182 + $0xbc] sm:$0xf] %vm5646, %v5565
        %5695 = vst.msk [vmem:[%s182 + $0xc0] sm:$0xf] %vm5646, %v5566
        %5696 = vst.msk [vmem:[%s182 + $0xc4] sm:$0xf] %vm5646, %v5567
        %5697 = vst.msk [vmem:[%s182 + $0xc8] sm:$0xf] %vm5646, %v5568
        %5698 = vst.msk [vmem:[%s182 + $0xcc] sm:$0xf] %vm5646, %v5569
        %5699 = vst.msk [vmem:[%s182 + $0xd0] sm:$0xf] %vm5646, %v5570
        %5700 = vst.msk [vmem:[%s182 + $0xd4] sm:$0xf] %vm5646, %v5571
        %5701 = vst.msk [vmem:[%s182 + $0xd8] sm:$0xf] %vm5646, %v5572
        %5702 = vst.msk [vmem:[%s182 + $0xdc] sm:$0xf] %vm5646, %v5573
        %5703 = vst.msk [vmem:[%s182 + $0xe0] sm:$0xf] %vm5646, %v5574
        %5704 = vst.msk [vmem:[%s182 + $0xe4] sm:$0xf] %vm5646, %v5575
        %5705 = vst.msk [vmem:[%s182 + $0xe8] sm:$0xf] %vm5646, %v5576
        %5706 = vst.msk [vmem:[%s182 + $0xec] sm:$0xf] %vm5646, %v5577
        %5707 = vst.msk [vmem:[%s182 + $0xf0] sm:$0xf] %vm5646, %v5578
        %5708 = vst.msk [vmem:[%s182 + $0xf4] sm:$0xf] %vm5646, %v5579
        %5709 = vst.msk [vmem:[%s182 + $0xf8] sm:$0xf] %vm5646, %v5580
        %5710 = vst.msk [vmem:[%s182 + $0xfc] sm:$0xf] %vm5646, %v5581
      $region40: #{vdsr_forward.1} parent=31 // pred_fallthru
        _
      %p5711 = scmp.ne.s32.totalorder %s19, 9
      // Predicated region
      $region41: #{vdsr_forward.1} parent=31 // pred_check
        %p5712 = pneg %p5711
      $region42: #{vdsr_forward.1} parent=31 // pred_check_branch
        %5714 = sbr.rel (%p5712) target = $region44
      $region43: #{vdsr_forward.1} parent=31 // pred_region
        %v5715 = vpack.c.bf16 %v5324, %v5323
        %v5716 = vpack.c.bf16 %v5326, %v5325
        %v5717 = vpack.c.bf16 %v5328, %v5327
        %v5718 = vpack.c.bf16 %v5330, %v5329
        %v5719 = vpack.c.bf16 %v5332, %v5331
        %v5720 = vpack.c.bf16 %v5334, %v5333
        %v5721 = vpack.c.bf16 %v5336, %v5335
        %v5722 = vpack.c.bf16 %v5338, %v5337
        %v5723 = vpack.c.bf16 %v5340, %v5339
        %v5724 = vpack.c.bf16 %v5342, %v5341
        %v5725 = vpack.c.bf16 %v5344, %v5343
        %v5726 = vpack.c.bf16 %v5346, %v5345
        %v5727 = vpack.c.bf16 %v5348, %v5347
        %v5728 = vpack.c.bf16 %v5350, %v5349
        %v5729 = vpack.c.bf16 %v5352, %v5351
        %v5730 = vpack.c.bf16 %v5354, %v5353
        %v5731 = vpack.c.bf16 %v5356, %v5355
        %v5732 = vpack.c.bf16 %v5358, %v5357
        %v5733 = vpack.c.bf16 %v5360, %v5359
        %v5734 = vpack.c.bf16 %v5362, %v5361
        %v5735 = vpack.c.bf16 %v5364, %v5363
        %v5736 = vpack.c.bf16 %v5366, %v5365
        %v5737 = vpack.c.bf16 %v5368, %v5367
        %v5738 = vpack.c.bf16 %v5370, %v5369
        %v5739 = vpack.c.bf16 %v5372, %v5371
        %v5740 = vpack.c.bf16 %v5374, %v5373
        %v5741 = vpack.c.bf16 %v5376, %v5375
        %v5742 = vpack.c.bf16 %v5378, %v5377
        %v5743 = vpack.c.bf16 %v5380, %v5379
        %v5744 = vpack.c.bf16 %v5382, %v5381
        %v5745 = vpack.c.bf16 %v5384, %v5383
        %v5746 = vpack.c.bf16 %v5386, %v5385
        %vm5747 = vsmask.f32 256
        %v5749 = vshrl.u32 %v5715, 16
        %v5751 = vrot.slane %v5749, 7
        %v5752 = vshll.u32 %v5715, 16
        %v5754 = vor.u32 %v5751, %v5752
        %v5756 = vshrl.u32 %v5716, 16
        %v5758 = vrot.slane %v5756, 7
        %v5759 = vshll.u32 %v5716, 16
        %v5761 = vor.u32 %v5758, %v5759
        %v5762 = vsel %vm5747, %v5751, %v5761
        %v5764 = vshrl.u32 %v5717, 16
        %v5766 = vrot.slane %v5764, 7
        %v5767 = vshll.u32 %v5717, 16
        %v5769 = vor.u32 %v5766, %v5767
        %v5771 = vshrl.u32 %v5718, 16
        %v5773 = vrot.slane %v5771, 7
        %v5774 = vshll.u32 %v5718, 16
        %v5776 = vor.u32 %v5773, %v5774
        %v5777 = vsel %vm5747, %v5766, %v5776
        %v5779 = vshrl.u32 %v5719, 16
        %v5781 = vrot.slane %v5779, 7
        %v5782 = vshll.u32 %v5719, 16
        %v5784 = vor.u32 %v5781, %v5782
        %v5786 = vshrl.u32 %v5720, 16
        %v5788 = vrot.slane %v5786, 7
        %v5789 = vshll.u32 %v5720, 16
        %v5791 = vor.u32 %v5788, %v5789
        %v5792 = vsel %vm5747, %v5781, %v5791
        %v5794 = vshrl.u32 %v5721, 16
        %v5796 = vrot.slane %v5794, 7
        %v5797 = vshll.u32 %v5721, 16
        %v5799 = vor.u32 %v5796, %v5797
        %v5801 = vshrl.u32 %v5722, 16
        %v5803 = vrot.slane %v5801, 7
        %v5804 = vshll.u32 %v5722, 16
        %v5806 = vor.u32 %v5803, %v5804
        %v5807 = vsel %vm5747, %v5796, %v5806
        %v5809 = vshrl.u32 %v5723, 16
        %v5811 = vrot.slane %v5809, 7
        %v5812 = vshll.u32 %v5723, 16
        %v5814 = vor.u32 %v5811, %v5812
        %v5816 = vshrl.u32 %v5724, 16
        %v5818 = vrot.slane %v5816, 7
        %v5819 = vshll.u32 %v5724, 16
        %v5821 = vor.u32 %v5818, %v5819
        %v5822 = vsel %vm5747, %v5811, %v5821
        %v5824 = vshrl.u32 %v5725, 16
        %v5826 = vrot.slane %v5824, 7
        %v5827 = vshll.u32 %v5725, 16
        %v5829 = vor.u32 %v5826, %v5827
        %v5831 = vshrl.u32 %v5726, 16
        %v5833 = vrot.slane %v5831, 7
        %v5834 = vshll.u32 %v5726, 16
        %v5836 = vor.u32 %v5833, %v5834
        %v5837 = vsel %vm5747, %v5826, %v5836
        %v5839 = vshrl.u32 %v5727, 16
        %v5841 = vrot.slane %v5839, 7
        %v5842 = vshll.u32 %v5727, 16
        %v5844 = vor.u32 %v5841, %v5842
        %v5846 = vshrl.u32 %v5728, 16
        %v5848 = vrot.slane %v5846, 7
        %v5849 = vshll.u32 %v5728, 16
        %v5851 = vor.u32 %v5848, %v5849
        %v5852 = vsel %vm5747, %v5841, %v5851
        %v5854 = vshrl.u32 %v5729, 16
        %v5856 = vrot.slane %v5854, 7
        %v5857 = vshll.u32 %v5729, 16
        %v5859 = vor.u32 %v5856, %v5857
        %v5861 = vshrl.u32 %v5730, 16
        %v5863 = vrot.slane %v5861, 7
        %v5864 = vshll.u32 %v5730, 16
        %v5866 = vor.u32 %v5863, %v5864
        %v5867 = vsel %vm5747, %v5856, %v5866
        %v5869 = vshrl.u32 %v5731, 16
        %v5871 = vrot.slane %v5869, 7
        %v5872 = vshll.u32 %v5731, 16
        %v5874 = vor.u32 %v5871, %v5872
        %v5876 = vshrl.u32 %v5732, 16
        %v5878 = vrot.slane %v5876, 7
        %v5879 = vshll.u32 %v5732, 16
        %v5881 = vor.u32 %v5878, %v5879
        %v5882 = vsel %vm5747, %v5871, %v5881
        %v5884 = vshrl.u32 %v5733, 16
        %v5886 = vrot.slane %v5884, 7
        %v5887 = vshll.u32 %v5733, 16
        %v5889 = vor.u32 %v5886, %v5887
        %v5891 = vshrl.u32 %v5734, 16
        %v5893 = vrot.slane %v5891, 7
        %v5894 = vshll.u32 %v5734, 16
        %v5896 = vor.u32 %v5893, %v5894
        %v5897 = vsel %vm5747, %v5886, %v5896
        %v5899 = vshrl.u32 %v5735, 16
        %v5901 = vrot.slane %v5899, 7
        %v5902 = vshll.u32 %v5735, 16
        %v5904 = vor.u32 %v5901, %v5902
        %v5906 = vshrl.u32 %v5736, 16
        %v5908 = vrot.slane %v5906, 7
        %v5909 = vshll.u32 %v5736, 16
        %v5911 = vor.u32 %v5908, %v5909
        %v5912 = vsel %vm5747, %v5901, %v5911
        %v5914 = vshrl.u32 %v5737, 16
        %v5916 = vrot.slane %v5914, 7
        %v5917 = vshll.u32 %v5737, 16
        %v5919 = vor.u32 %v5916, %v5917
        %v5921 = vshrl.u32 %v5738, 16
        %v5923 = vrot.slane %v5921, 7
        %v5924 = vshll.u32 %v5738, 16
        %v5926 = vor.u32 %v5923, %v5924
        %v5927 = vsel %vm5747, %v5916, %v5926
        %v5929 = vshrl.u32 %v5739, 16
        %v5931 = vrot.slane %v5929, 7
        %v5932 = vshll.u32 %v5739, 16
        %v5934 = vor.u32 %v5931, %v5932
        %v5936 = vshrl.u32 %v5740, 16
        %v5938 = vrot.slane %v5936, 7
        %v5939 = vshll.u32 %v5740, 16
        %v5941 = vor.u32 %v5938, %v5939
        %v5942 = vsel %vm5747, %v5931, %v5941
        %v5944 = vshrl.u32 %v5741, 16
        %v5946 = vrot.slane %v5944, 7
        %v5947 = vshll.u32 %v5741, 16
        %v5949 = vor.u32 %v5946, %v5947
        %v5951 = vshrl.u32 %v5742, 16
        %v5953 = vrot.slane %v5951, 7
        %v5954 = vshll.u32 %v5742, 16
        %v5956 = vor.u32 %v5953, %v5954
        %v5957 = vsel %vm5747, %v5946, %v5956
        %v5959 = vshrl.u32 %v5743, 16
        %v5961 = vrot.slane %v5959, 7
        %v5962 = vshll.u32 %v5743, 16
        %v5964 = vor.u32 %v5961, %v5962
        %v5966 = vshrl.u32 %v5744, 16
        %v5968 = vrot.slane %v5966, 7
        %v5969 = vshll.u32 %v5744, 16
        %v5971 = vor.u32 %v5968, %v5969
        %v5972 = vsel %vm5747, %v5961, %v5971
        %v5974 = vshrl.u32 %v5745, 16
        %v5976 = vrot.slane %v5974, 7
        %v5977 = vshll.u32 %v5745, 16
        %v5979 = vor.u32 %v5976, %v5977
        %v5981 = vshrl.u32 %v5746, 16
        %v5983 = vrot.slane %v5981, 7
        %v5984 = vshll.u32 %v5746, 16
        %v5986 = vor.u32 %v5983, %v5984
        %v5987 = vsel %vm5747, %v5976, %v5986
        %vm6020 = vcmask 1040384
        %vm6021 = vmand %vm6020, %vm5747
        %v6022 = vsel %vm6021, 0, %v5754
        %v6023 = vsel %vm6021, 0, %v5769
        %v6024 = vsel %vm6021, 0, %v5784
        %v6025 = vsel %vm6021, 0, %v5799
        %v6026 = vsel %vm6021, 0, %v5814
        %v6027 = vsel %vm6021, 0, %v5829
        %v6028 = vsel %vm6021, 0, %v5844
        %v6029 = vsel %vm6021, 0, %v5859
        %v6030 = vsel %vm6021, 0, %v5874
        %v6031 = vsel %vm6021, 0, %v5889
        %v6032 = vsel %vm6021, 0, %v5904
        %v6033 = vsel %vm6021, 0, %v5919
        %v6034 = vsel %vm6021, 0, %v5934
        %v6035 = vsel %vm6021, 0, %v5949
        %v6036 = vsel %vm6021, 0, %v5964
        %v6037 = vsel %vm6021, 0, %v5979
        %v6038 = vsel %vm6021, %v5758, 0
        %v6039 = vsel %vm6021, %v5773, 0
        %v6040 = vsel %vm6021, %v5788, 0
        %v6041 = vsel %vm6021, %v5803, 0
        %v6042 = vsel %vm6021, %v5818, 0
        %v6043 = vsel %vm6021, %v5833, 0
        %v6044 = vsel %vm6021, %v5848, 0
        %v6045 = vsel %vm6021, %v5863, 0
        %v6046 = vsel %vm6021, %v5878, 0
        %v6047 = vsel %vm6021, %v5893, 0
        %v6048 = vsel %vm6021, %v5908, 0
        %v6049 = vsel %vm6021, %v5923, 0
        %v6050 = vsel %vm6021, %v5938, 0
        %v6051 = vsel %vm6021, %v5953, 0
        %v6052 = vsel %vm6021, %v5968, 0
        %v6053 = vsel %vm6021, %v5983, 0
        %v6086 = vunpack.c.l.b16 %v6022
        %v6087 = vunpack.c.h.b16 %v6022
        %v6088 = vunpack.c.l.b16 %v5762
        %v6089 = vunpack.c.h.b16 %v5762
        %v6090 = vunpack.c.l.b16 %v6038
        %v6091 = vunpack.c.l.b16 %v6023
        %v6092 = vunpack.c.h.b16 %v6023
        %v6093 = vunpack.c.l.b16 %v5777
        %v6094 = vunpack.c.h.b16 %v5777
        %v6095 = vunpack.c.l.b16 %v6039
        %v6096 = vunpack.c.l.b16 %v6024
        %v6097 = vunpack.c.h.b16 %v6024
        %v6098 = vunpack.c.l.b16 %v5792
        %v6099 = vunpack.c.h.b16 %v5792
        %v6100 = vunpack.c.l.b16 %v6040
        %v6101 = vunpack.c.l.b16 %v6025
        %v6102 = vunpack.c.h.b16 %v6025
        %v6103 = vunpack.c.l.b16 %v5807
        %v6104 = vunpack.c.h.b16 %v5807
        %v6105 = vunpack.c.l.b16 %v6041
        %v6106 = vunpack.c.l.b16 %v6026
        %v6107 = vunpack.c.h.b16 %v6026
        %v6108 = vunpack.c.l.b16 %v5822
        %v6109 = vunpack.c.h.b16 %v5822
        %v6110 = vunpack.c.l.b16 %v6042
        %v6111 = vunpack.c.l.b16 %v6027
        %v6112 = vunpack.c.h.b16 %v6027
        %v6113 = vunpack.c.l.b16 %v5837
        %v6114 = vunpack.c.h.b16 %v5837
        %v6115 = vunpack.c.l.b16 %v6043
        %v6116 = vunpack.c.l.b16 %v6028
        %v6117 = vunpack.c.h.b16 %v6028
        %v6118 = vunpack.c.l.b16 %v5852
        %v6119 = vunpack.c.h.b16 %v5852
        %v6120 = vunpack.c.l.b16 %v6044
        %v6121 = vunpack.c.l.b16 %v6029
        %v6122 = vunpack.c.h.b16 %v6029
        %v6123 = vunpack.c.l.b16 %v5867
        %v6124 = vunpack.c.h.b16 %v5867
        %v6125 = vunpack.c.l.b16 %v6045
        %v6126 = vunpack.c.l.b16 %v6030
        %v6127 = vunpack.c.h.b16 %v6030
        %v6128 = vunpack.c.l.b16 %v5882
        %v6129 = vunpack.c.h.b16 %v5882
        %v6130 = vunpack.c.l.b16 %v6046
        %v6131 = vunpack.c.l.b16 %v6031
        %v6132 = vunpack.c.h.b16 %v6031
        %v6133 = vunpack.c.l.b16 %v5897
        %v6134 = vunpack.c.h.b16 %v5897
        %v6135 = vunpack.c.l.b16 %v6047
        %v6136 = vunpack.c.l.b16 %v6032
        %v6137 = vunpack.c.h.b16 %v6032
        %v6138 = vunpack.c.l.b16 %v5912
        %v6139 = vunpack.c.h.b16 %v5912
        %v6140 = vunpack.c.l.b16 %v6048
        %v6141 = vunpack.c.l.b16 %v6033
        %v6142 = vunpack.c.h.b16 %v6033
        %v6143 = vunpack.c.l.b16 %v5927
        %v6144 = vunpack.c.h.b16 %v5927
        %v6145 = vunpack.c.l.b16 %v6049
        %v6146 = vunpack.c.l.b16 %v6034
        %v6147 = vunpack.c.h.b16 %v6034
        %v6148 = vunpack.c.l.b16 %v5942
        %v6149 = vunpack.c.h.b16 %v5942
        %v6150 = vunpack.c.l.b16 %v6050
        %v6151 = vunpack.c.l.b16 %v6035
        %v6152 = vunpack.c.h.b16 %v6035
        %v6153 = vunpack.c.l.b16 %v5957
        %v6154 = vunpack.c.h.b16 %v5957
        %v6155 = vunpack.c.l.b16 %v6051
        %v6156 = vunpack.c.l.b16 %v6036
        %v6157 = vunpack.c.h.b16 %v6036
        %v6158 = vunpack.c.l.b16 %v5972
        %v6159 = vunpack.c.h.b16 %v5972
        %v6160 = vunpack.c.l.b16 %v6052
        %v6161 = vunpack.c.l.b16 %v6037
        %v6162 = vunpack.c.h.b16 %v6037
        %v6163 = vunpack.c.l.b16 %v5987
        %v6164 = vunpack.c.h.b16 %v5987
        %v6165 = vunpack.c.l.b16 %v6053
        %v6166 = vpack.c.b16 %v6086, %v6086
        %v6167 = vpack.c.b16 %v6087, %v6087
        %v6168 = vpack.c.b16 %v6088, %v6088
        %v6169 = vpack.c.b16 %v6089, %v6089
        %v6170 = vpack.c.b16 %v6090, %v6090
        %v6171 = vpack.c.b16 %v6091, %v6091
        %v6172 = vpack.c.b16 %v6092, %v6092
        %v6173 = vpack.c.b16 %v6093, %v6093
        %v6174 = vpack.c.b16 %v6094, %v6094
        %v6175 = vpack.c.b16 %v6095, %v6095
        %v6176 = vpack.c.b16 %v6096, %v6096
        %v6177 = vpack.c.b16 %v6097, %v6097
        %v6178 = vpack.c.b16 %v6098, %v6098
        %v6179 = vpack.c.b16 %v6099, %v6099
        %v6180 = vpack.c.b16 %v6100, %v6100
        %v6181 = vpack.c.b16 %v6101, %v6101
        %v6182 = vpack.c.b16 %v6102, %v6102
        %v6183 = vpack.c.b16 %v6103, %v6103
        %v6184 = vpack.c.b16 %v6104, %v6104
        %v6185 = vpack.c.b16 %v6105, %v6105
        %v6186 = vpack.c.b16 %v6106, %v6106
        %v6187 = vpack.c.b16 %v6107, %v6107
        %v6188 = vpack.c.b16 %v6108, %v6108
        %v6189 = vpack.c.b16 %v6109, %v6109
        %v6190 = vpack.c.b16 %v6110, %v6110
        %v6191 = vpack.c.b16 %v6111, %v6111
        %v6192 = vpack.c.b16 %v6112, %v6112
        %v6193 = vpack.c.b16 %v6113, %v6113
        %v6194 = vpack.c.b16 %v6114, %v6114
        %v6195 = vpack.c.b16 %v6115, %v6115
        %v6196 = vpack.c.b16 %v6116, %v6116
        %v6197 = vpack.c.b16 %v6117, %v6117
        %v6198 = vpack.c.b16 %v6118, %v6118
        %v6199 = vpack.c.b16 %v6119, %v6119
        %v6200 = vpack.c.b16 %v6120, %v6120
        %v6201 = vpack.c.b16 %v6121, %v6121
        %v6202 = vpack.c.b16 %v6122, %v6122
        %v6203 = vpack.c.b16 %v6123, %v6123
        %v6204 = vpack.c.b16 %v6124, %v6124
        %v6205 = vpack.c.b16 %v6125, %v6125
        %v6206 = vpack.c.b16 %v6126, %v6126
        %v6207 = vpack.c.b16 %v6127, %v6127
        %v6208 = vpack.c.b16 %v6128, %v6128
        %v6209 = vpack.c.b16 %v6129, %v6129
        %v6210 = vpack.c.b16 %v6130, %v6130
        %v6211 = vpack.c.b16 %v6131, %v6131
        %v6212 = vpack.c.b16 %v6132, %v6132
        %v6213 = vpack.c.b16 %v6133, %v6133
        %v6214 = vpack.c.b16 %v6134, %v6134
        %v6215 = vpack.c.b16 %v6135, %v6135
        %v6216 = vpack.c.b16 %v6136, %v6136
        %v6217 = vpack.c.b16 %v6137, %v6137
        %v6218 = vpack.c.b16 %v6138, %v6138
        %v6219 = vpack.c.b16 %v6139, %v6139
        %v6220 = vpack.c.b16 %v6140, %v6140
        %v6221 = vpack.c.b16 %v6141, %v6141
        %v6222 = vpack.c.b16 %v6142, %v6142
        %v6223 = vpack.c.b16 %v6143, %v6143
        %v6224 = vpack.c.b16 %v6144, %v6144
        %v6225 = vpack.c.b16 %v6145, %v6145
        %v6226 = vpack.c.b16 %v6146, %v6146
        %v6227 = vpack.c.b16 %v6147, %v6147
        %v6228 = vpack.c.b16 %v6148, %v6148
        %v6229 = vpack.c.b16 %v6149, %v6149
        %v6230 = vpack.c.b16 %v6150, %v6150
        %v6231 = vpack.c.b16 %v6151, %v6151
        %v6232 = vpack.c.b16 %v6152, %v6152
        %v6233 = vpack.c.b16 %v6153, %v6153
        %v6234 = vpack.c.b16 %v6154, %v6154
        %v6235 = vpack.c.b16 %v6155, %v6155
        %v6236 = vpack.c.b16 %v6156, %v6156
        %v6237 = vpack.c.b16 %v6157, %v6157
        %v6238 = vpack.c.b16 %v6158, %v6158
        %v6239 = vpack.c.b16 %v6159, %v6159
        %v6240 = vpack.c.b16 %v6160, %v6160
        %v6241 = vpack.c.b16 %v6161, %v6161
        %v6242 = vpack.c.b16 %v6162, %v6162
        %v6243 = vpack.c.b16 %v6163, %v6163
        %v6244 = vpack.c.b16 %v6164, %v6164
        %v6245 = vpack.c.b16 %v6165, %v6165
        %s6326 = smul.u32 %s195, 170
        %s6327 = sadd.s32 5, %s6326
        %s6328 = smul.addr %s6327, 4
        %s6329 = scalar_lea.vmem [#allocation2], %s6328
        %vm6330 = vcmask 257024
        %6331 = vst.msk [vmem:[%s6329] sm:$0xf] %vm6330, %v6166
        %6332 = vst.msk [vmem:[%s6329 + $0x4] sm:$0xf] %vm6330, %v6167
        %6333 = vst.msk [vmem:[%s6329 + $0x8] sm:$0xf] %vm6330, %v6168
        %6334 = vst.msk [vmem:[%s6329 + $0xc] sm:$0xf] %vm6330, %v6169
        %vm6335 = vcmask 253952
        %6336 = vst.msk [vmem:[%s6329 + $0x10] sm:$0x1] %vm6335, %v6170
        %6337 = vst.msk [vmem:[%s6329 + $0x14] sm:$0xf] %vm6330, %v6171
        %6338 = vst.msk [vmem:[%s6329 + $0x18] sm:$0xf] %vm6330, %v6172
        %6339 = vst.msk [vmem:[%s6329 + $0x1c] sm:$0xf] %vm6330, %v6173
        %6340 = vst.msk [vmem:[%s6329 + $0x20] sm:$0xf] %vm6330, %v6174
        %6341 = vst.msk [vmem:[%s6329 + $0x24] sm:$0x1] %vm6335, %v6175
        %6342 = vst.msk [vmem:[%s6329 + $0x28] sm:$0xf] %vm6330, %v6176
        %6343 = vst.msk [vmem:[%s6329 + $0x2c] sm:$0xf] %vm6330, %v6177
        %6344 = vst.msk [vmem:[%s6329 + $0x30] sm:$0xf] %vm6330, %v6178
        %6345 = vst.msk [vmem:[%s6329 + $0x34] sm:$0xf] %vm6330, %v6179
        %6346 = vst.msk [vmem:[%s6329 + $0x38] sm:$0x1] %vm6335, %v6180
        %6347 = vst.msk [vmem:[%s6329 + $0x3c] sm:$0xf] %vm6330, %v6181
        %6348 = vst.msk [vmem:[%s6329 + $0x40] sm:$0xf] %vm6330, %v6182
        %6349 = vst.msk [vmem:[%s6329 + $0x44] sm:$0xf] %vm6330, %v6183
        %6350 = vst.msk [vmem:[%s6329 + $0x48] sm:$0xf] %vm6330, %v6184
        %6351 = vst.msk [vmem:[%s6329 + $0x4c] sm:$0x1] %vm6335, %v6185
        %6352 = vst.msk [vmem:[%s6329 + $0x50] sm:$0xf] %vm6330, %v6186
        %6353 = vst.msk [vmem:[%s6329 + $0x54] sm:$0xf] %vm6330, %v6187
        %6354 = vst.msk [vmem:[%s6329 + $0x58] sm:$0xf] %vm6330, %v6188
        %6355 = vst.msk [vmem:[%s6329 + $0x5c] sm:$0xf] %vm6330, %v6189
        %6356 = vst.msk [vmem:[%s6329 + $0x60] sm:$0x1] %vm6335, %v6190
        %6357 = vst.msk [vmem:[%s6329 + $0x64] sm:$0xf] %vm6330, %v6191
        %6358 = vst.msk [vmem:[%s6329 + $0x68] sm:$0xf] %vm6330, %v6192
        %6359 = vst.msk [vmem:[%s6329 + $0x6c] sm:$0xf] %vm6330, %v6193
        %6360 = vst.msk [vmem:[%s6329 + $0x70] sm:$0xf] %vm6330, %v6194
        %6361 = vst.msk [vmem:[%s6329 + $0x74] sm:$0x1] %vm6335, %v6195
        %6362 = vst.msk [vmem:[%s6329 + $0x78] sm:$0xf] %vm6330, %v6196
        %6363 = vst.msk [vmem:[%s6329 + $0x7c] sm:$0xf] %vm6330, %v6197
        %6364 = vst.msk [vmem:[%s6329 + $0x80] sm:$0xf] %vm6330, %v6198
        %6365 = vst.msk [vmem:[%s6329 + $0x84] sm:$0xf] %vm6330, %v6199
        %6366 = vst.msk [vmem:[%s6329 + $0x88] sm:$0x1] %vm6335, %v6200
        %6367 = vst.msk [vmem:[%s6329 + $0x8c] sm:$0xf] %vm6330, %v6201
        %6368 = vst.msk [vmem:[%s6329 + $0x90] sm:$0xf] %vm6330, %v6202
        %6369 = vst.msk [vmem:[%s6329 + $0x94] sm:$0xf] %vm6330, %v6203
        %6370 = vst.msk [vmem:[%s6329 + $0x98] sm:$0xf] %vm6330, %v6204
        %6371 = vst.msk [vmem:[%s6329 + $0x9c] sm:$0x1] %vm6335, %v6205
        %6372 = vst.msk [vmem:[%s6329 + $0xa0] sm:$0xf] %vm6330, %v6206
        %6373 = vst.msk [vmem:[%s6329 + $0xa4] sm:$0xf] %vm6330, %v6207
        %6374 = vst.msk [vmem:[%s6329 + $0xa8] sm:$0xf] %vm6330, %v6208
        %6375 = vst.msk [vmem:[%s6329 + $0xac] sm:$0xf] %vm6330, %v6209
        %6376 = vst.msk [vmem:[%s6329 + $0xb0] sm:$0x1] %vm6335, %v6210
        %6377 = vst.msk [vmem:[%s6329 + $0xb4] sm:$0xf] %vm6330, %v6211
        %6378 = vst.msk [vmem:[%s6329 + $0xb8] sm:$0xf] %vm6330, %v6212
        %6379 = vst.msk [vmem:[%s6329 + $0xbc] sm:$0xf] %vm6330, %v6213
        %6380 = vst.msk [vmem:[%s6329 + $0xc0] sm:$0xf] %vm6330, %v6214
        %6381 = vst.msk [vmem:[%s6329 + $0xc4] sm:$0x1] %vm6335, %v6215
        %6382 = vst.msk [vmem:[%s6329 + $0xc8] sm:$0xf] %vm6330, %v6216
        %6383 = vst.msk [vmem:[%s6329 + $0xcc] sm:$0xf] %vm6330, %v6217
        %6384 = vst.msk [vmem:[%s6329 + $0xd0] sm:$0xf] %vm6330, %v6218
        %6385 = vst.msk [vmem:[%s6329 + $0xd4] sm:$0xf] %vm6330, %v6219
        %6386 = vst.msk [vmem:[%s6329 + $0xd8] sm:$0x1] %vm6335, %v6220
        %6387 = vst.msk [vmem:[%s6329 + $0xdc] sm:$0xf] %vm6330, %v6221
        %6388 = vst.msk [vmem:[%s6329 + $0xe0] sm:$0xf] %vm6330, %v6222
        %6389 = vst.msk [vmem:[%s6329 + $0xe4] sm:$0xf] %vm6330, %v6223
        %6390 = vst.msk [vmem:[%s6329 + $0xe8] sm:$0xf] %vm6330, %v6224
        %6391 = vst.msk [vmem:[%s6329 + $0xec] sm:$0x1] %vm6335, %v6225
        %6392 = vst.msk [vmem:[%s6329 + $0xf0] sm:$0xf] %vm6330, %v6226
        %6393 = vst.msk [vmem:[%s6329 + $0xf4] sm:$0xf] %vm6330, %v6227
        %6394 = vst.msk [vmem:[%s6329 + $0xf8] sm:$0xf] %vm6330, %v6228
        %6395 = vst.msk [vmem:[%s6329 + $0xfc] sm:$0xf] %vm6330, %v6229
        %6396 = vst.msk [vmem:[%s6329 + $0x100] sm:$0x1] %vm6335, %v6230
        %6397 = vst.msk [vmem:[%s6329 + $0x104] sm:$0xf] %vm6330, %v6231
        %6398 = vst.msk [vmem:[%s6329 + $0x108] sm:$0xf] %vm6330, %v6232
        %6399 = vst.msk [vmem:[%s6329 + $0x10c] sm:$0xf] %vm6330, %v6233
        %6400 = vst.msk [vmem:[%s6329 + $0x110] sm:$0xf] %vm6330, %v6234
        %6401 = vst.msk [vmem:[%s6329 + $0x114] sm:$0x1] %vm6335, %v6235
        %6402 = vst.msk [vmem:[%s6329 + $0x118] sm:$0xf] %vm6330, %v6236
        %6403 = vst.msk [vmem:[%s6329 + $0x11c] sm:$0xf] %vm6330, %v6237
        %6404 = vst.msk [vmem:[%s6329 + $0x120] sm:$0xf] %vm6330, %v6238
        %6405 = vst.msk [vmem:[%s6329 + $0x124] sm:$0xf] %vm6330, %v6239
        %6406 = vst.msk [vmem:[%s6329 + $0x128] sm:$0x1] %vm6335, %v6240
        %6407 = vst.msk [vmem:[%s6329 + $0x12c] sm:$0xf] %vm6330, %v6241
        %6408 = vst.msk [vmem:[%s6329 + $0x130] sm:$0xf] %vm6330, %v6242
        %6409 = vst.msk [vmem:[%s6329 + $0x134] sm:$0xf] %vm6330, %v6243
        %6410 = vst.msk [vmem:[%s6329 + $0x138] sm:$0xf] %vm6330, %v6244
        %6411 = vst.msk [vmem:[%s6329 + $0x13c] sm:$0x1] %vm6335, %v6245
      $region44: #{vdsr_forward.1} parent=31 // pred_fallthru
        _
      %s6412 = sadd.s32 80, %s2030
      %s6413 = smul.addr %s6412, 4
      %s6414 = scalar_lea.vmem [#allocation2], %s6413
      %v6415 = vld [vmem:[%s6414] sm:$0xf]
      %v6416 = vld [vmem:[%s6414 + $0x4] sm:$0xf]
      %v6417 = vld [vmem:[%s6414 + $0x8] sm:$0xf]
      %v6418 = vld [vmem:[%s6414 + $0xc] sm:$0xf]
      %v6419 = vld [vmem:[%s6414 + $0x10] sm:$0x1]
      %v6420 = vld [vmem:[%s6414 + $0x14] sm:$0xf]
      %v6421 = vld [vmem:[%s6414 + $0x18] sm:$0xf]
      %v6422 = vld [vmem:[%s6414 + $0x1c] sm:$0xf]
      %v6423 = vld [vmem:[%s6414 + $0x20] sm:$0xf]
      %v6424 = vld [vmem:[%s6414 + $0x24] sm:$0x1]
      %v6425 = vld [vmem:[%s6414 + $0x28] sm:$0xf]
      %v6426 = vld [vmem:[%s6414 + $0x2c] sm:$0xf]
      %v6427 = vld [vmem:[%s6414 + $0x30] sm:$0xf]
      %v6428 = vld [vmem:[%s6414 + $0x34] sm:$0xf]
      %v6429 = vld [vmem:[%s6414 + $0x38] sm:$0x1]
      %v6430 = vld [vmem:[%s6414 + $0x3c] sm:$0xf]
      %v6431 = vld [vmem:[%s6414 + $0x40] sm:$0xf]
      %v6432 = vld [vmem:[%s6414 + $0x44] sm:$0xf]
      %v6433 = vld [vmem:[%s6414 + $0x48] sm:$0xf]
      %v6434 = vld [vmem:[%s6414 + $0x4c] sm:$0x1]
      %v6435 = vld [vmem:[%s6414 + $0x50] sm:$0xf]
      %v6436 = vld [vmem:[%s6414 + $0x54] sm:$0xf]
      %v6437 = vld [vmem:[%s6414 + $0x58] sm:$0xf]
      %v6438 = vld [vmem:[%s6414 + $0x5c] sm:$0xf]
      %v6439 = vld [vmem:[%s6414 + $0x60] sm:$0x1]
      %v6440 = vld [vmem:[%s6414 + $0x64] sm:$0xf]
      %v6441 = vld [vmem:[%s6414 + $0x68] sm:$0xf]
      %v6442 = vld [vmem:[%s6414 + $0x6c] sm:$0xf]
      %v6443 = vld [vmem:[%s6414 + $0x70] sm:$0xf]
      %v6444 = vld [vmem:[%s6414 + $0x74] sm:$0x1]
      %v6445 = vld [vmem:[%s6414 + $0x78] sm:$0xf]
      %v6446 = vld [vmem:[%s6414 + $0x7c] sm:$0xf]
      %v6447 = vld [vmem:[%s6414 + $0x80] sm:$0xf]
      %v6448 = vld [vmem:[%s6414 + $0x84] sm:$0xf]
      %v6449 = vld [vmem:[%s6414 + $0x88] sm:$0x1]
      %v6450 = vld [vmem:[%s6414 + $0x8c] sm:$0xf]
      %v6451 = vld [vmem:[%s6414 + $0x90] sm:$0xf]
      %v6452 = vld [vmem:[%s6414 + $0x94] sm:$0xf]
      %v6453 = vld [vmem:[%s6414 + $0x98] sm:$0xf]
      %v6454 = vld [vmem:[%s6414 + $0x9c] sm:$0x1]
      %v6455 = vld [vmem:[%s6414 + $0xa0] sm:$0xf]
      %v6456 = vld [vmem:[%s6414 + $0xa4] sm:$0xf]
      %v6457 = vld [vmem:[%s6414 + $0xa8] sm:$0xf]
      %v6458 = vld [vmem:[%s6414 + $0xac] sm:$0xf]
      %v6459 = vld [vmem:[%s6414 + $0xb0] sm:$0x1]
      %v6460 = vld [vmem:[%s6414 + $0xb4] sm:$0xf]
      %v6461 = vld [vmem:[%s6414 + $0xb8] sm:$0xf]
      %v6462 = vld [vmem:[%s6414 + $0xbc] sm:$0xf]
      %v6463 = vld [vmem:[%s6414 + $0xc0] sm:$0xf]
      %v6464 = vld [vmem:[%s6414 + $0xc4] sm:$0x1]
      %v6465 = vld [vmem:[%s6414 + $0xc8] sm:$0xf]
      %v6466 = vld [vmem:[%s6414 + $0xcc] sm:$0xf]
      %v6467 = vld [vmem:[%s6414 + $0xd0] sm:$0xf]
      %v6468 = vld [vmem:[%s6414 + $0xd4] sm:$0xf]
      %v6469 = vld [vmem:[%s6414 + $0xd8] sm:$0x1]
      %v6470 = vld [vmem:[%s6414 + $0xdc] sm:$0xf]
      %v6471 = vld [vmem:[%s6414 + $0xe0] sm:$0xf]
      %v6472 = vld [vmem:[%s6414 + $0xe4] sm:$0xf]
      %v6473 = vld [vmem:[%s6414 + $0xe8] sm:$0xf]
      %v6474 = vld [vmem:[%s6414 + $0xec] sm:$0x1]
      %v6475 = vld [vmem:[%s6414 + $0xf0] sm:$0xf]
      %v6476 = vld [vmem:[%s6414 + $0xf4] sm:$0xf]
      %v6477 = vld [vmem:[%s6414 + $0xf8] sm:$0xf]
      %v6478 = vld [vmem:[%s6414 + $0xfc] sm:$0xf]
      %v6479 = vld [vmem:[%s6414 + $0x100] sm:$0x1]
      %v6480 = vld [vmem:[%s6414 + $0x104] sm:$0xf]
      %v6481 = vld [vmem:[%s6414 + $0x108] sm:$0xf]
      %v6482 = vld [vmem:[%s6414 + $0x10c] sm:$0xf]
      %v6483 = vld [vmem:[%s6414 + $0x110] sm:$0xf]
      %v6484 = vld [vmem:[%s6414 + $0x114] sm:$0x1]
      %v6485 = vld [vmem:[%s6414 + $0x118] sm:$0xf]
      %v6486 = vld [vmem:[%s6414 + $0x11c] sm:$0xf]
      %v6487 = vld [vmem:[%s6414 + $0x120] sm:$0xf]
      %v6488 = vld [vmem:[%s6414 + $0x124] sm:$0xf]
      %v6489 = vld [vmem:[%s6414 + $0x128] sm:$0x1]
      %v6490 = vld [vmem:[%s6414 + $0x12c] sm:$0xf]
      %v6491 = vld [vmem:[%s6414 + $0x130] sm:$0xf]
      %v6492 = vld [vmem:[%s6414 + $0x134] sm:$0xf]
      %v6493 = vld [vmem:[%s6414 + $0x138] sm:$0xf]
      %v6494 = vld [vmem:[%s6414 + $0x13c] sm:$0x1]
      %v6495 = vld [vmem:[%s6414 + $0x140] sm:$0xf]
      %v6496 = vld [vmem:[%s6414 + $0x144] sm:$0xf]
      %v6497 = vld [vmem:[%s6414 + $0x148] sm:$0xf]
      %v6498 = vld [vmem:[%s6414 + $0x14c] sm:$0xf]
      %v6499 = vld [vmem:[%s6414 + $0x150] sm:$0x1]
      %v6500 = vld [vmem:[%s6414 + $0x154] sm:$0xf]
      %v6501 = vld [vmem:[%s6414 + $0x158] sm:$0xf]
      %v6502 = vld [vmem:[%s6414 + $0x15c] sm:$0xf]
      %v6503 = vld [vmem:[%s6414 + $0x160] sm:$0xf]
      %v6504 = vld [vmem:[%s6414 + $0x164] sm:$0x1]
      %v6506 = vshrl.u32 %v6415, 16
      %v6508 = vrot.slane %v6506, 4
      %v6509 = vshll.u32 %v6415, 16
      %v6511 = vrot.slane %v6509, 5
      %v6512 = vor.u32 %v6508, %v6511
      %v6513 = vrot.slane %v6512, 4
      %v6515 = vshll.u32 %v6416, 16
      %v6517 = vrot.slane %v6515, 5
      %v6518 = vsel %vm2125, %v6513, %v6517
      %v6519 = vshrl.u32 %v6416, 16
      %v6521 = vrot.slane %v6519, 4
      %v6522 = vor.u32 %v6521, %v6517
      %v6523 = vrot.slane %v6522, 4
      %v6525 = vshll.u32 %v6417, 16
      %v6527 = vrot.slane %v6525, 5
      %v6528 = vsel %vm2125, %v6523, %v6527
      %v6529 = vshrl.u32 %v6417, 16
      %v6531 = vrot.slane %v6529, 4
      %v6532 = vor.u32 %v6531, %v6527
      %v6533 = vrot.slane %v6532, 4
      %v6535 = vshll.u32 %v6418, 16
      %v6537 = vrot.slane %v6535, 5
      %v6538 = vsel %vm2125, %v6533, %v6537
      %v6539 = vshrl.u32 %v6418, 16
      %v6541 = vrot.slane %v6539, 4
      %v6542 = vor.u32 %v6541, %v6537
      %v6543 = vrot.slane %v6542, 4
      %v6545 = vshll.u32 %v6419, 16
      %v6547 = vrot.slane %v6545, 5
      %v6548 = vsel %vm2125, %v6543, %v6547
      %v6550 = vshrl.u32 %v6420, 16
      %v6552 = vrot.slane %v6550, 4
      %v6553 = vshll.u32 %v6420, 16
      %v6555 = vrot.slane %v6553, 5
      %v6556 = vor.u32 %v6552, %v6555
      %v6557 = vrot.slane %v6556, 4
      %v6559 = vshll.u32 %v6421, 16
      %v6561 = vrot.slane %v6559, 5
      %v6562 = vsel %vm2125, %v6557, %v6561
      %v6563 = vshrl.u32 %v6421, 16
      %v6565 = vrot.slane %v6563, 4
      %v6566 = vor.u32 %v6565, %v6561
      %v6567 = vrot.slane %v6566, 4
      %v6569 = vshll.u32 %v6422, 16
      %v6571 = vrot.slane %v6569, 5
      %v6572 = vsel %vm2125, %v6567, %v6571
      %v6573 = vshrl.u32 %v6422, 16
      %v6575 = vrot.slane %v6573, 4
      %v6576 = vor.u32 %v6575, %v6571
      %v6577 = vrot.slane %v6576, 4
      %v6579 = vshll.u32 %v6423, 16
      %v6581 = vrot.slane %v6579, 5
      %v6582 = vsel %vm2125, %v6577, %v6581
      %v6583 = vshrl.u32 %v6423, 16
      %v6585 = vrot.slane %v6583, 4
      %v6586 = vor.u32 %v6585, %v6581
      %v6587 = vrot.slane %v6586, 4
      %v6589 = vshll.u32 %v6424, 16
      %v6591 = vrot.slane %v6589, 5
      %v6592 = vsel %vm2125, %v6587, %v6591
      %v6594 = vshrl.u32 %v6425, 16
      %v6596 = vrot.slane %v6594, 4
      %v6597 = vshll.u32 %v6425, 16
      %v6599 = vrot.slane %v6597, 5
      %v6600 = vor.u32 %v6596, %v6599
      %v6601 = vrot.slane %v6600, 4
      %v6603 = vshll.u32 %v6426, 16
      %v6605 = vrot.slane %v6603, 5
      %v6606 = vsel %vm2125, %v6601, %v6605
      %v6607 = vshrl.u32 %v6426, 16
      %v6609 = vrot.slane %v6607, 4
      %v6610 = vor.u32 %v6609, %v6605
      %v6611 = vrot.slane %v6610, 4
      %v6613 = vshll.u32 %v6427, 16
      %v6615 = vrot.slane %v6613, 5
      %v6616 = vsel %vm2125, %v6611, %v6615
      %v6617 = vshrl.u32 %v6427, 16
      %v6619 = vrot.slane %v6617, 4
      %v6620 = vor.u32 %v6619, %v6615
      %v6621 = vrot.slane %v6620, 4
      %v6623 = vshll.u32 %v6428, 16
      %v6625 = vrot.slane %v6623, 5
      %v6626 = vsel %vm2125, %v6621, %v6625
      %v6627 = vshrl.u32 %v6428, 16
      %v6629 = vrot.slane %v6627, 4
      %v6630 = vor.u32 %v6629, %v6625
      %v6631 = vrot.slane %v6630, 4
      %v6633 = vshll.u32 %v6429, 16
      %v6635 = vrot.slane %v6633, 5
      %v6636 = vsel %vm2125, %v6631, %v6635
      %v6638 = vshrl.u32 %v6430, 16
      %v6640 = vrot.slane %v6638, 4
      %v6641 = vshll.u32 %v6430, 16
      %v6643 = vrot.slane %v6641, 5
      %v6644 = vor.u32 %v6640, %v6643
      %v6645 = vrot.slane %v6644, 4
      %v6647 = vshll.u32 %v6431, 16
      %v6649 = vrot.slane %v6647, 5
      %v6650 = vsel %vm2125, %v6645, %v6649
      %v6651 = vshrl.u32 %v6431, 16
      %v6653 = vrot.slane %v6651, 4
      %v6654 = vor.u32 %v6653, %v6649
      %v6655 = vrot.slane %v6654, 4
      %v6657 = vshll.u32 %v6432, 16
      %v6659 = vrot.slane %v6657, 5
      %v6660 = vsel %vm2125, %v6655, %v6659
      %v6661 = vshrl.u32 %v6432, 16
      %v6663 = vrot.slane %v6661, 4
      %v6664 = vor.u32 %v6663, %v6659
      %v6665 = vrot.slane %v6664, 4
      %v6667 = vshll.u32 %v6433, 16
      %v6669 = vrot.slane %v6667, 5
      %v6670 = vsel %vm2125, %v6665, %v6669
      %v6671 = vshrl.u32 %v6433, 16
      %v6673 = vrot.slane %v6671, 4
      %v6674 = vor.u32 %v6673, %v6669
      %v6675 = vrot.slane %v6674, 4
      %v6677 = vshll.u32 %v6434, 16
      %v6679 = vrot.slane %v6677, 5
      %v6680 = vsel %vm2125, %v6675, %v6679
      %v6682 = vshrl.u32 %v6435, 16
      %v6684 = vrot.slane %v6682, 4
      %v6685 = vshll.u32 %v6435, 16
      %v6687 = vrot.slane %v6685, 5
      %v6688 = vor.u32 %v6684, %v6687
      %v6689 = vrot.slane %v6688, 4
      %v6691 = vshll.u32 %v6436, 16
      %v6693 = vrot.slane %v6691, 5
      %v6694 = vsel %vm2125, %v6689, %v6693
      %v6695 = vshrl.u32 %v6436, 16
      %v6697 = vrot.slane %v6695, 4
      %v6698 = vor.u32 %v6697, %v6693
      %v6699 = vrot.slane %v6698, 4
      %v6701 = vshll.u32 %v6437, 16
      %v6703 = vrot.slane %v6701, 5
      %v6704 = vsel %vm2125, %v6699, %v6703
      %v6705 = vshrl.u32 %v6437, 16
      %v6707 = vrot.slane %v6705, 4
      %v6708 = vor.u32 %v6707, %v6703
      %v6709 = vrot.slane %v6708, 4
      %v6711 = vshll.u32 %v6438, 16
      %v6713 = vrot.slane %v6711, 5
      %v6714 = vsel %vm2125, %v6709, %v6713
      %v6715 = vshrl.u32 %v6438, 16
      %v6717 = vrot.slane %v6715, 4
      %v6718 = vor.u32 %v6717, %v6713
      %v6719 = vrot.slane %v6718, 4
      %v6721 = vshll.u32 %v6439, 16
      %v6723 = vrot.slane %v6721, 5
      %v6724 = vsel %vm2125, %v6719, %v6723
      %v6726 = vshrl.u32 %v6440, 16
      %v6728 = vrot.slane %v6726, 4
      %v6729 = vshll.u32 %v6440, 16
      %v6731 = vrot.slane %v6729, 5
      %v6732 = vor.u32 %v6728, %v6731
      %v6733 = vrot.slane %v6732, 4
      %v6735 = vshll.u32 %v6441, 16
      %v6737 = vrot.slane %v6735, 5
      %v6738 = vsel %vm2125, %v6733, %v6737
      %v6739 = vshrl.u32 %v6441, 16
      %v6741 = vrot.slane %v6739, 4
      %v6742 = vor.u32 %v6741, %v6737
      %v6743 = vrot.slane %v6742, 4
      %v6745 = vshll.u32 %v6442, 16
      %v6747 = vrot.slane %v6745, 5
      %v6748 = vsel %vm2125, %v6743, %v6747
      %v6749 = vshrl.u32 %v6442, 16
      %v6751 = vrot.slane %v6749, 4
      %v6752 = vor.u32 %v6751, %v6747
      %v6753 = vrot.slane %v6752, 4
      %v6755 = vshll.u32 %v6443, 16
      %v6757 = vrot.slane %v6755, 5
      %v6758 = vsel %vm2125, %v6753, %v6757
      %v6759 = vshrl.u32 %v6443, 16
      %v6761 = vrot.slane %v6759, 4
      %v6762 = vor.u32 %v6761, %v6757
      %v6763 = vrot.slane %v6762, 4
      %v6765 = vshll.u32 %v6444, 16
      %v6767 = vrot.slane %v6765, 5
      %v6768 = vsel %vm2125, %v6763, %v6767
      %v6770 = vshrl.u32 %v6445, 16
      %v6772 = vrot.slane %v6770, 4
      %v6773 = vshll.u32 %v6445, 16
      %v6775 = vrot.slane %v6773, 5
      %v6776 = vor.u32 %v6772, %v6775
      %v6777 = vrot.slane %v6776, 4
      %v6779 = vshll.u32 %v6446, 16
      %v6781 = vrot.slane %v6779, 5
      %v6782 = vsel %vm2125, %v6777, %v6781
      %v6783 = vshrl.u32 %v6446, 16
      %v6785 = vrot.slane %v6783, 4
      %v6786 = vor.u32 %v6785, %v6781
      %v6787 = vrot.slane %v6786, 4
      %v6789 = vshll.u32 %v6447, 16
      %v6791 = vrot.slane %v6789, 5
      %v6792 = vsel %vm2125, %v6787, %v6791
      %v6793 = vshrl.u32 %v6447, 16
      %v6795 = vrot.slane %v6793, 4
      %v6796 = vor.u32 %v6795, %v6791
      %v6797 = vrot.slane %v6796, 4
      %v6799 = vshll.u32 %v6448, 16
      %v6801 = vrot.slane %v6799, 5
      %v6802 = vsel %vm2125, %v6797, %v6801
      %v6803 = vshrl.u32 %v6448, 16
      %v6805 = vrot.slane %v6803, 4
      %v6806 = vor.u32 %v6805, %v6801
      %v6807 = vrot.slane %v6806, 4
      %v6809 = vshll.u32 %v6449, 16
      %v6811 = vrot.slane %v6809, 5
      %v6812 = vsel %vm2125, %v6807, %v6811
      %v6814 = vshrl.u32 %v6450, 16
      %v6816 = vrot.slane %v6814, 4
      %v6817 = vshll.u32 %v6450, 16
      %v6819 = vrot.slane %v6817, 5
      %v6820 = vor.u32 %v6816, %v6819
      %v6821 = vrot.slane %v6820, 4
      %v6823 = vshll.u32 %v6451, 16
      %v6825 = vrot.slane %v6823, 5
      %v6826 = vsel %vm2125, %v6821, %v6825
      %v6827 = vshrl.u32 %v6451, 16
      %v6829 = vrot.slane %v6827, 4
      %v6830 = vor.u32 %v6829, %v6825
      %v6831 = vrot.slane %v6830, 4
      %v6833 = vshll.u32 %v6452, 16
      %v6835 = vrot.slane %v6833, 5
      %v6836 = vsel %vm2125, %v6831, %v6835
      %v6837 = vshrl.u32 %v6452, 16
      %v6839 = vrot.slane %v6837, 4
      %v6840 = vor.u32 %v6839, %v6835
      %v6841 = vrot.slane %v6840, 4
      %v6843 = vshll.u32 %v6453, 16
      %v6845 = vrot.slane %v6843, 5
      %v6846 = vsel %vm2125, %v6841, %v6845
      %v6847 = vshrl.u32 %v6453, 16
      %v6849 = vrot.slane %v6847, 4
      %v6850 = vor.u32 %v6849, %v6845
      %v6851 = vrot.slane %v6850, 4
      %v6853 = vshll.u32 %v6454, 16
      %v6855 = vrot.slane %v6853, 5
      %v6856 = vsel %vm2125, %v6851, %v6855
      %v6858 = vshrl.u32 %v6455, 16
      %v6860 = vrot.slane %v6858, 4
      %v6861 = vshll.u32 %v6455, 16
      %v6863 = vrot.slane %v6861, 5
      %v6864 = vor.u32 %v6860, %v6863
      %v6865 = vrot.slane %v6864, 4
      %v6867 = vshll.u32 %v6456, 16
      %v6869 = vrot.slane %v6867, 5
      %v6870 = vsel %vm2125, %v6865, %v6869
      %v6871 = vshrl.u32 %v6456, 16
      %v6873 = vrot.slane %v6871, 4
      %v6874 = vor.u32 %v6873, %v6869
      %v6875 = vrot.slane %v6874, 4
      %v6877 = vshll.u32 %v6457, 16
      %v6879 = vrot.slane %v6877, 5
      %v6880 = vsel %vm2125, %v6875, %v6879
      %v6881 = vshrl.u32 %v6457, 16
      %v6883 = vrot.slane %v6881, 4
      %v6884 = vor.u32 %v6883, %v6879
      %v6885 = vrot.slane %v6884, 4
      %v6887 = vshll.u32 %v6458, 16
      %v6889 = vrot.slane %v6887, 5
      %v6890 = vsel %vm2125, %v6885, %v6889
      %v6891 = vshrl.u32 %v6458, 16
      %v6893 = vrot.slane %v6891, 4
      %v6894 = vor.u32 %v6893, %v6889
      %v6895 = vrot.slane %v6894, 4
      %v6897 = vshll.u32 %v6459, 16
      %v6899 = vrot.slane %v6897, 5
      %v6900 = vsel %vm2125, %v6895, %v6899
      %v6902 = vshrl.u32 %v6460, 16
      %v6904 = vrot.slane %v6902, 4
      %v6905 = vshll.u32 %v6460, 16
      %v6907 = vrot.slane %v6905, 5
      %v6908 = vor.u32 %v6904, %v6907
      %v6909 = vrot.slane %v6908, 4
      %v6911 = vshll.u32 %v6461, 16
      %v6913 = vrot.slane %v6911, 5
      %v6914 = vsel %vm2125, %v6909, %v6913
      %v6915 = vshrl.u32 %v6461, 16
      %v6917 = vrot.slane %v6915, 4
      %v6918 = vor.u32 %v6917, %v6913
      %v6919 = vrot.slane %v6918, 4
      %v6921 = vshll.u32 %v6462, 16
      %v6923 = vrot.slane %v6921, 5
      %v6924 = vsel %vm2125, %v6919, %v6923
      %v6925 = vshrl.u32 %v6462, 16
      %v6927 = vrot.slane %v6925, 4
      %v6928 = vor.u32 %v6927, %v6923
      %v6929 = vrot.slane %v6928, 4
      %v6931 = vshll.u32 %v6463, 16
      %v6933 = vrot.slane %v6931, 5
      %v6934 = vsel %vm2125, %v6929, %v6933
      %v6935 = vshrl.u32 %v6463, 16
      %v6937 = vrot.slane %v6935, 4
      %v6938 = vor.u32 %v6937, %v6933
      %v6939 = vrot.slane %v6938, 4
      %v6941 = vshll.u32 %v6464, 16
      %v6943 = vrot.slane %v6941, 5
      %v6944 = vsel %vm2125, %v6939, %v6943
      %v6946 = vshrl.u32 %v6465, 16
      %v6948 = vrot.slane %v6946, 4
      %v6949 = vshll.u32 %v6465, 16
      %v6951 = vrot.slane %v6949, 5
      %v6952 = vor.u32 %v6948, %v6951
      %v6953 = vrot.slane %v6952, 4
      %v6955 = vshll.u32 %v6466, 16
      %v6957 = vrot.slane %v6955, 5
      %v6958 = vsel %vm2125, %v6953, %v6957
      %v6959 = vshrl.u32 %v6466, 16
      %v6961 = vrot.slane %v6959, 4
      %v6962 = vor.u32 %v6961, %v6957
      %v6963 = vrot.slane %v6962, 4
      %v6965 = vshll.u32 %v6467, 16
      %v6967 = vrot.slane %v6965, 5
      %v6968 = vsel %vm2125, %v6963, %v6967
      %v6969 = vshrl.u32 %v6467, 16
      %v6971 = vrot.slane %v6969, 4
      %v6972 = vor.u32 %v6971, %v6967
      %v6973 = vrot.slane %v6972, 4
      %v6975 = vshll.u32 %v6468, 16
      %v6977 = vrot.slane %v6975, 5
      %v6978 = vsel %vm2125, %v6973, %v6977
      %v6979 = vshrl.u32 %v6468, 16
      %v6981 = vrot.slane %v6979, 4
      %v6982 = vor.u32 %v6981, %v6977
      %v6983 = vrot.slane %v6982, 4
      %v6985 = vshll.u32 %v6469, 16
      %v6987 = vrot.slane %v6985, 5
      %v6988 = vsel %vm2125, %v6983, %v6987
      %v6990 = vshrl.u32 %v6470, 16
      %v6992 = vrot.slane %v6990, 4
      %v6993 = vshll.u32 %v6470, 16
      %v6995 = vrot.slane %v6993, 5
      %v6996 = vor.u32 %v6992, %v6995
      %v6997 = vrot.slane %v6996, 4
      %v6999 = vshll.u32 %v6471, 16
      %v7001 = vrot.slane %v6999, 5
      %v7002 = vsel %vm2125, %v6997, %v7001
      %v7003 = vshrl.u32 %v6471, 16
      %v7005 = vrot.slane %v7003, 4
      %v7006 = vor.u32 %v7005, %v7001
      %v7007 = vrot.slane %v7006, 4
      %v7009 = vshll.u32 %v6472, 16
      %v7011 = vrot.slane %v7009, 5
      %v7012 = vsel %vm2125, %v7007, %v7011
      %v7013 = vshrl.u32 %v6472, 16
      %v7015 = vrot.slane %v7013, 4
      %v7016 = vor.u32 %v7015, %v7011
      %v7017 = vrot.slane %v7016, 4
      %v7019 = vshll.u32 %v6473, 16
      %v7021 = vrot.slane %v7019, 5
      %v7022 = vsel %vm2125, %v7017, %v7021
      %v7023 = vshrl.u32 %v6473, 16
      %v7025 = vrot.slane %v7023, 4
      %v7026 = vor.u32 %v7025, %v7021
      %v7027 = vrot.slane %v7026, 4
      %v7029 = vshll.u32 %v6474, 16
      %v7031 = vrot.slane %v7029, 5
      %v7032 = vsel %vm2125, %v7027, %v7031
      %v7034 = vshrl.u32 %v6475, 16
      %v7036 = vrot.slane %v7034, 4
      %v7037 = vshll.u32 %v6475, 16
      %v7039 = vrot.slane %v7037, 5
      %v7040 = vor.u32 %v7036, %v7039
      %v7041 = vrot.slane %v7040, 4
      %v7043 = vshll.u32 %v6476, 16
      %v7045 = vrot.slane %v7043, 5
      %v7046 = vsel %vm2125, %v7041, %v7045
      %v7047 = vshrl.u32 %v6476, 16
      %v7049 = vrot.slane %v7047, 4
      %v7050 = vor.u32 %v7049, %v7045
      %v7051 = vrot.slane %v7050, 4
      %v7053 = vshll.u32 %v6477, 16
      %v7055 = vrot.slane %v7053, 5
      %v7056 = vsel %vm2125, %v7051, %v7055
      %v7057 = vshrl.u32 %v6477, 16
      %v7059 = vrot.slane %v7057, 4
      %v7060 = vor.u32 %v7059, %v7055
      %v7061 = vrot.slane %v7060, 4
      %v7063 = vshll.u32 %v6478, 16
      %v7065 = vrot.slane %v7063, 5
      %v7066 = vsel %vm2125, %v7061, %v7065
      %v7067 = vshrl.u32 %v6478, 16
      %v7069 = vrot.slane %v7067, 4
      %v7070 = vor.u32 %v7069, %v7065
      %v7071 = vrot.slane %v7070, 4
      %v7073 = vshll.u32 %v6479, 16
      %v7075 = vrot.slane %v7073, 5
      %v7076 = vsel %vm2125, %v7071, %v7075
      %v7078 = vshrl.u32 %v6480, 16
      %v7080 = vrot.slane %v7078, 4
      %v7081 = vshll.u32 %v6480, 16
      %v7083 = vrot.slane %v7081, 5
      %v7084 = vor.u32 %v7080, %v7083
      %v7085 = vrot.slane %v7084, 4
      %v7087 = vshll.u32 %v6481, 16
      %v7089 = vrot.slane %v7087, 5
      %v7090 = vsel %vm2125, %v7085, %v7089
      %v7091 = vshrl.u32 %v6481, 16
      %v7093 = vrot.slane %v7091, 4
      %v7094 = vor.u32 %v7093, %v7089
      %v7095 = vrot.slane %v7094, 4
      %v7097 = vshll.u32 %v6482, 16
      %v7099 = vrot.slane %v7097, 5
      %v7100 = vsel %vm2125, %v7095, %v7099
      %v7101 = vshrl.u32 %v6482, 16
      %v7103 = vrot.slane %v7101, 4
      %v7104 = vor.u32 %v7103, %v7099
      %v7105 = vrot.slane %v7104, 4
      %v7107 = vshll.u32 %v6483, 16
      %v7109 = vrot.slane %v7107, 5
      %v7110 = vsel %vm2125, %v7105, %v7109
      %v7111 = vshrl.u32 %v6483, 16
      %v7113 = vrot.slane %v7111, 4
      %v7114 = vor.u32 %v7113, %v7109
      %v7115 = vrot.slane %v7114, 4
      %v7117 = vshll.u32 %v6484, 16
      %v7119 = vrot.slane %v7117, 5
      %v7120 = vsel %vm2125, %v7115, %v7119
      %v7122 = vshrl.u32 %v6485, 16
      %v7124 = vrot.slane %v7122, 4
      %v7125 = vshll.u32 %v6485, 16
      %v7127 = vrot.slane %v7125, 5
      %v7128 = vor.u32 %v7124, %v7127
      %v7129 = vrot.slane %v7128, 4
      %v7131 = vshll.u32 %v6486, 16
      %v7133 = vrot.slane %v7131, 5
      %v7134 = vsel %vm2125, %v7129, %v7133
      %v7135 = vshrl.u32 %v6486, 16
      %v7137 = vrot.slane %v7135, 4
      %v7138 = vor.u32 %v7137, %v7133
      %v7139 = vrot.slane %v7138, 4
      %v7141 = vshll.u32 %v6487, 16
      %v7143 = vrot.slane %v7141, 5
      %v7144 = vsel %vm2125, %v7139, %v7143
      %v7145 = vshrl.u32 %v6487, 16
      %v7147 = vrot.slane %v7145, 4
      %v7148 = vor.u32 %v7147, %v7143
      %v7149 = vrot.slane %v7148, 4
      %v7151 = vshll.u32 %v6488, 16
      %v7153 = vrot.slane %v7151, 5
      %v7154 = vsel %vm2125, %v7149, %v7153
      %v7155 = vshrl.u32 %v6488, 16
      %v7157 = vrot.slane %v7155, 4
      %v7158 = vor.u32 %v7157, %v7153
      %v7159 = vrot.slane %v7158, 4
      %v7161 = vshll.u32 %v6489, 16
      %v7163 = vrot.slane %v7161, 5
      %v7164 = vsel %vm2125, %v7159, %v7163
      %v7166 = vshrl.u32 %v6490, 16
      %v7168 = vrot.slane %v7166, 4
      %v7169 = vshll.u32 %v6490, 16
      %v7171 = vrot.slane %v7169, 5
      %v7172 = vor.u32 %v7168, %v7171
      %v7173 = vrot.slane %v7172, 4
      %v7175 = vshll.u32 %v6491, 16
      %v7177 = vrot.slane %v7175, 5
      %v7178 = vsel %vm2125, %v7173, %v7177
      %v7179 = vshrl.u32 %v6491, 16
      %v7181 = vrot.slane %v7179, 4
      %v7182 = vor.u32 %v7181, %v7177
      %v7183 = vrot.slane %v7182, 4
      %v7185 = vshll.u32 %v6492, 16
      %v7187 = vrot.slane %v7185, 5
      %v7188 = vsel %vm2125, %v7183, %v7187
      %v7189 = vshrl.u32 %v6492, 16
      %v7191 = vrot.slane %v7189, 4
      %v7192 = vor.u32 %v7191, %v7187
      %v7193 = vrot.slane %v7192, 4
      %v7195 = vshll.u32 %v6493, 16
      %v7197 = vrot.slane %v7195, 5
      %v7198 = vsel %vm2125, %v7193, %v7197
      %v7199 = vshrl.u32 %v6493, 16
      %v7201 = vrot.slane %v7199, 4
      %v7202 = vor.u32 %v7201, %v7197
      %v7203 = vrot.slane %v7202, 4
      %v7205 = vshll.u32 %v6494, 16
      %v7207 = vrot.slane %v7205, 5
      %v7208 = vsel %vm2125, %v7203, %v7207
      %v7289 = vrot.slane %v6415, 5
      %v7290 = vrot.slane %v7289, 4
      %v7291 = vrot.slane %v6416, 5
      %v7292 = vsel %vm2912, %v7290, %v7291
      %v7293 = vrot.slane %v7291, 4
      %v7294 = vrot.slane %v6417, 5
      %v7295 = vsel %vm2912, %v7293, %v7294
      %v7296 = vrot.slane %v7294, 4
      %v7297 = vrot.slane %v6418, 5
      %v7298 = vsel %vm2912, %v7296, %v7297
      %v7299 = vrot.slane %v7297, 4
      %v7300 = vrot.slane %v6419, 5
      %v7301 = vsel %vm2912, %v7299, %v7300
      %v7302 = vrot.slane %v6420, 5
      %v7303 = vrot.slane %v7302, 4
      %v7304 = vrot.slane %v6421, 5
      %v7305 = vsel %vm2912, %v7303, %v7304
      %v7306 = vrot.slane %v7304, 4
      %v7307 = vrot.slane %v6422, 5
      %v7308 = vsel %vm2912, %v7306, %v7307
      %v7309 = vrot.slane %v7307, 4
      %v7310 = vrot.slane %v6423, 5
      %v7311 = vsel %vm2912, %v7309, %v7310
      %v7312 = vrot.slane %v7310, 4
      %v7313 = vrot.slane %v6424, 5
      %v7314 = vsel %vm2912, %v7312, %v7313
      %v7315 = vrot.slane %v6425, 5
      %v7316 = vrot.slane %v7315, 4
      %v7317 = vrot.slane %v6426, 5
      %v7318 = vsel %vm2912, %v7316, %v7317
      %v7319 = vrot.slane %v7317, 4
      %v7320 = vrot.slane %v6427, 5
      %v7321 = vsel %vm2912, %v7319, %v7320
      %v7322 = vrot.slane %v7320, 4
      %v7323 = vrot.slane %v6428, 5
      %v7324 = vsel %vm2912, %v7322, %v7323
      %v7325 = vrot.slane %v7323, 4
      %v7326 = vrot.slane %v6429, 5
      %v7327 = vsel %vm2912, %v7325, %v7326
      %v7328 = vrot.slane %v6430, 5
      %v7329 = vrot.slane %v7328, 4
      %v7330 = vrot.slane %v6431, 5
      %v7331 = vsel %vm2912, %v7329, %v7330
      %v7332 = vrot.slane %v7330, 4
      %v7333 = vrot.slane %v6432, 5
      %v7334 = vsel %vm2912, %v7332, %v7333
      %v7335 = vrot.slane %v7333, 4
      %v7336 = vrot.slane %v6433, 5
      %v7337 = vsel %vm2912, %v7335, %v7336
      %v7338 = vrot.slane %v7336, 4
      %v7339 = vrot.slane %v6434, 5
      %v7340 = vsel %vm2912, %v7338, %v7339
      %v7341 = vrot.slane %v6435, 5
      %v7342 = vrot.slane %v7341, 4
      %v7343 = vrot.slane %v6436, 5
      %v7344 = vsel %vm2912, %v7342, %v7343
      %v7345 = vrot.slane %v7343, 4
      %v7346 = vrot.slane %v6437, 5
      %v7347 = vsel %vm2912, %v7345, %v7346
      %v7348 = vrot.slane %v7346, 4
      %v7349 = vrot.slane %v6438, 5
      %v7350 = vsel %vm2912, %v7348, %v7349
      %v7351 = vrot.slane %v7349, 4
      %v7352 = vrot.slane %v6439, 5
      %v7353 = vsel %vm2912, %v7351, %v7352
      %v7354 = vrot.slane %v6440, 5
      %v7355 = vrot.slane %v7354, 4
      %v7356 = vrot.slane %v6441, 5
      %v7357 = vsel %vm2912, %v7355, %v7356
      %v7358 = vrot.slane %v7356, 4
      %v7359 = vrot.slane %v6442, 5
      %v7360 = vsel %vm2912, %v7358, %v7359
      %v7361 = vrot.slane %v7359, 4
      %v7362 = vrot.slane %v6443, 5
      %v7363 = vsel %vm2912, %v7361, %v7362
      %v7364 = vrot.slane %v7362, 4
      %v7365 = vrot.slane %v6444, 5
      %v7366 = vsel %vm2912, %v7364, %v7365
      %v7367 = vrot.slane %v6445, 5
      %v7368 = vrot.slane %v7367, 4
      %v7369 = vrot.slane %v6446, 5
      %v7370 = vsel %vm2912, %v7368, %v7369
      %v7371 = vrot.slane %v7369, 4
      %v7372 = vrot.slane %v6447, 5
      %v7373 = vsel %vm2912, %v7371, %v7372
      %v7374 = vrot.slane %v7372, 4
      %v7375 = vrot.slane %v6448, 5
      %v7376 = vsel %vm2912, %v7374, %v7375
      %v7377 = vrot.slane %v7375, 4
      %v7378 = vrot.slane %v6449, 5
      %v7379 = vsel %vm2912, %v7377, %v7378
      %v7380 = vrot.slane %v6450, 5
      %v7381 = vrot.slane %v7380, 4
      %v7382 = vrot.slane %v6451, 5
      %v7383 = vsel %vm2912, %v7381, %v7382
      %v7384 = vrot.slane %v7382, 4
      %v7385 = vrot.slane %v6452, 5
      %v7386 = vsel %vm2912, %v7384, %v7385
      %v7387 = vrot.slane %v7385, 4
      %v7388 = vrot.slane %v6453, 5
      %v7389 = vsel %vm2912, %v7387, %v7388
      %v7390 = vrot.slane %v7388, 4
      %v7391 = vrot.slane %v6454, 5
      %v7392 = vsel %vm2912, %v7390, %v7391
      %v7393 = vrot.slane %v6455, 5
      %v7394 = vrot.slane %v7393, 4
      %v7395 = vrot.slane %v6456, 5
      %v7396 = vsel %vm2912, %v7394, %v7395
      %v7397 = vrot.slane %v7395, 4
      %v7398 = vrot.slane %v6457, 5
      %v7399 = vsel %vm2912, %v7397, %v7398
      %v7400 = vrot.slane %v7398, 4
      %v7401 = vrot.slane %v6458, 5
      %v7402 = vsel %vm2912, %v7400, %v7401
      %v7403 = vrot.slane %v7401, 4
      %v7404 = vrot.slane %v6459, 5
      %v7405 = vsel %vm2912, %v7403, %v7404
      %v7406 = vrot.slane %v6460, 5
      %v7407 = vrot.slane %v7406, 4
      %v7408 = vrot.slane %v6461, 5
      %v7409 = vsel %vm2912, %v7407, %v7408
      %v7410 = vrot.slane %v7408, 4
      %v7411 = vrot.slane %v6462, 5
      %v7412 = vsel %vm2912, %v7410, %v7411
      %v7413 = vrot.slane %v7411, 4
      %v7414 = vrot.slane %v6463, 5
      %v7415 = vsel %vm2912, %v7413, %v7414
      %v7416 = vrot.slane %v7414, 4
      %v7417 = vrot.slane %v6464, 5
      %v7418 = vsel %vm2912, %v7416, %v7417
      %v7419 = vrot.slane %v6465, 5
      %v7420 = vrot.slane %v7419, 4
      %v7421 = vrot.slane %v6466, 5
      %v7422 = vsel %vm2912, %v7420, %v7421
      %v7423 = vrot.slane %v7421, 4
      %v7424 = vrot.slane %v6467, 5
      %v7425 = vsel %vm2912, %v7423, %v7424
      %v7426 = vrot.slane %v7424, 4
      %v7427 = vrot.slane %v6468, 5
      %v7428 = vsel %vm2912, %v7426, %v7427
      %v7429 = vrot.slane %v7427, 4
      %v7430 = vrot.slane %v6469, 5
      %v7431 = vsel %vm2912, %v7429, %v7430
      %v7432 = vrot.slane %v6470, 5
      %v7433 = vrot.slane %v7432, 4
      %v7434 = vrot.slane %v6471, 5
      %v7435 = vsel %vm2912, %v7433, %v7434
      %v7436 = vrot.slane %v7434, 4
      %v7437 = vrot.slane %v6472, 5
      %v7438 = vsel %vm2912, %v7436, %v7437
      %v7439 = vrot.slane %v7437, 4
      %v7440 = vrot.slane %v6473, 5
      %v7441 = vsel %vm2912, %v7439, %v7440
      %v7442 = vrot.slane %v7440, 4
      %v7443 = vrot.slane %v6474, 5
      %v7444 = vsel %vm2912, %v7442, %v7443
      %v7445 = vrot.slane %v6475, 5
      %v7446 = vrot.slane %v7445, 4
      %v7447 = vrot.slane %v6476, 5
      %v7448 = vsel %vm2912, %v7446, %v7447
      %v7449 = vrot.slane %v7447, 4
      %v7450 = vrot.slane %v6477, 5
      %v7451 = vsel %vm2912, %v7449, %v7450
      %v7452 = vrot.slane %v7450, 4
      %v7453 = vrot.slane %v6478, 5
      %v7454 = vsel %vm2912, %v7452, %v7453
      %v7455 = vrot.slane %v7453, 4
      %v7456 = vrot.slane %v6479, 5
      %v7457 = vsel %vm2912, %v7455, %v7456
      %v7458 = vrot.slane %v6480, 5
      %v7459 = vrot.slane %v7458, 4
      %v7460 = vrot.slane %v6481, 5
      %v7461 = vsel %vm2912, %v7459, %v7460
      %v7462 = vrot.slane %v7460, 4
      %v7463 = vrot.slane %v6482, 5
      %v7464 = vsel %vm2912, %v7462, %v7463
      %v7465 = vrot.slane %v7463, 4
      %v7466 = vrot.slane %v6483, 5
      %v7467 = vsel %vm2912, %v7465, %v7466
      %v7468 = vrot.slane %v7466, 4
      %v7469 = vrot.slane %v6484, 5
      %v7470 = vsel %vm2912, %v7468, %v7469
      %v7471 = vrot.slane %v6485, 5
      %v7472 = vrot.slane %v7471, 4
      %v7473 = vrot.slane %v6486, 5
      %v7474 = vsel %vm2912, %v7472, %v7473
      %v7475 = vrot.slane %v7473, 4
      %v7476 = vrot.slane %v6487, 5
      %v7477 = vsel %vm2912, %v7475, %v7476
      %v7478 = vrot.slane %v7476, 4
      %v7479 = vrot.slane %v6488, 5
      %v7480 = vsel %vm2912, %v7478, %v7479
      %v7481 = vrot.slane %v7479, 4
      %v7482 = vrot.slane %v6489, 5
      %v7483 = vsel %vm2912, %v7481, %v7482
      %v7484 = vrot.slane %v6490, 5
      %v7485 = vrot.slane %v7484, 4
      %v7486 = vrot.slane %v6491, 5
      %v7487 = vsel %vm2912, %v7485, %v7486
      %v7488 = vrot.slane %v7486, 4
      %v7489 = vrot.slane %v6492, 5
      %v7490 = vsel %vm2912, %v7488, %v7489
      %v7491 = vrot.slane %v7489, 4
      %v7492 = vrot.slane %v6493, 5
      %v7493 = vsel %vm2912, %v7491, %v7492
      %v7494 = vrot.slane %v7492, 4
      %v7495 = vrot.slane %v6494, 5
      %v7496 = vsel %vm2912, %v7494, %v7495
      %v7498 = vshrl.u32 %v6495, 16
      %v7500 = vrot.slane %v7498, 4
      %v7501 = vshll.u32 %v6495, 16
      %v7503 = vrot.slane %v7501, 5
      %v7504 = vor.u32 %v7500, %v7503
      %v7505 = vrot.slane %v7504, 4
      %v7507 = vshll.u32 %v6496, 16
      %v7509 = vrot.slane %v7507, 5
      %v7510 = vsel %vm2125, %v7505, %v7509
      %v7511 = vshrl.u32 %v6496, 16
      %v7513 = vrot.slane %v7511, 4
      %v7514 = vor.u32 %v7513, %v7509
      %v7515 = vrot.slane %v7514, 4
      %v7517 = vshll.u32 %v6497, 16
      %v7519 = vrot.slane %v7517, 5
      %v7520 = vsel %vm2125, %v7515, %v7519
      %v7521 = vshrl.u32 %v6497, 16
      %v7523 = vrot.slane %v7521, 4
      %v7524 = vor.u32 %v7523, %v7519
      %v7525 = vrot.slane %v7524, 4
      %v7527 = vshll.u32 %v6498, 16
      %v7529 = vrot.slane %v7527, 5
      %v7530 = vsel %vm2125, %v7525, %v7529
      %v7531 = vshrl.u32 %v6498, 16
      %v7533 = vrot.slane %v7531, 4
      %v7534 = vor.u32 %v7533, %v7529
      %v7535 = vrot.slane %v7534, 4
      %v7537 = vshll.u32 %v6499, 16
      %v7539 = vrot.slane %v7537, 5
      %v7540 = vsel %vm2125, %v7535, %v7539
      %v7546 = vrot.slane %v6495, 5
      %v7547 = vrot.slane %v7546, 4
      %v7548 = vrot.slane %v6496, 5
      %v7549 = vsel %vm2912, %v7547, %v7548
      %v7550 = vrot.slane %v7548, 4
      %v7551 = vrot.slane %v6497, 5
      %v7552 = vsel %vm2912, %v7550, %v7551
      %v7553 = vrot.slane %v7551, 4
      %v7554 = vrot.slane %v6498, 5
      %v7555 = vsel %vm2912, %v7553, %v7554
      %v7556 = vrot.slane %v7554, 4
      %v7557 = vrot.slane %v6499, 5
      %v7558 = vsel %vm2912, %v7556, %v7557
      %v7560 = vshrl.u32 %v6500, 16
      %v7562 = vrot.slane %v7560, 4
      %v7563 = vshll.u32 %v6500, 16
      %v7565 = vrot.slane %v7563, 5
      %v7566 = vor.u32 %v7562, %v7565
      %v7567 = vrot.slane %v7566, 4
      %v7569 = vshll.u32 %v6501, 16
      %v7571 = vrot.slane %v7569, 5
      %v7572 = vsel %vm2125, %v7567, %v7571
      %v7573 = vshrl.u32 %v6501, 16
      %v7575 = vrot.slane %v7573, 4
      %v7576 = vor.u32 %v7575, %v7571
      %v7577 = vrot.slane %v7576, 4
      %v7579 = vshll.u32 %v6502, 16
      %v7581 = vrot.slane %v7579, 5
      %v7582 = vsel %vm2125, %v7577, %v7581
      %v7583 = vshrl.u32 %v6502, 16
      %v7585 = vrot.slane %v7583, 4
      %v7586 = vor.u32 %v7585, %v7581
      %v7587 = vrot.slane %v7586, 4
      %v7589 = vshll.u32 %v6503, 16
      %v7591 = vrot.slane %v7589, 5
      %v7592 = vsel %vm2125, %v7587, %v7591
      %v7593 = vshrl.u32 %v6503, 16
      %v7595 = vrot.slane %v7593, 4
      %v7596 = vor.u32 %v7595, %v7591
      %v7597 = vrot.slane %v7596, 4
      %v7599 = vshll.u32 %v6504, 16
      %v7601 = vrot.slane %v7599, 5
      %v7602 = vsel %vm2125, %v7597, %v7601
      %v7608 = vrot.slane %v6500, 5
      %v7609 = vrot.slane %v7608, 4
      %v7610 = vrot.slane %v6501, 5
      %v7611 = vsel %vm2912, %v7609, %v7610
      %v7612 = vrot.slane %v7610, 4
      %v7613 = vrot.slane %v6502, 5
      %v7614 = vsel %vm2912, %v7612, %v7613
      %v7615 = vrot.slane %v7613, 4
      %v7616 = vrot.slane %v6503, 5
      %v7617 = vsel %vm2912, %v7615, %v7616
      %v7618 = vrot.slane %v7616, 4
      %v7619 = vrot.slane %v6504, 5
      %v7620 = vsel %vm2912, %v7618, %v7619
      %v7621 = vunpack.c.l.b16 %v6415
      %v7622 = vunpack.c.l.b16 %v6416
      %v7623 = vunpack.c.l.b16 %v6417
      %v7624 = vunpack.c.l.b16 %v6418
      %v7625 = vunpack.c.l.b16 %v6420
      %v7626 = vunpack.c.l.b16 %v6421
      %v7627 = vunpack.c.l.b16 %v6422
      %v7628 = vunpack.c.l.b16 %v6423
      %v7629 = vunpack.c.l.b16 %v6425
      %v7630 = vunpack.c.l.b16 %v6426
      %v7631 = vunpack.c.l.b16 %v6427
      %v7632 = vunpack.c.l.b16 %v6428
      %v7633 = vunpack.c.l.b16 %v6430
      %v7634 = vunpack.c.l.b16 %v6431
      %v7635 = vunpack.c.l.b16 %v6432
      %v7636 = vunpack.c.l.b16 %v6433
      %v7637 = vunpack.c.l.b16 %v6435
      %v7638 = vunpack.c.l.b16 %v6436
      %v7639 = vunpack.c.l.b16 %v6437
      %v7640 = vunpack.c.l.b16 %v6438
      %v7641 = vunpack.c.l.b16 %v6440
      %v7642 = vunpack.c.l.b16 %v6441
      %v7643 = vunpack.c.l.b16 %v6442
      %v7644 = vunpack.c.l.b16 %v6443
      %v7645 = vunpack.c.l.b16 %v6445
      %v7646 = vunpack.c.l.b16 %v6446
      %v7647 = vunpack.c.l.b16 %v6447
      %v7648 = vunpack.c.l.b16 %v6448
      %v7649 = vunpack.c.l.b16 %v6450
      %v7650 = vunpack.c.l.b16 %v6451
      %v7651 = vunpack.c.l.b16 %v6452
      %v7652 = vunpack.c.l.b16 %v6453
      %v7653 = vunpack.c.l.b16 %v6455
      %v7654 = vunpack.c.l.b16 %v6456
      %v7655 = vunpack.c.l.b16 %v6457
      %v7656 = vunpack.c.l.b16 %v6458
      %v7657 = vunpack.c.l.b16 %v6460
      %v7658 = vunpack.c.l.b16 %v6461
      %v7659 = vunpack.c.l.b16 %v6462
      %v7660 = vunpack.c.l.b16 %v6463
      %v7661 = vunpack.c.l.b16 %v6465
      %v7662 = vunpack.c.l.b16 %v6466
      %v7663 = vunpack.c.l.b16 %v6467
      %v7664 = vunpack.c.l.b16 %v6468
      %v7665 = vunpack.c.l.b16 %v6470
      %v7666 = vunpack.c.l.b16 %v6471
      %v7667 = vunpack.c.l.b16 %v6472
      %v7668 = vunpack.c.l.b16 %v6473
      %v7669 = vunpack.c.l.b16 %v6475
      %v7670 = vunpack.c.l.b16 %v6476
      %v7671 = vunpack.c.l.b16 %v6477
      %v7672 = vunpack.c.l.b16 %v6478
      %v7673 = vunpack.c.l.b16 %v6480
      %v7674 = vunpack.c.l.b16 %v6481
      %v7675 = vunpack.c.l.b16 %v6482
      %v7676 = vunpack.c.l.b16 %v6483
      %v7677 = vunpack.c.l.b16 %v6485
      %v7678 = vunpack.c.l.b16 %v6486
      %v7679 = vunpack.c.l.b16 %v6487
      %v7680 = vunpack.c.l.b16 %v6488
      %v7681 = vunpack.c.l.b16 %v6490
      %v7682 = vunpack.c.l.b16 %v6491
      %v7683 = vunpack.c.l.b16 %v6492
      %v7684 = vunpack.c.l.b16 %v6493
      %v7685 = vpack.c.b16 %v7622, %v7621
      %v7686 = vpack.c.b16 %v7624, %v7623
      %v7687 = vpack.c.b16 %v7626, %v7625
      %v7688 = vpack.c.b16 %v7628, %v7627
      %v7689 = vpack.c.b16 %v7630, %v7629
      %v7690 = vpack.c.b16 %v7632, %v7631
      %v7691 = vpack.c.b16 %v7634, %v7633
      %v7692 = vpack.c.b16 %v7636, %v7635
      %v7693 = vpack.c.b16 %v7638, %v7637
      %v7694 = vpack.c.b16 %v7640, %v7639
      %v7695 = vpack.c.b16 %v7642, %v7641
      %v7696 = vpack.c.b16 %v7644, %v7643
      %v7697 = vpack.c.b16 %v7646, %v7645
      %v7698 = vpack.c.b16 %v7648, %v7647
      %v7699 = vpack.c.b16 %v7650, %v7649
      %v7700 = vpack.c.b16 %v7652, %v7651
      %v7701 = vpack.c.b16 %v7654, %v7653
      %v7702 = vpack.c.b16 %v7656, %v7655
      %v7703 = vpack.c.b16 %v7658, %v7657
      %v7704 = vpack.c.b16 %v7660, %v7659
      %v7705 = vpack.c.b16 %v7662, %v7661
      %v7706 = vpack.c.b16 %v7664, %v7663
      %v7707 = vpack.c.b16 %v7666, %v7665
      %v7708 = vpack.c.b16 %v7668, %v7667
      %v7709 = vpack.c.b16 %v7670, %v7669
      %v7710 = vpack.c.b16 %v7672, %v7671
      %v7711 = vpack.c.b16 %v7674, %v7673
      %v7712 = vpack.c.b16 %v7676, %v7675
      %v7713 = vpack.c.b16 %v7678, %v7677
      %v7714 = vpack.c.b16 %v7680, %v7679
      %v7715 = vpack.c.b16 %v7682, %v7681
      %v7716 = vpack.c.b16 %v7684, %v7683
      %v7717 = vunpack.c.l.b16 %v6518
      %v7718 = vunpack.c.l.b16 %v6528
      %v7719 = vunpack.c.l.b16 %v6538
      %v7720 = vunpack.c.l.b16 %v6548
      %v7721 = vunpack.c.l.b16 %v6562
      %v7722 = vunpack.c.l.b16 %v6572
      %v7723 = vunpack.c.l.b16 %v6582
      %v7724 = vunpack.c.l.b16 %v6592
      %v7725 = vunpack.c.l.b16 %v6606
      %v7726 = vunpack.c.l.b16 %v6616
      %v7727 = vunpack.c.l.b16 %v6626
      %v7728 = vunpack.c.l.b16 %v6636
      %v7729 = vunpack.c.l.b16 %v6650
      %v7730 = vunpack.c.l.b16 %v6660
      %v7731 = vunpack.c.l.b16 %v6670
      %v7732 = vunpack.c.l.b16 %v6680
      %v7733 = vunpack.c.l.b16 %v6694
      %v7734 = vunpack.c.l.b16 %v6704
      %v7735 = vunpack.c.l.b16 %v6714
      %v7736 = vunpack.c.l.b16 %v6724
      %v7737 = vunpack.c.l.b16 %v6738
      %v7738 = vunpack.c.l.b16 %v6748
      %v7739 = vunpack.c.l.b16 %v6758
      %v7740 = vunpack.c.l.b16 %v6768
      %v7741 = vunpack.c.l.b16 %v6782
      %v7742 = vunpack.c.l.b16 %v6792
      %v7743 = vunpack.c.l.b16 %v6802
      %v7744 = vunpack.c.l.b16 %v6812
      %v7745 = vunpack.c.l.b16 %v6826
      %v7746 = vunpack.c.l.b16 %v6836
      %v7747 = vunpack.c.l.b16 %v6846
      %v7748 = vunpack.c.l.b16 %v6856
      %v7749 = vunpack.c.l.b16 %v6870
      %v7750 = vunpack.c.l.b16 %v6880
      %v7751 = vunpack.c.l.b16 %v6890
      %v7752 = vunpack.c.l.b16 %v6900
      %v7753 = vunpack.c.l.b16 %v6914
      %v7754 = vunpack.c.l.b16 %v6924
      %v7755 = vunpack.c.l.b16 %v6934
      %v7756 = vunpack.c.l.b16 %v6944
      %v7757 = vunpack.c.l.b16 %v6958
      %v7758 = vunpack.c.l.b16 %v6968
      %v7759 = vunpack.c.l.b16 %v6978
      %v7760 = vunpack.c.l.b16 %v6988
      %v7761 = vunpack.c.l.b16 %v7002
      %v7762 = vunpack.c.l.b16 %v7012
      %v7763 = vunpack.c.l.b16 %v7022
      %v7764 = vunpack.c.l.b16 %v7032
      %v7765 = vunpack.c.l.b16 %v7046
      %v7766 = vunpack.c.l.b16 %v7056
      %v7767 = vunpack.c.l.b16 %v7066
      %v7768 = vunpack.c.l.b16 %v7076
      %v7769 = vunpack.c.l.b16 %v7090
      %v7770 = vunpack.c.l.b16 %v7100
      %v7771 = vunpack.c.l.b16 %v7110
      %v7772 = vunpack.c.l.b16 %v7120
      %v7773 = vunpack.c.l.b16 %v7134
      %v7774 = vunpack.c.l.b16 %v7144
      %v7775 = vunpack.c.l.b16 %v7154
      %v7776 = vunpack.c.l.b16 %v7164
      %v7777 = vunpack.c.l.b16 %v7178
      %v7778 = vunpack.c.l.b16 %v7188
      %v7779 = vunpack.c.l.b16 %v7198
      %v7780 = vunpack.c.l.b16 %v7208
      %v7781 = vpack.c.b16 %v7718, %v7717
      %v7782 = vpack.c.b16 %v7720, %v7719
      %v7783 = vpack.c.b16 %v7722, %v7721
      %v7784 = vpack.c.b16 %v7724, %v7723
      %v7785 = vpack.c.b16 %v7726, %v7725
      %v7786 = vpack.c.b16 %v7728, %v7727
      %v7787 = vpack.c.b16 %v7730, %v7729
      %v7788 = vpack.c.b16 %v7732, %v7731
      %v7789 = vpack.c.b16 %v7734, %v7733
      %v7790 = vpack.c.b16 %v7736, %v7735
      %v7791 = vpack.c.b16 %v7738, %v7737
      %v7792 = vpack.c.b16 %v7740, %v7739
      %v7793 = vpack.c.b16 %v7742, %v7741
      %v7794 = vpack.c.b16 %v7744, %v7743
      %v7795 = vpack.c.b16 %v7746, %v7745
      %v7796 = vpack.c.b16 %v7748, %v7747
      %v7797 = vpack.c.b16 %v7750, %v7749
      %v7798 = vpack.c.b16 %v7752, %v7751
      %v7799 = vpack.c.b16 %v7754, %v7753
      %v7800 = vpack.c.b16 %v7756, %v7755
      %v7801 = vpack.c.b16 %v7758, %v7757
      %v7802 = vpack.c.b16 %v7760, %v7759
      %v7803 = vpack.c.b16 %v7762, %v7761
      %v7804 = vpack.c.b16 %v7764, %v7763
      %v7805 = vpack.c.b16 %v7766, %v7765
      %v7806 = vpack.c.b16 %v7768, %v7767
      %v7807 = vpack.c.b16 %v7770, %v7769
      %v7808 = vpack.c.b16 %v7772, %v7771
      %v7809 = vpack.c.b16 %v7774, %v7773
      %v7810 = vpack.c.b16 %v7776, %v7775
      %v7811 = vpack.c.b16 %v7778, %v7777
      %v7812 = vpack.c.b16 %v7780, %v7779
      %7813 = vrot.lane.b32.xlu0 %v7781, 32
      %v7814 = vpop.permute.xlu0 %7813
      %7815 = vrot.lane.b32.xlu0 %v7782, 32
      %v7816 = vpop.permute.xlu0 %7815
      %7817 = vrot.lane.b32.xlu0 %v7783, 32
      %v7818 = vpop.permute.xlu0 %7817
      %7819 = vrot.lane.b32.xlu0 %v7784, 32
      %v7820 = vpop.permute.xlu0 %7819
      %7821 = vrot.lane.b32.xlu0 %v7785, 32
      %v7822 = vpop.permute.xlu0 %7821
      %7823 = vrot.lane.b32.xlu0 %v7786, 32
      %v7824 = vpop.permute.xlu0 %7823
      %7825 = vrot.lane.b32.xlu0 %v7787, 32
      %v7826 = vpop.permute.xlu0 %7825
      %7827 = vrot.lane.b32.xlu0 %v7788, 32
      %v7828 = vpop.permute.xlu0 %7827
      %7829 = vrot.lane.b32.xlu0 %v7789, 32
      %v7830 = vpop.permute.xlu0 %7829
      %7831 = vrot.lane.b32.xlu0 %v7790, 32
      %v7832 = vpop.permute.xlu0 %7831
      %7833 = vrot.lane.b32.xlu0 %v7791, 32
      %v7834 = vpop.permute.xlu0 %7833
      %7835 = vrot.lane.b32.xlu0 %v7792, 32
      %v7836 = vpop.permute.xlu0 %7835
      %7837 = vrot.lane.b32.xlu0 %v7793, 32
      %v7838 = vpop.permute.xlu0 %7837
      %7839 = vrot.lane.b32.xlu0 %v7794, 32
      %v7840 = vpop.permute.xlu0 %7839
      %7841 = vrot.lane.b32.xlu0 %v7795, 32
      %v7842 = vpop.permute.xlu0 %7841
      %7843 = vrot.lane.b32.xlu0 %v7796, 32
      %v7844 = vpop.permute.xlu0 %7843
      %7845 = vrot.lane.b32.xlu0 %v7797, 32
      %v7846 = vpop.permute.xlu0 %7845
      %7847 = vrot.lane.b32.xlu0 %v7798, 32
      %v7848 = vpop.permute.xlu0 %7847
      %7849 = vrot.lane.b32.xlu0 %v7799, 32
      %v7850 = vpop.permute.xlu0 %7849
      %7851 = vrot.lane.b32.xlu0 %v7800, 32
      %v7852 = vpop.permute.xlu0 %7851
      %7853 = vrot.lane.b32.xlu0 %v7801, 32
      %v7854 = vpop.permute.xlu0 %7853
      %7855 = vrot.lane.b32.xlu0 %v7802, 32
      %v7856 = vpop.permute.xlu0 %7855
      %7857 = vrot.lane.b32.xlu0 %v7803, 32
      %v7858 = vpop.permute.xlu0 %7857
      %7859 = vrot.lane.b32.xlu0 %v7804, 32
      %v7860 = vpop.permute.xlu0 %7859
      %7861 = vrot.lane.b32.xlu0 %v7805, 32
      %v7862 = vpop.permute.xlu0 %7861
      %7863 = vrot.lane.b32.xlu0 %v7806, 32
      %v7864 = vpop.permute.xlu0 %7863
      %7865 = vrot.lane.b32.xlu0 %v7807, 32
      %v7866 = vpop.permute.xlu0 %7865
      %7867 = vrot.lane.b32.xlu0 %v7808, 32
      %v7868 = vpop.permute.xlu0 %7867
      %7869 = vrot.lane.b32.xlu0 %v7809, 32
      %v7870 = vpop.permute.xlu0 %7869
      %7871 = vrot.lane.b32.xlu0 %v7810, 32
      %v7872 = vpop.permute.xlu0 %7871
      %7873 = vrot.lane.b32.xlu0 %v7811, 32
      %v7874 = vpop.permute.xlu0 %7873
      %7875 = vrot.lane.b32.xlu0 %v7812, 32
      %v7876 = vpop.permute.xlu0 %7875
      %v7877 = vunpack.c.l.b16 %v7292
      %v7878 = vunpack.c.l.b16 %v7295
      %v7879 = vunpack.c.l.b16 %v7298
      %v7880 = vunpack.c.l.b16 %v7301
      %v7881 = vunpack.c.l.b16 %v7305
      %v7882 = vunpack.c.l.b16 %v7308
      %v7883 = vunpack.c.l.b16 %v7311
      %v7884 = vunpack.c.l.b16 %v7314
      %v7885 = vunpack.c.l.b16 %v7318
      %v7886 = vunpack.c.l.b16 %v7321
      %v7887 = vunpack.c.l.b16 %v7324
      %v7888 = vunpack.c.l.b16 %v7327
      %v7889 = vunpack.c.l.b16 %v7331
      %v7890 = vunpack.c.l.b16 %v7334
      %v7891 = vunpack.c.l.b16 %v7337
      %v7892 = vunpack.c.l.b16 %v7340
      %v7893 = vunpack.c.l.b16 %v7344
      %v7894 = vunpack.c.l.b16 %v7347
      %v7895 = vunpack.c.l.b16 %v7350
      %v7896 = vunpack.c.l.b16 %v7353
      %v7897 = vunpack.c.l.b16 %v7357
      %v7898 = vunpack.c.l.b16 %v7360
      %v7899 = vunpack.c.l.b16 %v7363
      %v7900 = vunpack.c.l.b16 %v7366
      %v7901 = vunpack.c.l.b16 %v7370
      %v7902 = vunpack.c.l.b16 %v7373
      %v7903 = vunpack.c.l.b16 %v7376
      %v7904 = vunpack.c.l.b16 %v7379
      %v7905 = vunpack.c.l.b16 %v7383
      %v7906 = vunpack.c.l.b16 %v7386
      %v7907 = vunpack.c.l.b16 %v7389
      %v7908 = vunpack.c.l.b16 %v7392
      %v7909 = vunpack.c.l.b16 %v7396
      %v7910 = vunpack.c.l.b16 %v7399
      %v7911 = vunpack.c.l.b16 %v7402
      %v7912 = vunpack.c.l.b16 %v7405
      %v7913 = vunpack.c.l.b16 %v7409
      %v7914 = vunpack.c.l.b16 %v7412
      %v7915 = vunpack.c.l.b16 %v7415
      %v7916 = vunpack.c.l.b16 %v7418
      %v7917 = vunpack.c.l.b16 %v7422
      %v7918 = vunpack.c.l.b16 %v7425
      %v7919 = vunpack.c.l.b16 %v7428
      %v7920 = vunpack.c.l.b16 %v7431
      %v7921 = vunpack.c.l.b16 %v7435
      %v7922 = vunpack.c.l.b16 %v7438
      %v7923 = vunpack.c.l.b16 %v7441
      %v7924 = vunpack.c.l.b16 %v7444
      %v7925 = vunpack.c.l.b16 %v7448
      %v7926 = vunpack.c.l.b16 %v7451
      %v7927 = vunpack.c.l.b16 %v7454
      %v7928 = vunpack.c.l.b16 %v7457
      %v7929 = vunpack.c.l.b16 %v7461
      %v7930 = vunpack.c.l.b16 %v7464
      %v7931 = vunpack.c.l.b16 %v7467
      %v7932 = vunpack.c.l.b16 %v7470
      %v7933 = vunpack.c.l.b16 %v7474
      %v7934 = vunpack.c.l.b16 %v7477
      %v7935 = vunpack.c.l.b16 %v7480
      %v7936 = vunpack.c.l.b16 %v7483
      %v7937 = vunpack.c.l.b16 %v7487
      %v7938 = vunpack.c.l.b16 %v7490
      %v7939 = vunpack.c.l.b16 %v7493
      %v7940 = vunpack.c.l.b16 %v7496
      %v7941 = vpack.c.b16 %v7878, %v7877
      %v7942 = vpack.c.b16 %v7880, %v7879
      %v7943 = vpack.c.b16 %v7882, %v7881
      %v7944 = vpack.c.b16 %v7884, %v7883
      %v7945 = vpack.c.b16 %v7886, %v7885
      %v7946 = vpack.c.b16 %v7888, %v7887
      %v7947 = vpack.c.b16 %v7890, %v7889
      %v7948 = vpack.c.b16 %v7892, %v7891
      %v7949 = vpack.c.b16 %v7894, %v7893
      %v7950 = vpack.c.b16 %v7896, %v7895
      %v7951 = vpack.c.b16 %v7898, %v7897
      %v7952 = vpack.c.b16 %v7900, %v7899
      %v7953 = vpack.c.b16 %v7902, %v7901
      %v7954 = vpack.c.b16 %v7904, %v7903
      %v7955 = vpack.c.b16 %v7906, %v7905
      %v7956 = vpack.c.b16 %v7908, %v7907
      %v7957 = vpack.c.b16 %v7910, %v7909
      %v7958 = vpack.c.b16 %v7912, %v7911
      %v7959 = vpack.c.b16 %v7914, %v7913
      %v7960 = vpack.c.b16 %v7916, %v7915
      %v7961 = vpack.c.b16 %v7918, %v7917
      %v7962 = vpack.c.b16 %v7920, %v7919
      %v7963 = vpack.c.b16 %v7922, %v7921
      %v7964 = vpack.c.b16 %v7924, %v7923
      %v7965 = vpack.c.b16 %v7926, %v7925
      %v7966 = vpack.c.b16 %v7928, %v7927
      %v7967 = vpack.c.b16 %v7930, %v7929
      %v7968 = vpack.c.b16 %v7932, %v7931
      %v7969 = vpack.c.b16 %v7934, %v7933
      %v7970 = vpack.c.b16 %v7936, %v7935
      %v7971 = vpack.c.b16 %v7938, %v7937
      %v7972 = vpack.c.b16 %v7940, %v7939
      %7973 = vrot.lane.b32.xlu0 %v7941, 64
      %v7974 = vpop.permute.xlu0 %7973
      %7975 = vrot.lane.b32.xlu0 %v7942, 64
      %v7976 = vpop.permute.xlu0 %7975
      %7977 = vrot.lane.b32.xlu0 %v7943, 64
      %v7978 = vpop.permute.xlu0 %7977
      %7979 = vrot.lane.b32.xlu0 %v7944, 64
      %v7980 = vpop.permute.xlu0 %7979
      %7981 = vrot.lane.b32.xlu0 %v7945, 64
      %v7982 = vpop.permute.xlu0 %7981
      %7983 = vrot.lane.b32.xlu0 %v7946, 64
      %v7984 = vpop.permute.xlu0 %7983
      %7985 = vrot.lane.b32.xlu0 %v7947, 64
      %v7986 = vpop.permute.xlu0 %7985
      %7987 = vrot.lane.b32.xlu0 %v7948, 64
      %v7988 = vpop.permute.xlu0 %7987
      %7989 = vrot.lane.b32.xlu0 %v7949, 64
      %v7990 = vpop.permute.xlu0 %7989
      %7991 = vrot.lane.b32.xlu0 %v7950, 64
      %v7992 = vpop.permute.xlu0 %7991
      %7993 = vrot.lane.b32.xlu0 %v7951, 64
      %v7994 = vpop.permute.xlu0 %7993
      %7995 = vrot.lane.b32.xlu0 %v7952, 64
      %v7996 = vpop.permute.xlu0 %7995
      %7997 = vrot.lane.b32.xlu0 %v7953, 64
      %v7998 = vpop.permute.xlu0 %7997
      %7999 = vrot.lane.b32.xlu0 %v7954, 64
      %v8000 = vpop.permute.xlu0 %7999
      %8001 = vrot.lane.b32.xlu0 %v7955, 64
      %v8002 = vpop.permute.xlu0 %8001
      %8003 = vrot.lane.b32.xlu0 %v7956, 64
      %v8004 = vpop.permute.xlu0 %8003
      %8005 = vrot.lane.b32.xlu0 %v7957, 64
      %v8006 = vpop.permute.xlu0 %8005
      %8007 = vrot.lane.b32.xlu0 %v7958, 64
      %v8008 = vpop.permute.xlu0 %8007
      %8009 = vrot.lane.b32.xlu0 %v7959, 64
      %v8010 = vpop.permute.xlu0 %8009
      %8011 = vrot.lane.b32.xlu0 %v7960, 64
      %v8012 = vpop.permute.xlu0 %8011
      %8013 = vrot.lane.b32.xlu0 %v7961, 64
      %v8014 = vpop.permute.xlu0 %8013
      %8015 = vrot.lane.b32.xlu0 %v7962, 64
      %v8016 = vpop.permute.xlu0 %8015
      %8017 = vrot.lane.b32.xlu0 %v7963, 64
      %v8018 = vpop.permute.xlu0 %8017
      %8019 = vrot.lane.b32.xlu0 %v7964, 64
      %v8020 = vpop.permute.xlu0 %8019
      %8021 = vrot.lane.b32.xlu0 %v7965, 64
      %v8022 = vpop.permute.xlu0 %8021
      %8023 = vrot.lane.b32.xlu0 %v7966, 64
      %v8024 = vpop.permute.xlu0 %8023
      %8025 = vrot.lane.b32.xlu0 %v7967, 64
      %v8026 = vpop.permute.xlu0 %8025
      %8027 = vrot.lane.b32.xlu0 %v7968, 64
      %v8028 = vpop.permute.xlu0 %8027
      %8029 = vrot.lane.b32.xlu0 %v7969, 64
      %v8030 = vpop.permute.xlu0 %8029
      %8031 = vrot.lane.b32.xlu0 %v7970, 64
      %v8032 = vpop.permute.xlu0 %8031
      %8033 = vrot.lane.b32.xlu0 %v7971, 64
      %v8034 = vpop.permute.xlu0 %8033
      %8035 = vrot.lane.b32.xlu0 %v7972, 64
      %v8036 = vpop.permute.xlu0 %8035
      %v8037 = vunpack.c.l.b16 %v6495
      %v8038 = vunpack.c.l.b16 %v6496
      %v8039 = vunpack.c.l.b16 %v6497
      %v8040 = vunpack.c.l.b16 %v6498
      %v8041 = vpack.c.b16 %v8038, %v8037
      %v8042 = vpack.c.b16 %v8040, %v8039
      %8043 = vrot.lane.b32.xlu0 %v7687, 96
      %v8044 = vpop.permute.xlu0 %8043
      %8045 = vrot.lane.b32.xlu0 %v7688, 96
      %v8046 = vpop.permute.xlu0 %8045
      %8047 = vrot.lane.b32.xlu0 %v7689, 96
      %v8048 = vpop.permute.xlu0 %8047
      %8049 = vrot.lane.b32.xlu0 %v7690, 96
      %v8050 = vpop.permute.xlu0 %8049
      %8051 = vrot.lane.b32.xlu0 %v7691, 96
      %v8052 = vpop.permute.xlu0 %8051
      %8053 = vrot.lane.b32.xlu0 %v7692, 96
      %v8054 = vpop.permute.xlu0 %8053
      %8055 = vrot.lane.b32.xlu0 %v7693, 96
      %v8056 = vpop.permute.xlu0 %8055
      %8057 = vrot.lane.b32.xlu0 %v7694, 96
      %v8058 = vpop.permute.xlu0 %8057
      %8059 = vrot.lane.b32.xlu0 %v7695, 96
      %v8060 = vpop.permute.xlu0 %8059
      %8061 = vrot.lane.b32.xlu0 %v7696, 96
      %v8062 = vpop.permute.xlu0 %8061
      %8063 = vrot.lane.b32.xlu0 %v7697, 96
      %v8064 = vpop.permute.xlu0 %8063
      %8065 = vrot.lane.b32.xlu0 %v7698, 96
      %v8066 = vpop.permute.xlu0 %8065
      %8067 = vrot.lane.b32.xlu0 %v7699, 96
      %v8068 = vpop.permute.xlu0 %8067
      %8069 = vrot.lane.b32.xlu0 %v7700, 96
      %v8070 = vpop.permute.xlu0 %8069
      %8071 = vrot.lane.b32.xlu0 %v7701, 96
      %v8072 = vpop.permute.xlu0 %8071
      %8073 = vrot.lane.b32.xlu0 %v7702, 96
      %v8074 = vpop.permute.xlu0 %8073
      %8075 = vrot.lane.b32.xlu0 %v7703, 96
      %v8076 = vpop.permute.xlu0 %8075
      %8077 = vrot.lane.b32.xlu0 %v7704, 96
      %v8078 = vpop.permute.xlu0 %8077
      %8079 = vrot.lane.b32.xlu0 %v7705, 96
      %v8080 = vpop.permute.xlu0 %8079
      %8081 = vrot.lane.b32.xlu0 %v7706, 96
      %v8082 = vpop.permute.xlu0 %8081
      %8083 = vrot.lane.b32.xlu0 %v7707, 96
      %v8084 = vpop.permute.xlu0 %8083
      %8085 = vrot.lane.b32.xlu0 %v7708, 96
      %v8086 = vpop.permute.xlu0 %8085
      %8087 = vrot.lane.b32.xlu0 %v7709, 96
      %v8088 = vpop.permute.xlu0 %8087
      %8089 = vrot.lane.b32.xlu0 %v7710, 96
      %v8090 = vpop.permute.xlu0 %8089
      %8091 = vrot.lane.b32.xlu0 %v7711, 96
      %v8092 = vpop.permute.xlu0 %8091
      %8093 = vrot.lane.b32.xlu0 %v7712, 96
      %v8094 = vpop.permute.xlu0 %8093
      %8095 = vrot.lane.b32.xlu0 %v7713, 96
      %v8096 = vpop.permute.xlu0 %8095
      %8097 = vrot.lane.b32.xlu0 %v7714, 96
      %v8098 = vpop.permute.xlu0 %8097
      %8099 = vrot.lane.b32.xlu0 %v7715, 96
      %v8100 = vpop.permute.xlu0 %8099
      %8101 = vrot.lane.b32.xlu0 %v7716, 96
      %v8102 = vpop.permute.xlu0 %8101
      %8103 = vrot.lane.b32.xlu0 %v8041, 96
      %v8104 = vpop.permute.xlu0 %8103
      %8105 = vrot.lane.b32.xlu0 %v8042, 96
      %v8106 = vpop.permute.xlu0 %8105
      %v8107 = vunpack.c.l.b16 %v7510
      %v8108 = vunpack.c.l.b16 %v7520
      %v8109 = vunpack.c.l.b16 %v7530
      %v8110 = vunpack.c.l.b16 %v7540
      %v8111 = vpack.c.b16 %v8108, %v8107
      %v8112 = vpack.c.b16 %v8110, %v8109
      %v8113 = vunpack.c.l.b16 %v7549
      %v8114 = vunpack.c.l.b16 %v7552
      %v8115 = vunpack.c.l.b16 %v7555
      %v8116 = vunpack.c.l.b16 %v7558
      %v8117 = vpack.c.b16 %v8114, %v8113
      %v8118 = vpack.c.b16 %v8116, %v8115
      %8119 = vrot.lane.b32.xlu0 %v7943, 32
      %v8120 = vpop.permute.xlu0 %8119
      %8121 = vrot.lane.b32.xlu0 %v7944, 32
      %v8122 = vpop.permute.xlu0 %8121
      %8123 = vrot.lane.b32.xlu0 %v7945, 32
      %v8124 = vpop.permute.xlu0 %8123
      %8125 = vrot.lane.b32.xlu0 %v7946, 32
      %v8126 = vpop.permute.xlu0 %8125
      %8127 = vrot.lane.b32.xlu0 %v7947, 32
      %v8128 = vpop.permute.xlu0 %8127
      %8129 = vrot.lane.b32.xlu0 %v7948, 32
      %v8130 = vpop.permute.xlu0 %8129
      %8131 = vrot.lane.b32.xlu0 %v7949, 32
      %v8132 = vpop.permute.xlu0 %8131
      %8133 = vrot.lane.b32.xlu0 %v7950, 32
      %v8134 = vpop.permute.xlu0 %8133
      %8135 = vrot.lane.b32.xlu0 %v7951, 32
      %v8136 = vpop.permute.xlu0 %8135
      %8137 = vrot.lane.b32.xlu0 %v7952, 32
      %v8138 = vpop.permute.xlu0 %8137
      %8139 = vrot.lane.b32.xlu0 %v7953, 32
      %v8140 = vpop.permute.xlu0 %8139
      %8141 = vrot.lane.b32.xlu0 %v7954, 32
      %v8142 = vpop.permute.xlu0 %8141
      %8143 = vrot.lane.b32.xlu0 %v7955, 32
      %v8144 = vpop.permute.xlu0 %8143
      %8145 = vrot.lane.b32.xlu0 %v7956, 32
      %v8146 = vpop.permute.xlu0 %8145
      %8147 = vrot.lane.b32.xlu0 %v7957, 32
      %v8148 = vpop.permute.xlu0 %8147
      %8149 = vrot.lane.b32.xlu0 %v7958, 32
      %v8150 = vpop.permute.xlu0 %8149
      %8151 = vrot.lane.b32.xlu0 %v7959, 32
      %v8152 = vpop.permute.xlu0 %8151
      %8153 = vrot.lane.b32.xlu0 %v7960, 32
      %v8154 = vpop.permute.xlu0 %8153
      %8155 = vrot.lane.b32.xlu0 %v7961, 32
      %v8156 = vpop.permute.xlu0 %8155
      %8157 = vrot.lane.b32.xlu0 %v7962, 32
      %v8158 = vpop.permute.xlu0 %8157
      %8159 = vrot.lane.b32.xlu0 %v7963, 32
      %v8160 = vpop.permute.xlu0 %8159
      %8161 = vrot.lane.b32.xlu0 %v7964, 32
      %v8162 = vpop.permute.xlu0 %8161
      %8163 = vrot.lane.b32.xlu0 %v7965, 32
      %v8164 = vpop.permute.xlu0 %8163
      %8165 = vrot.lane.b32.xlu0 %v7966, 32
      %v8166 = vpop.permute.xlu0 %8165
      %8167 = vrot.lane.b32.xlu0 %v7967, 32
      %v8168 = vpop.permute.xlu0 %8167
      %8169 = vrot.lane.b32.xlu0 %v7968, 32
      %v8170 = vpop.permute.xlu0 %8169
      %8171 = vrot.lane.b32.xlu0 %v7969, 32
      %v8172 = vpop.permute.xlu0 %8171
      %8173 = vrot.lane.b32.xlu0 %v7970, 32
      %v8174 = vpop.permute.xlu0 %8173
      %8175 = vrot.lane.b32.xlu0 %v7971, 32
      %v8176 = vpop.permute.xlu0 %8175
      %8177 = vrot.lane.b32.xlu0 %v7972, 32
      %v8178 = vpop.permute.xlu0 %8177
      %8179 = vrot.lane.b32.xlu0 %v8117, 32
      %v8180 = vpop.permute.xlu0 %8179
      %8181 = vrot.lane.b32.xlu0 %v8118, 32
      %v8182 = vpop.permute.xlu0 %8181
      %v8183 = vunpack.c.l.b16 %v6500
      %v8184 = vunpack.c.l.b16 %v6501
      %v8185 = vunpack.c.l.b16 %v6502
      %v8186 = vunpack.c.l.b16 %v6503
      %v8187 = vpack.c.b16 %v8184, %v8183
      %v8188 = vpack.c.b16 %v8186, %v8185
      %8189 = vrot.lane.b32.xlu0 %v7689, 64
      %v8190 = vpop.permute.xlu0 %8189
      %8191 = vrot.lane.b32.xlu0 %v7690, 64
      %v8192 = vpop.permute.xlu0 %8191
      %8193 = vrot.lane.b32.xlu0 %v7691, 64
      %v8194 = vpop.permute.xlu0 %8193
      %8195 = vrot.lane.b32.xlu0 %v7692, 64
      %v8196 = vpop.permute.xlu0 %8195
      %8197 = vrot.lane.b32.xlu0 %v7693, 64
      %v8198 = vpop.permute.xlu0 %8197
      %8199 = vrot.lane.b32.xlu0 %v7694, 64
      %v8200 = vpop.permute.xlu0 %8199
      %8201 = vrot.lane.b32.xlu0 %v7695, 64
      %v8202 = vpop.permute.xlu0 %8201
      %8203 = vrot.lane.b32.xlu0 %v7696, 64
      %v8204 = vpop.permute.xlu0 %8203
      %8205 = vrot.lane.b32.xlu0 %v7697, 64
      %v8206 = vpop.permute.xlu0 %8205
      %8207 = vrot.lane.b32.xlu0 %v7698, 64
      %v8208 = vpop.permute.xlu0 %8207
      %8209 = vrot.lane.b32.xlu0 %v7699, 64
      %v8210 = vpop.permute.xlu0 %8209
      %8211 = vrot.lane.b32.xlu0 %v7700, 64
      %v8212 = vpop.permute.xlu0 %8211
      %8213 = vrot.lane.b32.xlu0 %v7701, 64
      %v8214 = vpop.permute.xlu0 %8213
      %8215 = vrot.lane.b32.xlu0 %v7702, 64
      %v8216 = vpop.permute.xlu0 %8215
      %8217 = vrot.lane.b32.xlu0 %v7703, 64
      %v8218 = vpop.permute.xlu0 %8217
      %8219 = vrot.lane.b32.xlu0 %v7704, 64
      %v8220 = vpop.permute.xlu0 %8219
      %8221 = vrot.lane.b32.xlu0 %v7705, 64
      %v8222 = vpop.permute.xlu0 %8221
      %8223 = vrot.lane.b32.xlu0 %v7706, 64
      %v8224 = vpop.permute.xlu0 %8223
      %8225 = vrot.lane.b32.xlu0 %v7707, 64
      %v8226 = vpop.permute.xlu0 %8225
      %8227 = vrot.lane.b32.xlu0 %v7708, 64
      %v8228 = vpop.permute.xlu0 %8227
      %8229 = vrot.lane.b32.xlu0 %v7709, 64
      %v8230 = vpop.permute.xlu0 %8229
      %8231 = vrot.lane.b32.xlu0 %v7710, 64
      %v8232 = vpop.permute.xlu0 %8231
      %8233 = vrot.lane.b32.xlu0 %v7711, 64
      %v8234 = vpop.permute.xlu0 %8233
      %8235 = vrot.lane.b32.xlu0 %v7712, 64
      %v8236 = vpop.permute.xlu0 %8235
      %8237 = vrot.lane.b32.xlu0 %v7713, 64
      %v8238 = vpop.permute.xlu0 %8237
      %8239 = vrot.lane.b32.xlu0 %v7714, 64
      %v8240 = vpop.permute.xlu0 %8239
      %8241 = vrot.lane.b32.xlu0 %v7715, 64
      %v8242 = vpop.permute.xlu0 %8241
      %8243 = vrot.lane.b32.xlu0 %v7716, 64
      %v8244 = vpop.permute.xlu0 %8243
      %8245 = vrot.lane.b32.xlu0 %v8041, 64
      %v8246 = vpop.permute.xlu0 %8245
      %8247 = vrot.lane.b32.xlu0 %v8042, 64
      %v8248 = vpop.permute.xlu0 %8247
      %8249 = vrot.lane.b32.xlu0 %v8187, 64
      %v8250 = vpop.permute.xlu0 %8249
      %8251 = vrot.lane.b32.xlu0 %v8188, 64
      %v8252 = vpop.permute.xlu0 %8251
      %v8253 = vunpack.c.l.b16 %v7572
      %v8254 = vunpack.c.l.b16 %v7582
      %v8255 = vunpack.c.l.b16 %v7592
      %v8256 = vunpack.c.l.b16 %v7602
      %v8257 = vpack.c.b16 %v8254, %v8253
      %v8258 = vpack.c.b16 %v8256, %v8255
      %8259 = vrot.lane.b32.xlu0 %v7785, 96
      %v8260 = vpop.permute.xlu0 %8259
      %8261 = vrot.lane.b32.xlu0 %v7786, 96
      %v8262 = vpop.permute.xlu0 %8261
      %8263 = vrot.lane.b32.xlu0 %v7787, 96
      %v8264 = vpop.permute.xlu0 %8263
      %8265 = vrot.lane.b32.xlu0 %v7788, 96
      %v8266 = vpop.permute.xlu0 %8265
      %8267 = vrot.lane.b32.xlu0 %v7789, 96
      %v8268 = vpop.permute.xlu0 %8267
      %8269 = vrot.lane.b32.xlu0 %v7790, 96
      %v8270 = vpop.permute.xlu0 %8269
      %8271 = vrot.lane.b32.xlu0 %v7791, 96
      %v8272 = vpop.permute.xlu0 %8271
      %8273 = vrot.lane.b32.xlu0 %v7792, 96
      %v8274 = vpop.permute.xlu0 %8273
      %8275 = vrot.lane.b32.xlu0 %v7793, 96
      %v8276 = vpop.permute.xlu0 %8275
      %8277 = vrot.lane.b32.xlu0 %v7794, 96
      %v8278 = vpop.permute.xlu0 %8277
      %8279 = vrot.lane.b32.xlu0 %v7795, 96
      %v8280 = vpop.permute.xlu0 %8279
      %8281 = vrot.lane.b32.xlu0 %v7796, 96
      %v8282 = vpop.permute.xlu0 %8281
      %8283 = vrot.lane.b32.xlu0 %v7797, 96
      %v8284 = vpop.permute.xlu0 %8283
      %8285 = vrot.lane.b32.xlu0 %v7798, 96
      %v8286 = vpop.permute.xlu0 %8285
      %8287 = vrot.lane.b32.xlu0 %v7799, 96
      %v8288 = vpop.permute.xlu0 %8287
      %8289 = vrot.lane.b32.xlu0 %v7800, 96
      %v8290 = vpop.permute.xlu0 %8289
      %8291 = vrot.lane.b32.xlu0 %v7801, 96
      %v8292 = vpop.permute.xlu0 %8291
      %8293 = vrot.lane.b32.xlu0 %v7802, 96
      %v8294 = vpop.permute.xlu0 %8293
      %8295 = vrot.lane.b32.xlu0 %v7803, 96
      %v8296 = vpop.permute.xlu0 %8295
      %8297 = vrot.lane.b32.xlu0 %v7804, 96
      %v8298 = vpop.permute.xlu0 %8297
      %8299 = vrot.lane.b32.xlu0 %v7805, 96
      %v8300 = vpop.permute.xlu0 %8299
      %8301 = vrot.lane.b32.xlu0 %v7806, 96
      %v8302 = vpop.permute.xlu0 %8301
      %8303 = vrot.lane.b32.xlu0 %v7807, 96
      %v8304 = vpop.permute.xlu0 %8303
      %8305 = vrot.lane.b32.xlu0 %v7808, 96
      %v8306 = vpop.permute.xlu0 %8305
      %8307 = vrot.lane.b32.xlu0 %v7809, 96
      %v8308 = vpop.permute.xlu0 %8307
      %8309 = vrot.lane.b32.xlu0 %v7810, 96
      %v8310 = vpop.permute.xlu0 %8309
      %8311 = vrot.lane.b32.xlu0 %v7811, 96
      %v8312 = vpop.permute.xlu0 %8311
      %8313 = vrot.lane.b32.xlu0 %v7812, 96
      %v8314 = vpop.permute.xlu0 %8313
      %8315 = vrot.lane.b32.xlu0 %v8111, 96
      %v8316 = vpop.permute.xlu0 %8315
      %8317 = vrot.lane.b32.xlu0 %v8112, 96
      %v8318 = vpop.permute.xlu0 %8317
      %8319 = vrot.lane.b32.xlu0 %v8257, 96
      %v8320 = vpop.permute.xlu0 %8319
      %8321 = vrot.lane.b32.xlu0 %v8258, 96
      %v8322 = vpop.permute.xlu0 %8321
      %v8323 = vunpack.c.l.b16 %v7611
      %v8324 = vunpack.c.l.b16 %v7614
      %v8325 = vunpack.c.l.b16 %v7617
      %v8326 = vunpack.c.l.b16 %v7620
      %v8327 = vpack.c.b16 %v8324, %v8323
      %v8328 = vpack.c.b16 %v8326, %v8325
      %v8331 = vsel %vm3953, %v7685, %v7814
      %v8334 = vsel %vm3953, %v7686, %v7816
      %v8337 = vsel %vm3953, %v7687, %v7818
      %v8340 = vsel %vm3953, %v7688, %v7820
      %v8343 = vsel %vm3953, %v7689, %v7822
      %v8346 = vsel %vm3953, %v7690, %v7824
      %v8349 = vsel %vm3953, %v7691, %v7826
      %v8352 = vsel %vm3953, %v7692, %v7828
      %v8355 = vsel %vm3953, %v7693, %v7830
      %v8358 = vsel %vm3953, %v7694, %v7832
      %v8361 = vsel %vm3953, %v7695, %v7834
      %v8364 = vsel %vm3953, %v7696, %v7836
      %v8367 = vsel %vm3953, %v7697, %v7838
      %v8370 = vsel %vm3953, %v7698, %v7840
      %v8373 = vsel %vm3953, %v7699, %v7842
      %v8376 = vsel %vm3953, %v7700, %v7844
      %v8379 = vsel %vm3953, %v7701, %v7846
      %v8382 = vsel %vm3953, %v7702, %v7848
      %v8385 = vsel %vm3953, %v7703, %v7850
      %v8388 = vsel %vm3953, %v7704, %v7852
      %v8391 = vsel %vm3953, %v7705, %v7854
      %v8394 = vsel %vm3953, %v7706, %v7856
      %v8397 = vsel %vm3953, %v7707, %v7858
      %v8400 = vsel %vm3953, %v7708, %v7860
      %v8403 = vsel %vm3953, %v7709, %v7862
      %v8406 = vsel %vm3953, %v7710, %v7864
      %v8409 = vsel %vm3953, %v7711, %v7866
      %v8412 = vsel %vm3953, %v7712, %v7868
      %v8415 = vsel %vm3953, %v7713, %v7870
      %v8418 = vsel %vm3953, %v7714, %v7872
      %v8421 = vsel %vm3953, %v7715, %v7874
      %v8424 = vsel %vm3953, %v7716, %v7876
      %v8426 = vsel %vm4050, %v8331, %v7974
      %v8428 = vsel %vm4050, %v8334, %v7976
      %v8430 = vsel %vm4050, %v8337, %v7978
      %v8432 = vsel %vm4050, %v8340, %v7980
      %v8434 = vsel %vm4050, %v8343, %v7982
      %v8436 = vsel %vm4050, %v8346, %v7984
      %v8438 = vsel %vm4050, %v8349, %v7986
      %v8440 = vsel %vm4050, %v8352, %v7988
      %v8442 = vsel %vm4050, %v8355, %v7990
      %v8444 = vsel %vm4050, %v8358, %v7992
      %v8446 = vsel %vm4050, %v8361, %v7994
      %v8448 = vsel %vm4050, %v8364, %v7996
      %v8450 = vsel %vm4050, %v8367, %v7998
      %v8452 = vsel %vm4050, %v8370, %v8000
      %v8454 = vsel %vm4050, %v8373, %v8002
      %v8456 = vsel %vm4050, %v8376, %v8004
      %v8458 = vsel %vm4050, %v8379, %v8006
      %v8460 = vsel %vm4050, %v8382, %v8008
      %v8462 = vsel %vm4050, %v8385, %v8010
      %v8464 = vsel %vm4050, %v8388, %v8012
      %v8466 = vsel %vm4050, %v8391, %v8014
      %v8468 = vsel %vm4050, %v8394, %v8016
      %v8470 = vsel %vm4050, %v8397, %v8018
      %v8472 = vsel %vm4050, %v8400, %v8020
      %v8474 = vsel %vm4050, %v8403, %v8022
      %v8476 = vsel %vm4050, %v8406, %v8024
      %v8478 = vsel %vm4050, %v8409, %v8026
      %v8480 = vsel %vm4050, %v8412, %v8028
      %v8482 = vsel %vm4050, %v8415, %v8030
      %v8484 = vsel %vm4050, %v8418, %v8032
      %v8486 = vsel %vm4050, %v8421, %v8034
      %v8488 = vsel %vm4050, %v8424, %v8036
      %v8490 = vsel %vm4115, %v8426, %v8044
      %v8493 = vsel %vm4115, %v8428, %v8046
      %v8496 = vsel %vm4115, %v8430, %v8048
      %v8499 = vsel %vm4115, %v8432, %v8050
      %v8502 = vsel %vm4115, %v8434, %v8052
      %v8505 = vsel %vm4115, %v8436, %v8054
      %v8508 = vsel %vm4115, %v8438, %v8056
      %v8511 = vsel %vm4115, %v8440, %v8058
      %v8514 = vsel %vm4115, %v8442, %v8060
      %v8517 = vsel %vm4115, %v8444, %v8062
      %v8520 = vsel %vm4115, %v8446, %v8064
      %v8523 = vsel %vm4115, %v8448, %v8066
      %v8526 = vsel %vm4115, %v8450, %v8068
      %v8529 = vsel %vm4115, %v8452, %v8070
      %v8532 = vsel %vm4115, %v8454, %v8072
      %v8535 = vsel %vm4115, %v8456, %v8074
      %v8538 = vsel %vm4115, %v8458, %v8076
      %v8541 = vsel %vm4115, %v8460, %v8078
      %v8544 = vsel %vm4115, %v8462, %v8080
      %v8547 = vsel %vm4115, %v8464, %v8082
      %v8550 = vsel %vm4115, %v8466, %v8084
      %v8553 = vsel %vm4115, %v8468, %v8086
      %v8556 = vsel %vm4115, %v8470, %v8088
      %v8559 = vsel %vm4115, %v8472, %v8090
      %v8562 = vsel %vm4115, %v8474, %v8092
      %v8565 = vsel %vm4115, %v8476, %v8094
      %v8568 = vsel %vm4115, %v8478, %v8096
      %v8571 = vsel %vm4115, %v8480, %v8098
      %v8574 = vsel %vm4115, %v8482, %v8100
      %v8577 = vsel %vm4115, %v8484, %v8102
      %v8580 = vsel %vm4115, %v8486, %v8104
      %v8583 = vsel %vm4115, %v8488, %v8106
      %v8587 = vsel %vm3953, %v7783, %v8120
      %v8590 = vsel %vm3953, %v7784, %v8122
      %v8593 = vsel %vm3953, %v7785, %v8124
      %v8596 = vsel %vm3953, %v7786, %v8126
      %v8599 = vsel %vm3953, %v7787, %v8128
      %v8602 = vsel %vm3953, %v7788, %v8130
      %v8605 = vsel %vm3953, %v7789, %v8132
      %v8608 = vsel %vm3953, %v7790, %v8134
      %v8611 = vsel %vm3953, %v7791, %v8136
      %v8614 = vsel %vm3953, %v7792, %v8138
      %v8617 = vsel %vm3953, %v7793, %v8140
      %v8620 = vsel %vm3953, %v7794, %v8142
      %v8623 = vsel %vm3953, %v7795, %v8144
      %v8626 = vsel %vm3953, %v7796, %v8146
      %v8629 = vsel %vm3953, %v7797, %v8148
      %v8632 = vsel %vm3953, %v7798, %v8150
      %v8635 = vsel %vm3953, %v7799, %v8152
      %v8638 = vsel %vm3953, %v7800, %v8154
      %v8641 = vsel %vm3953, %v7801, %v8156
      %v8644 = vsel %vm3953, %v7802, %v8158
      %v8647 = vsel %vm3953, %v7803, %v8160
      %v8650 = vsel %vm3953, %v7804, %v8162
      %v8653 = vsel %vm3953, %v7805, %v8164
      %v8656 = vsel %vm3953, %v7806, %v8166
      %v8659 = vsel %vm3953, %v7807, %v8168
      %v8662 = vsel %vm3953, %v7808, %v8170
      %v8665 = vsel %vm3953, %v7809, %v8172
      %v8668 = vsel %vm3953, %v7810, %v8174
      %v8671 = vsel %vm3953, %v7811, %v8176
      %v8674 = vsel %vm3953, %v7812, %v8178
      %v8677 = vsel %vm3953, %v8111, %v8180
      %v8680 = vsel %vm3953, %v8112, %v8182
      %v8682 = vsel %vm4050, %v8587, %v8190
      %v8684 = vsel %vm4050, %v8590, %v8192
      %v8686 = vsel %vm4050, %v8593, %v8194
      %v8688 = vsel %vm4050, %v8596, %v8196
      %v8690 = vsel %vm4050, %v8599, %v8198
      %v8692 = vsel %vm4050, %v8602, %v8200
      %v8694 = vsel %vm4050, %v8605, %v8202
      %v8696 = vsel %vm4050, %v8608, %v8204
      %v8698 = vsel %vm4050, %v8611, %v8206
      %v8700 = vsel %vm4050, %v8614, %v8208
      %v8702 = vsel %vm4050, %v8617, %v8210
      %v8704 = vsel %vm4050, %v8620, %v8212
      %v8706 = vsel %vm4050, %v8623, %v8214
      %v8708 = vsel %vm4050, %v8626, %v8216
      %v8710 = vsel %vm4050, %v8629, %v8218
      %v8712 = vsel %vm4050, %v8632, %v8220
      %v8714 = vsel %vm4050, %v8635, %v8222
      %v8716 = vsel %vm4050, %v8638, %v8224
      %v8718 = vsel %vm4050, %v8641, %v8226
      %v8720 = vsel %vm4050, %v8644, %v8228
      %v8722 = vsel %vm4050, %v8647, %v8230
      %v8724 = vsel %vm4050, %v8650, %v8232
      %v8726 = vsel %vm4050, %v8653, %v8234
      %v8728 = vsel %vm4050, %v8656, %v8236
      %v8730 = vsel %vm4050, %v8659, %v8238
      %v8732 = vsel %vm4050, %v8662, %v8240
      %v8734 = vsel %vm4050, %v8665, %v8242
      %v8736 = vsel %vm4050, %v8668, %v8244
      %v8738 = vsel %vm4050, %v8671, %v8246
      %v8740 = vsel %vm4050, %v8674, %v8248
      %v8742 = vsel %vm4050, %v8677, %v8250
      %v8744 = vsel %vm4050, %v8680, %v8252
      %v8746 = vsel %vm4115, %v8682, %v8260
      %v8749 = vsel %vm4115, %v8684, %v8262
      %v8752 = vsel %vm4115, %v8686, %v8264
      %v8755 = vsel %vm4115, %v8688, %v8266
      %v8758 = vsel %vm4115, %v8690, %v8268
      %v8761 = vsel %vm4115, %v8692, %v8270
      %v8764 = vsel %vm4115, %v8694, %v8272
      %v8767 = vsel %vm4115, %v8696, %v8274
      %v8770 = vsel %vm4115, %v8698, %v8276
      %v8773 = vsel %vm4115, %v8700, %v8278
      %v8776 = vsel %vm4115, %v8702, %v8280
      %v8779 = vsel %vm4115, %v8704, %v8282
      %v8782 = vsel %vm4115, %v8706, %v8284
      %v8785 = vsel %vm4115, %v8708, %v8286
      %v8788 = vsel %vm4115, %v8710, %v8288
      %v8791 = vsel %vm4115, %v8712, %v8290
      %v8794 = vsel %vm4115, %v8714, %v8292
      %v8797 = vsel %vm4115, %v8716, %v8294
      %v8800 = vsel %vm4115, %v8718, %v8296
      %v8803 = vsel %vm4115, %v8720, %v8298
      %v8806 = vsel %vm4115, %v8722, %v8300
      %v8809 = vsel %vm4115, %v8724, %v8302
      %v8812 = vsel %vm4115, %v8726, %v8304
      %v8815 = vsel %vm4115, %v8728, %v8306
      %v8818 = vsel %vm4115, %v8730, %v8308
      %v8821 = vsel %vm4115, %v8732, %v8310
      %v8824 = vsel %vm4115, %v8734, %v8312
      %v8827 = vsel %vm4115, %v8736, %v8314
      %v8830 = vsel %vm4115, %v8738, %v8316
      %v8833 = vsel %vm4115, %v8740, %v8318
      %v8836 = vsel %vm4115, %v8742, %v8320
      %v8839 = vsel %vm4115, %v8744, %v8322
      %v8842 = vsel %vm3953, %v7945, 0
      %v8845 = vsel %vm3953, %v7946, 0
      %v8848 = vsel %vm3953, %v7947, 0
      %v8851 = vsel %vm3953, %v7948, 0
      %v8854 = vsel %vm3953, %v7949, 0
      %v8857 = vsel %vm3953, %v7950, 0
      %v8860 = vsel %vm3953, %v7951, 0
      %v8863 = vsel %vm3953, %v7952, 0
      %v8866 = vsel %vm3953, %v7953, 0
      %v8869 = vsel %vm3953, %v7954, 0
      %v8872 = vsel %vm3953, %v7955, 0
      %v8875 = vsel %vm3953, %v7956, 0
      %v8878 = vsel %vm3953, %v7957, 0
      %v8881 = vsel %vm3953, %v7958, 0
      %v8884 = vsel %vm3953, %v7959, 0
      %v8887 = vsel %vm3953, %v7960, 0
      %v8890 = vsel %vm3953, %v7961, 0
      %v8893 = vsel %vm3953, %v7962, 0
      %v8896 = vsel %vm3953, %v7963, 0
      %v8899 = vsel %vm3953, %v7964, 0
      %v8902 = vsel %vm3953, %v7965, 0
      %v8905 = vsel %vm3953, %v7966, 0
      %v8908 = vsel %vm3953, %v7967, 0
      %v8911 = vsel %vm3953, %v7968, 0
      %v8914 = vsel %vm3953, %v7969, 0
      %v8917 = vsel %vm3953, %v7970, 0
      %v8920 = vsel %vm3953, %v7971, 0
      %v8923 = vsel %vm3953, %v7972, 0
      %v8926 = vsel %vm3953, %v8117, 0
      %v8929 = vsel %vm3953, %v8118, 0
      %v8932 = vsel %vm3953, %v8327, 0
      %v8935 = vsel %vm3953, %v8328, 0
      %8937 = vmatprep.subr.bf16.mxu0 0
      %8938 = vmatpush1.bf16.msra.mxu0 %v4546
      %8939 = vmatprep.subr.bf16.mxu0 0
      %8940 = vmatpush1.bf16.msra.mxu0 %v4547
      %8941 = vmatprep.subr.bf16.mxu0 0
      %8942 = vmatpush1.bf16.msra.mxu0 %v4548
      %8943 = vmatprep.subr.bf16.mxu0 0
      %8944 = vmatpush1.bf16.msra.mxu0 %v4549
      %8945 = vmatprep.subr.bf16.mxu0 0
      %8946 = vmatpush1.bf16.msra.mxu0 %v4550
      %8947 = vmatprep.subr.bf16.mxu0 0
      %8948 = vmatpush1.bf16.msra.mxu0 %v4551
      %8949 = vmatprep.subr.bf16.mxu0 0
      %8950 = vmatpush1.bf16.msra.mxu0 %v4552
      %8951 = vmatprep.subr.bf16.mxu0 0
      %8952 = vmatpush1.bf16.msra.mxu0 %v4553
      %8953 = vmatprep.subr.bf16.mxu0 0
      %8954 = vmatpush1.bf16.msra.mxu0 %v4554
      %8955 = vmatprep.subr.bf16.mxu0 0
      %8956 = vmatpush1.bf16.msra.mxu0 %v4555
      %8957 = vmatprep.subr.bf16.mxu0 0
      %8958 = vmatpush1.bf16.msra.mxu0 %v4556
      %8959 = vmatprep.subr.bf16.mxu0 0
      %8960 = vmatpush1.bf16.msra.mxu0 %v4557
      %8961 = vmatprep.subr.bf16.mxu0 0
      %8962 = vmatpush1.bf16.msra.mxu0 %v4558
      %8963 = vmatprep.subr.bf16.mxu0 0
      %8964 = vmatpush1.bf16.msra.mxu0 %v4559
      %8965 = vmatprep.subr.bf16.mxu0 0
      %8966 = vmatpush1.bf16.msra.mxu0 %v4560
      %8967 = vmatprep.subr.bf16.mxu0 0
      %8968 = vmatpush1.bf16.msra.mxu0 %v4561
      %8969 = vmatprep.mubr.bf16.mxu0 %v8746
      %8970 = vmatmul.mubr.bf16.gmra.mrb[0].mxu0 %v8490
      %v8971 = vpop.f32.mrb[0].mxu0
      %v8972 = vadd.f32 %v4472, %v8971
      %v8973 = vpop.f32.mrb[0].mxu0
      %v8974 = vpop.f32.mrb[0].mxu0
      %v8975 = vadd.f32 %v4472, %v8974
      %v8976 = vpop.f32.mrb[0].mxu0
      %8977 = vmatprep.mubr.bf16.mxu0 %v8749
      %8978 = vmatmul.mubr.bf16.gmra.mrb[0].mxu0 %v8493
      %v8979 = vpop.f32.mrb[0].mxu0
      %v8980 = vadd.f32 %v4472, %v8979
      %v8981 = vpop.f32.mrb[0].mxu0
      %v8982 = vpop.f32.mrb[0].mxu0
      %v8983 = vadd.f32 %v4472, %v8982
      %v8984 = vpop.f32.mrb[0].mxu0
      %8985 = vmatprep.mubr.bf16.mxu0 %v8752
      %8986 = vmatmul.mubr.bf16.gmra.mrb[0].mxu0 %v8496
      %v8987 = vpop.f32.mrb[0].mxu0
      %v8988 = vadd.f32 %v4472, %v8987
      %v8989 = vpop.f32.mrb[0].mxu0
      %v8990 = vpop.f32.mrb[0].mxu0
      %v8991 = vadd.f32 %v4472, %v8990
      %v8992 = vpop.f32.mrb[0].mxu0
      %8993 = vmatprep.mubr.bf16.mxu0 %v8755
      %8994 = vmatmul.mubr.bf16.gmra.mrb[0].mxu0 %v8499
      %v8995 = vpop.f32.mrb[0].mxu0
      %v8996 = vadd.f32 %v4472, %v8995
      %v8997 = vpop.f32.mrb[0].mxu0
      %v8998 = vpop.f32.mrb[0].mxu0
      %v8999 = vadd.f32 %v4472, %v8998
      %v9000 = vpop.f32.mrb[0].mxu0
      %9001 = vmatprep.mubr.bf16.mxu0 %v8758
      %9002 = vmatmul.mubr.bf16.gmra.mrb[0].mxu0 %v8502
      %v9003 = vpop.f32.mrb[0].mxu0
      %v9004 = vadd.f32 %v4472, %v9003
      %v9005 = vpop.f32.mrb[0].mxu0
      %v9006 = vpop.f32.mrb[0].mxu0
      %v9007 = vadd.f32 %v4472, %v9006
      %v9008 = vpop.f32.mrb[0].mxu0
      %9009 = vmatprep.mubr.bf16.mxu0 %v8761
      %9010 = vmatmul.mubr.bf16.gmra.mrb[0].mxu0 %v8505
      %v9011 = vpop.f32.mrb[0].mxu0
      %v9012 = vadd.f32 %v4472, %v9011
      %v9013 = vpop.f32.mrb[0].mxu0
      %v9014 = vpop.f32.mrb[0].mxu0
      %v9015 = vadd.f32 %v4472, %v9014
      %v9016 = vpop.f32.mrb[0].mxu0
      %9017 = vmatprep.mubr.bf16.mxu0 %v8764
      %9018 = vmatmul.mubr.bf16.gmra.mrb[0].mxu0 %v8508
      %v9019 = vpop.f32.mrb[0].mxu0
      %v9020 = vadd.f32 %v4472, %v9019
      %v9021 = vpop.f32.mrb[0].mxu0
      %v9022 = vpop.f32.mrb[0].mxu0
      %v9023 = vadd.f32 %v4472, %v9022
      %v9024 = vpop.f32.mrb[0].mxu0
      %9025 = vmatprep.mubr.bf16.mxu0 %v8767
      %9026 = vmatmul.mubr.bf16.gmra.mrb[0].mxu0 %v8511
      %v9027 = vpop.f32.mrb[0].mxu0
      %v9028 = vadd.f32 %v4472, %v9027
      %v9029 = vpop.f32.mrb[0].mxu0
      %v9030 = vpop.f32.mrb[0].mxu0
      %v9031 = vadd.f32 %v4472, %v9030
      %v9032 = vpop.f32.mrb[0].mxu0
      %9033 = vmatprep.mubr.bf16.mxu0 %v8770
      %9034 = vmatmul.mubr.bf16.gmra.mrb[0].mxu0 %v8514
      %v9035 = vpop.f32.mrb[0].mxu0
      %v9036 = vadd.f32 %v4472, %v9035
      %v9037 = vpop.f32.mrb[0].mxu0
      %v9038 = vpop.f32.mrb[0].mxu0
      %v9039 = vadd.f32 %v4472, %v9038
      %v9040 = vpop.f32.mrb[0].mxu0
      %9041 = vmatprep.mubr.bf16.mxu0 %v8773
      %9042 = vmatmul.mubr.bf16.gmra.mrb[0].mxu0 %v8517
      %v9043 = vpop.f32.mrb[0].mxu0
      %v9044 = vadd.f32 %v4472, %v9043
      %v9045 = vpop.f32.mrb[0].mxu0
      %v9046 = vpop.f32.mrb[0].mxu0
      %v9047 = vadd.f32 %v4472, %v9046
      %v9048 = vpop.f32.mrb[0].mxu0
      %9049 = vmatprep.mubr.bf16.mxu0 %v8776
      %9050 = vmatmul.mubr.bf16.gmra.mrb[0].mxu0 %v8520
      %v9051 = vpop.f32.mrb[0].mxu0
      %v9052 = vadd.f32 %v4472, %v9051
      %v9053 = vpop.f32.mrb[0].mxu0
      %v9054 = vpop.f32.mrb[0].mxu0
      %v9055 = vadd.f32 %v4472, %v9054
      %v9056 = vpop.f32.mrb[0].mxu0
      %9057 = vmatprep.mubr.bf16.mxu0 %v8779
      %9058 = vmatmul.mubr.bf16.gmra.mrb[0].mxu0 %v8523
      %v9059 = vpop.f32.mrb[0].mxu0
      %v9060 = vadd.f32 %v4472, %v9059
      %v9061 = vpop.f32.mrb[0].mxu0
      %v9062 = vpop.f32.mrb[0].mxu0
      %v9063 = vadd.f32 %v4472, %v9062
      %v9064 = vpop.f32.mrb[0].mxu0
      %9065 = vmatprep.mubr.bf16.mxu0 %v8782
      %9066 = vmatmul.mubr.bf16.gmra.mrb[0].mxu0 %v8526
      %v9067 = vpop.f32.mrb[0].mxu0
      %v9068 = vadd.f32 %v4472, %v9067
      %v9069 = vpop.f32.mrb[0].mxu0
      %v9070 = vpop.f32.mrb[0].mxu0
      %v9071 = vadd.f32 %v4472, %v9070
      %v9072 = vpop.f32.mrb[0].mxu0
      %9073 = vmatprep.mubr.bf16.mxu0 %v8785
      %9074 = vmatmul.mubr.bf16.gmra.mrb[0].mxu0 %v8529
      %v9075 = vpop.f32.mrb[0].mxu0
      %v9076 = vadd.f32 %v4472, %v9075
      %v9077 = vpop.f32.mrb[0].mxu0
      %v9078 = vpop.f32.mrb[0].mxu0
      %v9079 = vadd.f32 %v4472, %v9078
      %v9080 = vpop.f32.mrb[0].mxu0
      %9081 = vmatprep.mubr.bf16.mxu0 %v8788
      %9082 = vmatmul.mubr.bf16.gmra.mrb[0].mxu0 %v8532
      %v9083 = vpop.f32.mrb[0].mxu0
      %v9084 = vadd.f32 %v4472, %v9083
      %v9085 = vpop.f32.mrb[0].mxu0
      %v9086 = vpop.f32.mrb[0].mxu0
      %v9087 = vadd.f32 %v4472, %v9086
      %v9088 = vpop.f32.mrb[0].mxu0
      %9089 = vmatprep.mubr.bf16.mxu0 %v8791
      %9090 = vmatmul.mubr.bf16.gmra.mrb[0].mxu0 %v8535
      %v9091 = vpop.f32.mrb[0].mxu0
      %v9092 = vadd.f32 %v4472, %v9091
      %v9093 = vpop.f32.mrb[0].mxu0
      %v9094 = vpop.f32.mrb[0].mxu0
      %v9095 = vadd.f32 %v4472, %v9094
      %v9096 = vpop.f32.mrb[0].mxu0
      %9097 = vmatprep.mubr.bf16.mxu0 %v8794
      %9098 = vmatmul.mubr.bf16.gmra.mrb[0].mxu0 %v8538
      %v9099 = vpop.f32.mrb[0].mxu0
      %v9100 = vadd.f32 %v4472, %v9099
      %v9101 = vpop.f32.mrb[0].mxu0
      %v9102 = vpop.f32.mrb[0].mxu0
      %v9103 = vadd.f32 %v4472, %v9102
      %v9104 = vpop.f32.mrb[0].mxu0
      %9105 = vmatprep.mubr.bf16.mxu0 %v8797
      %9106 = vmatmul.mubr.bf16.gmra.mrb[0].mxu0 %v8541
      %v9107 = vpop.f32.mrb[0].mxu0
      %v9108 = vadd.f32 %v4472, %v9107
      %v9109 = vpop.f32.mrb[0].mxu0
      %v9110 = vpop.f32.mrb[0].mxu0
      %v9111 = vadd.f32 %v4472, %v9110
      %v9112 = vpop.f32.mrb[0].mxu0
      %9113 = vmatprep.mubr.bf16.mxu0 %v8800
      %9114 = vmatmul.mubr.bf16.gmra.mrb[0].mxu0 %v8544
      %v9115 = vpop.f32.mrb[0].mxu0
      %v9116 = vadd.f32 %v4472, %v9115
      %v9117 = vpop.f32.mrb[0].mxu0
      %v9118 = vpop.f32.mrb[0].mxu0
      %v9119 = vadd.f32 %v4472, %v9118
      %v9120 = vpop.f32.mrb[0].mxu0
      %9121 = vmatprep.mubr.bf16.mxu0 %v8803
      %9122 = vmatmul.mubr.bf16.gmra.mrb[0].mxu0 %v8547
      %v9123 = vpop.f32.mrb[0].mxu0
      %v9124 = vadd.f32 %v4472, %v9123
      %v9125 = vpop.f32.mrb[0].mxu0
      %v9126 = vpop.f32.mrb[0].mxu0
      %v9127 = vadd.f32 %v4472, %v9126
      %v9128 = vpop.f32.mrb[0].mxu0
      %9129 = vmatprep.mubr.bf16.mxu0 %v8806
      %9130 = vmatmul.mubr.bf16.gmra.mrb[0].mxu0 %v8550
      %v9131 = vpop.f32.mrb[0].mxu0
      %v9132 = vadd.f32 %v4472, %v9131
      %v9133 = vpop.f32.mrb[0].mxu0
      %v9134 = vpop.f32.mrb[0].mxu0
      %v9135 = vadd.f32 %v4472, %v9134
      %v9136 = vpop.f32.mrb[0].mxu0
      %9137 = vmatprep.mubr.bf16.mxu0 %v8809
      %9138 = vmatmul.mubr.bf16.gmra.mrb[0].mxu0 %v8553
      %v9139 = vpop.f32.mrb[0].mxu0
      %v9140 = vadd.f32 %v4472, %v9139
      %v9141 = vpop.f32.mrb[0].mxu0
      %v9142 = vpop.f32.mrb[0].mxu0
      %v9143 = vadd.f32 %v4472, %v9142
      %v9144 = vpop.f32.mrb[0].mxu0
      %9145 = vmatprep.mubr.bf16.mxu0 %v8812
      %9146 = vmatmul.mubr.bf16.gmra.mrb[0].mxu0 %v8556
      %v9147 = vpop.f32.mrb[0].mxu0
      %v9148 = vadd.f32 %v4472, %v9147
      %v9149 = vpop.f32.mrb[0].mxu0
      %v9150 = vpop.f32.mrb[0].mxu0
      %v9151 = vadd.f32 %v4472, %v9150
      %v9152 = vpop.f32.mrb[0].mxu0
      %9153 = vmatprep.mubr.bf16.mxu0 %v8815
      %9154 = vmatmul.mubr.bf16.gmra.mrb[0].mxu0 %v8559
      %v9155 = vpop.f32.mrb[0].mxu0
      %v9156 = vadd.f32 %v4472, %v9155
      %v9157 = vpop.f32.mrb[0].mxu0
      %v9158 = vpop.f32.mrb[0].mxu0
      %v9159 = vadd.f32 %v4472, %v9158
      %v9160 = vpop.f32.mrb[0].mxu0
      %9161 = vmatprep.mubr.bf16.mxu0 %v8818
      %9162 = vmatmul.mubr.bf16.gmra.mrb[0].mxu0 %v8562
      %v9163 = vpop.f32.mrb[0].mxu0
      %v9164 = vadd.f32 %v4472, %v9163
      %v9165 = vpop.f32.mrb[0].mxu0
      %v9166 = vpop.f32.mrb[0].mxu0
      %v9167 = vadd.f32 %v4472, %v9166
      %v9168 = vpop.f32.mrb[0].mxu0
      %9169 = vmatprep.mubr.bf16.mxu0 %v8821
      %9170 = vmatmul.mubr.bf16.gmra.mrb[0].mxu0 %v8565
      %v9171 = vpop.f32.mrb[0].mxu0
      %v9172 = vadd.f32 %v4472, %v9171
      %v9173 = vpop.f32.mrb[0].mxu0
      %v9174 = vpop.f32.mrb[0].mxu0
      %v9175 = vadd.f32 %v4472, %v9174
      %v9176 = vpop.f32.mrb[0].mxu0
      %9177 = vmatprep.mubr.bf16.mxu0 %v8824
      %9178 = vmatmul.mubr.bf16.gmra.mrb[0].mxu0 %v8568
      %v9179 = vpop.f32.mrb[0].mxu0
      %v9180 = vadd.f32 %v4472, %v9179
      %v9181 = vpop.f32.mrb[0].mxu0
      %v9182 = vpop.f32.mrb[0].mxu0
      %v9183 = vadd.f32 %v4472, %v9182
      %v9184 = vpop.f32.mrb[0].mxu0
      %9185 = vmatprep.mubr.bf16.mxu0 %v8827
      %9186 = vmatmul.mubr.bf16.gmra.mrb[0].mxu0 %v8571
      %v9187 = vpop.f32.mrb[0].mxu0
      %v9188 = vadd.f32 %v4472, %v9187
      %v9189 = vpop.f32.mrb[0].mxu0
      %v9190 = vpop.f32.mrb[0].mxu0
      %v9191 = vadd.f32 %v4472, %v9190
      %v9192 = vpop.f32.mrb[0].mxu0
      %9193 = vmatprep.mubr.bf16.mxu0 %v8830
      %9194 = vmatmul.mubr.bf16.gmra.mrb[0].mxu0 %v8574
      %v9195 = vpop.f32.mrb[0].mxu0
      %v9196 = vadd.f32 %v4472, %v9195
      %v9197 = vpop.f32.mrb[0].mxu0
      %v9198 = vpop.f32.mrb[0].mxu0
      %v9199 = vadd.f32 %v4472, %v9198
      %v9200 = vpop.f32.mrb[0].mxu0
      %9201 = vmatprep.mubr.bf16.mxu0 %v8833
      %9202 = vmatmul.mubr.bf16.gmra.mrb[0].mxu0 %v8577
      %v9203 = vpop.f32.mrb[0].mxu0
      %v9204 = vadd.f32 %v4472, %v9203
      %v9205 = vpop.f32.mrb[0].mxu0
      %v9206 = vpop.f32.mrb[0].mxu0
      %v9207 = vadd.f32 %v4472, %v9206
      %v9208 = vpop.f32.mrb[0].mxu0
      %9209 = vmatprep.mubr.bf16.mxu0 %v8836
      %9210 = vmatmul.mubr.bf16.gmra.mrb[0].mxu0 %v8580
      %v9211 = vpop.f32.mrb[0].mxu0
      %v9212 = vadd.f32 %v4472, %v9211
      %v9213 = vpop.f32.mrb[0].mxu0
      %v9214 = vpop.f32.mrb[0].mxu0
      %v9215 = vadd.f32 %v4472, %v9214
      %v9216 = vpop.f32.mrb[0].mxu0
      %9217 = vmatprep.mubr.bf16.mxu0 %v8839
      %9218 = vmatmul.mubr.bf16.gmra.mrb[0].mxu0 %v8583
      %v9219 = vpop.f32.mrb[0].mxu0
      %v9220 = vadd.f32 %v4472, %v9219
      %v9221 = vpop.f32.mrb[0].mxu0
      %v9222 = vpop.f32.mrb[0].mxu0
      %v9223 = vadd.f32 %v4472, %v9222
      %v9224 = vpop.f32.mrb[0].mxu0
      %9225 = vdwg.mxu0
      %9226 = vmatprep.subr.bf16.mxu0 0
      %9227 = vmatpush1.bf16.msra.mxu0 %v4562
      %9228 = vmatprep.subr.bf16.mxu0 0
      %9229 = vmatpush1.bf16.msra.mxu0 %v4563
      %9230 = vmatprep.subr.bf16.mxu0 0
      %9231 = vmatpush1.bf16.msra.mxu0 0
      %9232 = vmatprep.subr.bf16.mxu0 0
      %9233 = vmatpush1.bf16.msra.mxu0 0
      %9234 = vmatprep.subr.bf16.mxu0 0
      %9235 = vmatpush1.bf16.msra.mxu0 0
      %9236 = vmatprep.subr.bf16.mxu0 0
      %9237 = vmatpush1.bf16.msra.mxu0 0
      %9238 = vmatprep.subr.bf16.mxu0 0
      %9239 = vmatpush1.bf16.msra.mxu0 0
      %9240 = vmatprep.subr.bf16.mxu0 0
      %9241 = vmatpush1.bf16.msra.mxu0 0
      %9242 = vmatprep.subr.bf16.mxu0 0
      %9243 = vmatpush1.bf16.msra.mxu0 0
      %9244 = vmatprep.subr.bf16.mxu0 0
      %9245 = vmatpush1.bf16.msra.mxu0 0
      %9246 = vmatprep.subr.bf16.mxu0 0
      %9247 = vmatpush1.bf16.msra.mxu0 0
      %9248 = vmatprep.subr.bf16.mxu0 0
      %9249 = vmatpush1.bf16.msra.mxu0 0
      %9250 = vmatprep.subr.bf16.mxu0 0
      %9251 = vmatpush1.bf16.msra.mxu0 0
      %9252 = vmatprep.subr.bf16.mxu0 0
      %9253 = vmatpush1.bf16.msra.mxu0 0
      %9254 = vmatprep.subr.bf16.mxu0 0
      %9255 = vmatpush1.bf16.msra.mxu0 0
      %9256 = vmatprep.subr.bf16.mxu0 0
      %9257 = vmatpush1.bf16.msra.mxu0 0
      %9258 = vmatprep.mubr.bf16.mxu0 0
      %9259 = vmatmul.mubr.bf16.gmra.mrb[0].mxu0 %v8842
      %v9260 = vpop.f32.mrb[0].mxu0
      %v9261 = vadd.f32 %v8972, %v9260
      %v9262 = vpop.f32.mrb[0].mxu0
      %v9263 = vpop.f32.mrb[0].mxu0
      %v9264 = vadd.f32 %v8975, %v9263
      %v9265 = vpop.f32.mrb[0].mxu0
      %9266 = vmatprep.mubr.bf16.mxu0 0
      %9267 = vmatmul.mubr.bf16.gmra.mrb[0].mxu0 %v8845
      %v9268 = vpop.f32.mrb[0].mxu0
      %v9269 = vadd.f32 %v8980, %v9268
      %v9270 = vpop.f32.mrb[0].mxu0
      %v9271 = vpop.f32.mrb[0].mxu0
      %v9272 = vadd.f32 %v8983, %v9271
      %v9273 = vpop.f32.mrb[0].mxu0
      %9274 = vmatprep.mubr.bf16.mxu0 0
      %9275 = vmatmul.mubr.bf16.gmra.mrb[0].mxu0 %v8848
      %v9276 = vpop.f32.mrb[0].mxu0
      %v9277 = vadd.f32 %v8988, %v9276
      %v9278 = vpop.f32.mrb[0].mxu0
      %v9279 = vpop.f32.mrb[0].mxu0
      %v9280 = vadd.f32 %v8991, %v9279
      %v9281 = vpop.f32.mrb[0].mxu0
      %9282 = vmatprep.mubr.bf16.mxu0 0
      %9283 = vmatmul.mubr.bf16.gmra.mrb[0].mxu0 %v8851
      %v9284 = vpop.f32.mrb[0].mxu0
      %v9285 = vadd.f32 %v8996, %v9284
      %v9286 = vpop.f32.mrb[0].mxu0
      %v9287 = vpop.f32.mrb[0].mxu0
      %v9288 = vadd.f32 %v8999, %v9287
      %v9289 = vpop.f32.mrb[0].mxu0
      %9290 = vmatprep.mubr.bf16.mxu0 0
      %9291 = vmatmul.mubr.bf16.gmra.mrb[0].mxu0 %v8854
      %v9292 = vpop.f32.mrb[0].mxu0
      %v9293 = vadd.f32 %v9004, %v9292
      %v9294 = vpop.f32.mrb[0].mxu0
      %v9295 = vpop.f32.mrb[0].mxu0
      %v9296 = vadd.f32 %v9007, %v9295
      %v9297 = vpop.f32.mrb[0].mxu0
      %9298 = vmatprep.mubr.bf16.mxu0 0
      %9299 = vmatmul.mubr.bf16.gmra.mrb[0].mxu0 %v8857
      %v9300 = vpop.f32.mrb[0].mxu0
      %v9301 = vadd.f32 %v9012, %v9300
      %v9302 = vpop.f32.mrb[0].mxu0
      %v9303 = vpop.f32.mrb[0].mxu0
      %v9304 = vadd.f32 %v9015, %v9303
      %v9305 = vpop.f32.mrb[0].mxu0
      %9306 = vmatprep.mubr.bf16.mxu0 0
      %9307 = vmatmul.mubr.bf16.gmra.mrb[0].mxu0 %v8860
      %v9308 = vpop.f32.mrb[0].mxu0
      %v9309 = vadd.f32 %v9020, %v9308
      %v9310 = vpop.f32.mrb[0].mxu0
      %v9311 = vpop.f32.mrb[0].mxu0
      %v9312 = vadd.f32 %v9023, %v9311
      %v9313 = vpop.f32.mrb[0].mxu0
      %9314 = vmatprep.mubr.bf16.mxu0 0
      %9315 = vmatmul.mubr.bf16.gmra.mrb[0].mxu0 %v8863
      %v9316 = vpop.f32.mrb[0].mxu0
      %v9317 = vadd.f32 %v9028, %v9316
      %v9318 = vpop.f32.mrb[0].mxu0
      %v9319 = vpop.f32.mrb[0].mxu0
      %v9320 = vadd.f32 %v9031, %v9319
      %v9321 = vpop.f32.mrb[0].mxu0
      %9322 = vmatprep.mubr.bf16.mxu0 0
      %9323 = vmatmul.mubr.bf16.gmra.mrb[0].mxu0 %v8866
      %v9324 = vpop.f32.mrb[0].mxu0
      %v9325 = vadd.f32 %v9036, %v9324
      %v9326 = vpop.f32.mrb[0].mxu0
      %v9327 = vpop.f32.mrb[0].mxu0
      %v9328 = vadd.f32 %v9039, %v9327
      %v9329 = vpop.f32.mrb[0].mxu0
      %9330 = vmatprep.mubr.bf16.mxu0 0
      %9331 = vmatmul.mubr.bf16.gmra.mrb[0].mxu0 %v8869
      %v9332 = vpop.f32.mrb[0].mxu0
      %v9333 = vadd.f32 %v9044, %v9332
      %v9334 = vpop.f32.mrb[0].mxu0
      %v9335 = vpop.f32.mrb[0].mxu0
      %v9336 = vadd.f32 %v9047, %v9335
      %v9337 = vpop.f32.mrb[0].mxu0
      %9338 = vmatprep.mubr.bf16.mxu0 0
      %9339 = vmatmul.mubr.bf16.gmra.mrb[0].mxu0 %v8872
      %v9340 = vpop.f32.mrb[0].mxu0
      %v9341 = vadd.f32 %v9052, %v9340
      %v9342 = vpop.f32.mrb[0].mxu0
      %v9343 = vpop.f32.mrb[0].mxu0
      %v9344 = vadd.f32 %v9055, %v9343
      %v9345 = vpop.f32.mrb[0].mxu0
      %9346 = vmatprep.mubr.bf16.mxu0 0
      %9347 = vmatmul.mubr.bf16.gmra.mrb[0].mxu0 %v8875
      %v9348 = vpop.f32.mrb[0].mxu0
      %v9349 = vadd.f32 %v9060, %v9348
      %v9350 = vpop.f32.mrb[0].mxu0
      %v9351 = vpop.f32.mrb[0].mxu0
      %v9352 = vadd.f32 %v9063, %v9351
      %v9353 = vpop.f32.mrb[0].mxu0
      %9354 = vmatprep.mubr.bf16.mxu0 0
      %9355 = vmatmul.mubr.bf16.gmra.mrb[0].mxu0 %v8878
      %v9356 = vpop.f32.mrb[0].mxu0
      %v9357 = vadd.f32 %v9068, %v9356
      %v9358 = vpop.f32.mrb[0].mxu0
      %v9359 = vpop.f32.mrb[0].mxu0
      %v9360 = vadd.f32 %v9071, %v9359
      %v9361 = vpop.f32.mrb[0].mxu0
      %9362 = vmatprep.mubr.bf16.mxu0 0
      %9363 = vmatmul.mubr.bf16.gmra.mrb[0].mxu0 %v8881
      %v9364 = vpop.f32.mrb[0].mxu0
      %v9365 = vadd.f32 %v9076, %v9364
      %v9366 = vpop.f32.mrb[0].mxu0
      %v9367 = vpop.f32.mrb[0].mxu0
      %v9368 = vadd.f32 %v9079, %v9367
      %v9369 = vpop.f32.mrb[0].mxu0
      %9370 = vmatprep.mubr.bf16.mxu0 0
      %9371 = vmatmul.mubr.bf16.gmra.mrb[0].mxu0 %v8884
      %v9372 = vpop.f32.mrb[0].mxu0
      %v9373 = vadd.f32 %v9084, %v9372
      %v9374 = vpop.f32.mrb[0].mxu0
      %v9375 = vpop.f32.mrb[0].mxu0
      %v9376 = vadd.f32 %v9087, %v9375
      %v9377 = vpop.f32.mrb[0].mxu0
      %9378 = vmatprep.mubr.bf16.mxu0 0
      %9379 = vmatmul.mubr.bf16.gmra.mrb[0].mxu0 %v8887
      %v9380 = vpop.f32.mrb[0].mxu0
      %v9381 = vadd.f32 %v9092, %v9380
      %v9382 = vpop.f32.mrb[0].mxu0
      %v9383 = vpop.f32.mrb[0].mxu0
      %v9384 = vadd.f32 %v9095, %v9383
      %v9385 = vpop.f32.mrb[0].mxu0
      %9386 = vmatprep.mubr.bf16.mxu0 0
      %9387 = vmatmul.mubr.bf16.gmra.mrb[0].mxu0 %v8890
      %v9388 = vpop.f32.mrb[0].mxu0
      %v9389 = vadd.f32 %v9100, %v9388
      %v9390 = vpop.f32.mrb[0].mxu0
      %v9391 = vpop.f32.mrb[0].mxu0
      %v9392 = vadd.f32 %v9103, %v9391
      %v9393 = vpop.f32.mrb[0].mxu0
      %9394 = vmatprep.mubr.bf16.mxu0 0
      %9395 = vmatmul.mubr.bf16.gmra.mrb[0].mxu0 %v8893
      %v9396 = vpop.f32.mrb[0].mxu0
      %v9397 = vadd.f32 %v9108, %v9396
      %v9398 = vpop.f32.mrb[0].mxu0
      %v9399 = vpop.f32.mrb[0].mxu0
      %v9400 = vadd.f32 %v9111, %v9399
      %v9401 = vpop.f32.mrb[0].mxu0
      %9402 = vmatprep.mubr.bf16.mxu0 0
      %9403 = vmatmul.mubr.bf16.gmra.mrb[0].mxu0 %v8896
      %v9404 = vpop.f32.mrb[0].mxu0
      %v9405 = vadd.f32 %v9116, %v9404
      %v9406 = vpop.f32.mrb[0].mxu0
      %v9407 = vpop.f32.mrb[0].mxu0
      %v9408 = vadd.f32 %v9119, %v9407
      %v9409 = vpop.f32.mrb[0].mxu0
      %9410 = vmatprep.mubr.bf16.mxu0 0
      %9411 = vmatmul.mubr.bf16.gmra.mrb[0].mxu0 %v8899
      %v9412 = vpop.f32.mrb[0].mxu0
      %v9413 = vadd.f32 %v9124, %v9412
      %v9414 = vpop.f32.mrb[0].mxu0
      %v9415 = vpop.f32.mrb[0].mxu0
      %v9416 = vadd.f32 %v9127, %v9415
      %v9417 = vpop.f32.mrb[0].mxu0
      %9418 = vmatprep.mubr.bf16.mxu0 0
      %9419 = vmatmul.mubr.bf16.gmra.mrb[0].mxu0 %v8902
      %v9420 = vpop.f32.mrb[0].mxu0
      %v9421 = vadd.f32 %v9132, %v9420
      %v9422 = vpop.f32.mrb[0].mxu0
      %v9423 = vpop.f32.mrb[0].mxu0
      %v9424 = vadd.f32 %v9135, %v9423
      %v9425 = vpop.f32.mrb[0].mxu0
      %9426 = vmatprep.mubr.bf16.mxu0 0
      %9427 = vmatmul.mubr.bf16.gmra.mrb[0].mxu0 %v8905
      %v9428 = vpop.f32.mrb[0].mxu0
      %v9429 = vadd.f32 %v9140, %v9428
      %v9430 = vpop.f32.mrb[0].mxu0
      %v9431 = vpop.f32.mrb[0].mxu0
      %v9432 = vadd.f32 %v9143, %v9431
      %v9433 = vpop.f32.mrb[0].mxu0
      %9434 = vmatprep.mubr.bf16.mxu0 0
      %9435 = vmatmul.mubr.bf16.gmra.mrb[0].mxu0 %v8908
      %v9436 = vpop.f32.mrb[0].mxu0
      %v9437 = vadd.f32 %v9148, %v9436
      %v9438 = vpop.f32.mrb[0].mxu0
      %v9439 = vpop.f32.mrb[0].mxu0
      %v9440 = vadd.f32 %v9151, %v9439
      %v9441 = vpop.f32.mrb[0].mxu0
      %9442 = vmatprep.mubr.bf16.mxu0 0
      %9443 = vmatmul.mubr.bf16.gmra.mrb[0].mxu0 %v8911
      %v9444 = vpop.f32.mrb[0].mxu0
      %v9445 = vadd.f32 %v9156, %v9444
      %v9446 = vpop.f32.mrb[0].mxu0
      %v9447 = vpop.f32.mrb[0].mxu0
      %v9448 = vadd.f32 %v9159, %v9447
      %v9449 = vpop.f32.mrb[0].mxu0
      %9450 = vmatprep.mubr.bf16.mxu0 0
      %9451 = vmatmul.mubr.bf16.gmra.mrb[0].mxu0 %v8914
      %v9452 = vpop.f32.mrb[0].mxu0
      %v9453 = vadd.f32 %v9164, %v9452
      %v9454 = vpop.f32.mrb[0].mxu0
      %v9455 = vpop.f32.mrb[0].mxu0
      %v9456 = vadd.f32 %v9167, %v9455
      %v9457 = vpop.f32.mrb[0].mxu0
      %9458 = vmatprep.mubr.bf16.mxu0 0
      %9459 = vmatmul.mubr.bf16.gmra.mrb[0].mxu0 %v8917
      %v9460 = vpop.f32.mrb[0].mxu0
      %v9461 = vadd.f32 %v9172, %v9460
      %v9462 = vpop.f32.mrb[0].mxu0
      %v9463 = vpop.f32.mrb[0].mxu0
      %v9464 = vadd.f32 %v9175, %v9463
      %v9465 = vpop.f32.mrb[0].mxu0
      %9466 = vmatprep.mubr.bf16.mxu0 0
      %9467 = vmatmul.mubr.bf16.gmra.mrb[0].mxu0 %v8920
      %v9468 = vpop.f32.mrb[0].mxu0
      %v9469 = vadd.f32 %v9180, %v9468
      %v9470 = vpop.f32.mrb[0].mxu0
      %v9471 = vpop.f32.mrb[0].mxu0
      %v9472 = vadd.f32 %v9183, %v9471
      %v9473 = vpop.f32.mrb[0].mxu0
      %9474 = vmatprep.mubr.bf16.mxu0 0
      %9475 = vmatmul.mubr.bf16.gmra.mrb[0].mxu0 %v8923
      %v9476 = vpop.f32.mrb[0].mxu0
      %v9477 = vadd.f32 %v9188, %v9476
      %v9478 = vpop.f32.mrb[0].mxu0
      %v9479 = vpop.f32.mrb[0].mxu0
      %v9480 = vadd.f32 %v9191, %v9479
      %v9481 = vpop.f32.mrb[0].mxu0
      %9482 = vmatprep.mubr.bf16.mxu0 0
      %9483 = vmatmul.mubr.bf16.gmra.mrb[0].mxu0 %v8926
      %v9484 = vpop.f32.mrb[0].mxu0
      %v9485 = vadd.f32 %v9196, %v9484
      %v9486 = vpop.f32.mrb[0].mxu0
      %v9487 = vpop.f32.mrb[0].mxu0
      %v9488 = vadd.f32 %v9199, %v9487
      %v9489 = vpop.f32.mrb[0].mxu0
      %9490 = vmatprep.mubr.bf16.mxu0 0
      %9491 = vmatmul.mubr.bf16.gmra.mrb[0].mxu0 %v8929
      %v9492 = vpop.f32.mrb[0].mxu0
      %v9493 = vadd.f32 %v9204, %v9492
      %v9494 = vpop.f32.mrb[0].mxu0
      %v9495 = vpop.f32.mrb[0].mxu0
      %v9496 = vadd.f32 %v9207, %v9495
      %v9497 = vpop.f32.mrb[0].mxu0
      %9498 = vmatprep.mubr.bf16.mxu0 0
      %9499 = vmatmul.mubr.bf16.gmra.mrb[0].mxu0 %v8932
      %v9500 = vpop.f32.mrb[0].mxu0
      %v9501 = vadd.f32 %v9212, %v9500
      %v9502 = vpop.f32.mrb[0].mxu0
      %v9503 = vpop.f32.mrb[0].mxu0
      %v9504 = vadd.f32 %v9215, %v9503
      %v9505 = vpop.f32.mrb[0].mxu0
      %9506 = vmatprep.mubr.bf16.mxu0 0
      %9507 = vmatmul.mubr.bf16.gmra.mrb[0].mxu0 %v8935
      %v9508 = vpop.f32.mrb[0].mxu0
      %v9509 = vadd.f32 %v9220, %v9508
      %v9510 = vpop.f32.mrb[0].mxu0
      %v9511 = vpop.f32.mrb[0].mxu0
      %v9512 = vadd.f32 %v9223, %v9511
      %v9513 = vpop.f32.mrb[0].mxu0
      %9514 = vdwg.mxu0
      %v9515 = vmax.f32 %v9261, 0.0
      %v9516 = vmax.f32 %v9264, 0.0
      %v9517 = vmax.f32 %v9269, 0.0
      %v9518 = vmax.f32 %v9272, 0.0
      %v9519 = vmax.f32 %v9277, 0.0
      %v9520 = vmax.f32 %v9280, 0.0
      %v9521 = vmax.f32 %v9285, 0.0
      %v9522 = vmax.f32 %v9288, 0.0
      %v9523 = vmax.f32 %v9293, 0.0
      %v9524 = vmax.f32 %v9296, 0.0
      %v9525 = vmax.f32 %v9301, 0.0
      %v9526 = vmax.f32 %v9304, 0.0
      %v9527 = vmax.f32 %v9309, 0.0
      %v9528 = vmax.f32 %v9312, 0.0
      %v9529 = vmax.f32 %v9317, 0.0
      %v9530 = vmax.f32 %v9320, 0.0
      %v9531 = vmax.f32 %v9325, 0.0
      %v9532 = vmax.f32 %v9328, 0.0
      %v9533 = vmax.f32 %v9333, 0.0
      %v9534 = vmax.f32 %v9336, 0.0
      %v9535 = vmax.f32 %v9341, 0.0
      %v9536 = vmax.f32 %v9344, 0.0
      %v9537 = vmax.f32 %v9349, 0.0
      %v9538 = vmax.f32 %v9352, 0.0
      %v9539 = vmax.f32 %v9357, 0.0
      %v9540 = vmax.f32 %v9360, 0.0
      %v9541 = vmax.f32 %v9365, 0.0
      %v9542 = vmax.f32 %v9368, 0.0
      %v9543 = vmax.f32 %v9373, 0.0
      %v9544 = vmax.f32 %v9376, 0.0
      %v9545 = vmax.f32 %v9381, 0.0
      %v9546 = vmax.f32 %v9384, 0.0
      %v9547 = vmax.f32 %v9389, 0.0
      %v9548 = vmax.f32 %v9392, 0.0
      %v9549 = vmax.f32 %v9397, 0.0
      %v9550 = vmax.f32 %v9400, 0.0
      %v9551 = vmax.f32 %v9405, 0.0
      %v9552 = vmax.f32 %v9408, 0.0
      %v9553 = vmax.f32 %v9413, 0.0
      %v9554 = vmax.f32 %v9416, 0.0
      %v9555 = vmax.f32 %v9421, 0.0
      %v9556 = vmax.f32 %v9424, 0.0
      %v9557 = vmax.f32 %v9429, 0.0
      %v9558 = vmax.f32 %v9432, 0.0
      %v9559 = vmax.f32 %v9437, 0.0
      %v9560 = vmax.f32 %v9440, 0.0
      %v9561 = vmax.f32 %v9445, 0.0
      %v9562 = vmax.f32 %v9448, 0.0
      %v9563 = vmax.f32 %v9453, 0.0
      %v9564 = vmax.f32 %v9456, 0.0
      %v9565 = vmax.f32 %v9461, 0.0
      %v9566 = vmax.f32 %v9464, 0.0
      %v9567 = vmax.f32 %v9469, 0.0
      %v9568 = vmax.f32 %v9472, 0.0
      %v9569 = vmax.f32 %v9477, 0.0
      %v9570 = vmax.f32 %v9480, 0.0
      %v9571 = vmax.f32 %v9485, 0.0
      %v9572 = vmax.f32 %v9488, 0.0
      %v9573 = vmax.f32 %v9493, 0.0
      %v9574 = vmax.f32 %v9496, 0.0
      %v9575 = vmax.f32 %v9501, 0.0
      %v9576 = vmax.f32 %v9504, 0.0
      %v9577 = vmax.f32 %v9509, 0.0
      %v9578 = vmax.f32 %v9512, 0.0
      %v9579 = vsel %vm5322, %v9515, %v9261
      %v9580 = vsel %vm5322, %v9516, %v9264
      %v9581 = vsel %vm5322, %v9517, %v9269
      %v9582 = vsel %vm5322, %v9518, %v9272
      %v9583 = vsel %vm5322, %v9519, %v9277
      %v9584 = vsel %vm5322, %v9520, %v9280
      %v9585 = vsel %vm5322, %v9521, %v9285
      %v9586 = vsel %vm5322, %v9522, %v9288
      %v9587 = vsel %vm5322, %v9523, %v9293
      %v9588 = vsel %vm5322, %v9524, %v9296
      %v9589 = vsel %vm5322, %v9525, %v9301
      %v9590 = vsel %vm5322, %v9526, %v9304
      %v9591 = vsel %vm5322, %v9527, %v9309
      %v9592 = vsel %vm5322, %v9528, %v9312
      %v9593 = vsel %vm5322, %v9529, %v9317
      %v9594 = vsel %vm5322, %v9530, %v9320
      %v9595 = vsel %vm5322, %v9531, %v9325
      %v9596 = vsel %vm5322, %v9532, %v9328
      %v9597 = vsel %vm5322, %v9533, %v9333
      %v9598 = vsel %vm5322, %v9534, %v9336
      %v9599 = vsel %vm5322, %v9535, %v9341
      %v9600 = vsel %vm5322, %v9536, %v9344
      %v9601 = vsel %vm5322, %v9537, %v9349
      %v9602 = vsel %vm5322, %v9538, %v9352
      %v9603 = vsel %vm5322, %v9539, %v9357
      %v9604 = vsel %vm5322, %v9540, %v9360
      %v9605 = vsel %vm5322, %v9541, %v9365
      %v9606 = vsel %vm5322, %v9542, %v9368
      %v9607 = vsel %vm5322, %v9543, %v9373
      %v9608 = vsel %vm5322, %v9544, %v9376
      %v9609 = vsel %vm5322, %v9545, %v9381
      %v9610 = vsel %vm5322, %v9546, %v9384
      %v9611 = vsel %vm5322, %v9547, %v9389
      %v9612 = vsel %vm5322, %v9548, %v9392
      %v9613 = vsel %vm5322, %v9549, %v9397
      %v9614 = vsel %vm5322, %v9550, %v9400
      %v9615 = vsel %vm5322, %v9551, %v9405
      %v9616 = vsel %vm5322, %v9552, %v9408
      %v9617 = vsel %vm5322, %v9553, %v9413
      %v9618 = vsel %vm5322, %v9554, %v9416
      %v9619 = vsel %vm5322, %v9555, %v9421
      %v9620 = vsel %vm5322, %v9556, %v9424
      %v9621 = vsel %vm5322, %v9557, %v9429
      %v9622 = vsel %vm5322, %v9558, %v9432
      %v9623 = vsel %vm5322, %v9559, %v9437
      %v9624 = vsel %vm5322, %v9560, %v9440
      %v9625 = vsel %vm5322, %v9561, %v9445
      %v9626 = vsel %vm5322, %v9562, %v9448
      %v9627 = vsel %vm5322, %v9563, %v9453
      %v9628 = vsel %vm5322, %v9564, %v9456
      %v9629 = vsel %vm5322, %v9565, %v9461
      %v9630 = vsel %vm5322, %v9566, %v9464
      %v9631 = vsel %vm5322, %v9567, %v9469
      %v9632 = vsel %vm5322, %v9568, %v9472
      %v9633 = vsel %vm5322, %v9569, %v9477
      %v9634 = vsel %vm5322, %v9570, %v9480
      %v9635 = vsel %vm5322, %v9571, %v9485
      %v9636 = vsel %vm5322, %v9572, %v9488
      %v9637 = vsel %vm5322, %v9573, %v9493
      %v9638 = vsel %vm5322, %v9574, %v9496
      %v9639 = vsel %vm5322, %v9575, %v9501
      %v9640 = vsel %vm5322, %v9576, %v9504
      %v9641 = vsel %vm5322, %v9577, %v9509
      %v9642 = vsel %vm5322, %v9578, %v9512
      // Predicated region
      $region45: #{vdsr_forward.1} parent=31 // pred_check
        %p9643 = pneg %p184
      $region46: #{vdsr_forward.1} parent=31 // pred_check_branch
        %9645 = sbr.rel (%p9643) target = $region48
      $region47: #{vdsr_forward.1} parent=31 // pred_region
        %v9646 = vpack.c.bf16 %v9580, %v9579
        %v9647 = vpack.c.bf16 %v9582, %v9581
        %v9648 = vpack.c.bf16 %v9584, %v9583
        %v9649 = vpack.c.bf16 %v9586, %v9585
        %v9650 = vpack.c.bf16 %v9588, %v9587
        %v9651 = vpack.c.bf16 %v9590, %v9589
        %v9652 = vpack.c.bf16 %v9592, %v9591
        %v9653 = vpack.c.bf16 %v9594, %v9593
        %v9654 = vpack.c.bf16 %v9596, %v9595
        %v9655 = vpack.c.bf16 %v9598, %v9597
        %v9656 = vpack.c.bf16 %v9600, %v9599
        %v9657 = vpack.c.bf16 %v9602, %v9601
        %v9658 = vpack.c.bf16 %v9604, %v9603
        %v9659 = vpack.c.bf16 %v9606, %v9605
        %v9660 = vpack.c.bf16 %v9608, %v9607
        %v9661 = vpack.c.bf16 %v9610, %v9609
        %v9662 = vpack.c.bf16 %v9612, %v9611
        %v9663 = vpack.c.bf16 %v9614, %v9613
        %v9664 = vpack.c.bf16 %v9616, %v9615
        %v9665 = vpack.c.bf16 %v9618, %v9617
        %v9666 = vpack.c.bf16 %v9620, %v9619
        %v9667 = vpack.c.bf16 %v9622, %v9621
        %v9668 = vpack.c.bf16 %v9624, %v9623
        %v9669 = vpack.c.bf16 %v9626, %v9625
        %v9670 = vpack.c.bf16 %v9628, %v9627
        %v9671 = vpack.c.bf16 %v9630, %v9629
        %v9672 = vpack.c.bf16 %v9632, %v9631
        %v9673 = vpack.c.bf16 %v9634, %v9633
        %v9674 = vpack.c.bf16 %v9636, %v9635
        %v9675 = vpack.c.bf16 %v9638, %v9637
        %v9676 = vpack.c.bf16 %v9640, %v9639
        %v9677 = vpack.c.bf16 %v9642, %v9641
        %v9710 = vunpack.c.l.b16 %v9646
        %v9711 = vunpack.c.h.b16 %v9646
        %v9712 = vunpack.c.l.b16 %v9647
        %v9713 = vunpack.c.h.b16 %v9647
        %v9714 = vunpack.c.l.b16 %v9648
        %v9715 = vunpack.c.h.b16 %v9648
        %v9716 = vunpack.c.l.b16 %v9649
        %v9717 = vunpack.c.h.b16 %v9649
        %v9718 = vunpack.c.l.b16 %v9650
        %v9719 = vunpack.c.h.b16 %v9650
        %v9720 = vunpack.c.l.b16 %v9651
        %v9721 = vunpack.c.h.b16 %v9651
        %v9722 = vunpack.c.l.b16 %v9652
        %v9723 = vunpack.c.h.b16 %v9652
        %v9724 = vunpack.c.l.b16 %v9653
        %v9725 = vunpack.c.h.b16 %v9653
        %v9726 = vunpack.c.l.b16 %v9654
        %v9727 = vunpack.c.h.b16 %v9654
        %v9728 = vunpack.c.l.b16 %v9655
        %v9729 = vunpack.c.h.b16 %v9655
        %v9730 = vunpack.c.l.b16 %v9656
        %v9731 = vunpack.c.h.b16 %v9656
        %v9732 = vunpack.c.l.b16 %v9657
        %v9733 = vunpack.c.h.b16 %v9657
        %v9734 = vunpack.c.l.b16 %v9658
        %v9735 = vunpack.c.h.b16 %v9658
        %v9736 = vunpack.c.l.b16 %v9659
        %v9737 = vunpack.c.h.b16 %v9659
        %v9738 = vunpack.c.l.b16 %v9660
        %v9739 = vunpack.c.h.b16 %v9660
        %v9740 = vunpack.c.l.b16 %v9661
        %v9741 = vunpack.c.h.b16 %v9661
        %v9742 = vunpack.c.l.b16 %v9662
        %v9743 = vunpack.c.h.b16 %v9662
        %v9744 = vunpack.c.l.b16 %v9663
        %v9745 = vunpack.c.h.b16 %v9663
        %v9746 = vunpack.c.l.b16 %v9664
        %v9747 = vunpack.c.h.b16 %v9664
        %v9748 = vunpack.c.l.b16 %v9665
        %v9749 = vunpack.c.h.b16 %v9665
        %v9750 = vunpack.c.l.b16 %v9666
        %v9751 = vunpack.c.h.b16 %v9666
        %v9752 = vunpack.c.l.b16 %v9667
        %v9753 = vunpack.c.h.b16 %v9667
        %v9754 = vunpack.c.l.b16 %v9668
        %v9755 = vunpack.c.h.b16 %v9668
        %v9756 = vunpack.c.l.b16 %v9669
        %v9757 = vunpack.c.h.b16 %v9669
        %v9758 = vunpack.c.l.b16 %v9670
        %v9759 = vunpack.c.h.b16 %v9670
        %v9760 = vunpack.c.l.b16 %v9671
        %v9761 = vunpack.c.h.b16 %v9671
        %v9762 = vunpack.c.l.b16 %v9672
        %v9763 = vunpack.c.h.b16 %v9672
        %v9764 = vunpack.c.l.b16 %v9673
        %v9765 = vunpack.c.h.b16 %v9673
        %v9766 = vunpack.c.l.b16 %v9674
        %v9767 = vunpack.c.h.b16 %v9674
        %v9768 = vunpack.c.l.b16 %v9675
        %v9769 = vunpack.c.h.b16 %v9675
        %v9770 = vunpack.c.l.b16 %v9676
        %v9771 = vunpack.c.h.b16 %v9676
        %v9772 = vunpack.c.l.b16 %v9677
        %v9773 = vunpack.c.h.b16 %v9677
        %v9774 = vpack.c.b16 %v9710, %v9710
        %v9775 = vpack.c.b16 %v9711, %v9711
        %v9776 = vpack.c.b16 %v9712, %v9712
        %v9777 = vpack.c.b16 %v9713, %v9713
        %v9778 = vpack.c.b16 %v9714, %v9714
        %v9779 = vpack.c.b16 %v9715, %v9715
        %v9780 = vpack.c.b16 %v9716, %v9716
        %v9781 = vpack.c.b16 %v9717, %v9717
        %v9782 = vpack.c.b16 %v9718, %v9718
        %v9783 = vpack.c.b16 %v9719, %v9719
        %v9784 = vpack.c.b16 %v9720, %v9720
        %v9785 = vpack.c.b16 %v9721, %v9721
        %v9786 = vpack.c.b16 %v9722, %v9722
        %v9787 = vpack.c.b16 %v9723, %v9723
        %v9788 = vpack.c.b16 %v9724, %v9724
        %v9789 = vpack.c.b16 %v9725, %v9725
        %v9790 = vpack.c.b16 %v9726, %v9726
        %v9791 = vpack.c.b16 %v9727, %v9727
        %v9792 = vpack.c.b16 %v9728, %v9728
        %v9793 = vpack.c.b16 %v9729, %v9729
        %v9794 = vpack.c.b16 %v9730, %v9730
        %v9795 = vpack.c.b16 %v9731, %v9731
        %v9796 = vpack.c.b16 %v9732, %v9732
        %v9797 = vpack.c.b16 %v9733, %v9733
        %v9798 = vpack.c.b16 %v9734, %v9734
        %v9799 = vpack.c.b16 %v9735, %v9735
        %v9800 = vpack.c.b16 %v9736, %v9736
        %v9801 = vpack.c.b16 %v9737, %v9737
        %v9802 = vpack.c.b16 %v9738, %v9738
        %v9803 = vpack.c.b16 %v9739, %v9739
        %v9804 = vpack.c.b16 %v9740, %v9740
        %v9805 = vpack.c.b16 %v9741, %v9741
        %v9806 = vpack.c.b16 %v9742, %v9742
        %v9807 = vpack.c.b16 %v9743, %v9743
        %v9808 = vpack.c.b16 %v9744, %v9744
        %v9809 = vpack.c.b16 %v9745, %v9745
        %v9810 = vpack.c.b16 %v9746, %v9746
        %v9811 = vpack.c.b16 %v9747, %v9747
        %v9812 = vpack.c.b16 %v9748, %v9748
        %v9813 = vpack.c.b16 %v9749, %v9749
        %v9814 = vpack.c.b16 %v9750, %v9750
        %v9815 = vpack.c.b16 %v9751, %v9751
        %v9816 = vpack.c.b16 %v9752, %v9752
        %v9817 = vpack.c.b16 %v9753, %v9753
        %v9818 = vpack.c.b16 %v9754, %v9754
        %v9819 = vpack.c.b16 %v9755, %v9755
        %v9820 = vpack.c.b16 %v9756, %v9756
        %v9821 = vpack.c.b16 %v9757, %v9757
        %v9822 = vpack.c.b16 %v9758, %v9758
        %v9823 = vpack.c.b16 %v9759, %v9759
        %v9824 = vpack.c.b16 %v9760, %v9760
        %v9825 = vpack.c.b16 %v9761, %v9761
        %v9826 = vpack.c.b16 %v9762, %v9762
        %v9827 = vpack.c.b16 %v9763, %v9763
        %v9828 = vpack.c.b16 %v9764, %v9764
        %v9829 = vpack.c.b16 %v9765, %v9765
        %v9830 = vpack.c.b16 %v9766, %v9766
        %v9831 = vpack.c.b16 %v9767, %v9767
        %v9832 = vpack.c.b16 %v9768, %v9768
        %v9833 = vpack.c.b16 %v9769, %v9769
        %v9834 = vpack.c.b16 %v9770, %v9770
        %v9835 = vpack.c.b16 %v9771, %v9771
        %v9836 = vpack.c.b16 %v9772, %v9772
        %v9837 = vpack.c.b16 %v9773, %v9773
        %s9902 = scalar_lea.vmem %s182, 256
        %vm9903 = vcmask 27648
        %9904 = vst.msk [vmem:[%s9902] sm:$0xf] %vm9903, %v9774
        %9905 = vst.msk [vmem:[%s9902 + $0x4] sm:$0xf] %vm9903, %v9775
        %9906 = vst.msk [vmem:[%s9902 + $0x8] sm:$0xf] %vm9903, %v9776
        %9907 = vst.msk [vmem:[%s9902 + $0xc] sm:$0xf] %vm9903, %v9777
        %9908 = vst.msk [vmem:[%s9902 + $0x10] sm:$0xf] %vm9903, %v9778
        %9909 = vst.msk [vmem:[%s9902 + $0x14] sm:$0xf] %vm9903, %v9779
        %9910 = vst.msk [vmem:[%s9902 + $0x18] sm:$0xf] %vm9903, %v9780
        %9911 = vst.msk [vmem:[%s9902 + $0x1c] sm:$0xf] %vm9903, %v9781
        %9912 = vst.msk [vmem:[%s9902 + $0x20] sm:$0xf] %vm9903, %v9782
        %9913 = vst.msk [vmem:[%s9902 + $0x24] sm:$0xf] %vm9903, %v9783
        %9914 = vst.msk [vmem:[%s9902 + $0x28] sm:$0xf] %vm9903, %v9784
        %9915 = vst.msk [vmem:[%s9902 + $0x2c] sm:$0xf] %vm9903, %v9785
        %9916 = vst.msk [vmem:[%s9902 + $0x30] sm:$0xf] %vm9903, %v9786
        %9917 = vst.msk [vmem:[%s9902 + $0x34] sm:$0xf] %vm9903, %v9787
        %9918 = vst.msk [vmem:[%s9902 + $0x38] sm:$0xf] %vm9903, %v9788
        %9919 = vst.msk [vmem:[%s9902 + $0x3c] sm:$0xf] %vm9903, %v9789
        %9920 = vst.msk [vmem:[%s9902 + $0x40] sm:$0xf] %vm9903, %v9790
        %9921 = vst.msk [vmem:[%s9902 + $0x44] sm:$0xf] %vm9903, %v9791
        %9922 = vst.msk [vmem:[%s9902 + $0x48] sm:$0xf] %vm9903, %v9792
        %9923 = vst.msk [vmem:[%s9902 + $0x4c] sm:$0xf] %vm9903, %v9793
        %9924 = vst.msk [vmem:[%s9902 + $0x50] sm:$0xf] %vm9903, %v9794
        %9925 = vst.msk [vmem:[%s9902 + $0x54] sm:$0xf] %vm9903, %v9795
        %9926 = vst.msk [vmem:[%s9902 + $0x58] sm:$0xf] %vm9903, %v9796
        %9927 = vst.msk [vmem:[%s9902 + $0x5c] sm:$0xf] %vm9903, %v9797
        %9928 = vst.msk [vmem:[%s9902 + $0x60] sm:$0xf] %vm9903, %v9798
        %9929 = vst.msk [vmem:[%s9902 + $0x64] sm:$0xf] %vm9903, %v9799
        %9930 = vst.msk [vmem:[%s9902 + $0x68] sm:$0xf] %vm9903, %v9800
        %9931 = vst.msk [vmem:[%s9902 + $0x6c] sm:$0xf] %vm9903, %v9801
        %9932 = vst.msk [vmem:[%s9902 + $0x70] sm:$0xf] %vm9903, %v9802
        %9933 = vst.msk [vmem:[%s9902 + $0x74] sm:$0xf] %vm9903, %v9803
        %9934 = vst.msk [vmem:[%s9902 + $0x78] sm:$0xf] %vm9903, %v9804
        %9935 = vst.msk [vmem:[%s9902 + $0x7c] sm:$0xf] %vm9903, %v9805
        %9936 = vst.msk [vmem:[%s9902 + $0x80] sm:$0xf] %vm9903, %v9806
        %9937 = vst.msk [vmem:[%s9902 + $0x84] sm:$0xf] %vm9903, %v9807
        %9938 = vst.msk [vmem:[%s9902 + $0x88] sm:$0xf] %vm9903, %v9808
        %9939 = vst.msk [vmem:[%s9902 + $0x8c] sm:$0xf] %vm9903, %v9809
        %9940 = vst.msk [vmem:[%s9902 + $0x90] sm:$0xf] %vm9903, %v9810
        %9941 = vst.msk [vmem:[%s9902 + $0x94] sm:$0xf] %vm9903, %v9811
        %9942 = vst.msk [vmem:[%s9902 + $0x98] sm:$0xf] %vm9903, %v9812
        %9943 = vst.msk [vmem:[%s9902 + $0x9c] sm:$0xf] %vm9903, %v9813
        %9944 = vst.msk [vmem:[%s9902 + $0xa0] sm:$0xf] %vm9903, %v9814
        %9945 = vst.msk [vmem:[%s9902 + $0xa4] sm:$0xf] %vm9903, %v9815
        %9946 = vst.msk [vmem:[%s9902 + $0xa8] sm:$0xf] %vm9903, %v9816
        %9947 = vst.msk [vmem:[%s9902 + $0xac] sm:$0xf] %vm9903, %v9817
        %9948 = vst.msk [vmem:[%s9902 + $0xb0] sm:$0xf] %vm9903, %v9818
        %9949 = vst.msk [vmem:[%s9902 + $0xb4] sm:$0xf] %vm9903, %v9819
        %9950 = vst.msk [vmem:[%s9902 + $0xb8] sm:$0xf] %vm9903, %v9820
        %9951 = vst.msk [vmem:[%s9902 + $0xbc] sm:$0xf] %vm9903, %v9821
        %9952 = vst.msk [vmem:[%s9902 + $0xc0] sm:$0xf] %vm9903, %v9822
        %9953 = vst.msk [vmem:[%s9902 + $0xc4] sm:$0xf] %vm9903, %v9823
        %9954 = vst.msk [vmem:[%s9902 + $0xc8] sm:$0xf] %vm9903, %v9824
        %9955 = vst.msk [vmem:[%s9902 + $0xcc] sm:$0xf] %vm9903, %v9825
        %9956 = vst.msk [vmem:[%s9902 + $0xd0] sm:$0xf] %vm9903, %v9826
        %9957 = vst.msk [vmem:[%s9902 + $0xd4] sm:$0xf] %vm9903, %v9827
        %9958 = vst.msk [vmem:[%s9902 + $0xd8] sm:$0xf] %vm9903, %v9828
        %9959 = vst.msk [vmem:[%s9902 + $0xdc] sm:$0xf] %vm9903, %v9829
        %9960 = vst.msk [vmem:[%s9902 + $0xe0] sm:$0xf] %vm9903, %v9830
        %9961 = vst.msk [vmem:[%s9902 + $0xe4] sm:$0xf] %vm9903, %v9831
        %9962 = vst.msk [vmem:[%s9902 + $0xe8] sm:$0xf] %vm9903, %v9832
        %9963 = vst.msk [vmem:[%s9902 + $0xec] sm:$0xf] %vm9903, %v9833
        %9964 = vst.msk [vmem:[%s9902 + $0xf0] sm:$0xf] %vm9903, %v9834
        %9965 = vst.msk [vmem:[%s9902 + $0xf4] sm:$0xf] %vm9903, %v9835
        %9966 = vst.msk [vmem:[%s9902 + $0xf8] sm:$0xf] %vm9903, %v9836
        %9967 = vst.msk [vmem:[%s9902 + $0xfc] sm:$0xf] %vm9903, %v9837
      $region48: #{vdsr_forward.1} parent=31 // pred_fallthru
        _
      // Predicated region
      $region49: #{vdsr_forward.1} parent=31 // pred_check
        %p9968 = pneg %p5711
      $region50: #{vdsr_forward.1} parent=31 // pred_check_branch
        %9970 = sbr.rel (%p9968) target = $region52
      $region51: #{vdsr_forward.1} parent=31 // pred_region
        %v9971 = vpack.c.bf16 %v9580, %v9579
        %v9972 = vpack.c.bf16 %v9582, %v9581
        %v9973 = vpack.c.bf16 %v9584, %v9583
        %v9974 = vpack.c.bf16 %v9586, %v9585
        %v9975 = vpack.c.bf16 %v9588, %v9587
        %v9976 = vpack.c.bf16 %v9590, %v9589
        %v9977 = vpack.c.bf16 %v9592, %v9591
        %v9978 = vpack.c.bf16 %v9594, %v9593
        %v9979 = vpack.c.bf16 %v9596, %v9595
        %v9980 = vpack.c.bf16 %v9598, %v9597
        %v9981 = vpack.c.bf16 %v9600, %v9599
        %v9982 = vpack.c.bf16 %v9602, %v9601
        %v9983 = vpack.c.bf16 %v9604, %v9603
        %v9984 = vpack.c.bf16 %v9606, %v9605
        %v9985 = vpack.c.bf16 %v9608, %v9607
        %v9986 = vpack.c.bf16 %v9610, %v9609
        %v9987 = vpack.c.bf16 %v9612, %v9611
        %v9988 = vpack.c.bf16 %v9614, %v9613
        %v9989 = vpack.c.bf16 %v9616, %v9615
        %v9990 = vpack.c.bf16 %v9618, %v9617
        %v9991 = vpack.c.bf16 %v9620, %v9619
        %v9992 = vpack.c.bf16 %v9622, %v9621
        %v9993 = vpack.c.bf16 %v9624, %v9623
        %v9994 = vpack.c.bf16 %v9626, %v9625
        %v9995 = vpack.c.bf16 %v9628, %v9627
        %v9996 = vpack.c.bf16 %v9630, %v9629
        %v9997 = vpack.c.bf16 %v9632, %v9631
        %v9998 = vpack.c.bf16 %v9634, %v9633
        %v9999 = vpack.c.bf16 %v9636, %v9635
        %v10000 = vpack.c.bf16 %v9638, %v9637
        %v10001 = vpack.c.bf16 %v9640, %v9639
        %v10002 = vpack.c.bf16 %v9642, %v9641
        %vm10003 = vsmask.f32 256
        %v10005 = vshrl.u32 %v9971, 16
        %v10007 = vrot.slane %v10005, 7
        %v10008 = vshll.u32 %v9971, 16
        %v10010 = vor.u32 %v10007, %v10008
        %v10012 = vshrl.u32 %v9972, 16
        %v10014 = vrot.slane %v10012, 7
        %v10015 = vshll.u32 %v9972, 16
        %v10017 = vor.u32 %v10014, %v10015
        %v10018 = vsel %vm10003, %v10007, %v10017
        %v10020 = vshrl.u32 %v9973, 16
        %v10022 = vrot.slane %v10020, 7
        %v10023 = vshll.u32 %v9973, 16
        %v10025 = vor.u32 %v10022, %v10023
        %v10027 = vshrl.u32 %v9974, 16
        %v10029 = vrot.slane %v10027, 7
        %v10030 = vshll.u32 %v9974, 16
        %v10032 = vor.u32 %v10029, %v10030
        %v10033 = vsel %vm10003, %v10022, %v10032
        %v10035 = vshrl.u32 %v9975, 16
        %v10037 = vrot.slane %v10035, 7
        %v10038 = vshll.u32 %v9975, 16
        %v10040 = vor.u32 %v10037, %v10038
        %v10042 = vshrl.u32 %v9976, 16
        %v10044 = vrot.slane %v10042, 7
        %v10045 = vshll.u32 %v9976, 16
        %v10047 = vor.u32 %v10044, %v10045
        %v10048 = vsel %vm10003, %v10037, %v10047
        %v10050 = vshrl.u32 %v9977, 16
        %v10052 = vrot.slane %v10050, 7
        %v10053 = vshll.u32 %v9977, 16
        %v10055 = vor.u32 %v10052, %v10053
        %v10057 = vshrl.u32 %v9978, 16
        %v10059 = vrot.slane %v10057, 7
        %v10060 = vshll.u32 %v9978, 16
        %v10062 = vor.u32 %v10059, %v10060
        %v10063 = vsel %vm10003, %v10052, %v10062
        %v10065 = vshrl.u32 %v9979, 16
        %v10067 = vrot.slane %v10065, 7
        %v10068 = vshll.u32 %v9979, 16
        %v10070 = vor.u32 %v10067, %v10068
        %v10072 = vshrl.u32 %v9980, 16
        %v10074 = vrot.slane %v10072, 7
        %v10075 = vshll.u32 %v9980, 16
        %v10077 = vor.u32 %v10074, %v10075
        %v10078 = vsel %vm10003, %v10067, %v10077
        %v10080 = vshrl.u32 %v9981, 16
        %v10082 = vrot.slane %v10080, 7
        %v10083 = vshll.u32 %v9981, 16
        %v10085 = vor.u32 %v10082, %v10083
        %v10087 = vshrl.u32 %v9982, 16
        %v10089 = vrot.slane %v10087, 7
        %v10090 = vshll.u32 %v9982, 16
        %v10092 = vor.u32 %v10089, %v10090
        %v10093 = vsel %vm10003, %v10082, %v10092
        %v10095 = vshrl.u32 %v9983, 16
        %v10097 = vrot.slane %v10095, 7
        %v10098 = vshll.u32 %v9983, 16
        %v10100 = vor.u32 %v10097, %v10098
        %v10102 = vshrl.u32 %v9984, 16
        %v10104 = vrot.slane %v10102, 7
        %v10105 = vshll.u32 %v9984, 16
        %v10107 = vor.u32 %v10104, %v10105
        %v10108 = vsel %vm10003, %v10097, %v10107
        %v10110 = vshrl.u32 %v9985, 16
        %v10112 = vrot.slane %v10110, 7
        %v10113 = vshll.u32 %v9985, 16
        %v10115 = vor.u32 %v10112, %v10113
        %v10117 = vshrl.u32 %v9986, 16
        %v10119 = vrot.slane %v10117, 7
        %v10120 = vshll.u32 %v9986, 16
        %v10122 = vor.u32 %v10119, %v10120
        %v10123 = vsel %vm10003, %v10112, %v10122
        %v10125 = vshrl.u32 %v9987, 16
        %v10127 = vrot.slane %v10125, 7
        %v10128 = vshll.u32 %v9987, 16
        %v10130 = vor.u32 %v10127, %v10128
        %v10132 = vshrl.u32 %v9988, 16
        %v10134 = vrot.slane %v10132, 7
        %v10135 = vshll.u32 %v9988, 16
        %v10137 = vor.u32 %v10134, %v10135
        %v10138 = vsel %vm10003, %v10127, %v10137
        %v10140 = vshrl.u32 %v9989, 16
        %v10142 = vrot.slane %v10140, 7
        %v10143 = vshll.u32 %v9989, 16
        %v10145 = vor.u32 %v10142, %v10143
        %v10147 = vshrl.u32 %v9990, 16
        %v10149 = vrot.slane %v10147, 7
        %v10150 = vshll.u32 %v9990, 16
        %v10152 = vor.u32 %v10149, %v10150
        %v10153 = vsel %vm10003, %v10142, %v10152
        %v10155 = vshrl.u32 %v9991, 16
        %v10157 = vrot.slane %v10155, 7
        %v10158 = vshll.u32 %v9991, 16
        %v10160 = vor.u32 %v10157, %v10158
        %v10162 = vshrl.u32 %v9992, 16
        %v10164 = vrot.slane %v10162, 7
        %v10165 = vshll.u32 %v9992, 16
        %v10167 = vor.u32 %v10164, %v10165
        %v10168 = vsel %vm10003, %v10157, %v10167
        %v10170 = vshrl.u32 %v9993, 16
        %v10172 = vrot.slane %v10170, 7
        %v10173 = vshll.u32 %v9993, 16
        %v10175 = vor.u32 %v10172, %v10173
        %v10177 = vshrl.u32 %v9994, 16
        %v10179 = vrot.slane %v10177, 7
        %v10180 = vshll.u32 %v9994, 16
        %v10182 = vor.u32 %v10179, %v10180
        %v10183 = vsel %vm10003, %v10172, %v10182
        %v10185 = vshrl.u32 %v9995, 16
        %v10187 = vrot.slane %v10185, 7
        %v10188 = vshll.u32 %v9995, 16
        %v10190 = vor.u32 %v10187, %v10188
        %v10192 = vshrl.u32 %v9996, 16
        %v10194 = vrot.slane %v10192, 7
        %v10195 = vshll.u32 %v9996, 16
        %v10197 = vor.u32 %v10194, %v10195
        %v10198 = vsel %vm10003, %v10187, %v10197
        %v10200 = vshrl.u32 %v9997, 16
        %v10202 = vrot.slane %v10200, 7
        %v10203 = vshll.u32 %v9997, 16
        %v10205 = vor.u32 %v10202, %v10203
        %v10207 = vshrl.u32 %v9998, 16
        %v10209 = vrot.slane %v10207, 7
        %v10210 = vshll.u32 %v9998, 16
        %v10212 = vor.u32 %v10209, %v10210
        %v10213 = vsel %vm10003, %v10202, %v10212
        %v10215 = vshrl.u32 %v9999, 16
        %v10217 = vrot.slane %v10215, 7
        %v10218 = vshll.u32 %v9999, 16
        %v10220 = vor.u32 %v10217, %v10218
        %v10222 = vshrl.u32 %v10000, 16
        %v10224 = vrot.slane %v10222, 7
        %v10225 = vshll.u32 %v10000, 16
        %v10227 = vor.u32 %v10224, %v10225
        %v10228 = vsel %vm10003, %v10217, %v10227
        %v10230 = vshrl.u32 %v10001, 16
        %v10232 = vrot.slane %v10230, 7
        %v10233 = vshll.u32 %v10001, 16
        %v10235 = vor.u32 %v10232, %v10233
        %v10237 = vshrl.u32 %v10002, 16
        %v10239 = vrot.slane %v10237, 7
        %v10240 = vshll.u32 %v10002, 16
        %v10242 = vor.u32 %v10239, %v10240
        %v10243 = vsel %vm10003, %v10232, %v10242
        %vm10276 = vcmask 1040384
        %vm10277 = vmand %vm10276, %vm10003
        %v10278 = vsel %vm10277, 0, %v10010
        %v10279 = vsel %vm10277, 0, %v10025
        %v10280 = vsel %vm10277, 0, %v10040
        %v10281 = vsel %vm10277, 0, %v10055
        %v10282 = vsel %vm10277, 0, %v10070
        %v10283 = vsel %vm10277, 0, %v10085
        %v10284 = vsel %vm10277, 0, %v10100
        %v10285 = vsel %vm10277, 0, %v10115
        %v10286 = vsel %vm10277, 0, %v10130
        %v10287 = vsel %vm10277, 0, %v10145
        %v10288 = vsel %vm10277, 0, %v10160
        %v10289 = vsel %vm10277, 0, %v10175
        %v10290 = vsel %vm10277, 0, %v10190
        %v10291 = vsel %vm10277, 0, %v10205
        %v10292 = vsel %vm10277, 0, %v10220
        %v10293 = vsel %vm10277, 0, %v10235
        %v10294 = vsel %vm10277, %v10014, 0
        %v10295 = vsel %vm10277, %v10029, 0
        %v10296 = vsel %vm10277, %v10044, 0
        %v10297 = vsel %vm10277, %v10059, 0
        %v10298 = vsel %vm10277, %v10074, 0
        %v10299 = vsel %vm10277, %v10089, 0
        %v10300 = vsel %vm10277, %v10104, 0
        %v10301 = vsel %vm10277, %v10119, 0
        %v10302 = vsel %vm10277, %v10134, 0
        %v10303 = vsel %vm10277, %v10149, 0
        %v10304 = vsel %vm10277, %v10164, 0
        %v10305 = vsel %vm10277, %v10179, 0
        %v10306 = vsel %vm10277, %v10194, 0
        %v10307 = vsel %vm10277, %v10209, 0
        %v10308 = vsel %vm10277, %v10224, 0
        %v10309 = vsel %vm10277, %v10239, 0
        %v10342 = vunpack.c.l.b16 %v10278
        %v10343 = vunpack.c.h.b16 %v10278
        %v10344 = vunpack.c.l.b16 %v10018
        %v10345 = vunpack.c.h.b16 %v10018
        %v10346 = vunpack.c.l.b16 %v10294
        %v10347 = vunpack.c.l.b16 %v10279
        %v10348 = vunpack.c.h.b16 %v10279
        %v10349 = vunpack.c.l.b16 %v10033
        %v10350 = vunpack.c.h.b16 %v10033
        %v10351 = vunpack.c.l.b16 %v10295
        %v10352 = vunpack.c.l.b16 %v10280
        %v10353 = vunpack.c.h.b16 %v10280
        %v10354 = vunpack.c.l.b16 %v10048
        %v10355 = vunpack.c.h.b16 %v10048
        %v10356 = vunpack.c.l.b16 %v10296
        %v10357 = vunpack.c.l.b16 %v10281
        %v10358 = vunpack.c.h.b16 %v10281
        %v10359 = vunpack.c.l.b16 %v10063
        %v10360 = vunpack.c.h.b16 %v10063
        %v10361 = vunpack.c.l.b16 %v10297
        %v10362 = vunpack.c.l.b16 %v10282
        %v10363 = vunpack.c.h.b16 %v10282
        %v10364 = vunpack.c.l.b16 %v10078
        %v10365 = vunpack.c.h.b16 %v10078
        %v10366 = vunpack.c.l.b16 %v10298
        %v10367 = vunpack.c.l.b16 %v10283
        %v10368 = vunpack.c.h.b16 %v10283
        %v10369 = vunpack.c.l.b16 %v10093
        %v10370 = vunpack.c.h.b16 %v10093
        %v10371 = vunpack.c.l.b16 %v10299
        %v10372 = vunpack.c.l.b16 %v10284
        %v10373 = vunpack.c.h.b16 %v10284
        %v10374 = vunpack.c.l.b16 %v10108
        %v10375 = vunpack.c.h.b16 %v10108
        %v10376 = vunpack.c.l.b16 %v10300
        %v10377 = vunpack.c.l.b16 %v10285
        %v10378 = vunpack.c.h.b16 %v10285
        %v10379 = vunpack.c.l.b16 %v10123
        %v10380 = vunpack.c.h.b16 %v10123
        %v10381 = vunpack.c.l.b16 %v10301
        %v10382 = vunpack.c.l.b16 %v10286
        %v10383 = vunpack.c.h.b16 %v10286
        %v10384 = vunpack.c.l.b16 %v10138
        %v10385 = vunpack.c.h.b16 %v10138
        %v10386 = vunpack.c.l.b16 %v10302
        %v10387 = vunpack.c.l.b16 %v10287
        %v10388 = vunpack.c.h.b16 %v10287
        %v10389 = vunpack.c.l.b16 %v10153
        %v10390 = vunpack.c.h.b16 %v10153
        %v10391 = vunpack.c.l.b16 %v10303
        %v10392 = vunpack.c.l.b16 %v10288
        %v10393 = vunpack.c.h.b16 %v10288
        %v10394 = vunpack.c.l.b16 %v10168
        %v10395 = vunpack.c.h.b16 %v10168
        %v10396 = vunpack.c.l.b16 %v10304
        %v10397 = vunpack.c.l.b16 %v10289
        %v10398 = vunpack.c.h.b16 %v10289
        %v10399 = vunpack.c.l.b16 %v10183
        %v10400 = vunpack.c.h.b16 %v10183
        %v10401 = vunpack.c.l.b16 %v10305
        %v10402 = vunpack.c.l.b16 %v10290
        %v10403 = vunpack.c.h.b16 %v10290
        %v10404 = vunpack.c.l.b16 %v10198
        %v10405 = vunpack.c.h.b16 %v10198
        %v10406 = vunpack.c.l.b16 %v10306
        %v10407 = vunpack.c.l.b16 %v10291
        %v10408 = vunpack.c.h.b16 %v10291
        %v10409 = vunpack.c.l.b16 %v10213
        %v10410 = vunpack.c.h.b16 %v10213
        %v10411 = vunpack.c.l.b16 %v10307
        %v10412 = vunpack.c.l.b16 %v10292
        %v10413 = vunpack.c.h.b16 %v10292
        %v10414 = vunpack.c.l.b16 %v10228
        %v10415 = vunpack.c.h.b16 %v10228
        %v10416 = vunpack.c.l.b16 %v10308
        %v10417 = vunpack.c.l.b16 %v10293
        %v10418 = vunpack.c.h.b16 %v10293
        %v10419 = vunpack.c.l.b16 %v10243
        %v10420 = vunpack.c.h.b16 %v10243
        %v10421 = vunpack.c.l.b16 %v10309
        %v10422 = vpack.c.b16 %v10342, %v10342
        %v10423 = vpack.c.b16 %v10343, %v10343
        %v10424 = vpack.c.b16 %v10344, %v10344
        %v10425 = vpack.c.b16 %v10345, %v10345
        %v10426 = vpack.c.b16 %v10346, %v10346
        %v10427 = vpack.c.b16 %v10347, %v10347
        %v10428 = vpack.c.b16 %v10348, %v10348
        %v10429 = vpack.c.b16 %v10349, %v10349
        %v10430 = vpack.c.b16 %v10350, %v10350
        %v10431 = vpack.c.b16 %v10351, %v10351
        %v10432 = vpack.c.b16 %v10352, %v10352
        %v10433 = vpack.c.b16 %v10353, %v10353
        %v10434 = vpack.c.b16 %v10354, %v10354
        %v10435 = vpack.c.b16 %v10355, %v10355
        %v10436 = vpack.c.b16 %v10356, %v10356
        %v10437 = vpack.c.b16 %v10357, %v10357
        %v10438 = vpack.c.b16 %v10358, %v10358
        %v10439 = vpack.c.b16 %v10359, %v10359
        %v10440 = vpack.c.b16 %v10360, %v10360
        %v10441 = vpack.c.b16 %v10361, %v10361
        %v10442 = vpack.c.b16 %v10362, %v10362
        %v10443 = vpack.c.b16 %v10363, %v10363
        %v10444 = vpack.c.b16 %v10364, %v10364
        %v10445 = vpack.c.b16 %v10365, %v10365
        %v10446 = vpack.c.b16 %v10366, %v10366
        %v10447 = vpack.c.b16 %v10367, %v10367
        %v10448 = vpack.c.b16 %v10368, %v10368
        %v10449 = vpack.c.b16 %v10369, %v10369
        %v10450 = vpack.c.b16 %v10370, %v10370
        %v10451 = vpack.c.b16 %v10371, %v10371
        %v10452 = vpack.c.b16 %v10372, %v10372
        %v10453 = vpack.c.b16 %v10373, %v10373
        %v10454 = vpack.c.b16 %v10374, %v10374
        %v10455 = vpack.c.b16 %v10375, %v10375
        %v10456 = vpack.c.b16 %v10376, %v10376
        %v10457 = vpack.c.b16 %v10377, %v10377
        %v10458 = vpack.c.b16 %v10378, %v10378
        %v10459 = vpack.c.b16 %v10379, %v10379
        %v10460 = vpack.c.b16 %v10380, %v10380
        %v10461 = vpack.c.b16 %v10381, %v10381
        %v10462 = vpack.c.b16 %v10382, %v10382
        %v10463 = vpack.c.b16 %v10383, %v10383
        %v10464 = vpack.c.b16 %v10384, %v10384
        %v10465 = vpack.c.b16 %v10385, %v10385
        %v10466 = vpack.c.b16 %v10386, %v10386
        %v10467 = vpack.c.b16 %v10387, %v10387
        %v10468 = vpack.c.b16 %v10388, %v10388
        %v10469 = vpack.c.b16 %v10389, %v10389
        %v10470 = vpack.c.b16 %v10390, %v10390
        %v10471 = vpack.c.b16 %v10391, %v10391
        %v10472 = vpack.c.b16 %v10392, %v10392
        %v10473 = vpack.c.b16 %v10393, %v10393
        %v10474 = vpack.c.b16 %v10394, %v10394
        %v10475 = vpack.c.b16 %v10395, %v10395
        %v10476 = vpack.c.b16 %v10396, %v10396
        %v10477 = vpack.c.b16 %v10397, %v10397
        %v10478 = vpack.c.b16 %v10398, %v10398
        %v10479 = vpack.c.b16 %v10399, %v10399
        %v10480 = vpack.c.b16 %v10400, %v10400
        %v10481 = vpack.c.b16 %v10401, %v10401
        %v10482 = vpack.c.b16 %v10402, %v10402
        %v10483 = vpack.c.b16 %v10403, %v10403
        %v10484 = vpack.c.b16 %v10404, %v10404
        %v10485 = vpack.c.b16 %v10405, %v10405
        %v10486 = vpack.c.b16 %v10406, %v10406
        %v10487 = vpack.c.b16 %v10407, %v10407
        %v10488 = vpack.c.b16 %v10408, %v10408
        %v10489 = vpack.c.b16 %v10409, %v10409
        %v10490 = vpack.c.b16 %v10410, %v10410
        %v10491 = vpack.c.b16 %v10411, %v10411
        %v10492 = vpack.c.b16 %v10412, %v10412
        %v10493 = vpack.c.b16 %v10413, %v10413
        %v10494 = vpack.c.b16 %v10414, %v10414
        %v10495 = vpack.c.b16 %v10415, %v10415
        %v10496 = vpack.c.b16 %v10416, %v10416
        %v10497 = vpack.c.b16 %v10417, %v10417
        %v10498 = vpack.c.b16 %v10418, %v10418
        %v10499 = vpack.c.b16 %v10419, %v10419
        %v10500 = vpack.c.b16 %v10420, %v10420
        %v10501 = vpack.c.b16 %v10421, %v10421
        %s10582 = smul.u32 %s195, 170
        %s10583 = sadd.s32 85, %s10582
        %s10584 = smul.addr %s10583, 4
        %s10585 = scalar_lea.vmem [#allocation2], %s10584
        %vm10586 = vcmask 257024
        %10587 = vst.msk [vmem:[%s10585] sm:$0xf] %vm10586, %v10422
        %10588 = vst.msk [vmem:[%s10585 + $0x4] sm:$0xf] %vm10586, %v10423
        %10589 = vst.msk [vmem:[%s10585 + $0x8] sm:$0xf] %vm10586, %v10424
        %10590 = vst.msk [vmem:[%s10585 + $0xc] sm:$0xf] %vm10586, %v10425
        %vm10591 = vcmask 253952
        %10592 = vst.msk [vmem:[%s10585 + $0x10] sm:$0x1] %vm10591, %v10426
        %10593 = vst.msk [vmem:[%s10585 + $0x14] sm:$0xf] %vm10586, %v10427
        %10594 = vst.msk [vmem:[%s10585 + $0x18] sm:$0xf] %vm10586, %v10428
        %10595 = vst.msk [vmem:[%s10585 + $0x1c] sm:$0xf] %vm10586, %v10429
        %10596 = vst.msk [vmem:[%s10585 + $0x20] sm:$0xf] %vm10586, %v10430
        %10597 = vst.msk [vmem:[%s10585 + $0x24] sm:$0x1] %vm10591, %v10431
        %10598 = vst.msk [vmem:[%s10585 + $0x28] sm:$0xf] %vm10586, %v10432
        %10599 = vst.msk [vmem:[%s10585 + $0x2c] sm:$0xf] %vm10586, %v10433
        %10600 = vst.msk [vmem:[%s10585 + $0x30] sm:$0xf] %vm10586, %v10434
        %10601 = vst.msk [vmem:[%s10585 + $0x34] sm:$0xf] %vm10586, %v10435
        %10602 = vst.msk [vmem:[%s10585 + $0x38] sm:$0x1] %vm10591, %v10436
        %10603 = vst.msk [vmem:[%s10585 + $0x3c] sm:$0xf] %vm10586, %v10437
        %10604 = vst.msk [vmem:[%s10585 + $0x40] sm:$0xf] %vm10586, %v10438
        %10605 = vst.msk [vmem:[%s10585 + $0x44] sm:$0xf] %vm10586, %v10439
        %10606 = vst.msk [vmem:[%s10585 + $0x48] sm:$0xf] %vm10586, %v10440
        %10607 = vst.msk [vmem:[%s10585 + $0x4c] sm:$0x1] %vm10591, %v10441
        %10608 = vst.msk [vmem:[%s10585 + $0x50] sm:$0xf] %vm10586, %v10442
        %10609 = vst.msk [vmem:[%s10585 + $0x54] sm:$0xf] %vm10586, %v10443
        %10610 = vst.msk [vmem:[%s10585 + $0x58] sm:$0xf] %vm10586, %v10444
        %10611 = vst.msk [vmem:[%s10585 + $0x5c] sm:$0xf] %vm10586, %v10445
        %10612 = vst.msk [vmem:[%s10585 + $0x60] sm:$0x1] %vm10591, %v10446
        %10613 = vst.msk [vmem:[%s10585 + $0x64] sm:$0xf] %vm10586, %v10447
        %10614 = vst.msk [vmem:[%s10585 + $0x68] sm:$0xf] %vm10586, %v10448
        %10615 = vst.msk [vmem:[%s10585 + $0x6c] sm:$0xf] %vm10586, %v10449
        %10616 = vst.msk [vmem:[%s10585 + $0x70] sm:$0xf] %vm10586, %v10450
        %10617 = vst.msk [vmem:[%s10585 + $0x74] sm:$0x1] %vm10591, %v10451
        %10618 = vst.msk [vmem:[%s10585 + $0x78] sm:$0xf] %vm10586, %v10452
        %10619 = vst.msk [vmem:[%s10585 + $0x7c] sm:$0xf] %vm10586, %v10453
        %10620 = vst.msk [vmem:[%s10585 + $0x80] sm:$0xf] %vm10586, %v10454
        %10621 = vst.msk [vmem:[%s10585 + $0x84] sm:$0xf] %vm10586, %v10455
        %10622 = vst.msk [vmem:[%s10585 + $0x88] sm:$0x1] %vm10591, %v10456
        %10623 = vst.msk [vmem:[%s10585 + $0x8c] sm:$0xf] %vm10586, %v10457
        %10624 = vst.msk [vmem:[%s10585 + $0x90] sm:$0xf] %vm10586, %v10458
        %10625 = vst.msk [vmem:[%s10585 + $0x94] sm:$0xf] %vm10586, %v10459
        %10626 = vst.msk [vmem:[%s10585 + $0x98] sm:$0xf] %vm10586, %v10460
        %10627 = vst.msk [vmem:[%s10585 + $0x9c] sm:$0x1] %vm10591, %v10461
        %10628 = vst.msk [vmem:[%s10585 + $0xa0] sm:$0xf] %vm10586, %v10462
        %10629 = vst.msk [vmem:[%s10585 + $0xa4] sm:$0xf] %vm10586, %v10463
        %10630 = vst.msk [vmem:[%s10585 + $0xa8] sm:$0xf] %vm10586, %v10464
        %10631 = vst.msk [vmem:[%s10585 + $0xac] sm:$0xf] %vm10586, %v10465
        %10632 = vst.msk [vmem:[%s10585 + $0xb0] sm:$0x1] %vm10591, %v10466
        %10633 = vst.msk [vmem:[%s10585 + $0xb4] sm:$0xf] %vm10586, %v10467
        %10634 = vst.msk [vmem:[%s10585 + $0xb8] sm:$0xf] %vm10586, %v10468
        %10635 = vst.msk [vmem:[%s10585 + $0xbc] sm:$0xf] %vm10586, %v10469
        %10636 = vst.msk [vmem:[%s10585 + $0xc0] sm:$0xf] %vm10586, %v10470
        %10637 = vst.msk [vmem:[%s10585 + $0xc4] sm:$0x1] %vm10591, %v10471
        %10638 = vst.msk [vmem:[%s10585 + $0xc8] sm:$0xf] %vm10586, %v10472
        %10639 = vst.msk [vmem:[%s10585 + $0xcc] sm:$0xf] %vm10586, %v10473
        %10640 = vst.msk [vmem:[%s10585 + $0xd0] sm:$0xf] %vm10586, %v10474
        %10641 = vst.msk [vmem:[%s10585 + $0xd4] sm:$0xf] %vm10586, %v10475
        %10642 = vst.msk [vmem:[%s10585 + $0xd8] sm:$0x1] %vm10591, %v10476
        %10643 = vst.msk [vmem:[%s10585 + $0xdc] sm:$0xf] %vm10586, %v10477
        %10644 = vst.msk [vmem:[%s10585 + $0xe0] sm:$0xf] %vm10586, %v10478
        %10645 = vst.msk [vmem:[%s10585 + $0xe4] sm:$0xf] %vm10586, %v10479
        %10646 = vst.msk [vmem:[%s10585 + $0xe8] sm:$0xf] %vm10586, %v10480
        %10647 = vst.msk [vmem:[%s10585 + $0xec] sm:$0x1] %vm10591, %v10481
        %10648 = vst.msk [vmem:[%s10585 + $0xf0] sm:$0xf] %vm10586, %v10482
        %10649 = vst.msk [vmem:[%s10585 + $0xf4] sm:$0xf] %vm10586, %v10483
        %10650 = vst.msk [vmem:[%s10585 + $0xf8] sm:$0xf] %vm10586, %v10484
        %10651 = vst.msk [vmem:[%s10585 + $0xfc] sm:$0xf] %vm10586, %v10485
        %10652 = vst.msk [vmem:[%s10585 + $0x100] sm:$0x1] %vm10591, %v10486
        %10653 = vst.msk [vmem:[%s10585 + $0x104] sm:$0xf] %vm10586, %v10487
        %10654 = vst.msk [vmem:[%s10585 + $0x108] sm:$0xf] %vm10586, %v10488
        %10655 = vst.msk [vmem:[%s10585 + $0x10c] sm:$0xf] %vm10586, %v10489
        %10656 = vst.msk [vmem:[%s10585 + $0x110] sm:$0xf] %vm10586, %v10490
        %10657 = vst.msk [vmem:[%s10585 + $0x114] sm:$0x1] %vm10591, %v10491
        %10658 = vst.msk [vmem:[%s10585 + $0x118] sm:$0xf] %vm10586, %v10492
        %10659 = vst.msk [vmem:[%s10585 + $0x11c] sm:$0xf] %vm10586, %v10493
        %10660 = vst.msk [vmem:[%s10585 + $0x120] sm:$0xf] %vm10586, %v10494
        %10661 = vst.msk [vmem:[%s10585 + $0x124] sm:$0xf] %vm10586, %v10495
        %10662 = vst.msk [vmem:[%s10585 + $0x128] sm:$0x1] %vm10591, %v10496
        %10663 = vst.msk [vmem:[%s10585 + $0x12c] sm:$0xf] %vm10586, %v10497
        %10664 = vst.msk [vmem:[%s10585 + $0x130] sm:$0xf] %vm10586, %v10498
        %10665 = vst.msk [vmem:[%s10585 + $0x134] sm:$0xf] %vm10586, %v10499
        %10666 = vst.msk [vmem:[%s10585 + $0x138] sm:$0xf] %vm10586, %v10500
        %10667 = vst.msk [vmem:[%s10585 + $0x13c] sm:$0x1] %vm10591, %v10501
      $region52: #{vdsr_forward.1} parent=31 // pred_fallthru
        _
      %p10668 = scmp.lt.s32.totalorder %s18, 1
      %s10669 = scalar_select %p10668, %s18, 1
      %s10670 = smul.addr %s10669, 128
      %s10671 = smul.addr %s10670, 4
      %s10672 = scalar_lea.vmem %s3, %s10671
      // Predicated region
      $region53: #{vdsr_forward.1} parent=31 // pred_check
        %p10673 = pneg %p112
      $region54: #{vdsr_forward.1} parent=31 // pred_check_branch
        %10675 = sbr.rel (%p10673) target = $region56
      $region55: #{vdsr_forward.1} parent=31 // pred_region
        _
      $region56: #{vdsr_forward.1} parent=31 // pred_fallthru
        _
    $region32: #{vdsr_forward.1} parent=5 // pred_fallthru
      _
    %p10676 = scmp.le.s32.totalorder 2, %s9
    // Predicated region
    $region57: #{vdsr_forward.1} parent=5 // pred_check
      %p10677 = pneg %p10676
    $region58: #{vdsr_forward.1} parent=5 // pred_check_branch
      %10679 = sbr.rel (%p10677) target = $region60
    $region59: #{vdsr_forward.1} parent=5 // pred_region
      %s10680 = ssub.s32 %s9, 2
      // Predicated region
      $region61: #{vdsr_forward.1} parent=59 // pred_check
        %p10681 = pneg %p118
      $region62: #{vdsr_forward.1} parent=59 // pred_check_branch
        %10683 = sbr.rel (%p10681) target = $region64
      $region63: #{vdsr_forward.1} parent=59 // pred_region
        %p10684 = scmp.lt.s32.totalorder %s20, 1
        %s10685 = scalar_select %p10684, %s20, 1
        %s10686 = smul.addr %s10685, 128
        %s10687 = smul.addr %s10686, 4
        %s10688 = scalar_lea.vmem %s3, %s10687
      $region64: #{vdsr_forward.1} parent=59 // pred_fallthru
        _
    $region60: #{vdsr_forward.1} parent=5 // pred_fallthru
      _
  $region6: #{vdsr_forward.1} parent=0 // loop_footer
    %s13 = sadd.s32 1, %s9
  $region7: #{vdsr_forward.1} parent=0 // loop_footer_branch
    %8 = sbr.rel target = $region3
  $region8: #{vdsr_forward.1} parent=0 // loop_exit
    _

</llo_original>
